<compile_context>
chip_gen: v5e
topology: v5e:2x2
jax: 0.10.0
libtpu: 0.0.40
codegen_flags: <defaults>
</compile_context>

<pallas_src>
import functools

import jax
import jax.numpy as jnp
from jax.experimental import pallas as pl
from jax.experimental.pallas import tpu as pltpu

IN_FEATURES = 256 * 5 * 4   # 5120
H1, H2, H3, OUT = 500, 200, 50, 2
# Lane-padded (multiple-of-128) widths used inside the kernel.
H1P, H2P, H3P, OUTP = 512, 256, 128, 128


def _round_up(a, m):
    return (a + m - 1) // m * m


def mlp_kernel(x_ref,
               w1_ref, b1_ref,
               w2_ref, b2_ref,
               w3_ref, b3_ref,
               w4_ref, b4_ref,
               o_ref):
    # Layer 1 + ReLU (bf16 operands on the MXU, f32 accumulation / epilogue).
    # If x is already bf16 the astype is a no-op.
    x = x_ref[...].astype(jnp.bfloat16)
    h = jnp.dot(x, w1_ref[...], preferred_element_type=jnp.float32)
    h = jnp.maximum(h + b1_ref[...], 0.0)
    # Layer 2 + ReLU
    h = jnp.dot(h.astype(jnp.bfloat16), w2_ref[...],
                preferred_element_type=jnp.float32)
    h = jnp.maximum(h + b2_ref[...], 0.0)
    # Layer 3 + ReLU
    h = jnp.dot(h.astype(jnp.bfloat16), w3_ref[...],
                preferred_element_type=jnp.float32)
    h = jnp.maximum(h + b3_ref[...], 0.0)
    # Layer 4 (no activation); lane-dense padded store.
    h = jnp.dot(h.astype(jnp.bfloat16), w4_ref[...],
                preferred_element_type=jnp.float32)
    o_ref[...] = (h + b4_ref[...]).astype(o_ref.dtype)


def _pad_weight(w, rows, cols):
    w = jnp.asarray(w, jnp.float32)
    w = jnp.pad(w, ((0, rows - w.shape[0]), (0, cols - w.shape[1])))
    return w.astype(jnp.bfloat16)


def _pad_bias(b, cols):
    b = jnp.asarray(b, jnp.float32)
    return jnp.pad(b, (0, cols - b.shape[0])).reshape(1, cols)


def _resident_spec(shape):
    """Constant-index (resident) block; single-buffered when supported."""
    idx = lambda i: (0, 0)
    if hasattr(pl, "Buffered"):
        try:
            return pl.BlockSpec(shape, idx, pipeline_mode=pl.Buffered(1))
        except TypeError:
            pass  # older Pallas without pipeline_mode kwarg
    return pl.BlockSpec(shape, idx)


def _tpu_generation_config():
    """Generation-aware tile cap / VMEM budget / core count."""
    try:
        kind = jax.devices()[0].device_kind.lower()
    except Exception:  # pragma: no cover - defensive
        kind = ""
    if "v7" in kind or "7x" in kind:
        # 64 MiB physical VMEM, 2 TensorCores per chip.
        return {"tb_cap": 512, "vmem_limit": 48 << 20, "num_cores": 2}
    if any(g in kind for g in ("v4", "v5", "v6")):
        # 128 MiB physical VMEM, 1 TC addressed per device here.
        return {"tb_cap": 1024, "vmem_limit": 96 << 20, "num_cores": 1}
    # Unknown part: conservative.
    return {"tb_cap": 512, "vmem_limit": 48 << 20, "num_cores": 1}


@functools.partial(jax.jit,
                   static_argnames=("tb_cap", "vmem_limit", "num_cores"))
def _forward_impl(img, params, *, tb_cap, vmem_limit, num_cores):
    w1, b1, w2, b2, w3, b3, w4, b4 = params
    x = img.reshape(-1, IN_FEATURES)
    # Keep bf16 activations if the producer already emits them; otherwise keep
    # f32 (do NOT add a standalone wrapper cast for a cold f32 input).
    if x.dtype != jnp.bfloat16:
        x = x.astype(jnp.float32)
    B = x.shape[0]

    # Batch tiling: tile multiple of 8 (sublane); batch padded to whole tiles.
    B8 = _round_up(B, 8)
    TB = min(tb_cap, B8)
    # v7x megacore: make sure there are >= 2 grid steps when the batch allows,
    # so "parallel" can shard batch steps across both TensorCores.
    if num_cores > 1 and B8 >= 2 * 8:
        TB = min(TB, _round_up(-(-B8 // num_cores), 8))
    B_pad = _round_up(B8, TB)
    if B_pad != B:
        x = jnp.pad(x, ((0, B_pad - B), (0, 0)))

    # Lane-pad + bf16-cast weights (zero padding keeps the math identical);
    # biases stay f32 rows for VPU broadcasting.
    w1p = _pad_weight(w1, IN_FEATURES, H1P)
    w2p = _pad_weight(w2, H1P, H2P)
    w3p = _pad_weight(w3, H2P, H3P)
    w4p = _pad_weight(w4, H3P, OUTP)
    b1p = _pad_bias(b1, H1P)
    b2p = _pad_bias(b2, H2P)
    b3p = _pad_bias(b3, H3P)
    b4p = _pad_bias(b4, OUTP)

    grid = (B_pad // TB,)

    out_padded = pl.pallas_call(
        mlp_kernel,
        out_shape=jax.ShapeDtypeStruct((B_pad, OUTP), jnp.float32),
        grid_spec=pltpu.PrefetchScalarGridSpec(
            num_scalar_prefetch=0,
            grid=grid,
            in_specs=[
                pl.BlockSpec((TB, IN_FEATURES), lambda i: (i, 0)),   # x tile
                _resident_spec((IN_FEATURES, H1P)), _resident_spec((1, H1P)),
                _resident_spec((H1P, H2P)),         _resident_spec((1, H2P)),
                _resident_spec((H2P, H3P)),         _resident_spec((1, H3P)),
                _resident_spec((H3P, OUTP)),        _resident_spec((1, OUTP)),
            ],
            out_specs=pl.BlockSpec((TB, OUTP), lambda i: (i, 0)),
        ),
        compiler_params=pltpu.CompilerParams(
            dimension_semantics=("parallel",),
            vmem_limit_bytes=vmem_limit,
        ),
    )(x, w1p, b1p, w2p, b2p, w3p, b3p, w4p, b4p)

    return out_padded[:B, :OUT]


def ann_ts_3l_forward(img, params, *, tb=None):
    """img: (B, 256, 5, 4) f32 (or bf16). Returns (B, 2) f32 logits."""
    cfg = _tpu_generation_config()
    tb_cap = int(tb) if tb is not None else cfg["tb_cap"]
    return _forward_impl(img, params,
                         tb_cap=tb_cap,
                         vmem_limit=cfg["vmem_limit"],
                         num_cores=cfg["num_cores"])


def init_params(key):
    """Deterministic init mimicking nn.Linear's U(-1/sqrt(fan_in), 1/sqrt(fan_in)).
    Weights are stored as (in, out) for the kernel."""
    dims = [(IN_FEATURES, H1), (H1, H2), (H2, H3), (H3, OUT)]
    params = []
    for i, (fin, fout) in enumerate(dims):
        kw, kb = jax.random.split(jax.random.fold_in(key, i))
        bound = 1.0 / jnp.sqrt(fin)
        w = jax.random.uniform(kw, (fin, fout), jnp.float32, -bound, bound)
        b = jax.random.uniform(kb, (fout,), jnp.float32, -bound, bound)
        params += [w, b]
    return tuple(params)


def reference_forward_f32(img, params):
    """Pure-f32 reference matching the PyTorch module."""
    w1, b1, w2, b2, w3, b3, w4, b4 = params
    x = img.reshape(-1, IN_FEATURES)
    h = jnp.maximum(x @ w1 + b1, 0.0)
    h = jnp.maximum(h @ w2 + b2, 0.0)
    h = jnp.maximum(h @ w3 + b3, 0.0)
    return h @ w4 + b4


def reference_forward_bf16(img, params):
    """Reference emulating the kernel's bf16-weight / f32-accumulate path."""
    w1, b1, w2, b2, w3, b3, w4, b4 = params
    bf = jnp.bfloat16
    x = img.reshape(-1, IN_FEATURES).astype(bf)
    h = jnp.maximum(jnp.dot(x, w1.astype(bf),
                            preferred_element_type=jnp.float32) + b1, 0.0)
    h = jnp.maximum(jnp.dot(h.astype(bf), w2.astype(bf),
                            preferred_element_type=jnp.float32) + b2, 0.0)
    h = jnp.maximum(jnp.dot(h.astype(bf), w3.astype(bf),
                            preferred_element_type=jnp.float32) + b3, 0.0)
    return jnp.dot(h.astype(bf), w4.astype(bf),
                   preferred_element_type=jnp.float32) + b4


if __name__ == "__main__":
    key = jax.random.PRNGKey(0)
    k_img, k_par = jax.random.split(key)

    B = 2
    img = jax.random.normal(k_img, (B, 256, 5, 4), jnp.float32)
    params = init_params(k_par)

    out = ann_ts_3l_forward(img, params)
    out = jax.block_until_ready(out)
    assert out.shape == (B, OUT), out.shape

    # Tight check against a reference that emulates the kernel's bf16 casts.
    ref_bf16 = reference_forward_bf16(img, params)
    assert jnp.allclose(out, ref_bf16, atol=1e-2, rtol=1e-2), (out, ref_bf16)

    # Loose check against the pure-f32 PyTorch-equivalent math (bf16 weight
    # quantization introduces a small, bounded deviation).
    ref_f32 = reference_forward_f32(img, params)
    assert jnp.allclose(out, ref_f32, atol=1e-1, rtol=1e-1), (out, ref_f32)

    print("KERNEL_OK")
</pallas_src>

<mosaic_0001>
module attributes {stable_mosaic.version = 11 : i64} {
  func.func @mlp_kernel(%arg0: i32, %arg1: memref<8x5120xf32, #tpu.memory_space<vmem>>, %arg2: memref<5120x512xbf16, #tpu.memory_space<vmem>>, %arg3: memref<1x512xf32, #tpu.memory_space<vmem>>, %arg4: memref<512x256xbf16, #tpu.memory_space<vmem>>, %arg5: memref<1x256xf32, #tpu.memory_space<vmem>>, %arg6: memref<256x128xbf16, #tpu.memory_space<vmem>>, %arg7: memref<1x128xf32, #tpu.memory_space<vmem>>, %arg8: memref<128x128xbf16, #tpu.memory_space<vmem>>, %arg9: memref<1x128xf32, #tpu.memory_space<vmem>>, %arg10: memref<8x128xf32, #tpu.memory_space<vmem>>) attributes {dimension_semantics = [#tpu.dimension_semantics<parallel>], iteration_bounds = array<i64: 1>, scalar_prefetch = 0 : i64, scratch_operands = 0 : i64, tpu.core_type = #tpu.core_type<tc>, window_params = [{transform_indices = @transform_0, window_bounds = array<i64: 8, 5120>}, {pipeline_mode = #tpu.pipeline_mode<synchronous>, transform_indices = @transform_1, window_bounds = array<i64: 5120, 512>}, {pipeline_mode = #tpu.pipeline_mode<synchronous>, transform_indices = @transform_2, window_bounds = array<i64: 1, 512>}, {pipeline_mode = #tpu.pipeline_mode<synchronous>, transform_indices = @transform_3, window_bounds = array<i64: 512, 256>}, {pipeline_mode = #tpu.pipeline_mode<synchronous>, transform_indices = @transform_4, window_bounds = array<i64: 1, 256>}, {pipeline_mode = #tpu.pipeline_mode<synchronous>, transform_indices = @transform_5, window_bounds = array<i64: 256, 128>}, {pipeline_mode = #tpu.pipeline_mode<synchronous>, transform_indices = @transform_6, window_bounds = array<i64: 1, 128>}, {pipeline_mode = #tpu.pipeline_mode<synchronous>, transform_indices = @transform_7, window_bounds = array<i64: 128, 128>}, {pipeline_mode = #tpu.pipeline_mode<synchronous>, transform_indices = @transform_8, window_bounds = array<i64: 1, 128>}, {transform_indices = @transform_9, window_bounds = array<i64: 8, 128>}]} {
    %c0 = arith.constant 0 : index
    %c0_0 = arith.constant 0 : index
    %0 = vector.load %arg1[%c0, %c0_0] : memref<8x5120xf32, #tpu.memory_space<vmem>>, vector<8x5120xf32>
    %1 = arith.truncf %0 : vector<8x5120xf32> to vector<8x5120xbf16>
    %c0_1 = arith.constant 0 : index
    %c0_2 = arith.constant 0 : index
    %2 = vector.load %arg2[%c0_1, %c0_2] : memref<5120x512xbf16, #tpu.memory_space<vmem>>, vector<5120x512xbf16>
    %cst = arith.constant dense<0.000000e+00> : vector<8x512xf32>
    %3 = tpu.matmul %1, %2, %cst {dimension_numbers = #tpu.dot_dimension_numbers<[1], [0], [0], [1], [0, 0, 1, 1], [], []>} : vector<8x5120xbf16>, vector<5120x512xbf16>, vector<8x512xf32> -> vector<8x512xf32>
    %c0_3 = arith.constant 0 : index
    %c0_4 = arith.constant 0 : index
    %4 = vector.load %arg3[%c0_3, %c0_4] : memref<1x512xf32, #tpu.memory_space<vmem>>, vector<1x512xf32>
    %5 = vector.broadcast %4 : vector<1x512xf32> to vector<8x512xf32>
    %6 = arith.addf %3, %5 : vector<8x512xf32>
    %cst_5 = arith.constant 0.000000e+00 : f32
    %7 = vector.broadcast %cst_5 : f32 to vector<8x512xf32>
    %8 = arith.maximumf %6, %7 : vector<8x512xf32>
    %9 = arith.truncf %8 : vector<8x512xf32> to vector<8x512xbf16>
    %c0_6 = arith.constant 0 : index
    %c0_7 = arith.constant 0 : index
    %10 = vector.load %arg4[%c0_6, %c0_7] : memref<512x256xbf16, #tpu.memory_space<vmem>>, vector<512x256xbf16>
    %cst_8 = arith.constant dense<0.000000e+00> : vector<8x256xf32>
    %11 = tpu.matmul %9, %10, %cst_8 {dimension_numbers = #tpu.dot_dimension_numbers<[1], [0], [0], [1], [0, 0, 1, 1], [], []>} : vector<8x512xbf16>, vector<512x256xbf16>, vector<8x256xf32> -> vector<8x256xf32>
    %c0_9 = arith.constant 0 : index
    %c0_10 = arith.constant 0 : index
    %12 = vector.load %arg5[%c0_9, %c0_10] : memref<1x256xf32, #tpu.memory_space<vmem>>, vector<1x256xf32>
    %13 = vector.broadcast %12 : vector<1x256xf32> to vector<8x256xf32>
    %14 = arith.addf %11, %13 : vector<8x256xf32>
    %cst_11 = arith.constant 0.000000e+00 : f32
    %15 = vector.broadcast %cst_11 : f32 to vector<8x256xf32>
    %16 = arith.maximumf %14, %15 : vector<8x256xf32>
    %17 = arith.truncf %16 : vector<8x256xf32> to vector<8x256xbf16>
    %c0_12 = arith.constant 0 : index
    %c0_13 = arith.constant 0 : index
    %18 = vector.load %arg6[%c0_12, %c0_13] : memref<256x128xbf16, #tpu.memory_space<vmem>>, vector<256x128xbf16>
    %cst_14 = arith.constant dense<0.000000e+00> : vector<8x128xf32>
    %19 = tpu.matmul %17, %18, %cst_14 {dimension_numbers = #tpu.dot_dimension_numbers<[1], [0], [0], [1], [0, 0, 1, 1], [], []>} : vector<8x256xbf16>, vector<256x128xbf16>, vector<8x128xf32> -> vector<8x128xf32>
    %c0_15 = arith.constant 0 : index
    %c0_16 = arith.constant 0 : index
    %20 = vector.load %arg7[%c0_15, %c0_16] : memref<1x128xf32, #tpu.memory_space<vmem>>, vector<1x128xf32>
    %21 = vector.broadcast %20 : vector<1x128xf32> to vector<8x128xf32>
    %22 = arith.addf %19, %21 : vector<8x128xf32>
    %cst_17 = arith.constant 0.000000e+00 : f32
    %23 = vector.broadcast %cst_17 : f32 to vector<8x128xf32>
    %24 = arith.maximumf %22, %23 : vector<8x128xf32>
    %25 = arith.truncf %24 : vector<8x128xf32> to vector<8x128xbf16>
    %c0_18 = arith.constant 0 : index
    %c0_19 = arith.constant 0 : index
    %26 = vector.load %arg8[%c0_18, %c0_19] : memref<128x128xbf16, #tpu.memory_space<vmem>>, vector<128x128xbf16>
    %cst_20 = arith.constant dense<0.000000e+00> : vector<8x128xf32>
    %27 = tpu.matmul %25, %26, %cst_20 {dimension_numbers = #tpu.dot_dimension_numbers<[1], [0], [0], [1], [0, 0, 1, 1], [], []>} : vector<8x128xbf16>, vector<128x128xbf16>, vector<8x128xf32> -> vector<8x128xf32>
    %c0_21 = arith.constant 0 : index
    %c0_22 = arith.constant 0 : index
    %28 = vector.load %arg9[%c0_21, %c0_22] : memref<1x128xf32, #tpu.memory_space<vmem>>, vector<1x128xf32>
    %29 = vector.broadcast %28 : vector<1x128xf32> to vector<8x128xf32>
    %30 = arith.addf %27, %29 : vector<8x128xf32>
    %c0_23 = arith.constant 0 : index
    %c0_24 = arith.constant 0 : index
    %31 = vector.load %arg10[%c0_23, %c0_24] : memref<8x128xf32, #tpu.memory_space<vmem>>, vector<8x128xf32>
    tpu.vector_store %arg10[%c0_23, %c0_24], %30 {strides = array<i32>} : memref<8x128xf32, #tpu.memory_space<vmem>>, vector<8x128xf32>,
    return
  }
  func.func @transform_0(%arg0: i32) -> (i32, i32) {
    %c0_i32 = arith.constant 0 : i32
    %c0_i32_0 = arith.constant 0 : i32
    return %arg0, %c0_i32 : i32, i32
  }
  func.func @transform_1(%arg0: i32) -> (i32, i32) {
    %c0_i32 = arith.constant 0 : i32
    %c0_i32_0 = arith.constant 0 : i32
    %c0_i32_1 = arith.constant 0 : i32
    return %c0_i32, %c0_i32_0 : i32, i32
  }
  func.func @transform_2(%arg0: i32) -> (i32, i32) {
    %c0_i32 = arith.constant 0 : i32
    %c0_i32_0 = arith.constant 0 : i32
    %c0_i32_1 = arith.constant 0 : i32
    return %c0_i32, %c0_i32_0 : i32, i32
  }
  func.func @transform_3(%arg0: i32) -> (i32, i32) {
    %c0_i32 = arith.constant 0 : i32
    %c0_i32_0 = arith.constant 0 : i32
    %c0_i32_1 = arith.constant 0 : i32
    return %c0_i32, %c0_i32_0 : i32, i32
  }
  func.func @transform_4(%arg0: i32) -> (i32, i32) {
    %c0_i32 = arith.constant 0 : i32
    %c0_i32_0 = arith.constant 0 : i32
    %c0_i32_1 = arith.constant 0 : i32
    return %c0_i32, %c0_i32_0 : i32, i32
  }
  func.func @transform_5(%arg0: i32) -> (i32, i32) {
    %c0_i32 = arith.constant 0 : i32
    %c0_i32_0 = arith.constant 0 : i32
    %c0_i32_1 = arith.constant 0 : i32
    return %c0_i32, %c0_i32_0 : i32, i32
  }
  func.func @transform_6(%arg0: i32) -> (i32, i32) {
    %c0_i32 = arith.constant 0 : i32
    %c0_i32_0 = arith.constant 0 : i32
    %c0_i32_1 = arith.constant 0 : i32
    return %c0_i32, %c0_i32_0 : i32, i32
  }
  func.func @transform_7(%arg0: i32) -> (i32, i32) {
    %c0_i32 = arith.constant 0 : i32
    %c0_i32_0 = arith.constant 0 : i32
    %c0_i32_1 = arith.constant 0 : i32
    return %c0_i32, %c0_i32_0 : i32, i32
  }
  func.func @transform_8(%arg0: i32) -> (i32, i32) {
    %c0_i32 = arith.constant 0 : i32
    %c0_i32_0 = arith.constant 0 : i32
    %c0_i32_1 = arith.constant 0 : i32
    return %c0_i32, %c0_i32_0 : i32, i32
  }
  func.func @transform_9(%arg0: i32) -> (i32, i32) {
    %c0_i32 = arith.constant 0 : i32
    %c0_i32_0 = arith.constant 0 : i32
    return %arg0, %c0_i32 : i32, i32
  }
}

</mosaic_0001>

<llo_original>
// kernel: _forward_impl.1
$region0: #{_forward_impl.1}
  #allocation0 [shape = 'u32[]', space=smem, size = 0x4, offset = 0x4, fixed_abs, tag = 'smem constant byte address 0x4 - core index']
  #allocation1 [shape = 'u32[72,128]{1,0:T(1,128)}', space=vmem, size = 0x9000, scoped, tag = 'internal scratch']
  %s0 = inlined_call_operand.vmem [shape: f32[8,5120], index: 0, kind: input, shape index: {}]
  %s1 = inlined_call_operand.vmem [shape: bf16[5120,512], index: 1, kind: input, shape index: {}]
  %s2 = inlined_call_operand.vmem [shape: f32[1,512], index: 2, kind: input, shape index: {}]
  %s3 = inlined_call_operand.vmem [shape: bf16[512,256], index: 3, kind: input, shape index: {}]
  %s4 = inlined_call_operand.vmem [shape: f32[1,256], index: 4, kind: input, shape index: {}]
  %s5 = inlined_call_operand.vmem [shape: bf16[256,128], index: 5, kind: input, shape index: {}]
  %s6 = inlined_call_operand.vmem [shape: f32[1,128], index: 6, kind: input, shape index: {}]
  %s7 = inlined_call_operand.vmem [shape: bf16[128,128], index: 7, kind: input, shape index: {}]
  %s8 = inlined_call_operand.vmem [shape: f32[1,128], index: 8, kind: input, shape index: {}]
  %s9 = inlined_call_operand.vmem [shape: f32[8,128], index: 9, kind: output, shape index: {}]
  %s10 = sld [smem:[#allocation0]]
  $region46: #{_forward_impl.1} parent=0
    _
  %s12 = ssub.s32 1, %s10
  %s13 = scalar_select 0, %s12, %s10
  // Predicated region
  $region2: #{_forward_impl.1} parent=0 // pred_check
    _
  $region3: #{_forward_impl.1} parent=0 // pred_check_branch
    %15 = sbr.rel (0) target = $region5
  $region4: #{_forward_impl.1} parent=0 // pred_region
    _
  $region5: #{_forward_impl.1} parent=0 // pred_fallthru
    _
  // Predicated region
  $region6: #{_forward_impl.1} parent=0 // pred_check
    _
  $region7: #{_forward_impl.1} parent=0 // pred_check_branch
    %17 = sbr.rel (0) target = $region9
  $region8: #{_forward_impl.1} parent=0 // pred_region
    _
  $region9: #{_forward_impl.1} parent=0 // pred_fallthru
    _
  // Predicated region
  $region10: #{_forward_impl.1} parent=0 // pred_check
    _
  $region11: #{_forward_impl.1} parent=0 // pred_check_branch
    %19 = sbr.rel (0) target = $region13
  $region12: #{_forward_impl.1} parent=0 // pred_region
    _
  $region13: #{_forward_impl.1} parent=0 // pred_fallthru
    _
  // Predicated region
  $region14: #{_forward_impl.1} parent=0 // pred_check
    _
  $region15: #{_forward_impl.1} parent=0 // pred_check_branch
    %21 = sbr.rel (0) target = $region17
  $region16: #{_forward_impl.1} parent=0 // pred_region
    _
  $region17: #{_forward_impl.1} parent=0 // pred_fallthru
    _
  // Predicated region
  $region18: #{_forward_impl.1} parent=0 // pred_check
    _
  $region19: #{_forward_impl.1} parent=0 // pred_check_branch
    %23 = sbr.rel (0) target = $region21
  $region20: #{_forward_impl.1} parent=0 // pred_region
    _
  $region21: #{_forward_impl.1} parent=0 // pred_fallthru
    _
  // Predicated region
  $region22: #{_forward_impl.1} parent=0 // pred_check
    _
  $region23: #{_forward_impl.1} parent=0 // pred_check_branch
    %25 = sbr.rel (0) target = $region25
  $region24: #{_forward_impl.1} parent=0 // pred_region
    _
  $region25: #{_forward_impl.1} parent=0 // pred_fallthru
    _
  // Predicated region
  $region26: #{_forward_impl.1} parent=0 // pred_check
    _
  $region27: #{_forward_impl.1} parent=0 // pred_check_branch
    %27 = sbr.rel (0) target = $region29
  $region28: #{_forward_impl.1} parent=0 // pred_region
    _
  $region29: #{_forward_impl.1} parent=0 // pred_fallthru
    _
  // Predicated region
  $region30: #{_forward_impl.1} parent=0 // pred_check
    _
  $region31: #{_forward_impl.1} parent=0 // pred_check_branch
    %29 = sbr.rel (0) target = $region33
  $region32: #{_forward_impl.1} parent=0 // pred_region
    _
  $region33: #{_forward_impl.1} parent=0 // pred_fallthru
    _
  // Predicated region
  $region34: #{_forward_impl.1} parent=0 // pred_check
    _
  $region35: #{_forward_impl.1} parent=0 // pred_check_branch
    %31 = sbr.rel (0) target = $region37
  $region36: #{_forward_impl.1} parent=0 // pred_region
    _
  $region37: #{_forward_impl.1} parent=0 // pred_fallthru
    _
  %v32 = vld [vmem:[%s0] sm:$0xff]
  %v33 = vld [vmem:[%s0 + $0x8] sm:$0xff]
  %v34 = vld [vmem:[%s0 + $0x10] sm:$0xff]
  %v35 = vld [vmem:[%s0 + $0x18] sm:$0xff]
  %v36 = vld [vmem:[%s0 + $0x20] sm:$0xff]
  %v37 = vld [vmem:[%s0 + $0x28] sm:$0xff]
  %v38 = vld [vmem:[%s0 + $0x30] sm:$0xff]
  %v39 = vld [vmem:[%s0 + $0x38] sm:$0xff]
  %v40 = vld [vmem:[%s0 + $0x40] sm:$0xff]
  %v41 = vld [vmem:[%s0 + $0x48] sm:$0xff]
  %v42 = vld [vmem:[%s0 + $0x50] sm:$0xff]
  %v43 = vld [vmem:[%s0 + $0x58] sm:$0xff]
  %v44 = vld [vmem:[%s0 + $0x60] sm:$0xff]
  %v45 = vld [vmem:[%s0 + $0x68] sm:$0xff]
  %v46 = vld [vmem:[%s0 + $0x70] sm:$0xff]
  %v47 = vld [vmem:[%s0 + $0x78] sm:$0xff]
  %v48 = vld [vmem:[%s0 + $0x80] sm:$0xff]
  %v49 = vld [vmem:[%s0 + $0x88] sm:$0xff]
  %v50 = vld [vmem:[%s0 + $0x90] sm:$0xff]
  %v51 = vld [vmem:[%s0 + $0x98] sm:$0xff]
  %v52 = vld [vmem:[%s0 + $0xa0] sm:$0xff]
  %v53 = vld [vmem:[%s0 + $0xa8] sm:$0xff]
  %v54 = vld [vmem:[%s0 + $0xb0] sm:$0xff]
  %v55 = vld [vmem:[%s0 + $0xb8] sm:$0xff]
  %v56 = vld [vmem:[%s0 + $0xc0] sm:$0xff]
  %v57 = vld [vmem:[%s0 + $0xc8] sm:$0xff]
  %v58 = vld [vmem:[%s0 + $0xd0] sm:$0xff]
  %v59 = vld [vmem:[%s0 + $0xd8] sm:$0xff]
  %v60 = vld [vmem:[%s0 + $0xe0] sm:$0xff]
  %v61 = vld [vmem:[%s0 + $0xe8] sm:$0xff]
  %v62 = vld [vmem:[%s0 + $0xf0] sm:$0xff]
  %v63 = vld [vmem:[%s0 + $0xf8] sm:$0xff]
  %v64 = vld [vmem:[%s0 + $0x100] sm:$0xff]
  %v65 = vld [vmem:[%s0 + $0x108] sm:$0xff]
  %v66 = vld [vmem:[%s0 + $0x110] sm:$0xff]
  %v67 = vld [vmem:[%s0 + $0x118] sm:$0xff]
  %v68 = vld [vmem:[%s0 + $0x120] sm:$0xff]
  %v69 = vld [vmem:[%s0 + $0x128] sm:$0xff]
  %v70 = vld [vmem:[%s0 + $0x130] sm:$0xff]
  %v71 = vld [vmem:[%s0 + $0x138] sm:$0xff]
  %v72 = vpack.c.bf16 %v32, %v32
  %v73 = vpack.c.bf16 %v33, %v33
  %v74 = vpack.c.bf16 %v34, %v34
  %v75 = vpack.c.bf16 %v35, %v35
  %v76 = vpack.c.bf16 %v36, %v36
  %v77 = vpack.c.bf16 %v37, %v37
  %v78 = vpack.c.bf16 %v38, %v38
  %v79 = vpack.c.bf16 %v39, %v39
  %v80 = vpack.c.bf16 %v40, %v40
  %v81 = vpack.c.bf16 %v41, %v41
  %v82 = vpack.c.bf16 %v42, %v42
  %v83 = vpack.c.bf16 %v43, %v43
  %v84 = vpack.c.bf16 %v44, %v44
  %v85 = vpack.c.bf16 %v45, %v45
  %v86 = vpack.c.bf16 %v46, %v46
  %v87 = vpack.c.bf16 %v47, %v47
  %v88 = vpack.c.bf16 %v48, %v48
  %v89 = vpack.c.bf16 %v49, %v49
  %v90 = vpack.c.bf16 %v50, %v50
  %v91 = vpack.c.bf16 %v51, %v51
  %v92 = vpack.c.bf16 %v52, %v52
  %v93 = vpack.c.bf16 %v53, %v53
  %v94 = vpack.c.bf16 %v54, %v54
  %v95 = vpack.c.bf16 %v55, %v55
  %v96 = vpack.c.bf16 %v56, %v56
  %v97 = vpack.c.bf16 %v57, %v57
  %v98 = vpack.c.bf16 %v58, %v58
  %v99 = vpack.c.bf16 %v59, %v59
  %v100 = vpack.c.bf16 %v60, %v60
  %v101 = vpack.c.bf16 %v61, %v61
  %v102 = vpack.c.bf16 %v62, %v62
  %v103 = vpack.c.bf16 %v63, %v63
  %v104 = vpack.c.bf16 %v64, %v64
  %v105 = vpack.c.bf16 %v65, %v65
  %v106 = vpack.c.bf16 %v66, %v66
  %v107 = vpack.c.bf16 %v67, %v67
  %v108 = vpack.c.bf16 %v68, %v68
  %v109 = vpack.c.bf16 %v69, %v69
  %v110 = vpack.c.bf16 %v70, %v70
  %v111 = vpack.c.bf16 %v71, %v71
  %v112 = vld [vmem:[%s1] sm:$0xff]
  %v113 = vld [vmem:[%s1 + $0x8] sm:$0xff]
  %v114 = vld [vmem:[%s1 + $0x10] sm:$0xff]
  %v115 = vld [vmem:[%s1 + $0x18] sm:$0xff]
  %v116 = vld [vmem:[%s1 + $0x20] sm:$0xff]
  %v117 = vld [vmem:[%s1 + $0x28] sm:$0xff]
  %v118 = vld [vmem:[%s1 + $0x30] sm:$0xff]
  %v119 = vld [vmem:[%s1 + $0x38] sm:$0xff]
  %v120 = vld [vmem:[%s1 + $0x40] sm:$0xff]
  %v121 = vld [vmem:[%s1 + $0x48] sm:$0xff]
  %v122 = vld [vmem:[%s1 + $0x50] sm:$0xff]
  %v123 = vld [vmem:[%s1 + $0x58] sm:$0xff]
  %v124 = vld [vmem:[%s1 + $0x60] sm:$0xff]
  %v125 = vld [vmem:[%s1 + $0x68] sm:$0xff]
  %v126 = vld [vmem:[%s1 + $0x70] sm:$0xff]
  %v127 = vld [vmem:[%s1 + $0x78] sm:$0xff]
  %v128 = vld [vmem:[%s1 + $0x80] sm:$0xff]
  %v129 = vld [vmem:[%s1 + $0x88] sm:$0xff]
  %v130 = vld [vmem:[%s1 + $0x90] sm:$0xff]
  %v131 = vld [vmem:[%s1 + $0x98] sm:$0xff]
  %v132 = vld [vmem:[%s1 + $0xa0] sm:$0xff]
  %v133 = vld [vmem:[%s1 + $0xa8] sm:$0xff]
  %v134 = vld [vmem:[%s1 + $0xb0] sm:$0xff]
  %v135 = vld [vmem:[%s1 + $0xb8] sm:$0xff]
  %v136 = vld [vmem:[%s1 + $0xc0] sm:$0xff]
  %v137 = vld [vmem:[%s1 + $0xc8] sm:$0xff]
  %v138 = vld [vmem:[%s1 + $0xd0] sm:$0xff]
  %v139 = vld [vmem:[%s1 + $0xd8] sm:$0xff]
  %v140 = vld [vmem:[%s1 + $0xe0] sm:$0xff]
  %v141 = vld [vmem:[%s1 + $0xe8] sm:$0xff]
  %v142 = vld [vmem:[%s1 + $0xf0] sm:$0xff]
  %v143 = vld [vmem:[%s1 + $0xf8] sm:$0xff]
  %v144 = vld [vmem:[%s1 + $0x100] sm:$0xff]
  %v145 = vld [vmem:[%s1 + $0x108] sm:$0xff]
  %v146 = vld [vmem:[%s1 + $0x110] sm:$0xff]
  %v147 = vld [vmem:[%s1 + $0x118] sm:$0xff]
  %v148 = vld [vmem:[%s1 + $0x120] sm:$0xff]
  %v149 = vld [vmem:[%s1 + $0x128] sm:$0xff]
  %v150 = vld [vmem:[%s1 + $0x130] sm:$0xff]
  %v151 = vld [vmem:[%s1 + $0x138] sm:$0xff]
  %v152 = vld [vmem:[%s1 + $0x140] sm:$0xff]
  %v153 = vld [vmem:[%s1 + $0x148] sm:$0xff]
  %v154 = vld [vmem:[%s1 + $0x150] sm:$0xff]
  %v155 = vld [vmem:[%s1 + $0x158] sm:$0xff]
  %v156 = vld [vmem:[%s1 + $0x160] sm:$0xff]
  %v157 = vld [vmem:[%s1 + $0x168] sm:$0xff]
  %v158 = vld [vmem:[%s1 + $0x170] sm:$0xff]
  %v159 = vld [vmem:[%s1 + $0x178] sm:$0xff]
  %v160 = vld [vmem:[%s1 + $0x180] sm:$0xff]
  %v161 = vld [vmem:[%s1 + $0x188] sm:$0xff]
  %v162 = vld [vmem:[%s1 + $0x190] sm:$0xff]
  %v163 = vld [vmem:[%s1 + $0x198] sm:$0xff]
  %v164 = vld [vmem:[%s1 + $0x1a0] sm:$0xff]
  %v165 = vld [vmem:[%s1 + $0x1a8] sm:$0xff]
  %v166 = vld [vmem:[%s1 + $0x1b0] sm:$0xff]
  %v167 = vld [vmem:[%s1 + $0x1b8] sm:$0xff]
  %v168 = vld [vmem:[%s1 + $0x1c0] sm:$0xff]
  %v169 = vld [vmem:[%s1 + $0x1c8] sm:$0xff]
  %v170 = vld [vmem:[%s1 + $0x1d0] sm:$0xff]
  %v171 = vld [vmem:[%s1 + $0x1d8] sm:$0xff]
  %v172 = vld [vmem:[%s1 + $0x1e0] sm:$0xff]
  %v173 = vld [vmem:[%s1 + $0x1e8] sm:$0xff]
  %v174 = vld [vmem:[%s1 + $0x1f0] sm:$0xff]
  %v175 = vld [vmem:[%s1 + $0x1f8] sm:$0xff]
  %v176 = vld [vmem:[%s1 + $0x200] sm:$0xff]
  %v177 = vld [vmem:[%s1 + $0x208] sm:$0xff]
  %v178 = vld [vmem:[%s1 + $0x210] sm:$0xff]
  %v179 = vld [vmem:[%s1 + $0x218] sm:$0xff]
  %v180 = vld [vmem:[%s1 + $0x220] sm:$0xff]
  %v181 = vld [vmem:[%s1 + $0x228] sm:$0xff]
  %v182 = vld [vmem:[%s1 + $0x230] sm:$0xff]
  %v183 = vld [vmem:[%s1 + $0x238] sm:$0xff]
  %v184 = vld [vmem:[%s1 + $0x240] sm:$0xff]
  %v185 = vld [vmem:[%s1 + $0x248] sm:$0xff]
  %v186 = vld [vmem:[%s1 + $0x250] sm:$0xff]
  %v187 = vld [vmem:[%s1 + $0x258] sm:$0xff]
  %v188 = vld [vmem:[%s1 + $0x260] sm:$0xff]
  %v189 = vld [vmem:[%s1 + $0x268] sm:$0xff]
  %v190 = vld [vmem:[%s1 + $0x270] sm:$0xff]
  %v191 = vld [vmem:[%s1 + $0x278] sm:$0xff]
  %v192 = vld [vmem:[%s1 + $0x280] sm:$0xff]
  %v193 = vld [vmem:[%s1 + $0x288] sm:$0xff]
  %v194 = vld [vmem:[%s1 + $0x290] sm:$0xff]
  %v195 = vld [vmem:[%s1 + $0x298] sm:$0xff]
  %v196 = vld [vmem:[%s1 + $0x2a0] sm:$0xff]
  %v197 = vld [vmem:[%s1 + $0x2a8] sm:$0xff]
  %v198 = vld [vmem:[%s1 + $0x2b0] sm:$0xff]
  %v199 = vld [vmem:[%s1 + $0x2b8] sm:$0xff]
  %v200 = vld [vmem:[%s1 + $0x2c0] sm:$0xff]
  %v201 = vld [vmem:[%s1 + $0x2c8] sm:$0xff]
  %v202 = vld [vmem:[%s1 + $0x2d0] sm:$0xff]
  %v203 = vld [vmem:[%s1 + $0x2d8] sm:$0xff]
  %v204 = vld [vmem:[%s1 + $0x2e0] sm:$0xff]
  %v205 = vld [vmem:[%s1 + $0x2e8] sm:$0xff]
  %v206 = vld [vmem:[%s1 + $0x2f0] sm:$0xff]
  %v207 = vld [vmem:[%s1 + $0x2f8] sm:$0xff]
  %v208 = vld [vmem:[%s1 + $0x300] sm:$0xff]
  %v209 = vld [vmem:[%s1 + $0x308] sm:$0xff]
  %v210 = vld [vmem:[%s1 + $0x310] sm:$0xff]
  %v211 = vld [vmem:[%s1 + $0x318] sm:$0xff]
  %v212 = vld [vmem:[%s1 + $0x320] sm:$0xff]
  %v213 = vld [vmem:[%s1 + $0x328] sm:$0xff]
  %v214 = vld [vmem:[%s1 + $0x330] sm:$0xff]
  %v215 = vld [vmem:[%s1 + $0x338] sm:$0xff]
  %v216 = vld [vmem:[%s1 + $0x340] sm:$0xff]
  %v217 = vld [vmem:[%s1 + $0x348] sm:$0xff]
  %v218 = vld [vmem:[%s1 + $0x350] sm:$0xff]
  %v219 = vld [vmem:[%s1 + $0x358] sm:$0xff]
  %v220 = vld [vmem:[%s1 + $0x360] sm:$0xff]
  %v221 = vld [vmem:[%s1 + $0x368] sm:$0xff]
  %v222 = vld [vmem:[%s1 + $0x370] sm:$0xff]
  %v223 = vld [vmem:[%s1 + $0x378] sm:$0xff]
  %v224 = vld [vmem:[%s1 + $0x380] sm:$0xff]
  %v225 = vld [vmem:[%s1 + $0x388] sm:$0xff]
  %v226 = vld [vmem:[%s1 + $0x390] sm:$0xff]
  %v227 = vld [vmem:[%s1 + $0x398] sm:$0xff]
  %v228 = vld [vmem:[%s1 + $0x3a0] sm:$0xff]
  %v229 = vld [vmem:[%s1 + $0x3a8] sm:$0xff]
  %v230 = vld [vmem:[%s1 + $0x3b0] sm:$0xff]
  %v231 = vld [vmem:[%s1 + $0x3b8] sm:$0xff]
  %v232 = vld [vmem:[%s1 + $0x3c0] sm:$0xff]
  %v233 = vld [vmem:[%s1 + $0x3c8] sm:$0xff]
  %v234 = vld [vmem:[%s1 + $0x3d0] sm:$0xff]
  %v235 = vld [vmem:[%s1 + $0x3d8] sm:$0xff]
  %v236 = vld [vmem:[%s1 + $0x3e0] sm:$0xff]
  %v237 = vld [vmem:[%s1 + $0x3e8] sm:$0xff]
  %v238 = vld [vmem:[%s1 + $0x3f0] sm:$0xff]
  %v239 = vld [vmem:[%s1 + $0x3f8] sm:$0xff]
  %v240 = vld [vmem:[%s1 + $0x400] sm:$0xff]
  %v241 = vld [vmem:[%s1 + $0x408] sm:$0xff]
  %v242 = vld [vmem:[%s1 + $0x410] sm:$0xff]
  %v243 = vld [vmem:[%s1 + $0x418] sm:$0xff]
  %v244 = vld [vmem:[%s1 + $0x420] sm:$0xff]
  %v245 = vld [vmem:[%s1 + $0x428] sm:$0xff]
  %v246 = vld [vmem:[%s1 + $0x430] sm:$0xff]
  %v247 = vld [vmem:[%s1 + $0x438] sm:$0xff]
  %v248 = vld [vmem:[%s1 + $0x440] sm:$0xff]
  %v249 = vld [vmem:[%s1 + $0x448] sm:$0xff]
  %v250 = vld [vmem:[%s1 + $0x450] sm:$0xff]
  %v251 = vld [vmem:[%s1 + $0x458] sm:$0xff]
  %v252 = vld [vmem:[%s1 + $0x460] sm:$0xff]
  %v253 = vld [vmem:[%s1 + $0x468] sm:$0xff]
  %v254 = vld [vmem:[%s1 + $0x470] sm:$0xff]
  %v255 = vld [vmem:[%s1 + $0x478] sm:$0xff]
  %v256 = vld [vmem:[%s1 + $0x480] sm:$0xff]
  %v257 = vld [vmem:[%s1 + $0x488] sm:$0xff]
  %v258 = vld [vmem:[%s1 + $0x490] sm:$0xff]
  %v259 = vld [vmem:[%s1 + $0x498] sm:$0xff]
  %v260 = vld [vmem:[%s1 + $0x4a0] sm:$0xff]
  %v261 = vld [vmem:[%s1 + $0x4a8] sm:$0xff]
  %v262 = vld [vmem:[%s1 + $0x4b0] sm:$0xff]
  %v263 = vld [vmem:[%s1 + $0x4b8] sm:$0xff]
  %v264 = vld [vmem:[%s1 + $0x4c0] sm:$0xff]
  %v265 = vld [vmem:[%s1 + $0x4c8] sm:$0xff]
  %v266 = vld [vmem:[%s1 + $0x4d0] sm:$0xff]
  %v267 = vld [vmem:[%s1 + $0x4d8] sm:$0xff]
  %v268 = vld [vmem:[%s1 + $0x4e0] sm:$0xff]
  %v269 = vld [vmem:[%s1 + $0x4e8] sm:$0xff]
  %v270 = vld [vmem:[%s1 + $0x4f0] sm:$0xff]
  %v271 = vld [vmem:[%s1 + $0x4f8] sm:$0xff]
  %v272 = vld [vmem:[%s1 + $0x500] sm:$0xff]
  %v273 = vld [vmem:[%s1 + $0x508] sm:$0xff]
  %v274 = vld [vmem:[%s1 + $0x510] sm:$0xff]
  %v275 = vld [vmem:[%s1 + $0x518] sm:$0xff]
  %v276 = vld [vmem:[%s1 + $0x520] sm:$0xff]
  %v277 = vld [vmem:[%s1 + $0x528] sm:$0xff]
  %v278 = vld [vmem:[%s1 + $0x530] sm:$0xff]
  %v279 = vld [vmem:[%s1 + $0x538] sm:$0xff]
  %v280 = vld [vmem:[%s1 + $0x540] sm:$0xff]
  %v281 = vld [vmem:[%s1 + $0x548] sm:$0xff]
  %v282 = vld [vmem:[%s1 + $0x550] sm:$0xff]
  %v283 = vld [vmem:[%s1 + $0x558] sm:$0xff]
  %v284 = vld [vmem:[%s1 + $0x560] sm:$0xff]
  %v285 = vld [vmem:[%s1 + $0x568] sm:$0xff]
  %v286 = vld [vmem:[%s1 + $0x570] sm:$0xff]
  %v287 = vld [vmem:[%s1 + $0x578] sm:$0xff]
  %v288 = vld [vmem:[%s1 + $0x580] sm:$0xff]
  %v289 = vld [vmem:[%s1 + $0x588] sm:$0xff]
  %v290 = vld [vmem:[%s1 + $0x590] sm:$0xff]
  %v291 = vld [vmem:[%s1 + $0x598] sm:$0xff]
  %v292 = vld [vmem:[%s1 + $0x5a0] sm:$0xff]
  %v293 = vld [vmem:[%s1 + $0x5a8] sm:$0xff]
  %v294 = vld [vmem:[%s1 + $0x5b0] sm:$0xff]
  %v295 = vld [vmem:[%s1 + $0x5b8] sm:$0xff]
  %v296 = vld [vmem:[%s1 + $0x5c0] sm:$0xff]
  %v297 = vld [vmem:[%s1 + $0x5c8] sm:$0xff]
  %v298 = vld [vmem:[%s1 + $0x5d0] sm:$0xff]
  %v299 = vld [vmem:[%s1 + $0x5d8] sm:$0xff]
  %v300 = vld [vmem:[%s1 + $0x5e0] sm:$0xff]
  %v301 = vld [vmem:[%s1 + $0x5e8] sm:$0xff]
  %v302 = vld [vmem:[%s1 + $0x5f0] sm:$0xff]
  %v303 = vld [vmem:[%s1 + $0x5f8] sm:$0xff]
  %v304 = vld [vmem:[%s1 + $0x600] sm:$0xff]
  %v305 = vld [vmem:[%s1 + $0x608] sm:$0xff]
  %v306 = vld [vmem:[%s1 + $0x610] sm:$0xff]
  %v307 = vld [vmem:[%s1 + $0x618] sm:$0xff]
  %v308 = vld [vmem:[%s1 + $0x620] sm:$0xff]
  %v309 = vld [vmem:[%s1 + $0x628] sm:$0xff]
  %v310 = vld [vmem:[%s1 + $0x630] sm:$0xff]
  %v311 = vld [vmem:[%s1 + $0x638] sm:$0xff]
  %v312 = vld [vmem:[%s1 + $0x640] sm:$0xff]
  %v313 = vld [vmem:[%s1 + $0x648] sm:$0xff]
  %v314 = vld [vmem:[%s1 + $0x650] sm:$0xff]
  %v315 = vld [vmem:[%s1 + $0x658] sm:$0xff]
  %v316 = vld [vmem:[%s1 + $0x660] sm:$0xff]
  %v317 = vld [vmem:[%s1 + $0x668] sm:$0xff]
  %v318 = vld [vmem:[%s1 + $0x670] sm:$0xff]
  %v319 = vld [vmem:[%s1 + $0x678] sm:$0xff]
  %v320 = vld [vmem:[%s1 + $0x680] sm:$0xff]
  %v321 = vld [vmem:[%s1 + $0x688] sm:$0xff]
  %v322 = vld [vmem:[%s1 + $0x690] sm:$0xff]
  %v323 = vld [vmem:[%s1 + $0x698] sm:$0xff]
  %v324 = vld [vmem:[%s1 + $0x6a0] sm:$0xff]
  %v325 = vld [vmem:[%s1 + $0x6a8] sm:$0xff]
  %v326 = vld [vmem:[%s1 + $0x6b0] sm:$0xff]
  %v327 = vld [vmem:[%s1 + $0x6b8] sm:$0xff]
  %v328 = vld [vmem:[%s1 + $0x6c0] sm:$0xff]
  %v329 = vld [vmem:[%s1 + $0x6c8] sm:$0xff]
  %v330 = vld [vmem:[%s1 + $0x6d0] sm:$0xff]
  %v331 = vld [vmem:[%s1 + $0x6d8] sm:$0xff]
  %v332 = vld [vmem:[%s1 + $0x6e0] sm:$0xff]
  %v333 = vld [vmem:[%s1 + $0x6e8] sm:$0xff]
  %v334 = vld [vmem:[%s1 + $0x6f0] sm:$0xff]
  %v335 = vld [vmem:[%s1 + $0x6f8] sm:$0xff]
  %v336 = vld [vmem:[%s1 + $0x700] sm:$0xff]
  %v337 = vld [vmem:[%s1 + $0x708] sm:$0xff]
  %v338 = vld [vmem:[%s1 + $0x710] sm:$0xff]
  %v339 = vld [vmem:[%s1 + $0x718] sm:$0xff]
  %v340 = vld [vmem:[%s1 + $0x720] sm:$0xff]
  %v341 = vld [vmem:[%s1 + $0x728] sm:$0xff]
  %v342 = vld [vmem:[%s1 + $0x730] sm:$0xff]
  %v343 = vld [vmem:[%s1 + $0x738] sm:$0xff]
  %v344 = vld [vmem:[%s1 + $0x740] sm:$0xff]
  %v345 = vld [vmem:[%s1 + $0x748] sm:$0xff]
  %v346 = vld [vmem:[%s1 + $0x750] sm:$0xff]
  %v347 = vld [vmem:[%s1 + $0x758] sm:$0xff]
  %v348 = vld [vmem:[%s1 + $0x760] sm:$0xff]
  %v349 = vld [vmem:[%s1 + $0x768] sm:$0xff]
  %v350 = vld [vmem:[%s1 + $0x770] sm:$0xff]
  %v351 = vld [vmem:[%s1 + $0x778] sm:$0xff]
  %v352 = vld [vmem:[%s1 + $0x780] sm:$0xff]
  %v353 = vld [vmem:[%s1 + $0x788] sm:$0xff]
  %v354 = vld [vmem:[%s1 + $0x790] sm:$0xff]
  %v355 = vld [vmem:[%s1 + $0x798] sm:$0xff]
  %v356 = vld [vmem:[%s1 + $0x7a0] sm:$0xff]
  %v357 = vld [vmem:[%s1 + $0x7a8] sm:$0xff]
  %v358 = vld [vmem:[%s1 + $0x7b0] sm:$0xff]
  %v359 = vld [vmem:[%s1 + $0x7b8] sm:$0xff]
  %v360 = vld [vmem:[%s1 + $0x7c0] sm:$0xff]
  %v361 = vld [vmem:[%s1 + $0x7c8] sm:$0xff]
  %v362 = vld [vmem:[%s1 + $0x7d0] sm:$0xff]
  %v363 = vld [vmem:[%s1 + $0x7d8] sm:$0xff]
  %v364 = vld [vmem:[%s1 + $0x7e0] sm:$0xff]
  %v365 = vld [vmem:[%s1 + $0x7e8] sm:$0xff]
  %v366 = vld [vmem:[%s1 + $0x7f0] sm:$0xff]
  %v367 = vld [vmem:[%s1 + $0x7f8] sm:$0xff]
  %v368 = vld [vmem:[%s1 + $0x800] sm:$0xff]
  %v369 = vld [vmem:[%s1 + $0x808] sm:$0xff]
  %v370 = vld [vmem:[%s1 + $0x810] sm:$0xff]
  %v371 = vld [vmem:[%s1 + $0x818] sm:$0xff]
  %v372 = vld [vmem:[%s1 + $0x820] sm:$0xff]
  %v373 = vld [vmem:[%s1 + $0x828] sm:$0xff]
  %v374 = vld [vmem:[%s1 + $0x830] sm:$0xff]
  %v375 = vld [vmem:[%s1 + $0x838] sm:$0xff]
  %v376 = vld [vmem:[%s1 + $0x840] sm:$0xff]
  %v377 = vld [vmem:[%s1 + $0x848] sm:$0xff]
  %v378 = vld [vmem:[%s1 + $0x850] sm:$0xff]
  %v379 = vld [vmem:[%s1 + $0x858] sm:$0xff]
  %v380 = vld [vmem:[%s1 + $0x860] sm:$0xff]
  %v381 = vld [vmem:[%s1 + $0x868] sm:$0xff]
  %v382 = vld [vmem:[%s1 + $0x870] sm:$0xff]
  %v383 = vld [vmem:[%s1 + $0x878] sm:$0xff]
  %v384 = vld [vmem:[%s1 + $0x880] sm:$0xff]
  %v385 = vld [vmem:[%s1 + $0x888] sm:$0xff]
  %v386 = vld [vmem:[%s1 + $0x890] sm:$0xff]
  %v387 = vld [vmem:[%s1 + $0x898] sm:$0xff]
  %v388 = vld [vmem:[%s1 + $0x8a0] sm:$0xff]
  %v389 = vld [vmem:[%s1 + $0x8a8] sm:$0xff]
  %v390 = vld [vmem:[%s1 + $0x8b0] sm:$0xff]
  %v391 = vld [vmem:[%s1 + $0x8b8] sm:$0xff]
  %v392 = vld [vmem:[%s1 + $0x8c0] sm:$0xff]
  %v393 = vld [vmem:[%s1 + $0x8c8] sm:$0xff]
  %v394 = vld [vmem:[%s1 + $0x8d0] sm:$0xff]
  %v395 = vld [vmem:[%s1 + $0x8d8] sm:$0xff]
  %v396 = vld [vmem:[%s1 + $0x8e0] sm:$0xff]
  %v397 = vld [vmem:[%s1 + $0x8e8] sm:$0xff]
  %v398 = vld [vmem:[%s1 + $0x8f0] sm:$0xff]
  %v399 = vld [vmem:[%s1 + $0x8f8] sm:$0xff]
  %v400 = vld [vmem:[%s1 + $0x900] sm:$0xff]
  %v401 = vld [vmem:[%s1 + $0x908] sm:$0xff]
  %v402 = vld [vmem:[%s1 + $0x910] sm:$0xff]
  %v403 = vld [vmem:[%s1 + $0x918] sm:$0xff]
  %v404 = vld [vmem:[%s1 + $0x920] sm:$0xff]
  %v405 = vld [vmem:[%s1 + $0x928] sm:$0xff]
  %v406 = vld [vmem:[%s1 + $0x930] sm:$0xff]
  %v407 = vld [vmem:[%s1 + $0x938] sm:$0xff]
  %v408 = vld [vmem:[%s1 + $0x940] sm:$0xff]
  %v409 = vld [vmem:[%s1 + $0x948] sm:$0xff]
  %v410 = vld [vmem:[%s1 + $0x950] sm:$0xff]
  %v411 = vld [vmem:[%s1 + $0x958] sm:$0xff]
  %v412 = vld [vmem:[%s1 + $0x960] sm:$0xff]
  %v413 = vld [vmem:[%s1 + $0x968] sm:$0xff]
  %v414 = vld [vmem:[%s1 + $0x970] sm:$0xff]
  %v415 = vld [vmem:[%s1 + $0x978] sm:$0xff]
  %v416 = vld [vmem:[%s1 + $0x980] sm:$0xff]
  %v417 = vld [vmem:[%s1 + $0x988] sm:$0xff]
  %v418 = vld [vmem:[%s1 + $0x990] sm:$0xff]
  %v419 = vld [vmem:[%s1 + $0x998] sm:$0xff]
  %v420 = vld [vmem:[%s1 + $0x9a0] sm:$0xff]
  %v421 = vld [vmem:[%s1 + $0x9a8] sm:$0xff]
  %v422 = vld [vmem:[%s1 + $0x9b0] sm:$0xff]
  %v423 = vld [vmem:[%s1 + $0x9b8] sm:$0xff]
  %v424 = vld [vmem:[%s1 + $0x9c0] sm:$0xff]
  %v425 = vld [vmem:[%s1 + $0x9c8] sm:$0xff]
  %v426 = vld [vmem:[%s1 + $0x9d0] sm:$0xff]
  %v427 = vld [vmem:[%s1 + $0x9d8] sm:$0xff]
  %v428 = vld [vmem:[%s1 + $0x9e0] sm:$0xff]
  %v429 = vld [vmem:[%s1 + $0x9e8] sm:$0xff]
  %v430 = vld [vmem:[%s1 + $0x9f0] sm:$0xff]
  %v431 = vld [vmem:[%s1 + $0x9f8] sm:$0xff]
  %v432 = vld [vmem:[%s1 + $0xa00] sm:$0xff]
  %v433 = vld [vmem:[%s1 + $0xa08] sm:$0xff]
  %v434 = vld [vmem:[%s1 + $0xa10] sm:$0xff]
  %v435 = vld [vmem:[%s1 + $0xa18] sm:$0xff]
  %v436 = vld [vmem:[%s1 + $0xa20] sm:$0xff]
  %v437 = vld [vmem:[%s1 + $0xa28] sm:$0xff]
  %v438 = vld [vmem:[%s1 + $0xa30] sm:$0xff]
  %v439 = vld [vmem:[%s1 + $0xa38] sm:$0xff]
  %v440 = vld [vmem:[%s1 + $0xa40] sm:$0xff]
  %v441 = vld [vmem:[%s1 + $0xa48] sm:$0xff]
  %v442 = vld [vmem:[%s1 + $0xa50] sm:$0xff]
  %v443 = vld [vmem:[%s1 + $0xa58] sm:$0xff]
  %v444 = vld [vmem:[%s1 + $0xa60] sm:$0xff]
  %v445 = vld [vmem:[%s1 + $0xa68] sm:$0xff]
  %v446 = vld [vmem:[%s1 + $0xa70] sm:$0xff]
  %v447 = vld [vmem:[%s1 + $0xa78] sm:$0xff]
  %v448 = vld [vmem:[%s1 + $0xa80] sm:$0xff]
  %v449 = vld [vmem:[%s1 + $0xa88] sm:$0xff]
  %v450 = vld [vmem:[%s1 + $0xa90] sm:$0xff]
  %v451 = vld [vmem:[%s1 + $0xa98] sm:$0xff]
  %v452 = vld [vmem:[%s1 + $0xaa0] sm:$0xff]
  %v453 = vld [vmem:[%s1 + $0xaa8] sm:$0xff]
  %v454 = vld [vmem:[%s1 + $0xab0] sm:$0xff]
  %v455 = vld [vmem:[%s1 + $0xab8] sm:$0xff]
  %v456 = vld [vmem:[%s1 + $0xac0] sm:$0xff]
  %v457 = vld [vmem:[%s1 + $0xac8] sm:$0xff]
  %v458 = vld [vmem:[%s1 + $0xad0] sm:$0xff]
  %v459 = vld [vmem:[%s1 + $0xad8] sm:$0xff]
  %v460 = vld [vmem:[%s1 + $0xae0] sm:$0xff]
  %v461 = vld [vmem:[%s1 + $0xae8] sm:$0xff]
  %v462 = vld [vmem:[%s1 + $0xaf0] sm:$0xff]
  %v463 = vld [vmem:[%s1 + $0xaf8] sm:$0xff]
  %v464 = vld [vmem:[%s1 + $0xb00] sm:$0xff]
  %v465 = vld [vmem:[%s1 + $0xb08] sm:$0xff]
  %v466 = vld [vmem:[%s1 + $0xb10] sm:$0xff]
  %v467 = vld [vmem:[%s1 + $0xb18] sm:$0xff]
  %v468 = vld [vmem:[%s1 + $0xb20] sm:$0xff]
  %v469 = vld [vmem:[%s1 + $0xb28] sm:$0xff]
  %v470 = vld [vmem:[%s1 + $0xb30] sm:$0xff]
  %v471 = vld [vmem:[%s1 + $0xb38] sm:$0xff]
  %v472 = vld [vmem:[%s1 + $0xb40] sm:$0xff]
  %v473 = vld [vmem:[%s1 + $0xb48] sm:$0xff]
  %v474 = vld [vmem:[%s1 + $0xb50] sm:$0xff]
  %v475 = vld [vmem:[%s1 + $0xb58] sm:$0xff]
  %v476 = vld [vmem:[%s1 + $0xb60] sm:$0xff]
  %v477 = vld [vmem:[%s1 + $0xb68] sm:$0xff]
  %v478 = vld [vmem:[%s1 + $0xb70] sm:$0xff]
  %v479 = vld [vmem:[%s1 + $0xb78] sm:$0xff]
  %v480 = vld [vmem:[%s1 + $0xb80] sm:$0xff]
  %v481 = vld [vmem:[%s1 + $0xb88] sm:$0xff]
  %v482 = vld [vmem:[%s1 + $0xb90] sm:$0xff]
  %v483 = vld [vmem:[%s1 + $0xb98] sm:$0xff]
  %v484 = vld [vmem:[%s1 + $0xba0] sm:$0xff]
  %v485 = vld [vmem:[%s1 + $0xba8] sm:$0xff]
  %v486 = vld [vmem:[%s1 + $0xbb0] sm:$0xff]
  %v487 = vld [vmem:[%s1 + $0xbb8] sm:$0xff]
  %v488 = vld [vmem:[%s1 + $0xbc0] sm:$0xff]
  %v489 = vld [vmem:[%s1 + $0xbc8] sm:$0xff]
  %v490 = vld [vmem:[%s1 + $0xbd0] sm:$0xff]
  %v491 = vld [vmem:[%s1 + $0xbd8] sm:$0xff]
  %v492 = vld [vmem:[%s1 + $0xbe0] sm:$0xff]
  %v493 = vld [vmem:[%s1 + $0xbe8] sm:$0xff]
  %v494 = vld [vmem:[%s1 + $0xbf0] sm:$0xff]
  %v495 = vld [vmem:[%s1 + $0xbf8] sm:$0xff]
  %v496 = vld [vmem:[%s1 + $0xc00] sm:$0xff]
  %v497 = vld [vmem:[%s1 + $0xc08] sm:$0xff]
  %v498 = vld [vmem:[%s1 + $0xc10] sm:$0xff]
  %v499 = vld [vmem:[%s1 + $0xc18] sm:$0xff]
  %v500 = vld [vmem:[%s1 + $0xc20] sm:$0xff]
  %v501 = vld [vmem:[%s1 + $0xc28] sm:$0xff]
  %v502 = vld [vmem:[%s1 + $0xc30] sm:$0xff]
  %v503 = vld [vmem:[%s1 + $0xc38] sm:$0xff]
  %v504 = vld [vmem:[%s1 + $0xc40] sm:$0xff]
  %v505 = vld [vmem:[%s1 + $0xc48] sm:$0xff]
  %v506 = vld [vmem:[%s1 + $0xc50] sm:$0xff]
  %v507 = vld [vmem:[%s1 + $0xc58] sm:$0xff]
  %v508 = vld [vmem:[%s1 + $0xc60] sm:$0xff]
  %v509 = vld [vmem:[%s1 + $0xc68] sm:$0xff]
  %v510 = vld [vmem:[%s1 + $0xc70] sm:$0xff]
  %v511 = vld [vmem:[%s1 + $0xc78] sm:$0xff]
  %v512 = vld [vmem:[%s1 + $0xc80] sm:$0xff]
  %v513 = vld [vmem:[%s1 + $0xc88] sm:$0xff]
  %v514 = vld [vmem:[%s1 + $0xc90] sm:$0xff]
  %v515 = vld [vmem:[%s1 + $0xc98] sm:$0xff]
  %v516 = vld [vmem:[%s1 + $0xca0] sm:$0xff]
  %v517 = vld [vmem:[%s1 + $0xca8] sm:$0xff]
  %v518 = vld [vmem:[%s1 + $0xcb0] sm:$0xff]
  %v519 = vld [vmem:[%s1 + $0xcb8] sm:$0xff]
  %v520 = vld [vmem:[%s1 + $0xcc0] sm:$0xff]
  %v521 = vld [vmem:[%s1 + $0xcc8] sm:$0xff]
  %v522 = vld [vmem:[%s1 + $0xcd0] sm:$0xff]
  %v523 = vld [vmem:[%s1 + $0xcd8] sm:$0xff]
  %v524 = vld [vmem:[%s1 + $0xce0] sm:$0xff]
  %v525 = vld [vmem:[%s1 + $0xce8] sm:$0xff]
  %v526 = vld [vmem:[%s1 + $0xcf0] sm:$0xff]
  %v527 = vld [vmem:[%s1 + $0xcf8] sm:$0xff]
  %v528 = vld [vmem:[%s1 + $0xd00] sm:$0xff]
  %v529 = vld [vmem:[%s1 + $0xd08] sm:$0xff]
  %v530 = vld [vmem:[%s1 + $0xd10] sm:$0xff]
  %v531 = vld [vmem:[%s1 + $0xd18] sm:$0xff]
  %v532 = vld [vmem:[%s1 + $0xd20] sm:$0xff]
  %v533 = vld [vmem:[%s1 + $0xd28] sm:$0xff]
  %v534 = vld [vmem:[%s1 + $0xd30] sm:$0xff]
  %v535 = vld [vmem:[%s1 + $0xd38] sm:$0xff]
  %v536 = vld [vmem:[%s1 + $0xd40] sm:$0xff]
  %v537 = vld [vmem:[%s1 + $0xd48] sm:$0xff]
  %v538 = vld [vmem:[%s1 + $0xd50] sm:$0xff]
  %v539 = vld [vmem:[%s1 + $0xd58] sm:$0xff]
  %v540 = vld [vmem:[%s1 + $0xd60] sm:$0xff]
  %v541 = vld [vmem:[%s1 + $0xd68] sm:$0xff]
  %v542 = vld [vmem:[%s1 + $0xd70] sm:$0xff]
  %v543 = vld [vmem:[%s1 + $0xd78] sm:$0xff]
  %v544 = vld [vmem:[%s1 + $0xd80] sm:$0xff]
  %v545 = vld [vmem:[%s1 + $0xd88] sm:$0xff]
  %v546 = vld [vmem:[%s1 + $0xd90] sm:$0xff]
  %v547 = vld [vmem:[%s1 + $0xd98] sm:$0xff]
  %v548 = vld [vmem:[%s1 + $0xda0] sm:$0xff]
  %v549 = vld [vmem:[%s1 + $0xda8] sm:$0xff]
  %v550 = vld [vmem:[%s1 + $0xdb0] sm:$0xff]
  %v551 = vld [vmem:[%s1 + $0xdb8] sm:$0xff]
  %v552 = vld [vmem:[%s1 + $0xdc0] sm:$0xff]
  %v553 = vld [vmem:[%s1 + $0xdc8] sm:$0xff]
  %v554 = vld [vmem:[%s1 + $0xdd0] sm:$0xff]
  %v555 = vld [vmem:[%s1 + $0xdd8] sm:$0xff]
  %v556 = vld [vmem:[%s1 + $0xde0] sm:$0xff]
  %v557 = vld [vmem:[%s1 + $0xde8] sm:$0xff]
  %v558 = vld [vmem:[%s1 + $0xdf0] sm:$0xff]
  %v559 = vld [vmem:[%s1 + $0xdf8] sm:$0xff]
  %v560 = vld [vmem:[%s1 + $0xe00] sm:$0xff]
  %v561 = vld [vmem:[%s1 + $0xe08] sm:$0xff]
  %v562 = vld [vmem:[%s1 + $0xe10] sm:$0xff]
  %v563 = vld [vmem:[%s1 + $0xe18] sm:$0xff]
  %v564 = vld [vmem:[%s1 + $0xe20] sm:$0xff]
  %v565 = vld [vmem:[%s1 + $0xe28] sm:$0xff]
  %v566 = vld [vmem:[%s1 + $0xe30] sm:$0xff]
  %v567 = vld [vmem:[%s1 + $0xe38] sm:$0xff]
  %v568 = vld [vmem:[%s1 + $0xe40] sm:$0xff]
  %v569 = vld [vmem:[%s1 + $0xe48] sm:$0xff]
  %v570 = vld [vmem:[%s1 + $0xe50] sm:$0xff]
  %v571 = vld [vmem:[%s1 + $0xe58] sm:$0xff]
  %v572 = vld [vmem:[%s1 + $0xe60] sm:$0xff]
  %v573 = vld [vmem:[%s1 + $0xe68] sm:$0xff]
  %v574 = vld [vmem:[%s1 + $0xe70] sm:$0xff]
  %v575 = vld [vmem:[%s1 + $0xe78] sm:$0xff]
  %v576 = vld [vmem:[%s1 + $0xe80] sm:$0xff]
  %v577 = vld [vmem:[%s1 + $0xe88] sm:$0xff]
  %v578 = vld [vmem:[%s1 + $0xe90] sm:$0xff]
  %v579 = vld [vmem:[%s1 + $0xe98] sm:$0xff]
  %v580 = vld [vmem:[%s1 + $0xea0] sm:$0xff]
  %v581 = vld [vmem:[%s1 + $0xea8] sm:$0xff]
  %v582 = vld [vmem:[%s1 + $0xeb0] sm:$0xff]
  %v583 = vld [vmem:[%s1 + $0xeb8] sm:$0xff]
  %v584 = vld [vmem:[%s1 + $0xec0] sm:$0xff]
  %v585 = vld [vmem:[%s1 + $0xec8] sm:$0xff]
  %v586 = vld [vmem:[%s1 + $0xed0] sm:$0xff]
  %v587 = vld [vmem:[%s1 + $0xed8] sm:$0xff]
  %v588 = vld [vmem:[%s1 + $0xee0] sm:$0xff]
  %v589 = vld [vmem:[%s1 + $0xee8] sm:$0xff]
  %v590 = vld [vmem:[%s1 + $0xef0] sm:$0xff]
  %v591 = vld [vmem:[%s1 + $0xef8] sm:$0xff]
  %v592 = vld [vmem:[%s1 + $0xf00] sm:$0xff]
  %v593 = vld [vmem:[%s1 + $0xf08] sm:$0xff]
  %v594 = vld [vmem:[%s1 + $0xf10] sm:$0xff]
  %v595 = vld [vmem:[%s1 + $0xf18] sm:$0xff]
  %v596 = vld [vmem:[%s1 + $0xf20] sm:$0xff]
  %v597 = vld [vmem:[%s1 + $0xf28] sm:$0xff]
  %v598 = vld [vmem:[%s1 + $0xf30] sm:$0xff]
  %v599 = vld [vmem:[%s1 + $0xf38] sm:$0xff]
  %v600 = vld [vmem:[%s1 + $0xf40] sm:$0xff]
  %v601 = vld [vmem:[%s1 + $0xf48] sm:$0xff]
  %v602 = vld [vmem:[%s1 + $0xf50] sm:$0xff]
  %v603 = vld [vmem:[%s1 + $0xf58] sm:$0xff]
  %v604 = vld [vmem:[%s1 + $0xf60] sm:$0xff]
  %v605 = vld [vmem:[%s1 + $0xf68] sm:$0xff]
  %v606 = vld [vmem:[%s1 + $0xf70] sm:$0xff]
  %v607 = vld [vmem:[%s1 + $0xf78] sm:$0xff]
  %v608 = vld [vmem:[%s1 + $0xf80] sm:$0xff]
  %v609 = vld [vmem:[%s1 + $0xf88] sm:$0xff]
  %v610 = vld [vmem:[%s1 + $0xf90] sm:$0xff]
  %v611 = vld [vmem:[%s1 + $0xf98] sm:$0xff]
  %v612 = vld [vmem:[%s1 + $0xfa0] sm:$0xff]
  %v613 = vld [vmem:[%s1 + $0xfa8] sm:$0xff]
  %v614 = vld [vmem:[%s1 + $0xfb0] sm:$0xff]
  %v615 = vld [vmem:[%s1 + $0xfb8] sm:$0xff]
  %v616 = vld [vmem:[%s1 + $0xfc0] sm:$0xff]
  %v617 = vld [vmem:[%s1 + $0xfc8] sm:$0xff]
  %v618 = vld [vmem:[%s1 + $0xfd0] sm:$0xff]
  %v619 = vld [vmem:[%s1 + $0xfd8] sm:$0xff]
  %v620 = vld [vmem:[%s1 + $0xfe0] sm:$0xff]
  %v621 = vld [vmem:[%s1 + $0xfe8] sm:$0xff]
  %v622 = vld [vmem:[%s1 + $0xff0] sm:$0xff]
  %v623 = vld [vmem:[%s1 + $0xff8] sm:$0xff]
  %v624 = vld [vmem:[%s1 + $0x1000] sm:$0xff]
  %v625 = vld [vmem:[%s1 + $0x1008] sm:$0xff]
  %v626 = vld [vmem:[%s1 + $0x1010] sm:$0xff]
  %v627 = vld [vmem:[%s1 + $0x1018] sm:$0xff]
  %v628 = vld [vmem:[%s1 + $0x1020] sm:$0xff]
  %v629 = vld [vmem:[%s1 + $0x1028] sm:$0xff]
  %v630 = vld [vmem:[%s1 + $0x1030] sm:$0xff]
  %v631 = vld [vmem:[%s1 + $0x1038] sm:$0xff]
  %v632 = vld [vmem:[%s1 + $0x1040] sm:$0xff]
  %v633 = vld [vmem:[%s1 + $0x1048] sm:$0xff]
  %v634 = vld [vmem:[%s1 + $0x1050] sm:$0xff]
  %v635 = vld [vmem:[%s1 + $0x1058] sm:$0xff]
  %v636 = vld [vmem:[%s1 + $0x1060] sm:$0xff]
  %v637 = vld [vmem:[%s1 + $0x1068] sm:$0xff]
  %v638 = vld [vmem:[%s1 + $0x1070] sm:$0xff]
  %v639 = vld [vmem:[%s1 + $0x1078] sm:$0xff]
  %v640 = vld [vmem:[%s1 + $0x1080] sm:$0xff]
  %v641 = vld [vmem:[%s1 + $0x1088] sm:$0xff]
  %v642 = vld [vmem:[%s1 + $0x1090] sm:$0xff]
  %v643 = vld [vmem:[%s1 + $0x1098] sm:$0xff]
  %v644 = vld [vmem:[%s1 + $0x10a0] sm:$0xff]
  %v645 = vld [vmem:[%s1 + $0x10a8] sm:$0xff]
  %v646 = vld [vmem:[%s1 + $0x10b0] sm:$0xff]
  %v647 = vld [vmem:[%s1 + $0x10b8] sm:$0xff]
  %v648 = vld [vmem:[%s1 + $0x10c0] sm:$0xff]
  %v649 = vld [vmem:[%s1 + $0x10c8] sm:$0xff]
  %v650 = vld [vmem:[%s1 + $0x10d0] sm:$0xff]
  %v651 = vld [vmem:[%s1 + $0x10d8] sm:$0xff]
  %v652 = vld [vmem:[%s1 + $0x10e0] sm:$0xff]
  %v653 = vld [vmem:[%s1 + $0x10e8] sm:$0xff]
  %v654 = vld [vmem:[%s1 + $0x10f0] sm:$0xff]
  %v655 = vld [vmem:[%s1 + $0x10f8] sm:$0xff]
  %v656 = vld [vmem:[%s1 + $0x1100] sm:$0xff]
  %v657 = vld [vmem:[%s1 + $0x1108] sm:$0xff]
  %v658 = vld [vmem:[%s1 + $0x1110] sm:$0xff]
  %v659 = vld [vmem:[%s1 + $0x1118] sm:$0xff]
  %v660 = vld [vmem:[%s1 + $0x1120] sm:$0xff]
  %v661 = vld [vmem:[%s1 + $0x1128] sm:$0xff]
  %v662 = vld [vmem:[%s1 + $0x1130] sm:$0xff]
  %v663 = vld [vmem:[%s1 + $0x1138] sm:$0xff]
  %v664 = vld [vmem:[%s1 + $0x1140] sm:$0xff]
  %v665 = vld [vmem:[%s1 + $0x1148] sm:$0xff]
  %v666 = vld [vmem:[%s1 + $0x1150] sm:$0xff]
  %v667 = vld [vmem:[%s1 + $0x1158] sm:$0xff]
  %v668 = vld [vmem:[%s1 + $0x1160] sm:$0xff]
  %v669 = vld [vmem:[%s1 + $0x1168] sm:$0xff]
  %v670 = vld [vmem:[%s1 + $0x1170] sm:$0xff]
  %v671 = vld [vmem:[%s1 + $0x1178] sm:$0xff]
  %v672 = vld [vmem:[%s1 + $0x1180] sm:$0xff]
  %v673 = vld [vmem:[%s1 + $0x1188] sm:$0xff]
  %v674 = vld [vmem:[%s1 + $0x1190] sm:$0xff]
  %v675 = vld [vmem:[%s1 + $0x1198] sm:$0xff]
  %v676 = vld [vmem:[%s1 + $0x11a0] sm:$0xff]
  %v677 = vld [vmem:[%s1 + $0x11a8] sm:$0xff]
  %v678 = vld [vmem:[%s1 + $0x11b0] sm:$0xff]
  %v679 = vld [vmem:[%s1 + $0x11b8] sm:$0xff]
  %v680 = vld [vmem:[%s1 + $0x11c0] sm:$0xff]
  %v681 = vld [vmem:[%s1 + $0x11c8] sm:$0xff]
  %v682 = vld [vmem:[%s1 + $0x11d0] sm:$0xff]
  %v683 = vld [vmem:[%s1 + $0x11d8] sm:$0xff]
  %v684 = vld [vmem:[%s1 + $0x11e0] sm:$0xff]
  %v685 = vld [vmem:[%s1 + $0x11e8] sm:$0xff]
  %v686 = vld [vmem:[%s1 + $0x11f0] sm:$0xff]
  %v687 = vld [vmem:[%s1 + $0x11f8] sm:$0xff]
  %v688 = vld [vmem:[%s1 + $0x1200] sm:$0xff]
  %v689 = vld [vmem:[%s1 + $0x1208] sm:$0xff]
  %v690 = vld [vmem:[%s1 + $0x1210] sm:$0xff]
  %v691 = vld [vmem:[%s1 + $0x1218] sm:$0xff]
  %v692 = vld [vmem:[%s1 + $0x1220] sm:$0xff]
  %v693 = vld [vmem:[%s1 + $0x1228] sm:$0xff]
  %v694 = vld [vmem:[%s1 + $0x1230] sm:$0xff]
  %v695 = vld [vmem:[%s1 + $0x1238] sm:$0xff]
  %v696 = vld [vmem:[%s1 + $0x1240] sm:$0xff]
  %v697 = vld [vmem:[%s1 + $0x1248] sm:$0xff]
  %v698 = vld [vmem:[%s1 + $0x1250] sm:$0xff]
  %v699 = vld [vmem:[%s1 + $0x1258] sm:$0xff]
  %v700 = vld [vmem:[%s1 + $0x1260] sm:$0xff]
  %v701 = vld [vmem:[%s1 + $0x1268] sm:$0xff]
  %v702 = vld [vmem:[%s1 + $0x1270] sm:$0xff]
  %v703 = vld [vmem:[%s1 + $0x1278] sm:$0xff]
  %v704 = vld [vmem:[%s1 + $0x1280] sm:$0xff]
  %v705 = vld [vmem:[%s1 + $0x1288] sm:$0xff]
  %v706 = vld [vmem:[%s1 + $0x1290] sm:$0xff]
  %v707 = vld [vmem:[%s1 + $0x1298] sm:$0xff]
  %v708 = vld [vmem:[%s1 + $0x12a0] sm:$0xff]
  %v709 = vld [vmem:[%s1 + $0x12a8] sm:$0xff]
  %v710 = vld [vmem:[%s1 + $0x12b0] sm:$0xff]
  %v711 = vld [vmem:[%s1 + $0x12b8] sm:$0xff]
  %v712 = vld [vmem:[%s1 + $0x12c0] sm:$0xff]
  %v713 = vld [vmem:[%s1 + $0x12c8] sm:$0xff]
  %v714 = vld [vmem:[%s1 + $0x12d0] sm:$0xff]
  %v715 = vld [vmem:[%s1 + $0x12d8] sm:$0xff]
  %v716 = vld [vmem:[%s1 + $0x12e0] sm:$0xff]
  %v717 = vld [vmem:[%s1 + $0x12e8] sm:$0xff]
  %v718 = vld [vmem:[%s1 + $0x12f0] sm:$0xff]
  %v719 = vld [vmem:[%s1 + $0x12f8] sm:$0xff]
  %v720 = vld [vmem:[%s1 + $0x1300] sm:$0xff]
  %v721 = vld [vmem:[%s1 + $0x1308] sm:$0xff]
  %v722 = vld [vmem:[%s1 + $0x1310] sm:$0xff]
  %v723 = vld [vmem:[%s1 + $0x1318] sm:$0xff]
  %v724 = vld [vmem:[%s1 + $0x1320] sm:$0xff]
  %v725 = vld [vmem:[%s1 + $0x1328] sm:$0xff]
  %v726 = vld [vmem:[%s1 + $0x1330] sm:$0xff]
  %v727 = vld [vmem:[%s1 + $0x1338] sm:$0xff]
  %v728 = vld [vmem:[%s1 + $0x1340] sm:$0xff]
  %v729 = vld [vmem:[%s1 + $0x1348] sm:$0xff]
  %v730 = vld [vmem:[%s1 + $0x1350] sm:$0xff]
  %v731 = vld [vmem:[%s1 + $0x1358] sm:$0xff]
  %v732 = vld [vmem:[%s1 + $0x1360] sm:$0xff]
  %v733 = vld [vmem:[%s1 + $0x1368] sm:$0xff]
  %v734 = vld [vmem:[%s1 + $0x1370] sm:$0xff]
  %v735 = vld [vmem:[%s1 + $0x1378] sm:$0xff]
  %v736 = vld [vmem:[%s1 + $0x1380] sm:$0xff]
  %v737 = vld [vmem:[%s1 + $0x1388] sm:$0xff]
  %v738 = vld [vmem:[%s1 + $0x1390] sm:$0xff]
  %v739 = vld [vmem:[%s1 + $0x1398] sm:$0xff]
  %v740 = vld [vmem:[%s1 + $0x13a0] sm:$0xff]
  %v741 = vld [vmem:[%s1 + $0x13a8] sm:$0xff]
  %v742 = vld [vmem:[%s1 + $0x13b0] sm:$0xff]
  %v743 = vld [vmem:[%s1 + $0x13b8] sm:$0xff]
  %v744 = vld [vmem:[%s1 + $0x13c0] sm:$0xff]
  %v745 = vld [vmem:[%s1 + $0x13c8] sm:$0xff]
  %v746 = vld [vmem:[%s1 + $0x13d0] sm:$0xff]
  %v747 = vld [vmem:[%s1 + $0x13d8] sm:$0xff]
  %v748 = vld [vmem:[%s1 + $0x13e0] sm:$0xff]
  %v749 = vld [vmem:[%s1 + $0x13e8] sm:$0xff]
  %v750 = vld [vmem:[%s1 + $0x13f0] sm:$0xff]
  %v751 = vld [vmem:[%s1 + $0x13f8] sm:$0xff]
  %v752 = vld [vmem:[%s1 + $0x1400] sm:$0xff]
  %v753 = vld [vmem:[%s1 + $0x1408] sm:$0xff]
  %v754 = vld [vmem:[%s1 + $0x1410] sm:$0xff]
  %v755 = vld [vmem:[%s1 + $0x1418] sm:$0xff]
  %v756 = vld [vmem:[%s1 + $0x1420] sm:$0xff]
  %v757 = vld [vmem:[%s1 + $0x1428] sm:$0xff]
  %v758 = vld [vmem:[%s1 + $0x1430] sm:$0xff]
  %v759 = vld [vmem:[%s1 + $0x1438] sm:$0xff]
  %v760 = vld [vmem:[%s1 + $0x1440] sm:$0xff]
  %v761 = vld [vmem:[%s1 + $0x1448] sm:$0xff]
  %v762 = vld [vmem:[%s1 + $0x1450] sm:$0xff]
  %v763 = vld [vmem:[%s1 + $0x1458] sm:$0xff]
  %v764 = vld [vmem:[%s1 + $0x1460] sm:$0xff]
  %v765 = vld [vmem:[%s1 + $0x1468] sm:$0xff]
  %v766 = vld [vmem:[%s1 + $0x1470] sm:$0xff]
  %v767 = vld [vmem:[%s1 + $0x1478] sm:$0xff]
  %v768 = vld [vmem:[%s1 + $0x1480] sm:$0xff]
  %v769 = vld [vmem:[%s1 + $0x1488] sm:$0xff]
  %v770 = vld [vmem:[%s1 + $0x1490] sm:$0xff]
  %v771 = vld [vmem:[%s1 + $0x1498] sm:$0xff]
  %v772 = vld [vmem:[%s1 + $0x14a0] sm:$0xff]
  %v773 = vld [vmem:[%s1 + $0x14a8] sm:$0xff]
  %v774 = vld [vmem:[%s1 + $0x14b0] sm:$0xff]
  %v775 = vld [vmem:[%s1 + $0x14b8] sm:$0xff]
  %v776 = vld [vmem:[%s1 + $0x14c0] sm:$0xff]
  %v777 = vld [vmem:[%s1 + $0x14c8] sm:$0xff]
  %v778 = vld [vmem:[%s1 + $0x14d0] sm:$0xff]
  %v779 = vld [vmem:[%s1 + $0x14d8] sm:$0xff]
  %v780 = vld [vmem:[%s1 + $0x14e0] sm:$0xff]
  %v781 = vld [vmem:[%s1 + $0x14e8] sm:$0xff]
  %v782 = vld [vmem:[%s1 + $0x14f0] sm:$0xff]
  %v783 = vld [vmem:[%s1 + $0x14f8] sm:$0xff]
  %v784 = vld [vmem:[%s1 + $0x1500] sm:$0xff]
  %v785 = vld [vmem:[%s1 + $0x1508] sm:$0xff]
  %v786 = vld [vmem:[%s1 + $0x1510] sm:$0xff]
  %v787 = vld [vmem:[%s1 + $0x1518] sm:$0xff]
  %v788 = vld [vmem:[%s1 + $0x1520] sm:$0xff]
  %v789 = vld [vmem:[%s1 + $0x1528] sm:$0xff]
  %v790 = vld [vmem:[%s1 + $0x1530] sm:$0xff]
  %v791 = vld [vmem:[%s1 + $0x1538] sm:$0xff]
  %v792 = vld [vmem:[%s1 + $0x1540] sm:$0xff]
  %v793 = vld [vmem:[%s1 + $0x1548] sm:$0xff]
  %v794 = vld [vmem:[%s1 + $0x1550] sm:$0xff]
  %v795 = vld [vmem:[%s1 + $0x1558] sm:$0xff]
  %v796 = vld [vmem:[%s1 + $0x1560] sm:$0xff]
  %v797 = vld [vmem:[%s1 + $0x1568] sm:$0xff]
  %v798 = vld [vmem:[%s1 + $0x1570] sm:$0xff]
  %v799 = vld [vmem:[%s1 + $0x1578] sm:$0xff]
  %v800 = vld [vmem:[%s1 + $0x1580] sm:$0xff]
  %v801 = vld [vmem:[%s1 + $0x1588] sm:$0xff]
  %v802 = vld [vmem:[%s1 + $0x1590] sm:$0xff]
  %v803 = vld [vmem:[%s1 + $0x1598] sm:$0xff]
  %v804 = vld [vmem:[%s1 + $0x15a0] sm:$0xff]
  %v805 = vld [vmem:[%s1 + $0x15a8] sm:$0xff]
  %v806 = vld [vmem:[%s1 + $0x15b0] sm:$0xff]
  %v807 = vld [vmem:[%s1 + $0x15b8] sm:$0xff]
  %v808 = vld [vmem:[%s1 + $0x15c0] sm:$0xff]
  %v809 = vld [vmem:[%s1 + $0x15c8] sm:$0xff]
  %v810 = vld [vmem:[%s1 + $0x15d0] sm:$0xff]
  %v811 = vld [vmem:[%s1 + $0x15d8] sm:$0xff]
  %v812 = vld [vmem:[%s1 + $0x15e0] sm:$0xff]
  %v813 = vld [vmem:[%s1 + $0x15e8] sm:$0xff]
  %v814 = vld [vmem:[%s1 + $0x15f0] sm:$0xff]
  %v815 = vld [vmem:[%s1 + $0x15f8] sm:$0xff]
  %v816 = vld [vmem:[%s1 + $0x1600] sm:$0xff]
  %v817 = vld [vmem:[%s1 + $0x1608] sm:$0xff]
  %v818 = vld [vmem:[%s1 + $0x1610] sm:$0xff]
  %v819 = vld [vmem:[%s1 + $0x1618] sm:$0xff]
  %v820 = vld [vmem:[%s1 + $0x1620] sm:$0xff]
  %v821 = vld [vmem:[%s1 + $0x1628] sm:$0xff]
  %v822 = vld [vmem:[%s1 + $0x1630] sm:$0xff]
  %v823 = vld [vmem:[%s1 + $0x1638] sm:$0xff]
  %v824 = vld [vmem:[%s1 + $0x1640] sm:$0xff]
  %v825 = vld [vmem:[%s1 + $0x1648] sm:$0xff]
  %v826 = vld [vmem:[%s1 + $0x1650] sm:$0xff]
  %v827 = vld [vmem:[%s1 + $0x1658] sm:$0xff]
  %v828 = vld [vmem:[%s1 + $0x1660] sm:$0xff]
  %v829 = vld [vmem:[%s1 + $0x1668] sm:$0xff]
  %v830 = vld [vmem:[%s1 + $0x1670] sm:$0xff]
  %v831 = vld [vmem:[%s1 + $0x1678] sm:$0xff]
  %v832 = vld [vmem:[%s1 + $0x1680] sm:$0xff]
  %v833 = vld [vmem:[%s1 + $0x1688] sm:$0xff]
  %v834 = vld [vmem:[%s1 + $0x1690] sm:$0xff]
  %v835 = vld [vmem:[%s1 + $0x1698] sm:$0xff]
  %v836 = vld [vmem:[%s1 + $0x16a0] sm:$0xff]
  %v837 = vld [vmem:[%s1 + $0x16a8] sm:$0xff]
  %v838 = vld [vmem:[%s1 + $0x16b0] sm:$0xff]
  %v839 = vld [vmem:[%s1 + $0x16b8] sm:$0xff]
  %v840 = vld [vmem:[%s1 + $0x16c0] sm:$0xff]
  %v841 = vld [vmem:[%s1 + $0x16c8] sm:$0xff]
  %v842 = vld [vmem:[%s1 + $0x16d0] sm:$0xff]
  %v843 = vld [vmem:[%s1 + $0x16d8] sm:$0xff]
  %v844 = vld [vmem:[%s1 + $0x16e0] sm:$0xff]
  %v845 = vld [vmem:[%s1 + $0x16e8] sm:$0xff]
  %v846 = vld [vmem:[%s1 + $0x16f0] sm:$0xff]
  %v847 = vld [vmem:[%s1 + $0x16f8] sm:$0xff]
  %v848 = vld [vmem:[%s1 + $0x1700] sm:$0xff]
  %v849 = vld [vmem:[%s1 + $0x1708] sm:$0xff]
  %v850 = vld [vmem:[%s1 + $0x1710] sm:$0xff]
  %v851 = vld [vmem:[%s1 + $0x1718] sm:$0xff]
  %v852 = vld [vmem:[%s1 + $0x1720] sm:$0xff]
  %v853 = vld [vmem:[%s1 + $0x1728] sm:$0xff]
  %v854 = vld [vmem:[%s1 + $0x1730] sm:$0xff]
  %v855 = vld [vmem:[%s1 + $0x1738] sm:$0xff]
  %v856 = vld [vmem:[%s1 + $0x1740] sm:$0xff]
  %v857 = vld [vmem:[%s1 + $0x1748] sm:$0xff]
  %v858 = vld [vmem:[%s1 + $0x1750] sm:$0xff]
  %v859 = vld [vmem:[%s1 + $0x1758] sm:$0xff]
  %v860 = vld [vmem:[%s1 + $0x1760] sm:$0xff]
  %v861 = vld [vmem:[%s1 + $0x1768] sm:$0xff]
  %v862 = vld [vmem:[%s1 + $0x1770] sm:$0xff]
  %v863 = vld [vmem:[%s1 + $0x1778] sm:$0xff]
  %v864 = vld [vmem:[%s1 + $0x1780] sm:$0xff]
  %v865 = vld [vmem:[%s1 + $0x1788] sm:$0xff]
  %v866 = vld [vmem:[%s1 + $0x1790] sm:$0xff]
  %v867 = vld [vmem:[%s1 + $0x1798] sm:$0xff]
  %v868 = vld [vmem:[%s1 + $0x17a0] sm:$0xff]
  %v869 = vld [vmem:[%s1 + $0x17a8] sm:$0xff]
  %v870 = vld [vmem:[%s1 + $0x17b0] sm:$0xff]
  %v871 = vld [vmem:[%s1 + $0x17b8] sm:$0xff]
  %v872 = vld [vmem:[%s1 + $0x17c0] sm:$0xff]
  %v873 = vld [vmem:[%s1 + $0x17c8] sm:$0xff]
  %v874 = vld [vmem:[%s1 + $0x17d0] sm:$0xff]
  %v875 = vld [vmem:[%s1 + $0x17d8] sm:$0xff]
  %v876 = vld [vmem:[%s1 + $0x17e0] sm:$0xff]
  %v877 = vld [vmem:[%s1 + $0x17e8] sm:$0xff]
  %v878 = vld [vmem:[%s1 + $0x17f0] sm:$0xff]
  %v879 = vld [vmem:[%s1 + $0x17f8] sm:$0xff]
  %v880 = vld [vmem:[%s1 + $0x1800] sm:$0xff]
  %v881 = vld [vmem:[%s1 + $0x1808] sm:$0xff]
  %v882 = vld [vmem:[%s1 + $0x1810] sm:$0xff]
  %v883 = vld [vmem:[%s1 + $0x1818] sm:$0xff]
  %v884 = vld [vmem:[%s1 + $0x1820] sm:$0xff]
  %v885 = vld [vmem:[%s1 + $0x1828] sm:$0xff]
  %v886 = vld [vmem:[%s1 + $0x1830] sm:$0xff]
  %v887 = vld [vmem:[%s1 + $0x1838] sm:$0xff]
  %v888 = vld [vmem:[%s1 + $0x1840] sm:$0xff]
  %v889 = vld [vmem:[%s1 + $0x1848] sm:$0xff]
  %v890 = vld [vmem:[%s1 + $0x1850] sm:$0xff]
  %v891 = vld [vmem:[%s1 + $0x1858] sm:$0xff]
  %v892 = vld [vmem:[%s1 + $0x1860] sm:$0xff]
  %v893 = vld [vmem:[%s1 + $0x1868] sm:$0xff]
  %v894 = vld [vmem:[%s1 + $0x1870] sm:$0xff]
  %v895 = vld [vmem:[%s1 + $0x1878] sm:$0xff]
  %v896 = vld [vmem:[%s1 + $0x1880] sm:$0xff]
  %v897 = vld [vmem:[%s1 + $0x1888] sm:$0xff]
  %v898 = vld [vmem:[%s1 + $0x1890] sm:$0xff]
  %v899 = vld [vmem:[%s1 + $0x1898] sm:$0xff]
  %v900 = vld [vmem:[%s1 + $0x18a0] sm:$0xff]
  %v901 = vld [vmem:[%s1 + $0x18a8] sm:$0xff]
  %v902 = vld [vmem:[%s1 + $0x18b0] sm:$0xff]
  %v903 = vld [vmem:[%s1 + $0x18b8] sm:$0xff]
  %v904 = vld [vmem:[%s1 + $0x18c0] sm:$0xff]
  %v905 = vld [vmem:[%s1 + $0x18c8] sm:$0xff]
  %v906 = vld [vmem:[%s1 + $0x18d0] sm:$0xff]
  %v907 = vld [vmem:[%s1 + $0x18d8] sm:$0xff]
  %v908 = vld [vmem:[%s1 + $0x18e0] sm:$0xff]
  %v909 = vld [vmem:[%s1 + $0x18e8] sm:$0xff]
  %v910 = vld [vmem:[%s1 + $0x18f0] sm:$0xff]
  %v911 = vld [vmem:[%s1 + $0x18f8] sm:$0xff]
  %v912 = vld [vmem:[%s1 + $0x1900] sm:$0xff]
  %v913 = vld [vmem:[%s1 + $0x1908] sm:$0xff]
  %v914 = vld [vmem:[%s1 + $0x1910] sm:$0xff]
  %v915 = vld [vmem:[%s1 + $0x1918] sm:$0xff]
  %v916 = vld [vmem:[%s1 + $0x1920] sm:$0xff]
  %v917 = vld [vmem:[%s1 + $0x1928] sm:$0xff]
  %v918 = vld [vmem:[%s1 + $0x1930] sm:$0xff]
  %v919 = vld [vmem:[%s1 + $0x1938] sm:$0xff]
  %v920 = vld [vmem:[%s1 + $0x1940] sm:$0xff]
  %v921 = vld [vmem:[%s1 + $0x1948] sm:$0xff]
  %v922 = vld [vmem:[%s1 + $0x1950] sm:$0xff]
  %v923 = vld [vmem:[%s1 + $0x1958] sm:$0xff]
  %v924 = vld [vmem:[%s1 + $0x1960] sm:$0xff]
  %v925 = vld [vmem:[%s1 + $0x1968] sm:$0xff]
  %v926 = vld [vmem:[%s1 + $0x1970] sm:$0xff]
  %v927 = vld [vmem:[%s1 + $0x1978] sm:$0xff]
  %v928 = vld [vmem:[%s1 + $0x1980] sm:$0xff]
  %v929 = vld [vmem:[%s1 + $0x1988] sm:$0xff]
  %v930 = vld [vmem:[%s1 + $0x1990] sm:$0xff]
  %v931 = vld [vmem:[%s1 + $0x1998] sm:$0xff]
  %v932 = vld [vmem:[%s1 + $0x19a0] sm:$0xff]
  %v933 = vld [vmem:[%s1 + $0x19a8] sm:$0xff]
  %v934 = vld [vmem:[%s1 + $0x19b0] sm:$0xff]
  %v935 = vld [vmem:[%s1 + $0x19b8] sm:$0xff]
  %v936 = vld [vmem:[%s1 + $0x19c0] sm:$0xff]
  %v937 = vld [vmem:[%s1 + $0x19c8] sm:$0xff]
  %v938 = vld [vmem:[%s1 + $0x19d0] sm:$0xff]
  %v939 = vld [vmem:[%s1 + $0x19d8] sm:$0xff]
  %v940 = vld [vmem:[%s1 + $0x19e0] sm:$0xff]
  %v941 = vld [vmem:[%s1 + $0x19e8] sm:$0xff]
  %v942 = vld [vmem:[%s1 + $0x19f0] sm:$0xff]
  %v943 = vld [vmem:[%s1 + $0x19f8] sm:$0xff]
  %v944 = vld [vmem:[%s1 + $0x1a00] sm:$0xff]
  %v945 = vld [vmem:[%s1 + $0x1a08] sm:$0xff]
  %v946 = vld [vmem:[%s1 + $0x1a10] sm:$0xff]
  %v947 = vld [vmem:[%s1 + $0x1a18] sm:$0xff]
  %v948 = vld [vmem:[%s1 + $0x1a20] sm:$0xff]
  %v949 = vld [vmem:[%s1 + $0x1a28] sm:$0xff]
  %v950 = vld [vmem:[%s1 + $0x1a30] sm:$0xff]
  %v951 = vld [vmem:[%s1 + $0x1a38] sm:$0xff]
  %v952 = vld [vmem:[%s1 + $0x1a40] sm:$0xff]
  %v953 = vld [vmem:[%s1 + $0x1a48] sm:$0xff]
  %v954 = vld [vmem:[%s1 + $0x1a50] sm:$0xff]
  %v955 = vld [vmem:[%s1 + $0x1a58] sm:$0xff]
  %v956 = vld [vmem:[%s1 + $0x1a60] sm:$0xff]
  %v957 = vld [vmem:[%s1 + $0x1a68] sm:$0xff]
  %v958 = vld [vmem:[%s1 + $0x1a70] sm:$0xff]
  %v959 = vld [vmem:[%s1 + $0x1a78] sm:$0xff]
  %v960 = vld [vmem:[%s1 + $0x1a80] sm:$0xff]
  %v961 = vld [vmem:[%s1 + $0x1a88] sm:$0xff]
  %v962 = vld [vmem:[%s1 + $0x1a90] sm:$0xff]
  %v963 = vld [vmem:[%s1 + $0x1a98] sm:$0xff]
  %v964 = vld [vmem:[%s1 + $0x1aa0] sm:$0xff]
  %v965 = vld [vmem:[%s1 + $0x1aa8] sm:$0xff]
  %v966 = vld [vmem:[%s1 + $0x1ab0] sm:$0xff]
  %v967 = vld [vmem:[%s1 + $0x1ab8] sm:$0xff]
  %v968 = vld [vmem:[%s1 + $0x1ac0] sm:$0xff]
  %v969 = vld [vmem:[%s1 + $0x1ac8] sm:$0xff]
  %v970 = vld [vmem:[%s1 + $0x1ad0] sm:$0xff]
  %v971 = vld [vmem:[%s1 + $0x1ad8] sm:$0xff]
  %v972 = vld [vmem:[%s1 + $0x1ae0] sm:$0xff]
  %v973 = vld [vmem:[%s1 + $0x1ae8] sm:$0xff]
  %v974 = vld [vmem:[%s1 + $0x1af0] sm:$0xff]
  %v975 = vld [vmem:[%s1 + $0x1af8] sm:$0xff]
  %v976 = vld [vmem:[%s1 + $0x1b00] sm:$0xff]
  %v977 = vld [vmem:[%s1 + $0x1b08] sm:$0xff]
  %v978 = vld [vmem:[%s1 + $0x1b10] sm:$0xff]
  %v979 = vld [vmem:[%s1 + $0x1b18] sm:$0xff]
  %v980 = vld [vmem:[%s1 + $0x1b20] sm:$0xff]
  %v981 = vld [vmem:[%s1 + $0x1b28] sm:$0xff]
  %v982 = vld [vmem:[%s1 + $0x1b30] sm:$0xff]
  %v983 = vld [vmem:[%s1 + $0x1b38] sm:$0xff]
  %v984 = vld [vmem:[%s1 + $0x1b40] sm:$0xff]
  %v985 = vld [vmem:[%s1 + $0x1b48] sm:$0xff]
  %v986 = vld [vmem:[%s1 + $0x1b50] sm:$0xff]
  %v987 = vld [vmem:[%s1 + $0x1b58] sm:$0xff]
  %v988 = vld [vmem:[%s1 + $0x1b60] sm:$0xff]
  %v989 = vld [vmem:[%s1 + $0x1b68] sm:$0xff]
  %v990 = vld [vmem:[%s1 + $0x1b70] sm:$0xff]
  %v991 = vld [vmem:[%s1 + $0x1b78] sm:$0xff]
  %v992 = vld [vmem:[%s1 + $0x1b80] sm:$0xff]
  %v993 = vld [vmem:[%s1 + $0x1b88] sm:$0xff]
  %v994 = vld [vmem:[%s1 + $0x1b90] sm:$0xff]
  %v995 = vld [vmem:[%s1 + $0x1b98] sm:$0xff]
  %v996 = vld [vmem:[%s1 + $0x1ba0] sm:$0xff]
  %v997 = vld [vmem:[%s1 + $0x1ba8] sm:$0xff]
  %v998 = vld [vmem:[%s1 + $0x1bb0] sm:$0xff]
  %v999 = vld [vmem:[%s1 + $0x1bb8] sm:$0xff]
  %v1000 = vld [vmem:[%s1 + $0x1bc0] sm:$0xff]
  %v1001 = vld [vmem:[%s1 + $0x1bc8] sm:$0xff]
  %v1002 = vld [vmem:[%s1 + $0x1bd0] sm:$0xff]
  %v1003 = vld [vmem:[%s1 + $0x1bd8] sm:$0xff]
  %v1004 = vld [vmem:[%s1 + $0x1be0] sm:$0xff]
  %v1005 = vld [vmem:[%s1 + $0x1be8] sm:$0xff]
  %v1006 = vld [vmem:[%s1 + $0x1bf0] sm:$0xff]
  %v1007 = vld [vmem:[%s1 + $0x1bf8] sm:$0xff]
  %v1008 = vld [vmem:[%s1 + $0x1c00] sm:$0xff]
  %v1009 = vld [vmem:[%s1 + $0x1c08] sm:$0xff]
  %v1010 = vld [vmem:[%s1 + $0x1c10] sm:$0xff]
  %v1011 = vld [vmem:[%s1 + $0x1c18] sm:$0xff]
  %v1012 = vld [vmem:[%s1 + $0x1c20] sm:$0xff]
  %v1013 = vld [vmem:[%s1 + $0x1c28] sm:$0xff]
  %v1014 = vld [vmem:[%s1 + $0x1c30] sm:$0xff]
  %v1015 = vld [vmem:[%s1 + $0x1c38] sm:$0xff]
  %v1016 = vld [vmem:[%s1 + $0x1c40] sm:$0xff]
  %v1017 = vld [vmem:[%s1 + $0x1c48] sm:$0xff]
  %v1018 = vld [vmem:[%s1 + $0x1c50] sm:$0xff]
  %v1019 = vld [vmem:[%s1 + $0x1c58] sm:$0xff]
  %v1020 = vld [vmem:[%s1 + $0x1c60] sm:$0xff]
  %v1021 = vld [vmem:[%s1 + $0x1c68] sm:$0xff]
  %v1022 = vld [vmem:[%s1 + $0x1c70] sm:$0xff]
  %v1023 = vld [vmem:[%s1 + $0x1c78] sm:$0xff]
  %v1024 = vld [vmem:[%s1 + $0x1c80] sm:$0xff]
  %v1025 = vld [vmem:[%s1 + $0x1c88] sm:$0xff]
  %v1026 = vld [vmem:[%s1 + $0x1c90] sm:$0xff]
  %v1027 = vld [vmem:[%s1 + $0x1c98] sm:$0xff]
  %v1028 = vld [vmem:[%s1 + $0x1ca0] sm:$0xff]
  %v1029 = vld [vmem:[%s1 + $0x1ca8] sm:$0xff]
  %v1030 = vld [vmem:[%s1 + $0x1cb0] sm:$0xff]
  %v1031 = vld [vmem:[%s1 + $0x1cb8] sm:$0xff]
  %v1032 = vld [vmem:[%s1 + $0x1cc0] sm:$0xff]
  %v1033 = vld [vmem:[%s1 + $0x1cc8] sm:$0xff]
  %v1034 = vld [vmem:[%s1 + $0x1cd0] sm:$0xff]
  %v1035 = vld [vmem:[%s1 + $0x1cd8] sm:$0xff]
  %v1036 = vld [vmem:[%s1 + $0x1ce0] sm:$0xff]
  %v1037 = vld [vmem:[%s1 + $0x1ce8] sm:$0xff]
  %v1038 = vld [vmem:[%s1 + $0x1cf0] sm:$0xff]
  %v1039 = vld [vmem:[%s1 + $0x1cf8] sm:$0xff]
  %v1040 = vld [vmem:[%s1 + $0x1d00] sm:$0xff]
  %v1041 = vld [vmem:[%s1 + $0x1d08] sm:$0xff]
  %v1042 = vld [vmem:[%s1 + $0x1d10] sm:$0xff]
  %v1043 = vld [vmem:[%s1 + $0x1d18] sm:$0xff]
  %v1044 = vld [vmem:[%s1 + $0x1d20] sm:$0xff]
  %v1045 = vld [vmem:[%s1 + $0x1d28] sm:$0xff]
  %v1046 = vld [vmem:[%s1 + $0x1d30] sm:$0xff]
  %v1047 = vld [vmem:[%s1 + $0x1d38] sm:$0xff]
  %v1048 = vld [vmem:[%s1 + $0x1d40] sm:$0xff]
  %v1049 = vld [vmem:[%s1 + $0x1d48] sm:$0xff]
  %v1050 = vld [vmem:[%s1 + $0x1d50] sm:$0xff]
  %v1051 = vld [vmem:[%s1 + $0x1d58] sm:$0xff]
  %v1052 = vld [vmem:[%s1 + $0x1d60] sm:$0xff]
  %v1053 = vld [vmem:[%s1 + $0x1d68] sm:$0xff]
  %v1054 = vld [vmem:[%s1 + $0x1d70] sm:$0xff]
  %v1055 = vld [vmem:[%s1 + $0x1d78] sm:$0xff]
  %v1056 = vld [vmem:[%s1 + $0x1d80] sm:$0xff]
  %v1057 = vld [vmem:[%s1 + $0x1d88] sm:$0xff]
  %v1058 = vld [vmem:[%s1 + $0x1d90] sm:$0xff]
  %v1059 = vld [vmem:[%s1 + $0x1d98] sm:$0xff]
  %v1060 = vld [vmem:[%s1 + $0x1da0] sm:$0xff]
  %v1061 = vld [vmem:[%s1 + $0x1da8] sm:$0xff]
  %v1062 = vld [vmem:[%s1 + $0x1db0] sm:$0xff]
  %v1063 = vld [vmem:[%s1 + $0x1db8] sm:$0xff]
  %v1064 = vld [vmem:[%s1 + $0x1dc0] sm:$0xff]
  %v1065 = vld [vmem:[%s1 + $0x1dc8] sm:$0xff]
  %v1066 = vld [vmem:[%s1 + $0x1dd0] sm:$0xff]
  %v1067 = vld [vmem:[%s1 + $0x1dd8] sm:$0xff]
  %v1068 = vld [vmem:[%s1 + $0x1de0] sm:$0xff]
  %v1069 = vld [vmem:[%s1 + $0x1de8] sm:$0xff]
  %v1070 = vld [vmem:[%s1 + $0x1df0] sm:$0xff]
  %v1071 = vld [vmem:[%s1 + $0x1df8] sm:$0xff]
  %v1072 = vld [vmem:[%s1 + $0x1e00] sm:$0xff]
  %v1073 = vld [vmem:[%s1 + $0x1e08] sm:$0xff]
  %v1074 = vld [vmem:[%s1 + $0x1e10] sm:$0xff]
  %v1075 = vld [vmem:[%s1 + $0x1e18] sm:$0xff]
  %v1076 = vld [vmem:[%s1 + $0x1e20] sm:$0xff]
  %v1077 = vld [vmem:[%s1 + $0x1e28] sm:$0xff]
  %v1078 = vld [vmem:[%s1 + $0x1e30] sm:$0xff]
  %v1079 = vld [vmem:[%s1 + $0x1e38] sm:$0xff]
  %v1080 = vld [vmem:[%s1 + $0x1e40] sm:$0xff]
  %v1081 = vld [vmem:[%s1 + $0x1e48] sm:$0xff]
  %v1082 = vld [vmem:[%s1 + $0x1e50] sm:$0xff]
  %v1083 = vld [vmem:[%s1 + $0x1e58] sm:$0xff]
  %v1084 = vld [vmem:[%s1 + $0x1e60] sm:$0xff]
  %v1085 = vld [vmem:[%s1 + $0x1e68] sm:$0xff]
  %v1086 = vld [vmem:[%s1 + $0x1e70] sm:$0xff]
  %v1087 = vld [vmem:[%s1 + $0x1e78] sm:$0xff]
  %v1088 = vld [vmem:[%s1 + $0x1e80] sm:$0xff]
  %v1089 = vld [vmem:[%s1 + $0x1e88] sm:$0xff]
  %v1090 = vld [vmem:[%s1 + $0x1e90] sm:$0xff]
  %v1091 = vld [vmem:[%s1 + $0x1e98] sm:$0xff]
  %v1092 = vld [vmem:[%s1 + $0x1ea0] sm:$0xff]
  %v1093 = vld [vmem:[%s1 + $0x1ea8] sm:$0xff]
  %v1094 = vld [vmem:[%s1 + $0x1eb0] sm:$0xff]
  %v1095 = vld [vmem:[%s1 + $0x1eb8] sm:$0xff]
  %v1096 = vld [vmem:[%s1 + $0x1ec0] sm:$0xff]
  %v1097 = vld [vmem:[%s1 + $0x1ec8] sm:$0xff]
  %v1098 = vld [vmem:[%s1 + $0x1ed0] sm:$0xff]
  %v1099 = vld [vmem:[%s1 + $0x1ed8] sm:$0xff]
  %v1100 = vld [vmem:[%s1 + $0x1ee0] sm:$0xff]
  %v1101 = vld [vmem:[%s1 + $0x1ee8] sm:$0xff]
  %v1102 = vld [vmem:[%s1 + $0x1ef0] sm:$0xff]
  %v1103 = vld [vmem:[%s1 + $0x1ef8] sm:$0xff]
  %v1104 = vld [vmem:[%s1 + $0x1f00] sm:$0xff]
  %v1105 = vld [vmem:[%s1 + $0x1f08] sm:$0xff]
  %v1106 = vld [vmem:[%s1 + $0x1f10] sm:$0xff]
  %v1107 = vld [vmem:[%s1 + $0x1f18] sm:$0xff]
  %v1108 = vld [vmem:[%s1 + $0x1f20] sm:$0xff]
  %v1109 = vld [vmem:[%s1 + $0x1f28] sm:$0xff]
  %v1110 = vld [vmem:[%s1 + $0x1f30] sm:$0xff]
  %v1111 = vld [vmem:[%s1 + $0x1f38] sm:$0xff]
  %v1112 = vld [vmem:[%s1 + $0x1f40] sm:$0xff]
  %v1113 = vld [vmem:[%s1 + $0x1f48] sm:$0xff]
  %v1114 = vld [vmem:[%s1 + $0x1f50] sm:$0xff]
  %v1115 = vld [vmem:[%s1 + $0x1f58] sm:$0xff]
  %v1116 = vld [vmem:[%s1 + $0x1f60] sm:$0xff]
  %v1117 = vld [vmem:[%s1 + $0x1f68] sm:$0xff]
  %v1118 = vld [vmem:[%s1 + $0x1f70] sm:$0xff]
  %v1119 = vld [vmem:[%s1 + $0x1f78] sm:$0xff]
  %v1120 = vld [vmem:[%s1 + $0x1f80] sm:$0xff]
  %v1121 = vld [vmem:[%s1 + $0x1f88] sm:$0xff]
  %v1122 = vld [vmem:[%s1 + $0x1f90] sm:$0xff]
  %v1123 = vld [vmem:[%s1 + $0x1f98] sm:$0xff]
  %v1124 = vld [vmem:[%s1 + $0x1fa0] sm:$0xff]
  %v1125 = vld [vmem:[%s1 + $0x1fa8] sm:$0xff]
  %v1126 = vld [vmem:[%s1 + $0x1fb0] sm:$0xff]
  %v1127 = vld [vmem:[%s1 + $0x1fb8] sm:$0xff]
  %v1128 = vld [vmem:[%s1 + $0x1fc0] sm:$0xff]
  %v1129 = vld [vmem:[%s1 + $0x1fc8] sm:$0xff]
  %v1130 = vld [vmem:[%s1 + $0x1fd0] sm:$0xff]
  %v1131 = vld [vmem:[%s1 + $0x1fd8] sm:$0xff]
  %v1132 = vld [vmem:[%s1 + $0x1fe0] sm:$0xff]
  %v1133 = vld [vmem:[%s1 + $0x1fe8] sm:$0xff]
  %v1134 = vld [vmem:[%s1 + $0x1ff0] sm:$0xff]
  %v1135 = vld [vmem:[%s1 + $0x1ff8] sm:$0xff]
  %v1136 = vld [vmem:[%s1 + $0x2000] sm:$0xff]
  %v1137 = vld [vmem:[%s1 + $0x2008] sm:$0xff]
  %v1138 = vld [vmem:[%s1 + $0x2010] sm:$0xff]
  %v1139 = vld [vmem:[%s1 + $0x2018] sm:$0xff]
  %v1140 = vld [vmem:[%s1 + $0x2020] sm:$0xff]
  %v1141 = vld [vmem:[%s1 + $0x2028] sm:$0xff]
  %v1142 = vld [vmem:[%s1 + $0x2030] sm:$0xff]
  %v1143 = vld [vmem:[%s1 + $0x2038] sm:$0xff]
  %v1144 = vld [vmem:[%s1 + $0x2040] sm:$0xff]
  %v1145 = vld [vmem:[%s1 + $0x2048] sm:$0xff]
  %v1146 = vld [vmem:[%s1 + $0x2050] sm:$0xff]
  %v1147 = vld [vmem:[%s1 + $0x2058] sm:$0xff]
  %v1148 = vld [vmem:[%s1 + $0x2060] sm:$0xff]
  %v1149 = vld [vmem:[%s1 + $0x2068] sm:$0xff]
  %v1150 = vld [vmem:[%s1 + $0x2070] sm:$0xff]
  %v1151 = vld [vmem:[%s1 + $0x2078] sm:$0xff]
  %v1152 = vld [vmem:[%s1 + $0x2080] sm:$0xff]
  %v1153 = vld [vmem:[%s1 + $0x2088] sm:$0xff]
  %v1154 = vld [vmem:[%s1 + $0x2090] sm:$0xff]
  %v1155 = vld [vmem:[%s1 + $0x2098] sm:$0xff]
  %v1156 = vld [vmem:[%s1 + $0x20a0] sm:$0xff]
  %v1157 = vld [vmem:[%s1 + $0x20a8] sm:$0xff]
  %v1158 = vld [vmem:[%s1 + $0x20b0] sm:$0xff]
  %v1159 = vld [vmem:[%s1 + $0x20b8] sm:$0xff]
  %v1160 = vld [vmem:[%s1 + $0x20c0] sm:$0xff]
  %v1161 = vld [vmem:[%s1 + $0x20c8] sm:$0xff]
  %v1162 = vld [vmem:[%s1 + $0x20d0] sm:$0xff]
  %v1163 = vld [vmem:[%s1 + $0x20d8] sm:$0xff]
  %v1164 = vld [vmem:[%s1 + $0x20e0] sm:$0xff]
  %v1165 = vld [vmem:[%s1 + $0x20e8] sm:$0xff]
  %v1166 = vld [vmem:[%s1 + $0x20f0] sm:$0xff]
  %v1167 = vld [vmem:[%s1 + $0x20f8] sm:$0xff]
  %v1168 = vld [vmem:[%s1 + $0x2100] sm:$0xff]
  %v1169 = vld [vmem:[%s1 + $0x2108] sm:$0xff]
  %v1170 = vld [vmem:[%s1 + $0x2110] sm:$0xff]
  %v1171 = vld [vmem:[%s1 + $0x2118] sm:$0xff]
  %v1172 = vld [vmem:[%s1 + $0x2120] sm:$0xff]
  %v1173 = vld [vmem:[%s1 + $0x2128] sm:$0xff]
  %v1174 = vld [vmem:[%s1 + $0x2130] sm:$0xff]
  %v1175 = vld [vmem:[%s1 + $0x2138] sm:$0xff]
  %v1176 = vld [vmem:[%s1 + $0x2140] sm:$0xff]
  %v1177 = vld [vmem:[%s1 + $0x2148] sm:$0xff]
  %v1178 = vld [vmem:[%s1 + $0x2150] sm:$0xff]
  %v1179 = vld [vmem:[%s1 + $0x2158] sm:$0xff]
  %v1180 = vld [vmem:[%s1 + $0x2160] sm:$0xff]
  %v1181 = vld [vmem:[%s1 + $0x2168] sm:$0xff]
  %v1182 = vld [vmem:[%s1 + $0x2170] sm:$0xff]
  %v1183 = vld [vmem:[%s1 + $0x2178] sm:$0xff]
  %v1184 = vld [vmem:[%s1 + $0x2180] sm:$0xff]
  %v1185 = vld [vmem:[%s1 + $0x2188] sm:$0xff]
  %v1186 = vld [vmem:[%s1 + $0x2190] sm:$0xff]
  %v1187 = vld [vmem:[%s1 + $0x2198] sm:$0xff]
  %v1188 = vld [vmem:[%s1 + $0x21a0] sm:$0xff]
  %v1189 = vld [vmem:[%s1 + $0x21a8] sm:$0xff]
  %v1190 = vld [vmem:[%s1 + $0x21b0] sm:$0xff]
  %v1191 = vld [vmem:[%s1 + $0x21b8] sm:$0xff]
  %v1192 = vld [vmem:[%s1 + $0x21c0] sm:$0xff]
  %v1193 = vld [vmem:[%s1 + $0x21c8] sm:$0xff]
  %v1194 = vld [vmem:[%s1 + $0x21d0] sm:$0xff]
  %v1195 = vld [vmem:[%s1 + $0x21d8] sm:$0xff]
  %v1196 = vld [vmem:[%s1 + $0x21e0] sm:$0xff]
  %v1197 = vld [vmem:[%s1 + $0x21e8] sm:$0xff]
  %v1198 = vld [vmem:[%s1 + $0x21f0] sm:$0xff]
  %v1199 = vld [vmem:[%s1 + $0x21f8] sm:$0xff]
  %v1200 = vld [vmem:[%s1 + $0x2200] sm:$0xff]
  %v1201 = vld [vmem:[%s1 + $0x2208] sm:$0xff]
  %v1202 = vld [vmem:[%s1 + $0x2210] sm:$0xff]
  %v1203 = vld [vmem:[%s1 + $0x2218] sm:$0xff]
  %v1204 = vld [vmem:[%s1 + $0x2220] sm:$0xff]
  %v1205 = vld [vmem:[%s1 + $0x2228] sm:$0xff]
  %v1206 = vld [vmem:[%s1 + $0x2230] sm:$0xff]
  %v1207 = vld [vmem:[%s1 + $0x2238] sm:$0xff]
  %v1208 = vld [vmem:[%s1 + $0x2240] sm:$0xff]
  %v1209 = vld [vmem:[%s1 + $0x2248] sm:$0xff]
  %v1210 = vld [vmem:[%s1 + $0x2250] sm:$0xff]
  %v1211 = vld [vmem:[%s1 + $0x2258] sm:$0xff]
  %v1212 = vld [vmem:[%s1 + $0x2260] sm:$0xff]
  %v1213 = vld [vmem:[%s1 + $0x2268] sm:$0xff]
  %v1214 = vld [vmem:[%s1 + $0x2270] sm:$0xff]
  %v1215 = vld [vmem:[%s1 + $0x2278] sm:$0xff]
  %v1216 = vld [vmem:[%s1 + $0x2280] sm:$0xff]
  %v1217 = vld [vmem:[%s1 + $0x2288] sm:$0xff]
  %v1218 = vld [vmem:[%s1 + $0x2290] sm:$0xff]
  %v1219 = vld [vmem:[%s1 + $0x2298] sm:$0xff]
  %v1220 = vld [vmem:[%s1 + $0x22a0] sm:$0xff]
  %v1221 = vld [vmem:[%s1 + $0x22a8] sm:$0xff]
  %v1222 = vld [vmem:[%s1 + $0x22b0] sm:$0xff]
  %v1223 = vld [vmem:[%s1 + $0x22b8] sm:$0xff]
  %v1224 = vld [vmem:[%s1 + $0x22c0] sm:$0xff]
  %v1225 = vld [vmem:[%s1 + $0x22c8] sm:$0xff]
  %v1226 = vld [vmem:[%s1 + $0x22d0] sm:$0xff]
  %v1227 = vld [vmem:[%s1 + $0x22d8] sm:$0xff]
  %v1228 = vld [vmem:[%s1 + $0x22e0] sm:$0xff]
  %v1229 = vld [vmem:[%s1 + $0x22e8] sm:$0xff]
  %v1230 = vld [vmem:[%s1 + $0x22f0] sm:$0xff]
  %v1231 = vld [vmem:[%s1 + $0x22f8] sm:$0xff]
  %v1232 = vld [vmem:[%s1 + $0x2300] sm:$0xff]
  %v1233 = vld [vmem:[%s1 + $0x2308] sm:$0xff]
  %v1234 = vld [vmem:[%s1 + $0x2310] sm:$0xff]
  %v1235 = vld [vmem:[%s1 + $0x2318] sm:$0xff]
  %v1236 = vld [vmem:[%s1 + $0x2320] sm:$0xff]
  %v1237 = vld [vmem:[%s1 + $0x2328] sm:$0xff]
  %v1238 = vld [vmem:[%s1 + $0x2330] sm:$0xff]
  %v1239 = vld [vmem:[%s1 + $0x2338] sm:$0xff]
  %v1240 = vld [vmem:[%s1 + $0x2340] sm:$0xff]
  %v1241 = vld [vmem:[%s1 + $0x2348] sm:$0xff]
  %v1242 = vld [vmem:[%s1 + $0x2350] sm:$0xff]
  %v1243 = vld [vmem:[%s1 + $0x2358] sm:$0xff]
  %v1244 = vld [vmem:[%s1 + $0x2360] sm:$0xff]
  %v1245 = vld [vmem:[%s1 + $0x2368] sm:$0xff]
  %v1246 = vld [vmem:[%s1 + $0x2370] sm:$0xff]
  %v1247 = vld [vmem:[%s1 + $0x2378] sm:$0xff]
  %v1248 = vld [vmem:[%s1 + $0x2380] sm:$0xff]
  %v1249 = vld [vmem:[%s1 + $0x2388] sm:$0xff]
  %v1250 = vld [vmem:[%s1 + $0x2390] sm:$0xff]
  %v1251 = vld [vmem:[%s1 + $0x2398] sm:$0xff]
  %v1252 = vld [vmem:[%s1 + $0x23a0] sm:$0xff]
  %v1253 = vld [vmem:[%s1 + $0x23a8] sm:$0xff]
  %v1254 = vld [vmem:[%s1 + $0x23b0] sm:$0xff]
  %v1255 = vld [vmem:[%s1 + $0x23b8] sm:$0xff]
  %v1256 = vld [vmem:[%s1 + $0x23c0] sm:$0xff]
  %v1257 = vld [vmem:[%s1 + $0x23c8] sm:$0xff]
  %v1258 = vld [vmem:[%s1 + $0x23d0] sm:$0xff]
  %v1259 = vld [vmem:[%s1 + $0x23d8] sm:$0xff]
  %v1260 = vld [vmem:[%s1 + $0x23e0] sm:$0xff]
  %v1261 = vld [vmem:[%s1 + $0x23e8] sm:$0xff]
  %v1262 = vld [vmem:[%s1 + $0x23f0] sm:$0xff]
  %v1263 = vld [vmem:[%s1 + $0x23f8] sm:$0xff]
  %v1264 = vld [vmem:[%s1 + $0x2400] sm:$0xff]
  %v1265 = vld [vmem:[%s1 + $0x2408] sm:$0xff]
  %v1266 = vld [vmem:[%s1 + $0x2410] sm:$0xff]
  %v1267 = vld [vmem:[%s1 + $0x2418] sm:$0xff]
  %v1268 = vld [vmem:[%s1 + $0x2420] sm:$0xff]
  %v1269 = vld [vmem:[%s1 + $0x2428] sm:$0xff]
  %v1270 = vld [vmem:[%s1 + $0x2430] sm:$0xff]
  %v1271 = vld [vmem:[%s1 + $0x2438] sm:$0xff]
  %v1272 = vld [vmem:[%s1 + $0x2440] sm:$0xff]
  %v1273 = vld [vmem:[%s1 + $0x2448] sm:$0xff]
  %v1274 = vld [vmem:[%s1 + $0x2450] sm:$0xff]
  %v1275 = vld [vmem:[%s1 + $0x2458] sm:$0xff]
  %v1276 = vld [vmem:[%s1 + $0x2460] sm:$0xff]
  %v1277 = vld [vmem:[%s1 + $0x2468] sm:$0xff]
  %v1278 = vld [vmem:[%s1 + $0x2470] sm:$0xff]
  %v1279 = vld [vmem:[%s1 + $0x2478] sm:$0xff]
  %v1280 = vld [vmem:[%s1 + $0x2480] sm:$0xff]
  %v1281 = vld [vmem:[%s1 + $0x2488] sm:$0xff]
  %v1282 = vld [vmem:[%s1 + $0x2490] sm:$0xff]
  %v1283 = vld [vmem:[%s1 + $0x2498] sm:$0xff]
  %v1284 = vld [vmem:[%s1 + $0x24a0] sm:$0xff]
  %v1285 = vld [vmem:[%s1 + $0x24a8] sm:$0xff]
  %v1286 = vld [vmem:[%s1 + $0x24b0] sm:$0xff]
  %v1287 = vld [vmem:[%s1 + $0x24b8] sm:$0xff]
  %v1288 = vld [vmem:[%s1 + $0x24c0] sm:$0xff]
  %v1289 = vld [vmem:[%s1 + $0x24c8] sm:$0xff]
  %v1290 = vld [vmem:[%s1 + $0x24d0] sm:$0xff]
  %v1291 = vld [vmem:[%s1 + $0x24d8] sm:$0xff]
  %v1292 = vld [vmem:[%s1 + $0x24e0] sm:$0xff]
  %v1293 = vld [vmem:[%s1 + $0x24e8] sm:$0xff]
  %v1294 = vld [vmem:[%s1 + $0x24f0] sm:$0xff]
  %v1295 = vld [vmem:[%s1 + $0x24f8] sm:$0xff]
  %v1296 = vld [vmem:[%s1 + $0x2500] sm:$0xff]
  %v1297 = vld [vmem:[%s1 + $0x2508] sm:$0xff]
  %v1298 = vld [vmem:[%s1 + $0x2510] sm:$0xff]
  %v1299 = vld [vmem:[%s1 + $0x2518] sm:$0xff]
  %v1300 = vld [vmem:[%s1 + $0x2520] sm:$0xff]
  %v1301 = vld [vmem:[%s1 + $0x2528] sm:$0xff]
  %v1302 = vld [vmem:[%s1 + $0x2530] sm:$0xff]
  %v1303 = vld [vmem:[%s1 + $0x2538] sm:$0xff]
  %v1304 = vld [vmem:[%s1 + $0x2540] sm:$0xff]
  %v1305 = vld [vmem:[%s1 + $0x2548] sm:$0xff]
  %v1306 = vld [vmem:[%s1 + $0x2550] sm:$0xff]
  %v1307 = vld [vmem:[%s1 + $0x2558] sm:$0xff]
  %v1308 = vld [vmem:[%s1 + $0x2560] sm:$0xff]
  %v1309 = vld [vmem:[%s1 + $0x2568] sm:$0xff]
  %v1310 = vld [vmem:[%s1 + $0x2570] sm:$0xff]
  %v1311 = vld [vmem:[%s1 + $0x2578] sm:$0xff]
  %v1312 = vld [vmem:[%s1 + $0x2580] sm:$0xff]
  %v1313 = vld [vmem:[%s1 + $0x2588] sm:$0xff]
  %v1314 = vld [vmem:[%s1 + $0x2590] sm:$0xff]
  %v1315 = vld [vmem:[%s1 + $0x2598] sm:$0xff]
  %v1316 = vld [vmem:[%s1 + $0x25a0] sm:$0xff]
  %v1317 = vld [vmem:[%s1 + $0x25a8] sm:$0xff]
  %v1318 = vld [vmem:[%s1 + $0x25b0] sm:$0xff]
  %v1319 = vld [vmem:[%s1 + $0x25b8] sm:$0xff]
  %v1320 = vld [vmem:[%s1 + $0x25c0] sm:$0xff]
  %v1321 = vld [vmem:[%s1 + $0x25c8] sm:$0xff]
  %v1322 = vld [vmem:[%s1 + $0x25d0] sm:$0xff]
  %v1323 = vld [vmem:[%s1 + $0x25d8] sm:$0xff]
  %v1324 = vld [vmem:[%s1 + $0x25e0] sm:$0xff]
  %v1325 = vld [vmem:[%s1 + $0x25e8] sm:$0xff]
  %v1326 = vld [vmem:[%s1 + $0x25f0] sm:$0xff]
  %v1327 = vld [vmem:[%s1 + $0x25f8] sm:$0xff]
  %v1328 = vld [vmem:[%s1 + $0x2600] sm:$0xff]
  %v1329 = vld [vmem:[%s1 + $0x2608] sm:$0xff]
  %v1330 = vld [vmem:[%s1 + $0x2610] sm:$0xff]
  %v1331 = vld [vmem:[%s1 + $0x2618] sm:$0xff]
  %v1332 = vld [vmem:[%s1 + $0x2620] sm:$0xff]
  %v1333 = vld [vmem:[%s1 + $0x2628] sm:$0xff]
  %v1334 = vld [vmem:[%s1 + $0x2630] sm:$0xff]
  %v1335 = vld [vmem:[%s1 + $0x2638] sm:$0xff]
  %v1336 = vld [vmem:[%s1 + $0x2640] sm:$0xff]
  %v1337 = vld [vmem:[%s1 + $0x2648] sm:$0xff]
  %v1338 = vld [vmem:[%s1 + $0x2650] sm:$0xff]
  %v1339 = vld [vmem:[%s1 + $0x2658] sm:$0xff]
  %v1340 = vld [vmem:[%s1 + $0x2660] sm:$0xff]
  %v1341 = vld [vmem:[%s1 + $0x2668] sm:$0xff]
  %v1342 = vld [vmem:[%s1 + $0x2670] sm:$0xff]
  %v1343 = vld [vmem:[%s1 + $0x2678] sm:$0xff]
  %v1344 = vld [vmem:[%s1 + $0x2680] sm:$0xff]
  %v1345 = vld [vmem:[%s1 + $0x2688] sm:$0xff]
  %v1346 = vld [vmem:[%s1 + $0x2690] sm:$0xff]
  %v1347 = vld [vmem:[%s1 + $0x2698] sm:$0xff]
  %v1348 = vld [vmem:[%s1 + $0x26a0] sm:$0xff]
  %v1349 = vld [vmem:[%s1 + $0x26a8] sm:$0xff]
  %v1350 = vld [vmem:[%s1 + $0x26b0] sm:$0xff]
  %v1351 = vld [vmem:[%s1 + $0x26b8] sm:$0xff]
  %v1352 = vld [vmem:[%s1 + $0x26c0] sm:$0xff]
  %v1353 = vld [vmem:[%s1 + $0x26c8] sm:$0xff]
  %v1354 = vld [vmem:[%s1 + $0x26d0] sm:$0xff]
  %v1355 = vld [vmem:[%s1 + $0x26d8] sm:$0xff]
  %v1356 = vld [vmem:[%s1 + $0x26e0] sm:$0xff]
  %v1357 = vld [vmem:[%s1 + $0x26e8] sm:$0xff]
  %v1358 = vld [vmem:[%s1 + $0x26f0] sm:$0xff]
  %v1359 = vld [vmem:[%s1 + $0x26f8] sm:$0xff]
  %v1360 = vld [vmem:[%s1 + $0x2700] sm:$0xff]
  %v1361 = vld [vmem:[%s1 + $0x2708] sm:$0xff]
  %v1362 = vld [vmem:[%s1 + $0x2710] sm:$0xff]
  %v1363 = vld [vmem:[%s1 + $0x2718] sm:$0xff]
  %v1364 = vld [vmem:[%s1 + $0x2720] sm:$0xff]
  %v1365 = vld [vmem:[%s1 + $0x2728] sm:$0xff]
  %v1366 = vld [vmem:[%s1 + $0x2730] sm:$0xff]
  %v1367 = vld [vmem:[%s1 + $0x2738] sm:$0xff]
  %v1368 = vld [vmem:[%s1 + $0x2740] sm:$0xff]
  %v1369 = vld [vmem:[%s1 + $0x2748] sm:$0xff]
  %v1370 = vld [vmem:[%s1 + $0x2750] sm:$0xff]
  %v1371 = vld [vmem:[%s1 + $0x2758] sm:$0xff]
  %v1372 = vld [vmem:[%s1 + $0x2760] sm:$0xff]
  %v1373 = vld [vmem:[%s1 + $0x2768] sm:$0xff]
  %v1374 = vld [vmem:[%s1 + $0x2770] sm:$0xff]
  %v1375 = vld [vmem:[%s1 + $0x2778] sm:$0xff]
  %v1376 = vld [vmem:[%s1 + $0x2780] sm:$0xff]
  %v1377 = vld [vmem:[%s1 + $0x2788] sm:$0xff]
  %v1378 = vld [vmem:[%s1 + $0x2790] sm:$0xff]
  %v1379 = vld [vmem:[%s1 + $0x2798] sm:$0xff]
  %v1380 = vld [vmem:[%s1 + $0x27a0] sm:$0xff]
  %v1381 = vld [vmem:[%s1 + $0x27a8] sm:$0xff]
  %v1382 = vld [vmem:[%s1 + $0x27b0] sm:$0xff]
  %v1383 = vld [vmem:[%s1 + $0x27b8] sm:$0xff]
  %v1384 = vld [vmem:[%s1 + $0x27c0] sm:$0xff]
  %v1385 = vld [vmem:[%s1 + $0x27c8] sm:$0xff]
  %v1386 = vld [vmem:[%s1 + $0x27d0] sm:$0xff]
  %v1387 = vld [vmem:[%s1 + $0x27d8] sm:$0xff]
  %v1388 = vld [vmem:[%s1 + $0x27e0] sm:$0xff]
  %v1389 = vld [vmem:[%s1 + $0x27e8] sm:$0xff]
  %v1390 = vld [vmem:[%s1 + $0x27f0] sm:$0xff]
  %v1391 = vld [vmem:[%s1 + $0x27f8] sm:$0xff]
  %v1392 = vld [vmem:[%s2] sm:$0xf]
  %v1394 = vperm.slane %v1392, 0
  %v1395 = vperm.slane %v1392, 1
  %v1396 = vperm.slane %v1392, 2
  %v1397 = vperm.slane %v1392, 3
  %v2682 = vunpack.c.l.b16 %v112
  %v2683 = vunpack.c.h.b16 %v112
  %v2684 = vunpack.c.l.b16 %v113
  %v2685 = vunpack.c.h.b16 %v113
  %v2686 = vunpack.c.l.b16 %v114
  %v2687 = vunpack.c.h.b16 %v114
  %v2688 = vunpack.c.l.b16 %v115
  %v2689 = vunpack.c.h.b16 %v115
  %v2690 = vunpack.c.l.b16 %v116
  %v2691 = vunpack.c.h.b16 %v116
  %v2692 = vunpack.c.l.b16 %v117
  %v2693 = vunpack.c.h.b16 %v117
  %v2694 = vunpack.c.l.b16 %v118
  %v2695 = vunpack.c.h.b16 %v118
  %v2696 = vunpack.c.l.b16 %v119
  %v2697 = vunpack.c.h.b16 %v119
  %v2698 = vunpack.c.l.b16 %v120
  %v2699 = vunpack.c.h.b16 %v120
  %v2700 = vunpack.c.l.b16 %v121
  %v2701 = vunpack.c.h.b16 %v121
  %v2702 = vunpack.c.l.b16 %v122
  %v2703 = vunpack.c.h.b16 %v122
  %v2704 = vunpack.c.l.b16 %v123
  %v2705 = vunpack.c.h.b16 %v123
  %v2706 = vunpack.c.l.b16 %v124
  %v2707 = vunpack.c.h.b16 %v124
  %v2708 = vunpack.c.l.b16 %v125
  %v2709 = vunpack.c.h.b16 %v125
  %v2710 = vunpack.c.l.b16 %v126
  %v2711 = vunpack.c.h.b16 %v126
  %v2712 = vunpack.c.l.b16 %v127
  %v2713 = vunpack.c.h.b16 %v127
  %v2714 = vunpack.c.l.b16 %v128
  %v2715 = vunpack.c.h.b16 %v128
  %v2716 = vunpack.c.l.b16 %v129
  %v2717 = vunpack.c.h.b16 %v129
  %v2718 = vunpack.c.l.b16 %v130
  %v2719 = vunpack.c.h.b16 %v130
  %v2720 = vunpack.c.l.b16 %v131
  %v2721 = vunpack.c.h.b16 %v131
  %v2722 = vunpack.c.l.b16 %v132
  %v2723 = vunpack.c.h.b16 %v132
  %v2724 = vunpack.c.l.b16 %v133
  %v2725 = vunpack.c.h.b16 %v133
  %v2726 = vunpack.c.l.b16 %v134
  %v2727 = vunpack.c.h.b16 %v134
  %v2728 = vunpack.c.l.b16 %v135
  %v2729 = vunpack.c.h.b16 %v135
  %v2730 = vunpack.c.l.b16 %v136
  %v2731 = vunpack.c.h.b16 %v136
  %v2732 = vunpack.c.l.b16 %v137
  %v2733 = vunpack.c.h.b16 %v137
  %v2734 = vunpack.c.l.b16 %v138
  %v2735 = vunpack.c.h.b16 %v138
  %v2736 = vunpack.c.l.b16 %v139
  %v2737 = vunpack.c.h.b16 %v139
  %v2738 = vunpack.c.l.b16 %v140
  %v2739 = vunpack.c.h.b16 %v140
  %v2740 = vunpack.c.l.b16 %v141
  %v2741 = vunpack.c.h.b16 %v141
  %v2742 = vunpack.c.l.b16 %v142
  %v2743 = vunpack.c.h.b16 %v142
  %v2744 = vunpack.c.l.b16 %v143
  %v2745 = vunpack.c.h.b16 %v143
  %v2746 = vunpack.c.l.b16 %v144
  %v2747 = vunpack.c.h.b16 %v144
  %v2748 = vunpack.c.l.b16 %v145
  %v2749 = vunpack.c.h.b16 %v145
  %v2750 = vunpack.c.l.b16 %v146
  %v2751 = vunpack.c.h.b16 %v146
  %v2752 = vunpack.c.l.b16 %v147
  %v2753 = vunpack.c.h.b16 %v147
  %v2754 = vunpack.c.l.b16 %v148
  %v2755 = vunpack.c.h.b16 %v148
  %v2756 = vunpack.c.l.b16 %v149
  %v2757 = vunpack.c.h.b16 %v149
  %v2758 = vunpack.c.l.b16 %v150
  %v2759 = vunpack.c.h.b16 %v150
  %v2760 = vunpack.c.l.b16 %v151
  %v2761 = vunpack.c.h.b16 %v151
  %v2762 = vunpack.c.l.b16 %v152
  %v2763 = vunpack.c.h.b16 %v152
  %v2764 = vunpack.c.l.b16 %v153
  %v2765 = vunpack.c.h.b16 %v153
  %v2766 = vunpack.c.l.b16 %v154
  %v2767 = vunpack.c.h.b16 %v154
  %v2768 = vunpack.c.l.b16 %v155
  %v2769 = vunpack.c.h.b16 %v155
  %v2770 = vunpack.c.l.b16 %v156
  %v2771 = vunpack.c.h.b16 %v156
  %v2772 = vunpack.c.l.b16 %v157
  %v2773 = vunpack.c.h.b16 %v157
  %v2774 = vunpack.c.l.b16 %v158
  %v2775 = vunpack.c.h.b16 %v158
  %v2776 = vunpack.c.l.b16 %v159
  %v2777 = vunpack.c.h.b16 %v159
  %v2778 = vunpack.c.l.b16 %v160
  %v2779 = vunpack.c.h.b16 %v160
  %v2780 = vunpack.c.l.b16 %v161
  %v2781 = vunpack.c.h.b16 %v161
  %v2782 = vunpack.c.l.b16 %v162
  %v2783 = vunpack.c.h.b16 %v162
  %v2784 = vunpack.c.l.b16 %v163
  %v2785 = vunpack.c.h.b16 %v163
  %v2786 = vunpack.c.l.b16 %v164
  %v2787 = vunpack.c.h.b16 %v164
  %v2788 = vunpack.c.l.b16 %v165
  %v2789 = vunpack.c.h.b16 %v165
  %v2790 = vunpack.c.l.b16 %v166
  %v2791 = vunpack.c.h.b16 %v166
  %v2792 = vunpack.c.l.b16 %v167
  %v2793 = vunpack.c.h.b16 %v167
  %v2794 = vunpack.c.l.b16 %v168
  %v2795 = vunpack.c.h.b16 %v168
  %v2796 = vunpack.c.l.b16 %v169
  %v2797 = vunpack.c.h.b16 %v169
  %v2798 = vunpack.c.l.b16 %v170
  %v2799 = vunpack.c.h.b16 %v170
  %v2800 = vunpack.c.l.b16 %v171
  %v2801 = vunpack.c.h.b16 %v171
  %v2802 = vunpack.c.l.b16 %v172
  %v2803 = vunpack.c.h.b16 %v172
  %v2804 = vunpack.c.l.b16 %v173
  %v2805 = vunpack.c.h.b16 %v173
  %v2806 = vunpack.c.l.b16 %v174
  %v2807 = vunpack.c.h.b16 %v174
  %v2808 = vunpack.c.l.b16 %v175
  %v2809 = vunpack.c.h.b16 %v175
  %v2810 = vunpack.c.l.b16 %v176
  %v2811 = vunpack.c.h.b16 %v176
  %v2812 = vunpack.c.l.b16 %v177
  %v2813 = vunpack.c.h.b16 %v177
  %v2814 = vunpack.c.l.b16 %v178
  %v2815 = vunpack.c.h.b16 %v178
  %v2816 = vunpack.c.l.b16 %v179
  %v2817 = vunpack.c.h.b16 %v179
  %v2818 = vunpack.c.l.b16 %v180
  %v2819 = vunpack.c.h.b16 %v180
  %v2820 = vunpack.c.l.b16 %v181
  %v2821 = vunpack.c.h.b16 %v181
  %v2822 = vunpack.c.l.b16 %v182
  %v2823 = vunpack.c.h.b16 %v182
  %v2824 = vunpack.c.l.b16 %v183
  %v2825 = vunpack.c.h.b16 %v183
  %v2826 = vunpack.c.l.b16 %v184
  %v2827 = vunpack.c.h.b16 %v184
  %v2828 = vunpack.c.l.b16 %v185
  %v2829 = vunpack.c.h.b16 %v185
  %v2830 = vunpack.c.l.b16 %v186
  %v2831 = vunpack.c.h.b16 %v186
  %v2832 = vunpack.c.l.b16 %v187
  %v2833 = vunpack.c.h.b16 %v187
  %v2834 = vunpack.c.l.b16 %v188
  %v2835 = vunpack.c.h.b16 %v188
  %v2836 = vunpack.c.l.b16 %v189
  %v2837 = vunpack.c.h.b16 %v189
  %v2838 = vunpack.c.l.b16 %v190
  %v2839 = vunpack.c.h.b16 %v190
  %v2840 = vunpack.c.l.b16 %v191
  %v2841 = vunpack.c.h.b16 %v191
  %v2842 = vunpack.c.l.b16 %v192
  %v2843 = vunpack.c.h.b16 %v192
  %v2844 = vunpack.c.l.b16 %v193
  %v2845 = vunpack.c.h.b16 %v193
  %v2846 = vunpack.c.l.b16 %v194
  %v2847 = vunpack.c.h.b16 %v194
  %v2848 = vunpack.c.l.b16 %v195
  %v2849 = vunpack.c.h.b16 %v195
  %v2850 = vunpack.c.l.b16 %v196
  %v2851 = vunpack.c.h.b16 %v196
  %v2852 = vunpack.c.l.b16 %v197
  %v2853 = vunpack.c.h.b16 %v197
  %v2854 = vunpack.c.l.b16 %v198
  %v2855 = vunpack.c.h.b16 %v198
  %v2856 = vunpack.c.l.b16 %v199
  %v2857 = vunpack.c.h.b16 %v199
  %v2858 = vunpack.c.l.b16 %v200
  %v2859 = vunpack.c.h.b16 %v200
  %v2860 = vunpack.c.l.b16 %v201
  %v2861 = vunpack.c.h.b16 %v201
  %v2862 = vunpack.c.l.b16 %v202
  %v2863 = vunpack.c.h.b16 %v202
  %v2864 = vunpack.c.l.b16 %v203
  %v2865 = vunpack.c.h.b16 %v203
  %v2866 = vunpack.c.l.b16 %v204
  %v2867 = vunpack.c.h.b16 %v204
  %v2868 = vunpack.c.l.b16 %v205
  %v2869 = vunpack.c.h.b16 %v205
  %v2870 = vunpack.c.l.b16 %v206
  %v2871 = vunpack.c.h.b16 %v206
  %v2872 = vunpack.c.l.b16 %v207
  %v2873 = vunpack.c.h.b16 %v207
  %v2874 = vunpack.c.l.b16 %v208
  %v2875 = vunpack.c.h.b16 %v208
  %v2876 = vunpack.c.l.b16 %v209
  %v2877 = vunpack.c.h.b16 %v209
  %v2878 = vunpack.c.l.b16 %v210
  %v2879 = vunpack.c.h.b16 %v210
  %v2880 = vunpack.c.l.b16 %v211
  %v2881 = vunpack.c.h.b16 %v211
  %v2882 = vunpack.c.l.b16 %v212
  %v2883 = vunpack.c.h.b16 %v212
  %v2884 = vunpack.c.l.b16 %v213
  %v2885 = vunpack.c.h.b16 %v213
  %v2886 = vunpack.c.l.b16 %v214
  %v2887 = vunpack.c.h.b16 %v214
  %v2888 = vunpack.c.l.b16 %v215
  %v2889 = vunpack.c.h.b16 %v215
  %v2890 = vunpack.c.l.b16 %v216
  %v2891 = vunpack.c.h.b16 %v216
  %v2892 = vunpack.c.l.b16 %v217
  %v2893 = vunpack.c.h.b16 %v217
  %v2894 = vunpack.c.l.b16 %v218
  %v2895 = vunpack.c.h.b16 %v218
  %v2896 = vunpack.c.l.b16 %v219
  %v2897 = vunpack.c.h.b16 %v219
  %v2898 = vunpack.c.l.b16 %v220
  %v2899 = vunpack.c.h.b16 %v220
  %v2900 = vunpack.c.l.b16 %v221
  %v2901 = vunpack.c.h.b16 %v221
  %v2902 = vunpack.c.l.b16 %v222
  %v2903 = vunpack.c.h.b16 %v222
  %v2904 = vunpack.c.l.b16 %v223
  %v2905 = vunpack.c.h.b16 %v223
  %v2906 = vunpack.c.l.b16 %v224
  %v2907 = vunpack.c.h.b16 %v224
  %v2908 = vunpack.c.l.b16 %v225
  %v2909 = vunpack.c.h.b16 %v225
  %v2910 = vunpack.c.l.b16 %v226
  %v2911 = vunpack.c.h.b16 %v226
  %v2912 = vunpack.c.l.b16 %v227
  %v2913 = vunpack.c.h.b16 %v227
  %v2914 = vunpack.c.l.b16 %v228
  %v2915 = vunpack.c.h.b16 %v228
  %v2916 = vunpack.c.l.b16 %v229
  %v2917 = vunpack.c.h.b16 %v229
  %v2918 = vunpack.c.l.b16 %v230
  %v2919 = vunpack.c.h.b16 %v230
  %v2920 = vunpack.c.l.b16 %v231
  %v2921 = vunpack.c.h.b16 %v231
  %v2922 = vunpack.c.l.b16 %v232
  %v2923 = vunpack.c.h.b16 %v232
  %v2924 = vunpack.c.l.b16 %v233
  %v2925 = vunpack.c.h.b16 %v233
  %v2926 = vunpack.c.l.b16 %v234
  %v2927 = vunpack.c.h.b16 %v234
  %v2928 = vunpack.c.l.b16 %v235
  %v2929 = vunpack.c.h.b16 %v235
  %v2930 = vunpack.c.l.b16 %v236
  %v2931 = vunpack.c.h.b16 %v236
  %v2932 = vunpack.c.l.b16 %v237
  %v2933 = vunpack.c.h.b16 %v237
  %v2934 = vunpack.c.l.b16 %v238
  %v2935 = vunpack.c.h.b16 %v238
  %v2936 = vunpack.c.l.b16 %v239
  %v2937 = vunpack.c.h.b16 %v239
  %v2938 = vunpack.c.l.b16 %v240
  %v2939 = vunpack.c.h.b16 %v240
  %v2940 = vunpack.c.l.b16 %v241
  %v2941 = vunpack.c.h.b16 %v241
  %v2942 = vunpack.c.l.b16 %v242
  %v2943 = vunpack.c.h.b16 %v242
  %v2944 = vunpack.c.l.b16 %v243
  %v2945 = vunpack.c.h.b16 %v243
  %v2946 = vunpack.c.l.b16 %v244
  %v2947 = vunpack.c.h.b16 %v244
  %v2948 = vunpack.c.l.b16 %v245
  %v2949 = vunpack.c.h.b16 %v245
  %v2950 = vunpack.c.l.b16 %v246
  %v2951 = vunpack.c.h.b16 %v246
  %v2952 = vunpack.c.l.b16 %v247
  %v2953 = vunpack.c.h.b16 %v247
  %v2954 = vunpack.c.l.b16 %v248
  %v2955 = vunpack.c.h.b16 %v248
  %v2956 = vunpack.c.l.b16 %v249
  %v2957 = vunpack.c.h.b16 %v249
  %v2958 = vunpack.c.l.b16 %v250
  %v2959 = vunpack.c.h.b16 %v250
  %v2960 = vunpack.c.l.b16 %v251
  %v2961 = vunpack.c.h.b16 %v251
  %v2962 = vunpack.c.l.b16 %v252
  %v2963 = vunpack.c.h.b16 %v252
  %v2964 = vunpack.c.l.b16 %v253
  %v2965 = vunpack.c.h.b16 %v253
  %v2966 = vunpack.c.l.b16 %v254
  %v2967 = vunpack.c.h.b16 %v254
  %v2968 = vunpack.c.l.b16 %v255
  %v2969 = vunpack.c.h.b16 %v255
  %v2970 = vunpack.c.l.b16 %v256
  %v2971 = vunpack.c.h.b16 %v256
  %v2972 = vunpack.c.l.b16 %v257
  %v2973 = vunpack.c.h.b16 %v257
  %v2974 = vunpack.c.l.b16 %v258
  %v2975 = vunpack.c.h.b16 %v258
  %v2976 = vunpack.c.l.b16 %v259
  %v2977 = vunpack.c.h.b16 %v259
  %v2978 = vunpack.c.l.b16 %v260
  %v2979 = vunpack.c.h.b16 %v260
  %v2980 = vunpack.c.l.b16 %v261
  %v2981 = vunpack.c.h.b16 %v261
  %v2982 = vunpack.c.l.b16 %v262
  %v2983 = vunpack.c.h.b16 %v262
  %v2984 = vunpack.c.l.b16 %v263
  %v2985 = vunpack.c.h.b16 %v263
  %v2986 = vunpack.c.l.b16 %v264
  %v2987 = vunpack.c.h.b16 %v264
  %v2988 = vunpack.c.l.b16 %v265
  %v2989 = vunpack.c.h.b16 %v265
  %v2990 = vunpack.c.l.b16 %v266
  %v2991 = vunpack.c.h.b16 %v266
  %v2992 = vunpack.c.l.b16 %v267
  %v2993 = vunpack.c.h.b16 %v267
  %v2994 = vunpack.c.l.b16 %v268
  %v2995 = vunpack.c.h.b16 %v268
  %v2996 = vunpack.c.l.b16 %v269
  %v2997 = vunpack.c.h.b16 %v269
  %v2998 = vunpack.c.l.b16 %v270
  %v2999 = vunpack.c.h.b16 %v270
  %v3000 = vunpack.c.l.b16 %v271
  %v3001 = vunpack.c.h.b16 %v271
  %v3002 = vunpack.c.l.b16 %v272
  %v3003 = vunpack.c.h.b16 %v272
  %v3004 = vunpack.c.l.b16 %v273
  %v3005 = vunpack.c.h.b16 %v273
  %v3006 = vunpack.c.l.b16 %v274
  %v3007 = vunpack.c.h.b16 %v274
  %v3008 = vunpack.c.l.b16 %v275
  %v3009 = vunpack.c.h.b16 %v275
  %v3010 = vunpack.c.l.b16 %v276
  %v3011 = vunpack.c.h.b16 %v276
  %v3012 = vunpack.c.l.b16 %v277
  %v3013 = vunpack.c.h.b16 %v277
  %v3014 = vunpack.c.l.b16 %v278
  %v3015 = vunpack.c.h.b16 %v278
  %v3016 = vunpack.c.l.b16 %v279
  %v3017 = vunpack.c.h.b16 %v279
  %v3018 = vunpack.c.l.b16 %v280
  %v3019 = vunpack.c.h.b16 %v280
  %v3020 = vunpack.c.l.b16 %v281
  %v3021 = vunpack.c.h.b16 %v281
  %v3022 = vunpack.c.l.b16 %v282
  %v3023 = vunpack.c.h.b16 %v282
  %v3024 = vunpack.c.l.b16 %v283
  %v3025 = vunpack.c.h.b16 %v283
  %v3026 = vunpack.c.l.b16 %v284
  %v3027 = vunpack.c.h.b16 %v284
  %v3028 = vunpack.c.l.b16 %v285
  %v3029 = vunpack.c.h.b16 %v285
  %v3030 = vunpack.c.l.b16 %v286
  %v3031 = vunpack.c.h.b16 %v286
  %v3032 = vunpack.c.l.b16 %v287
  %v3033 = vunpack.c.h.b16 %v287
  %v3034 = vunpack.c.l.b16 %v288
  %v3035 = vunpack.c.h.b16 %v288
  %v3036 = vunpack.c.l.b16 %v289
  %v3037 = vunpack.c.h.b16 %v289
  %v3038 = vunpack.c.l.b16 %v290
  %v3039 = vunpack.c.h.b16 %v290
  %v3040 = vunpack.c.l.b16 %v291
  %v3041 = vunpack.c.h.b16 %v291
  %v3042 = vunpack.c.l.b16 %v292
  %v3043 = vunpack.c.h.b16 %v292
  %v3044 = vunpack.c.l.b16 %v293
  %v3045 = vunpack.c.h.b16 %v293
  %v3046 = vunpack.c.l.b16 %v294
  %v3047 = vunpack.c.h.b16 %v294
  %v3048 = vunpack.c.l.b16 %v295
  %v3049 = vunpack.c.h.b16 %v295
  %v3050 = vunpack.c.l.b16 %v296
  %v3051 = vunpack.c.h.b16 %v296
  %v3052 = vunpack.c.l.b16 %v297
  %v3053 = vunpack.c.h.b16 %v297
  %v3054 = vunpack.c.l.b16 %v298
  %v3055 = vunpack.c.h.b16 %v298
  %v3056 = vunpack.c.l.b16 %v299
  %v3057 = vunpack.c.h.b16 %v299
  %v3058 = vunpack.c.l.b16 %v300
  %v3059 = vunpack.c.h.b16 %v300
  %v3060 = vunpack.c.l.b16 %v301
  %v3061 = vunpack.c.h.b16 %v301
  %v3062 = vunpack.c.l.b16 %v302
  %v3063 = vunpack.c.h.b16 %v302
  %v3064 = vunpack.c.l.b16 %v303
  %v3065 = vunpack.c.h.b16 %v303
  %v3066 = vunpack.c.l.b16 %v304
  %v3067 = vunpack.c.h.b16 %v304
  %v3068 = vunpack.c.l.b16 %v305
  %v3069 = vunpack.c.h.b16 %v305
  %v3070 = vunpack.c.l.b16 %v306
  %v3071 = vunpack.c.h.b16 %v306
  %v3072 = vunpack.c.l.b16 %v307
  %v3073 = vunpack.c.h.b16 %v307
  %v3074 = vunpack.c.l.b16 %v308
  %v3075 = vunpack.c.h.b16 %v308
  %v3076 = vunpack.c.l.b16 %v309
  %v3077 = vunpack.c.h.b16 %v309
  %v3078 = vunpack.c.l.b16 %v310
  %v3079 = vunpack.c.h.b16 %v310
  %v3080 = vunpack.c.l.b16 %v311
  %v3081 = vunpack.c.h.b16 %v311
  %v3082 = vunpack.c.l.b16 %v312
  %v3083 = vunpack.c.h.b16 %v312
  %v3084 = vunpack.c.l.b16 %v313
  %v3085 = vunpack.c.h.b16 %v313
  %v3086 = vunpack.c.l.b16 %v314
  %v3087 = vunpack.c.h.b16 %v314
  %v3088 = vunpack.c.l.b16 %v315
  %v3089 = vunpack.c.h.b16 %v315
  %v3090 = vunpack.c.l.b16 %v316
  %v3091 = vunpack.c.h.b16 %v316
  %v3092 = vunpack.c.l.b16 %v317
  %v3093 = vunpack.c.h.b16 %v317
  %v3094 = vunpack.c.l.b16 %v318
  %v3095 = vunpack.c.h.b16 %v318
  %v3096 = vunpack.c.l.b16 %v319
  %v3097 = vunpack.c.h.b16 %v319
  %v3098 = vunpack.c.l.b16 %v320
  %v3099 = vunpack.c.h.b16 %v320
  %v3100 = vunpack.c.l.b16 %v321
  %v3101 = vunpack.c.h.b16 %v321
  %v3102 = vunpack.c.l.b16 %v322
  %v3103 = vunpack.c.h.b16 %v322
  %v3104 = vunpack.c.l.b16 %v323
  %v3105 = vunpack.c.h.b16 %v323
  %v3106 = vunpack.c.l.b16 %v324
  %v3107 = vunpack.c.h.b16 %v324
  %v3108 = vunpack.c.l.b16 %v325
  %v3109 = vunpack.c.h.b16 %v325
  %v3110 = vunpack.c.l.b16 %v326
  %v3111 = vunpack.c.h.b16 %v326
  %v3112 = vunpack.c.l.b16 %v327
  %v3113 = vunpack.c.h.b16 %v327
  %v3114 = vunpack.c.l.b16 %v328
  %v3115 = vunpack.c.h.b16 %v328
  %v3116 = vunpack.c.l.b16 %v329
  %v3117 = vunpack.c.h.b16 %v329
  %v3118 = vunpack.c.l.b16 %v330
  %v3119 = vunpack.c.h.b16 %v330
  %v3120 = vunpack.c.l.b16 %v331
  %v3121 = vunpack.c.h.b16 %v331
  %v3122 = vunpack.c.l.b16 %v332
  %v3123 = vunpack.c.h.b16 %v332
  %v3124 = vunpack.c.l.b16 %v333
  %v3125 = vunpack.c.h.b16 %v333
  %v3126 = vunpack.c.l.b16 %v334
  %v3127 = vunpack.c.h.b16 %v334
  %v3128 = vunpack.c.l.b16 %v335
  %v3129 = vunpack.c.h.b16 %v335
  %v3130 = vunpack.c.l.b16 %v336
  %v3131 = vunpack.c.h.b16 %v336
  %v3132 = vunpack.c.l.b16 %v337
  %v3133 = vunpack.c.h.b16 %v337
  %v3134 = vunpack.c.l.b16 %v338
  %v3135 = vunpack.c.h.b16 %v338
  %v3136 = vunpack.c.l.b16 %v339
  %v3137 = vunpack.c.h.b16 %v339
  %v3138 = vunpack.c.l.b16 %v340
  %v3139 = vunpack.c.h.b16 %v340
  %v3140 = vunpack.c.l.b16 %v341
  %v3141 = vunpack.c.h.b16 %v341
  %v3142 = vunpack.c.l.b16 %v342
  %v3143 = vunpack.c.h.b16 %v342
  %v3144 = vunpack.c.l.b16 %v343
  %v3145 = vunpack.c.h.b16 %v343
  %v3146 = vunpack.c.l.b16 %v344
  %v3147 = vunpack.c.h.b16 %v344
  %v3148 = vunpack.c.l.b16 %v345
  %v3149 = vunpack.c.h.b16 %v345
  %v3150 = vunpack.c.l.b16 %v346
  %v3151 = vunpack.c.h.b16 %v346
  %v3152 = vunpack.c.l.b16 %v347
  %v3153 = vunpack.c.h.b16 %v347
  %v3154 = vunpack.c.l.b16 %v348
  %v3155 = vunpack.c.h.b16 %v348
  %v3156 = vunpack.c.l.b16 %v349
  %v3157 = vunpack.c.h.b16 %v349
  %v3158 = vunpack.c.l.b16 %v350
  %v3159 = vunpack.c.h.b16 %v350
  %v3160 = vunpack.c.l.b16 %v351
  %v3161 = vunpack.c.h.b16 %v351
  %v3162 = vunpack.c.l.b16 %v352
  %v3163 = vunpack.c.h.b16 %v352
  %v3164 = vunpack.c.l.b16 %v353
  %v3165 = vunpack.c.h.b16 %v353
  %v3166 = vunpack.c.l.b16 %v354
  %v3167 = vunpack.c.h.b16 %v354
  %v3168 = vunpack.c.l.b16 %v355
  %v3169 = vunpack.c.h.b16 %v355
  %v3170 = vunpack.c.l.b16 %v356
  %v3171 = vunpack.c.h.b16 %v356
  %v3172 = vunpack.c.l.b16 %v357
  %v3173 = vunpack.c.h.b16 %v357
  %v3174 = vunpack.c.l.b16 %v358
  %v3175 = vunpack.c.h.b16 %v358
  %v3176 = vunpack.c.l.b16 %v359
  %v3177 = vunpack.c.h.b16 %v359
  %v3178 = vunpack.c.l.b16 %v360
  %v3179 = vunpack.c.h.b16 %v360
  %v3180 = vunpack.c.l.b16 %v361
  %v3181 = vunpack.c.h.b16 %v361
  %v3182 = vunpack.c.l.b16 %v362
  %v3183 = vunpack.c.h.b16 %v362
  %v3184 = vunpack.c.l.b16 %v363
  %v3185 = vunpack.c.h.b16 %v363
  %v3186 = vunpack.c.l.b16 %v364
  %v3187 = vunpack.c.h.b16 %v364
  %v3188 = vunpack.c.l.b16 %v365
  %v3189 = vunpack.c.h.b16 %v365
  %v3190 = vunpack.c.l.b16 %v366
  %v3191 = vunpack.c.h.b16 %v366
  %v3192 = vunpack.c.l.b16 %v367
  %v3193 = vunpack.c.h.b16 %v367
  %v3194 = vunpack.c.l.b16 %v368
  %v3195 = vunpack.c.h.b16 %v368
  %v3196 = vunpack.c.l.b16 %v369
  %v3197 = vunpack.c.h.b16 %v369
  %v3198 = vunpack.c.l.b16 %v370
  %v3199 = vunpack.c.h.b16 %v370
  %v3200 = vunpack.c.l.b16 %v371
  %v3201 = vunpack.c.h.b16 %v371
  %v3202 = vunpack.c.l.b16 %v372
  %v3203 = vunpack.c.h.b16 %v372
  %v3204 = vunpack.c.l.b16 %v373
  %v3205 = vunpack.c.h.b16 %v373
  %v3206 = vunpack.c.l.b16 %v374
  %v3207 = vunpack.c.h.b16 %v374
  %v3208 = vunpack.c.l.b16 %v375
  %v3209 = vunpack.c.h.b16 %v375
  %v3210 = vunpack.c.l.b16 %v376
  %v3211 = vunpack.c.h.b16 %v376
  %v3212 = vunpack.c.l.b16 %v377
  %v3213 = vunpack.c.h.b16 %v377
  %v3214 = vunpack.c.l.b16 %v378
  %v3215 = vunpack.c.h.b16 %v378
  %v3216 = vunpack.c.l.b16 %v379
  %v3217 = vunpack.c.h.b16 %v379
  %v3218 = vunpack.c.l.b16 %v380
  %v3219 = vunpack.c.h.b16 %v380
  %v3220 = vunpack.c.l.b16 %v381
  %v3221 = vunpack.c.h.b16 %v381
  %v3222 = vunpack.c.l.b16 %v382
  %v3223 = vunpack.c.h.b16 %v382
  %v3224 = vunpack.c.l.b16 %v383
  %v3225 = vunpack.c.h.b16 %v383
  %v3226 = vunpack.c.l.b16 %v384
  %v3227 = vunpack.c.h.b16 %v384
  %v3228 = vunpack.c.l.b16 %v385
  %v3229 = vunpack.c.h.b16 %v385
  %v3230 = vunpack.c.l.b16 %v386
  %v3231 = vunpack.c.h.b16 %v386
  %v3232 = vunpack.c.l.b16 %v387
  %v3233 = vunpack.c.h.b16 %v387
  %v3234 = vunpack.c.l.b16 %v388
  %v3235 = vunpack.c.h.b16 %v388
  %v3236 = vunpack.c.l.b16 %v389
  %v3237 = vunpack.c.h.b16 %v389
  %v3238 = vunpack.c.l.b16 %v390
  %v3239 = vunpack.c.h.b16 %v390
  %v3240 = vunpack.c.l.b16 %v391
  %v3241 = vunpack.c.h.b16 %v391
  %v3242 = vunpack.c.l.b16 %v392
  %v3243 = vunpack.c.h.b16 %v392
  %v3244 = vunpack.c.l.b16 %v393
  %v3245 = vunpack.c.h.b16 %v393
  %v3246 = vunpack.c.l.b16 %v394
  %v3247 = vunpack.c.h.b16 %v394
  %v3248 = vunpack.c.l.b16 %v395
  %v3249 = vunpack.c.h.b16 %v395
  %v3250 = vunpack.c.l.b16 %v396
  %v3251 = vunpack.c.h.b16 %v396
  %v3252 = vunpack.c.l.b16 %v397
  %v3253 = vunpack.c.h.b16 %v397
  %v3254 = vunpack.c.l.b16 %v398
  %v3255 = vunpack.c.h.b16 %v398
  %v3256 = vunpack.c.l.b16 %v399
  %v3257 = vunpack.c.h.b16 %v399
  %v3258 = vunpack.c.l.b16 %v400
  %v3259 = vunpack.c.h.b16 %v400
  %v3260 = vunpack.c.l.b16 %v401
  %v3261 = vunpack.c.h.b16 %v401
  %v3262 = vunpack.c.l.b16 %v402
  %v3263 = vunpack.c.h.b16 %v402
  %v3264 = vunpack.c.l.b16 %v403
  %v3265 = vunpack.c.h.b16 %v403
  %v3266 = vunpack.c.l.b16 %v404
  %v3267 = vunpack.c.h.b16 %v404
  %v3268 = vunpack.c.l.b16 %v405
  %v3269 = vunpack.c.h.b16 %v405
  %v3270 = vunpack.c.l.b16 %v406
  %v3271 = vunpack.c.h.b16 %v406
  %v3272 = vunpack.c.l.b16 %v407
  %v3273 = vunpack.c.h.b16 %v407
  %v3274 = vunpack.c.l.b16 %v408
  %v3275 = vunpack.c.h.b16 %v408
  %v3276 = vunpack.c.l.b16 %v409
  %v3277 = vunpack.c.h.b16 %v409
  %v3278 = vunpack.c.l.b16 %v410
  %v3279 = vunpack.c.h.b16 %v410
  %v3280 = vunpack.c.l.b16 %v411
  %v3281 = vunpack.c.h.b16 %v411
  %v3282 = vunpack.c.l.b16 %v412
  %v3283 = vunpack.c.h.b16 %v412
  %v3284 = vunpack.c.l.b16 %v413
  %v3285 = vunpack.c.h.b16 %v413
  %v3286 = vunpack.c.l.b16 %v414
  %v3287 = vunpack.c.h.b16 %v414
  %v3288 = vunpack.c.l.b16 %v415
  %v3289 = vunpack.c.h.b16 %v415
  %v3290 = vunpack.c.l.b16 %v416
  %v3291 = vunpack.c.h.b16 %v416
  %v3292 = vunpack.c.l.b16 %v417
  %v3293 = vunpack.c.h.b16 %v417
  %v3294 = vunpack.c.l.b16 %v418
  %v3295 = vunpack.c.h.b16 %v418
  %v3296 = vunpack.c.l.b16 %v419
  %v3297 = vunpack.c.h.b16 %v419
  %v3298 = vunpack.c.l.b16 %v420
  %v3299 = vunpack.c.h.b16 %v420
  %v3300 = vunpack.c.l.b16 %v421
  %v3301 = vunpack.c.h.b16 %v421
  %v3302 = vunpack.c.l.b16 %v422
  %v3303 = vunpack.c.h.b16 %v422
  %v3304 = vunpack.c.l.b16 %v423
  %v3305 = vunpack.c.h.b16 %v423
  %v3306 = vunpack.c.l.b16 %v424
  %v3307 = vunpack.c.h.b16 %v424
  %v3308 = vunpack.c.l.b16 %v425
  %v3309 = vunpack.c.h.b16 %v425
  %v3310 = vunpack.c.l.b16 %v426
  %v3311 = vunpack.c.h.b16 %v426
  %v3312 = vunpack.c.l.b16 %v427
  %v3313 = vunpack.c.h.b16 %v427
  %v3314 = vunpack.c.l.b16 %v428
  %v3315 = vunpack.c.h.b16 %v428
  %v3316 = vunpack.c.l.b16 %v429
  %v3317 = vunpack.c.h.b16 %v429
  %v3318 = vunpack.c.l.b16 %v430
  %v3319 = vunpack.c.h.b16 %v430
  %v3320 = vunpack.c.l.b16 %v431
  %v3321 = vunpack.c.h.b16 %v431
  %v3322 = vunpack.c.l.b16 %v432
  %v3323 = vunpack.c.h.b16 %v432
  %v3324 = vunpack.c.l.b16 %v433
  %v3325 = vunpack.c.h.b16 %v433
  %v3326 = vunpack.c.l.b16 %v434
  %v3327 = vunpack.c.h.b16 %v434
  %v3328 = vunpack.c.l.b16 %v435
  %v3329 = vunpack.c.h.b16 %v435
  %v3330 = vunpack.c.l.b16 %v436
  %v3331 = vunpack.c.h.b16 %v436
  %v3332 = vunpack.c.l.b16 %v437
  %v3333 = vunpack.c.h.b16 %v437
  %v3334 = vunpack.c.l.b16 %v438
  %v3335 = vunpack.c.h.b16 %v438
  %v3336 = vunpack.c.l.b16 %v439
  %v3337 = vunpack.c.h.b16 %v439
  %v3338 = vunpack.c.l.b16 %v440
  %v3339 = vunpack.c.h.b16 %v440
  %v3340 = vunpack.c.l.b16 %v441
  %v3341 = vunpack.c.h.b16 %v441
  %v3342 = vunpack.c.l.b16 %v442
  %v3343 = vunpack.c.h.b16 %v442
  %v3344 = vunpack.c.l.b16 %v443
  %v3345 = vunpack.c.h.b16 %v443
  %v3346 = vunpack.c.l.b16 %v444
  %v3347 = vunpack.c.h.b16 %v444
  %v3348 = vunpack.c.l.b16 %v445
  %v3349 = vunpack.c.h.b16 %v445
  %v3350 = vunpack.c.l.b16 %v446
  %v3351 = vunpack.c.h.b16 %v446
  %v3352 = vunpack.c.l.b16 %v447
  %v3353 = vunpack.c.h.b16 %v447
  %v3354 = vunpack.c.l.b16 %v448
  %v3355 = vunpack.c.h.b16 %v448
  %v3356 = vunpack.c.l.b16 %v449
  %v3357 = vunpack.c.h.b16 %v449
  %v3358 = vunpack.c.l.b16 %v450
  %v3359 = vunpack.c.h.b16 %v450
  %v3360 = vunpack.c.l.b16 %v451
  %v3361 = vunpack.c.h.b16 %v451
  %v3362 = vunpack.c.l.b16 %v452
  %v3363 = vunpack.c.h.b16 %v452
  %v3364 = vunpack.c.l.b16 %v453
  %v3365 = vunpack.c.h.b16 %v453
  %v3366 = vunpack.c.l.b16 %v454
  %v3367 = vunpack.c.h.b16 %v454
  %v3368 = vunpack.c.l.b16 %v455
  %v3369 = vunpack.c.h.b16 %v455
  %v3370 = vunpack.c.l.b16 %v456
  %v3371 = vunpack.c.h.b16 %v456
  %v3372 = vunpack.c.l.b16 %v457
  %v3373 = vunpack.c.h.b16 %v457
  %v3374 = vunpack.c.l.b16 %v458
  %v3375 = vunpack.c.h.b16 %v458
  %v3376 = vunpack.c.l.b16 %v459
  %v3377 = vunpack.c.h.b16 %v459
  %v3378 = vunpack.c.l.b16 %v460
  %v3379 = vunpack.c.h.b16 %v460
  %v3380 = vunpack.c.l.b16 %v461
  %v3381 = vunpack.c.h.b16 %v461
  %v3382 = vunpack.c.l.b16 %v462
  %v3383 = vunpack.c.h.b16 %v462
  %v3384 = vunpack.c.l.b16 %v463
  %v3385 = vunpack.c.h.b16 %v463
  %v3386 = vunpack.c.l.b16 %v464
  %v3387 = vunpack.c.h.b16 %v464
  %v3388 = vunpack.c.l.b16 %v465
  %v3389 = vunpack.c.h.b16 %v465
  %v3390 = vunpack.c.l.b16 %v466
  %v3391 = vunpack.c.h.b16 %v466
  %v3392 = vunpack.c.l.b16 %v467
  %v3393 = vunpack.c.h.b16 %v467
  %v3394 = vunpack.c.l.b16 %v468
  %v3395 = vunpack.c.h.b16 %v468
  %v3396 = vunpack.c.l.b16 %v469
  %v3397 = vunpack.c.h.b16 %v469
  %v3398 = vunpack.c.l.b16 %v470
  %v3399 = vunpack.c.h.b16 %v470
  %v3400 = vunpack.c.l.b16 %v471
  %v3401 = vunpack.c.h.b16 %v471
  %v3402 = vunpack.c.l.b16 %v472
  %v3403 = vunpack.c.h.b16 %v472
  %v3404 = vunpack.c.l.b16 %v473
  %v3405 = vunpack.c.h.b16 %v473
  %v3406 = vunpack.c.l.b16 %v474
  %v3407 = vunpack.c.h.b16 %v474
  %v3408 = vunpack.c.l.b16 %v475
  %v3409 = vunpack.c.h.b16 %v475
  %v3410 = vunpack.c.l.b16 %v476
  %v3411 = vunpack.c.h.b16 %v476
  %v3412 = vunpack.c.l.b16 %v477
  %v3413 = vunpack.c.h.b16 %v477
  %v3414 = vunpack.c.l.b16 %v478
  %v3415 = vunpack.c.h.b16 %v478
  %v3416 = vunpack.c.l.b16 %v479
  %v3417 = vunpack.c.h.b16 %v479
  %v3418 = vunpack.c.l.b16 %v480
  %v3419 = vunpack.c.h.b16 %v480
  %v3420 = vunpack.c.l.b16 %v481
  %v3421 = vunpack.c.h.b16 %v481
  %v3422 = vunpack.c.l.b16 %v482
  %v3423 = vunpack.c.h.b16 %v482
  %v3424 = vunpack.c.l.b16 %v483
  %v3425 = vunpack.c.h.b16 %v483
  %v3426 = vunpack.c.l.b16 %v484
  %v3427 = vunpack.c.h.b16 %v484
  %v3428 = vunpack.c.l.b16 %v485
  %v3429 = vunpack.c.h.b16 %v485
  %v3430 = vunpack.c.l.b16 %v486
  %v3431 = vunpack.c.h.b16 %v486
  %v3432 = vunpack.c.l.b16 %v487
  %v3433 = vunpack.c.h.b16 %v487
  %v3434 = vunpack.c.l.b16 %v488
  %v3435 = vunpack.c.h.b16 %v488
  %v3436 = vunpack.c.l.b16 %v489
  %v3437 = vunpack.c.h.b16 %v489
  %v3438 = vunpack.c.l.b16 %v490
  %v3439 = vunpack.c.h.b16 %v490
  %v3440 = vunpack.c.l.b16 %v491
  %v3441 = vunpack.c.h.b16 %v491
  %v3442 = vunpack.c.l.b16 %v492
  %v3443 = vunpack.c.h.b16 %v492
  %v3444 = vunpack.c.l.b16 %v493
  %v3445 = vunpack.c.h.b16 %v493
  %v3446 = vunpack.c.l.b16 %v494
  %v3447 = vunpack.c.h.b16 %v494
  %v3448 = vunpack.c.l.b16 %v495
  %v3449 = vunpack.c.h.b16 %v495
  %v3450 = vunpack.c.l.b16 %v496
  %v3451 = vunpack.c.h.b16 %v496
  %v3452 = vunpack.c.l.b16 %v497
  %v3453 = vunpack.c.h.b16 %v497
  %v3454 = vunpack.c.l.b16 %v498
  %v3455 = vunpack.c.h.b16 %v498
  %v3456 = vunpack.c.l.b16 %v499
  %v3457 = vunpack.c.h.b16 %v499
  %v3458 = vunpack.c.l.b16 %v500
  %v3459 = vunpack.c.h.b16 %v500
  %v3460 = vunpack.c.l.b16 %v501
  %v3461 = vunpack.c.h.b16 %v501
  %v3462 = vunpack.c.l.b16 %v502
  %v3463 = vunpack.c.h.b16 %v502
  %v3464 = vunpack.c.l.b16 %v503
  %v3465 = vunpack.c.h.b16 %v503
  %v3466 = vunpack.c.l.b16 %v504
  %v3467 = vunpack.c.h.b16 %v504
  %v3468 = vunpack.c.l.b16 %v505
  %v3469 = vunpack.c.h.b16 %v505
  %v3470 = vunpack.c.l.b16 %v506
  %v3471 = vunpack.c.h.b16 %v506
  %v3472 = vunpack.c.l.b16 %v507
  %v3473 = vunpack.c.h.b16 %v507
  %v3474 = vunpack.c.l.b16 %v508
  %v3475 = vunpack.c.h.b16 %v508
  %v3476 = vunpack.c.l.b16 %v509
  %v3477 = vunpack.c.h.b16 %v509
  %v3478 = vunpack.c.l.b16 %v510
  %v3479 = vunpack.c.h.b16 %v510
  %v3480 = vunpack.c.l.b16 %v511
  %v3481 = vunpack.c.h.b16 %v511
  %v3482 = vunpack.c.l.b16 %v512
  %v3483 = vunpack.c.h.b16 %v512
  %v3484 = vunpack.c.l.b16 %v513
  %v3485 = vunpack.c.h.b16 %v513
  %v3486 = vunpack.c.l.b16 %v514
  %v3487 = vunpack.c.h.b16 %v514
  %v3488 = vunpack.c.l.b16 %v515
  %v3489 = vunpack.c.h.b16 %v515
  %v3490 = vunpack.c.l.b16 %v516
  %v3491 = vunpack.c.h.b16 %v516
  %v3492 = vunpack.c.l.b16 %v517
  %v3493 = vunpack.c.h.b16 %v517
  %v3494 = vunpack.c.l.b16 %v518
  %v3495 = vunpack.c.h.b16 %v518
  %v3496 = vunpack.c.l.b16 %v519
  %v3497 = vunpack.c.h.b16 %v519
  %v3498 = vunpack.c.l.b16 %v520
  %v3499 = vunpack.c.h.b16 %v520
  %v3500 = vunpack.c.l.b16 %v521
  %v3501 = vunpack.c.h.b16 %v521
  %v3502 = vunpack.c.l.b16 %v522
  %v3503 = vunpack.c.h.b16 %v522
  %v3504 = vunpack.c.l.b16 %v523
  %v3505 = vunpack.c.h.b16 %v523
  %v3506 = vunpack.c.l.b16 %v524
  %v3507 = vunpack.c.h.b16 %v524
  %v3508 = vunpack.c.l.b16 %v525
  %v3509 = vunpack.c.h.b16 %v525
  %v3510 = vunpack.c.l.b16 %v526
  %v3511 = vunpack.c.h.b16 %v526
  %v3512 = vunpack.c.l.b16 %v527
  %v3513 = vunpack.c.h.b16 %v527
  %v3514 = vunpack.c.l.b16 %v528
  %v3515 = vunpack.c.h.b16 %v528
  %v3516 = vunpack.c.l.b16 %v529
  %v3517 = vunpack.c.h.b16 %v529
  %v3518 = vunpack.c.l.b16 %v530
  %v3519 = vunpack.c.h.b16 %v530
  %v3520 = vunpack.c.l.b16 %v531
  %v3521 = vunpack.c.h.b16 %v531
  %v3522 = vunpack.c.l.b16 %v532
  %v3523 = vunpack.c.h.b16 %v532
  %v3524 = vunpack.c.l.b16 %v533
  %v3525 = vunpack.c.h.b16 %v533
  %v3526 = vunpack.c.l.b16 %v534
  %v3527 = vunpack.c.h.b16 %v534
  %v3528 = vunpack.c.l.b16 %v535
  %v3529 = vunpack.c.h.b16 %v535
  %v3530 = vunpack.c.l.b16 %v536
  %v3531 = vunpack.c.h.b16 %v536
  %v3532 = vunpack.c.l.b16 %v537
  %v3533 = vunpack.c.h.b16 %v537
  %v3534 = vunpack.c.l.b16 %v538
  %v3535 = vunpack.c.h.b16 %v538
  %v3536 = vunpack.c.l.b16 %v539
  %v3537 = vunpack.c.h.b16 %v539
  %v3538 = vunpack.c.l.b16 %v540
  %v3539 = vunpack.c.h.b16 %v540
  %v3540 = vunpack.c.l.b16 %v541
  %v3541 = vunpack.c.h.b16 %v541
  %v3542 = vunpack.c.l.b16 %v542
  %v3543 = vunpack.c.h.b16 %v542
  %v3544 = vunpack.c.l.b16 %v543
  %v3545 = vunpack.c.h.b16 %v543
  %v3546 = vunpack.c.l.b16 %v544
  %v3547 = vunpack.c.h.b16 %v544
  %v3548 = vunpack.c.l.b16 %v545
  %v3549 = vunpack.c.h.b16 %v545
  %v3550 = vunpack.c.l.b16 %v546
  %v3551 = vunpack.c.h.b16 %v546
  %v3552 = vunpack.c.l.b16 %v547
  %v3553 = vunpack.c.h.b16 %v547
  %v3554 = vunpack.c.l.b16 %v548
  %v3555 = vunpack.c.h.b16 %v548
  %v3556 = vunpack.c.l.b16 %v549
  %v3557 = vunpack.c.h.b16 %v549
  %v3558 = vunpack.c.l.b16 %v550
  %v3559 = vunpack.c.h.b16 %v550
  %v3560 = vunpack.c.l.b16 %v551
  %v3561 = vunpack.c.h.b16 %v551
  %v3562 = vunpack.c.l.b16 %v552
  %v3563 = vunpack.c.h.b16 %v552
  %v3564 = vunpack.c.l.b16 %v553
  %v3565 = vunpack.c.h.b16 %v553
  %v3566 = vunpack.c.l.b16 %v554
  %v3567 = vunpack.c.h.b16 %v554
  %v3568 = vunpack.c.l.b16 %v555
  %v3569 = vunpack.c.h.b16 %v555
  %v3570 = vunpack.c.l.b16 %v556
  %v3571 = vunpack.c.h.b16 %v556
  %v3572 = vunpack.c.l.b16 %v557
  %v3573 = vunpack.c.h.b16 %v557
  %v3574 = vunpack.c.l.b16 %v558
  %v3575 = vunpack.c.h.b16 %v558
  %v3576 = vunpack.c.l.b16 %v559
  %v3577 = vunpack.c.h.b16 %v559
  %v3578 = vunpack.c.l.b16 %v560
  %v3579 = vunpack.c.h.b16 %v560
  %v3580 = vunpack.c.l.b16 %v561
  %v3581 = vunpack.c.h.b16 %v561
  %v3582 = vunpack.c.l.b16 %v562
  %v3583 = vunpack.c.h.b16 %v562
  %v3584 = vunpack.c.l.b16 %v563
  %v3585 = vunpack.c.h.b16 %v563
  %v3586 = vunpack.c.l.b16 %v564
  %v3587 = vunpack.c.h.b16 %v564
  %v3588 = vunpack.c.l.b16 %v565
  %v3589 = vunpack.c.h.b16 %v565
  %v3590 = vunpack.c.l.b16 %v566
  %v3591 = vunpack.c.h.b16 %v566
  %v3592 = vunpack.c.l.b16 %v567
  %v3593 = vunpack.c.h.b16 %v567
  %v3594 = vunpack.c.l.b16 %v568
  %v3595 = vunpack.c.h.b16 %v568
  %v3596 = vunpack.c.l.b16 %v569
  %v3597 = vunpack.c.h.b16 %v569
  %v3598 = vunpack.c.l.b16 %v570
  %v3599 = vunpack.c.h.b16 %v570
  %v3600 = vunpack.c.l.b16 %v571
  %v3601 = vunpack.c.h.b16 %v571
  %v3602 = vunpack.c.l.b16 %v572
  %v3603 = vunpack.c.h.b16 %v572
  %v3604 = vunpack.c.l.b16 %v573
  %v3605 = vunpack.c.h.b16 %v573
  %v3606 = vunpack.c.l.b16 %v574
  %v3607 = vunpack.c.h.b16 %v574
  %v3608 = vunpack.c.l.b16 %v575
  %v3609 = vunpack.c.h.b16 %v575
  %v3610 = vunpack.c.l.b16 %v576
  %v3611 = vunpack.c.h.b16 %v576
  %v3612 = vunpack.c.l.b16 %v577
  %v3613 = vunpack.c.h.b16 %v577
  %v3614 = vunpack.c.l.b16 %v578
  %v3615 = vunpack.c.h.b16 %v578
  %v3616 = vunpack.c.l.b16 %v579
  %v3617 = vunpack.c.h.b16 %v579
  %v3618 = vunpack.c.l.b16 %v580
  %v3619 = vunpack.c.h.b16 %v580
  %v3620 = vunpack.c.l.b16 %v581
  %v3621 = vunpack.c.h.b16 %v581
  %v3622 = vunpack.c.l.b16 %v582
  %v3623 = vunpack.c.h.b16 %v582
  %v3624 = vunpack.c.l.b16 %v583
  %v3625 = vunpack.c.h.b16 %v583
  %v3626 = vunpack.c.l.b16 %v584
  %v3627 = vunpack.c.h.b16 %v584
  %v3628 = vunpack.c.l.b16 %v585
  %v3629 = vunpack.c.h.b16 %v585
  %v3630 = vunpack.c.l.b16 %v586
  %v3631 = vunpack.c.h.b16 %v586
  %v3632 = vunpack.c.l.b16 %v587
  %v3633 = vunpack.c.h.b16 %v587
  %v3634 = vunpack.c.l.b16 %v588
  %v3635 = vunpack.c.h.b16 %v588
  %v3636 = vunpack.c.l.b16 %v589
  %v3637 = vunpack.c.h.b16 %v589
  %v3638 = vunpack.c.l.b16 %v590
  %v3639 = vunpack.c.h.b16 %v590
  %v3640 = vunpack.c.l.b16 %v591
  %v3641 = vunpack.c.h.b16 %v591
  %v3642 = vunpack.c.l.b16 %v592
  %v3643 = vunpack.c.h.b16 %v592
  %v3644 = vunpack.c.l.b16 %v593
  %v3645 = vunpack.c.h.b16 %v593
  %v3646 = vunpack.c.l.b16 %v594
  %v3647 = vunpack.c.h.b16 %v594
  %v3648 = vunpack.c.l.b16 %v595
  %v3649 = vunpack.c.h.b16 %v595
  %v3650 = vunpack.c.l.b16 %v596
  %v3651 = vunpack.c.h.b16 %v596
  %v3652 = vunpack.c.l.b16 %v597
  %v3653 = vunpack.c.h.b16 %v597
  %v3654 = vunpack.c.l.b16 %v598
  %v3655 = vunpack.c.h.b16 %v598
  %v3656 = vunpack.c.l.b16 %v599
  %v3657 = vunpack.c.h.b16 %v599
  %v3658 = vunpack.c.l.b16 %v600
  %v3659 = vunpack.c.h.b16 %v600
  %v3660 = vunpack.c.l.b16 %v601
  %v3661 = vunpack.c.h.b16 %v601
  %v3662 = vunpack.c.l.b16 %v602
  %v3663 = vunpack.c.h.b16 %v602
  %v3664 = vunpack.c.l.b16 %v603
  %v3665 = vunpack.c.h.b16 %v603
  %v3666 = vunpack.c.l.b16 %v604
  %v3667 = vunpack.c.h.b16 %v604
  %v3668 = vunpack.c.l.b16 %v605
  %v3669 = vunpack.c.h.b16 %v605
  %v3670 = vunpack.c.l.b16 %v606
  %v3671 = vunpack.c.h.b16 %v606
  %v3672 = vunpack.c.l.b16 %v607
  %v3673 = vunpack.c.h.b16 %v607
  %v3674 = vunpack.c.l.b16 %v608
  %v3675 = vunpack.c.h.b16 %v608
  %v3676 = vunpack.c.l.b16 %v609
  %v3677 = vunpack.c.h.b16 %v609
  %v3678 = vunpack.c.l.b16 %v610
  %v3679 = vunpack.c.h.b16 %v610
  %v3680 = vunpack.c.l.b16 %v611
  %v3681 = vunpack.c.h.b16 %v611
  %v3682 = vunpack.c.l.b16 %v612
  %v3683 = vunpack.c.h.b16 %v612
  %v3684 = vunpack.c.l.b16 %v613
  %v3685 = vunpack.c.h.b16 %v613
  %v3686 = vunpack.c.l.b16 %v614
  %v3687 = vunpack.c.h.b16 %v614
  %v3688 = vunpack.c.l.b16 %v615
  %v3689 = vunpack.c.h.b16 %v615
  %v3690 = vunpack.c.l.b16 %v616
  %v3691 = vunpack.c.h.b16 %v616
  %v3692 = vunpack.c.l.b16 %v617
  %v3693 = vunpack.c.h.b16 %v617
  %v3694 = vunpack.c.l.b16 %v618
  %v3695 = vunpack.c.h.b16 %v618
  %v3696 = vunpack.c.l.b16 %v619
  %v3697 = vunpack.c.h.b16 %v619
  %v3698 = vunpack.c.l.b16 %v620
  %v3699 = vunpack.c.h.b16 %v620
  %v3700 = vunpack.c.l.b16 %v621
  %v3701 = vunpack.c.h.b16 %v621
  %v3702 = vunpack.c.l.b16 %v622
  %v3703 = vunpack.c.h.b16 %v622
  %v3704 = vunpack.c.l.b16 %v623
  %v3705 = vunpack.c.h.b16 %v623
  %v3706 = vunpack.c.l.b16 %v624
  %v3707 = vunpack.c.h.b16 %v624
  %v3708 = vunpack.c.l.b16 %v625
  %v3709 = vunpack.c.h.b16 %v625
  %v3710 = vunpack.c.l.b16 %v626
  %v3711 = vunpack.c.h.b16 %v626
  %v3712 = vunpack.c.l.b16 %v627
  %v3713 = vunpack.c.h.b16 %v627
  %v3714 = vunpack.c.l.b16 %v628
  %v3715 = vunpack.c.h.b16 %v628
  %v3716 = vunpack.c.l.b16 %v629
  %v3717 = vunpack.c.h.b16 %v629
  %v3718 = vunpack.c.l.b16 %v630
  %v3719 = vunpack.c.h.b16 %v630
  %v3720 = vunpack.c.l.b16 %v631
  %v3721 = vunpack.c.h.b16 %v631
  %v3722 = vunpack.c.l.b16 %v632
  %v3723 = vunpack.c.h.b16 %v632
  %v3724 = vunpack.c.l.b16 %v633
  %v3725 = vunpack.c.h.b16 %v633
  %v3726 = vunpack.c.l.b16 %v634
  %v3727 = vunpack.c.h.b16 %v634
  %v3728 = vunpack.c.l.b16 %v635
  %v3729 = vunpack.c.h.b16 %v635
  %v3730 = vunpack.c.l.b16 %v636
  %v3731 = vunpack.c.h.b16 %v636
  %v3732 = vunpack.c.l.b16 %v637
  %v3733 = vunpack.c.h.b16 %v637
  %v3734 = vunpack.c.l.b16 %v638
  %v3735 = vunpack.c.h.b16 %v638
  %v3736 = vunpack.c.l.b16 %v639
  %v3737 = vunpack.c.h.b16 %v639
  %v3738 = vunpack.c.l.b16 %v640
  %v3739 = vunpack.c.h.b16 %v640
  %v3740 = vunpack.c.l.b16 %v641
  %v3741 = vunpack.c.h.b16 %v641
  %v3742 = vunpack.c.l.b16 %v642
  %v3743 = vunpack.c.h.b16 %v642
  %v3744 = vunpack.c.l.b16 %v643
  %v3745 = vunpack.c.h.b16 %v643
  %v3746 = vunpack.c.l.b16 %v644
  %v3747 = vunpack.c.h.b16 %v644
  %v3748 = vunpack.c.l.b16 %v645
  %v3749 = vunpack.c.h.b16 %v645
  %v3750 = vunpack.c.l.b16 %v646
  %v3751 = vunpack.c.h.b16 %v646
  %v3752 = vunpack.c.l.b16 %v647
  %v3753 = vunpack.c.h.b16 %v647
  %v3754 = vunpack.c.l.b16 %v648
  %v3755 = vunpack.c.h.b16 %v648
  %v3756 = vunpack.c.l.b16 %v649
  %v3757 = vunpack.c.h.b16 %v649
  %v3758 = vunpack.c.l.b16 %v650
  %v3759 = vunpack.c.h.b16 %v650
  %v3760 = vunpack.c.l.b16 %v651
  %v3761 = vunpack.c.h.b16 %v651
  %v3762 = vunpack.c.l.b16 %v652
  %v3763 = vunpack.c.h.b16 %v652
  %v3764 = vunpack.c.l.b16 %v653
  %v3765 = vunpack.c.h.b16 %v653
  %v3766 = vunpack.c.l.b16 %v654
  %v3767 = vunpack.c.h.b16 %v654
  %v3768 = vunpack.c.l.b16 %v655
  %v3769 = vunpack.c.h.b16 %v655
  %v3770 = vunpack.c.l.b16 %v656
  %v3771 = vunpack.c.h.b16 %v656
  %v3772 = vunpack.c.l.b16 %v657
  %v3773 = vunpack.c.h.b16 %v657
  %v3774 = vunpack.c.l.b16 %v658
  %v3775 = vunpack.c.h.b16 %v658
  %v3776 = vunpack.c.l.b16 %v659
  %v3777 = vunpack.c.h.b16 %v659
  %v3778 = vunpack.c.l.b16 %v660
  %v3779 = vunpack.c.h.b16 %v660
  %v3780 = vunpack.c.l.b16 %v661
  %v3781 = vunpack.c.h.b16 %v661
  %v3782 = vunpack.c.l.b16 %v662
  %v3783 = vunpack.c.h.b16 %v662
  %v3784 = vunpack.c.l.b16 %v663
  %v3785 = vunpack.c.h.b16 %v663
  %v3786 = vunpack.c.l.b16 %v664
  %v3787 = vunpack.c.h.b16 %v664
  %v3788 = vunpack.c.l.b16 %v665
  %v3789 = vunpack.c.h.b16 %v665
  %v3790 = vunpack.c.l.b16 %v666
  %v3791 = vunpack.c.h.b16 %v666
  %v3792 = vunpack.c.l.b16 %v667
  %v3793 = vunpack.c.h.b16 %v667
  %v3794 = vunpack.c.l.b16 %v668
  %v3795 = vunpack.c.h.b16 %v668
  %v3796 = vunpack.c.l.b16 %v669
  %v3797 = vunpack.c.h.b16 %v669
  %v3798 = vunpack.c.l.b16 %v670
  %v3799 = vunpack.c.h.b16 %v670
  %v3800 = vunpack.c.l.b16 %v671
  %v3801 = vunpack.c.h.b16 %v671
  %v3802 = vunpack.c.l.b16 %v672
  %v3803 = vunpack.c.h.b16 %v672
  %v3804 = vunpack.c.l.b16 %v673
  %v3805 = vunpack.c.h.b16 %v673
  %v3806 = vunpack.c.l.b16 %v674
  %v3807 = vunpack.c.h.b16 %v674
  %v3808 = vunpack.c.l.b16 %v675
  %v3809 = vunpack.c.h.b16 %v675
  %v3810 = vunpack.c.l.b16 %v676
  %v3811 = vunpack.c.h.b16 %v676
  %v3812 = vunpack.c.l.b16 %v677
  %v3813 = vunpack.c.h.b16 %v677
  %v3814 = vunpack.c.l.b16 %v678
  %v3815 = vunpack.c.h.b16 %v678
  %v3816 = vunpack.c.l.b16 %v679
  %v3817 = vunpack.c.h.b16 %v679
  %v3818 = vunpack.c.l.b16 %v680
  %v3819 = vunpack.c.h.b16 %v680
  %v3820 = vunpack.c.l.b16 %v681
  %v3821 = vunpack.c.h.b16 %v681
  %v3822 = vunpack.c.l.b16 %v682
  %v3823 = vunpack.c.h.b16 %v682
  %v3824 = vunpack.c.l.b16 %v683
  %v3825 = vunpack.c.h.b16 %v683
  %v3826 = vunpack.c.l.b16 %v684
  %v3827 = vunpack.c.h.b16 %v684
  %v3828 = vunpack.c.l.b16 %v685
  %v3829 = vunpack.c.h.b16 %v685
  %v3830 = vunpack.c.l.b16 %v686
  %v3831 = vunpack.c.h.b16 %v686
  %v3832 = vunpack.c.l.b16 %v687
  %v3833 = vunpack.c.h.b16 %v687
  %v3834 = vunpack.c.l.b16 %v688
  %v3835 = vunpack.c.h.b16 %v688
  %v3836 = vunpack.c.l.b16 %v689
  %v3837 = vunpack.c.h.b16 %v689
  %v3838 = vunpack.c.l.b16 %v690
  %v3839 = vunpack.c.h.b16 %v690
  %v3840 = vunpack.c.l.b16 %v691
  %v3841 = vunpack.c.h.b16 %v691
  %v3842 = vunpack.c.l.b16 %v692
  %v3843 = vunpack.c.h.b16 %v692
  %v3844 = vunpack.c.l.b16 %v693
  %v3845 = vunpack.c.h.b16 %v693
  %v3846 = vunpack.c.l.b16 %v694
  %v3847 = vunpack.c.h.b16 %v694
  %v3848 = vunpack.c.l.b16 %v695
  %v3849 = vunpack.c.h.b16 %v695
  %v3850 = vunpack.c.l.b16 %v696
  %v3851 = vunpack.c.h.b16 %v696
  %v3852 = vunpack.c.l.b16 %v697
  %v3853 = vunpack.c.h.b16 %v697
  %v3854 = vunpack.c.l.b16 %v698
  %v3855 = vunpack.c.h.b16 %v698
  %v3856 = vunpack.c.l.b16 %v699
  %v3857 = vunpack.c.h.b16 %v699
  %v3858 = vunpack.c.l.b16 %v700
  %v3859 = vunpack.c.h.b16 %v700
  %v3860 = vunpack.c.l.b16 %v701
  %v3861 = vunpack.c.h.b16 %v701
  %v3862 = vunpack.c.l.b16 %v702
  %v3863 = vunpack.c.h.b16 %v702
  %v3864 = vunpack.c.l.b16 %v703
  %v3865 = vunpack.c.h.b16 %v703
  %v3866 = vunpack.c.l.b16 %v704
  %v3867 = vunpack.c.h.b16 %v704
  %v3868 = vunpack.c.l.b16 %v705
  %v3869 = vunpack.c.h.b16 %v705
  %v3870 = vunpack.c.l.b16 %v706
  %v3871 = vunpack.c.h.b16 %v706
  %v3872 = vunpack.c.l.b16 %v707
  %v3873 = vunpack.c.h.b16 %v707
  %v3874 = vunpack.c.l.b16 %v708
  %v3875 = vunpack.c.h.b16 %v708
  %v3876 = vunpack.c.l.b16 %v709
  %v3877 = vunpack.c.h.b16 %v709
  %v3878 = vunpack.c.l.b16 %v710
  %v3879 = vunpack.c.h.b16 %v710
  %v3880 = vunpack.c.l.b16 %v711
  %v3881 = vunpack.c.h.b16 %v711
  %v3882 = vunpack.c.l.b16 %v712
  %v3883 = vunpack.c.h.b16 %v712
  %v3884 = vunpack.c.l.b16 %v713
  %v3885 = vunpack.c.h.b16 %v713
  %v3886 = vunpack.c.l.b16 %v714
  %v3887 = vunpack.c.h.b16 %v714
  %v3888 = vunpack.c.l.b16 %v715
  %v3889 = vunpack.c.h.b16 %v715
  %v3890 = vunpack.c.l.b16 %v716
  %v3891 = vunpack.c.h.b16 %v716
  %v3892 = vunpack.c.l.b16 %v717
  %v3893 = vunpack.c.h.b16 %v717
  %v3894 = vunpack.c.l.b16 %v718
  %v3895 = vunpack.c.h.b16 %v718
  %v3896 = vunpack.c.l.b16 %v719
  %v3897 = vunpack.c.h.b16 %v719
  %v3898 = vunpack.c.l.b16 %v720
  %v3899 = vunpack.c.h.b16 %v720
  %v3900 = vunpack.c.l.b16 %v721
  %v3901 = vunpack.c.h.b16 %v721
  %v3902 = vunpack.c.l.b16 %v722
  %v3903 = vunpack.c.h.b16 %v722
  %v3904 = vunpack.c.l.b16 %v723
  %v3905 = vunpack.c.h.b16 %v723
  %v3906 = vunpack.c.l.b16 %v724
  %v3907 = vunpack.c.h.b16 %v724
  %v3908 = vunpack.c.l.b16 %v725
  %v3909 = vunpack.c.h.b16 %v725
  %v3910 = vunpack.c.l.b16 %v726
  %v3911 = vunpack.c.h.b16 %v726
  %v3912 = vunpack.c.l.b16 %v727
  %v3913 = vunpack.c.h.b16 %v727
  %v3914 = vunpack.c.l.b16 %v728
  %v3915 = vunpack.c.h.b16 %v728
  %v3916 = vunpack.c.l.b16 %v729
  %v3917 = vunpack.c.h.b16 %v729
  %v3918 = vunpack.c.l.b16 %v730
  %v3919 = vunpack.c.h.b16 %v730
  %v3920 = vunpack.c.l.b16 %v731
  %v3921 = vunpack.c.h.b16 %v731
  %v3922 = vunpack.c.l.b16 %v732
  %v3923 = vunpack.c.h.b16 %v732
  %v3924 = vunpack.c.l.b16 %v733
  %v3925 = vunpack.c.h.b16 %v733
  %v3926 = vunpack.c.l.b16 %v734
  %v3927 = vunpack.c.h.b16 %v734
  %v3928 = vunpack.c.l.b16 %v735
  %v3929 = vunpack.c.h.b16 %v735
  %v3930 = vunpack.c.l.b16 %v736
  %v3931 = vunpack.c.h.b16 %v736
  %v3932 = vunpack.c.l.b16 %v737
  %v3933 = vunpack.c.h.b16 %v737
  %v3934 = vunpack.c.l.b16 %v738
  %v3935 = vunpack.c.h.b16 %v738
  %v3936 = vunpack.c.l.b16 %v739
  %v3937 = vunpack.c.h.b16 %v739
  %v3938 = vunpack.c.l.b16 %v740
  %v3939 = vunpack.c.h.b16 %v740
  %v3940 = vunpack.c.l.b16 %v741
  %v3941 = vunpack.c.h.b16 %v741
  %v3942 = vunpack.c.l.b16 %v742
  %v3943 = vunpack.c.h.b16 %v742
  %v3944 = vunpack.c.l.b16 %v743
  %v3945 = vunpack.c.h.b16 %v743
  %v3946 = vunpack.c.l.b16 %v744
  %v3947 = vunpack.c.h.b16 %v744
  %v3948 = vunpack.c.l.b16 %v745
  %v3949 = vunpack.c.h.b16 %v745
  %v3950 = vunpack.c.l.b16 %v746
  %v3951 = vunpack.c.h.b16 %v746
  %v3952 = vunpack.c.l.b16 %v747
  %v3953 = vunpack.c.h.b16 %v747
  %v3954 = vunpack.c.l.b16 %v748
  %v3955 = vunpack.c.h.b16 %v748
  %v3956 = vunpack.c.l.b16 %v749
  %v3957 = vunpack.c.h.b16 %v749
  %v3958 = vunpack.c.l.b16 %v750
  %v3959 = vunpack.c.h.b16 %v750
  %v3960 = vunpack.c.l.b16 %v751
  %v3961 = vunpack.c.h.b16 %v751
  %v3962 = vunpack.c.l.b16 %v752
  %v3963 = vunpack.c.h.b16 %v752
  %v3964 = vunpack.c.l.b16 %v753
  %v3965 = vunpack.c.h.b16 %v753
  %v3966 = vunpack.c.l.b16 %v754
  %v3967 = vunpack.c.h.b16 %v754
  %v3968 = vunpack.c.l.b16 %v755
  %v3969 = vunpack.c.h.b16 %v755
  %v3970 = vunpack.c.l.b16 %v756
  %v3971 = vunpack.c.h.b16 %v756
  %v3972 = vunpack.c.l.b16 %v757
  %v3973 = vunpack.c.h.b16 %v757
  %v3974 = vunpack.c.l.b16 %v758
  %v3975 = vunpack.c.h.b16 %v758
  %v3976 = vunpack.c.l.b16 %v759
  %v3977 = vunpack.c.h.b16 %v759
  %v3978 = vunpack.c.l.b16 %v760
  %v3979 = vunpack.c.h.b16 %v760
  %v3980 = vunpack.c.l.b16 %v761
  %v3981 = vunpack.c.h.b16 %v761
  %v3982 = vunpack.c.l.b16 %v762
  %v3983 = vunpack.c.h.b16 %v762
  %v3984 = vunpack.c.l.b16 %v763
  %v3985 = vunpack.c.h.b16 %v763
  %v3986 = vunpack.c.l.b16 %v764
  %v3987 = vunpack.c.h.b16 %v764
  %v3988 = vunpack.c.l.b16 %v765
  %v3989 = vunpack.c.h.b16 %v765
  %v3990 = vunpack.c.l.b16 %v766
  %v3991 = vunpack.c.h.b16 %v766
  %v3992 = vunpack.c.l.b16 %v767
  %v3993 = vunpack.c.h.b16 %v767
  %v3994 = vunpack.c.l.b16 %v768
  %v3995 = vunpack.c.h.b16 %v768
  %v3996 = vunpack.c.l.b16 %v769
  %v3997 = vunpack.c.h.b16 %v769
  %v3998 = vunpack.c.l.b16 %v770
  %v3999 = vunpack.c.h.b16 %v770
  %v4000 = vunpack.c.l.b16 %v771
  %v4001 = vunpack.c.h.b16 %v771
  %v4002 = vunpack.c.l.b16 %v772
  %v4003 = vunpack.c.h.b16 %v772
  %v4004 = vunpack.c.l.b16 %v773
  %v4005 = vunpack.c.h.b16 %v773
  %v4006 = vunpack.c.l.b16 %v774
  %v4007 = vunpack.c.h.b16 %v774
  %v4008 = vunpack.c.l.b16 %v775
  %v4009 = vunpack.c.h.b16 %v775
  %v4010 = vunpack.c.l.b16 %v776
  %v4011 = vunpack.c.h.b16 %v776
  %v4012 = vunpack.c.l.b16 %v777
  %v4013 = vunpack.c.h.b16 %v777
  %v4014 = vunpack.c.l.b16 %v778
  %v4015 = vunpack.c.h.b16 %v778
  %v4016 = vunpack.c.l.b16 %v779
  %v4017 = vunpack.c.h.b16 %v779
  %v4018 = vunpack.c.l.b16 %v780
  %v4019 = vunpack.c.h.b16 %v780
  %v4020 = vunpack.c.l.b16 %v781
  %v4021 = vunpack.c.h.b16 %v781
  %v4022 = vunpack.c.l.b16 %v782
  %v4023 = vunpack.c.h.b16 %v782
  %v4024 = vunpack.c.l.b16 %v783
  %v4025 = vunpack.c.h.b16 %v783
  %v4026 = vunpack.c.l.b16 %v784
  %v4027 = vunpack.c.h.b16 %v784
  %v4028 = vunpack.c.l.b16 %v785
  %v4029 = vunpack.c.h.b16 %v785
  %v4030 = vunpack.c.l.b16 %v786
  %v4031 = vunpack.c.h.b16 %v786
  %v4032 = vunpack.c.l.b16 %v787
  %v4033 = vunpack.c.h.b16 %v787
  %v4034 = vunpack.c.l.b16 %v788
  %v4035 = vunpack.c.h.b16 %v788
  %v4036 = vunpack.c.l.b16 %v789
  %v4037 = vunpack.c.h.b16 %v789
  %v4038 = vunpack.c.l.b16 %v790
  %v4039 = vunpack.c.h.b16 %v790
  %v4040 = vunpack.c.l.b16 %v791
  %v4041 = vunpack.c.h.b16 %v791
  %v4042 = vunpack.c.l.b16 %v792
  %v4043 = vunpack.c.h.b16 %v792
  %v4044 = vunpack.c.l.b16 %v793
  %v4045 = vunpack.c.h.b16 %v793
  %v4046 = vunpack.c.l.b16 %v794
  %v4047 = vunpack.c.h.b16 %v794
  %v4048 = vunpack.c.l.b16 %v795
  %v4049 = vunpack.c.h.b16 %v795
  %v4050 = vunpack.c.l.b16 %v796
  %v4051 = vunpack.c.h.b16 %v796
  %v4052 = vunpack.c.l.b16 %v797
  %v4053 = vunpack.c.h.b16 %v797
  %v4054 = vunpack.c.l.b16 %v798
  %v4055 = vunpack.c.h.b16 %v798
  %v4056 = vunpack.c.l.b16 %v799
  %v4057 = vunpack.c.h.b16 %v799
  %v4058 = vunpack.c.l.b16 %v800
  %v4059 = vunpack.c.h.b16 %v800
  %v4060 = vunpack.c.l.b16 %v801
  %v4061 = vunpack.c.h.b16 %v801
  %v4062 = vunpack.c.l.b16 %v802
  %v4063 = vunpack.c.h.b16 %v802
  %v4064 = vunpack.c.l.b16 %v803
  %v4065 = vunpack.c.h.b16 %v803
  %v4066 = vunpack.c.l.b16 %v804
  %v4067 = vunpack.c.h.b16 %v804
  %v4068 = vunpack.c.l.b16 %v805
  %v4069 = vunpack.c.h.b16 %v805
  %v4070 = vunpack.c.l.b16 %v806
  %v4071 = vunpack.c.h.b16 %v806
  %v4072 = vunpack.c.l.b16 %v807
  %v4073 = vunpack.c.h.b16 %v807
  %v4074 = vunpack.c.l.b16 %v808
  %v4075 = vunpack.c.h.b16 %v808
  %v4076 = vunpack.c.l.b16 %v809
  %v4077 = vunpack.c.h.b16 %v809
  %v4078 = vunpack.c.l.b16 %v810
  %v4079 = vunpack.c.h.b16 %v810
  %v4080 = vunpack.c.l.b16 %v811
  %v4081 = vunpack.c.h.b16 %v811
  %v4082 = vunpack.c.l.b16 %v812
  %v4083 = vunpack.c.h.b16 %v812
  %v4084 = vunpack.c.l.b16 %v813
  %v4085 = vunpack.c.h.b16 %v813
  %v4086 = vunpack.c.l.b16 %v814
  %v4087 = vunpack.c.h.b16 %v814
  %v4088 = vunpack.c.l.b16 %v815
  %v4089 = vunpack.c.h.b16 %v815
  %v4090 = vunpack.c.l.b16 %v816
  %v4091 = vunpack.c.h.b16 %v816
  %v4092 = vunpack.c.l.b16 %v817
  %v4093 = vunpack.c.h.b16 %v817
  %v4094 = vunpack.c.l.b16 %v818
  %v4095 = vunpack.c.h.b16 %v818
  %v4096 = vunpack.c.l.b16 %v819
  %v4097 = vunpack.c.h.b16 %v819
  %v4098 = vunpack.c.l.b16 %v820
  %v4099 = vunpack.c.h.b16 %v820
  %v4100 = vunpack.c.l.b16 %v821
  %v4101 = vunpack.c.h.b16 %v821
  %v4102 = vunpack.c.l.b16 %v822
  %v4103 = vunpack.c.h.b16 %v822
  %v4104 = vunpack.c.l.b16 %v823
  %v4105 = vunpack.c.h.b16 %v823
  %v4106 = vunpack.c.l.b16 %v824
  %v4107 = vunpack.c.h.b16 %v824
  %v4108 = vunpack.c.l.b16 %v825
  %v4109 = vunpack.c.h.b16 %v825
  %v4110 = vunpack.c.l.b16 %v826
  %v4111 = vunpack.c.h.b16 %v826
  %v4112 = vunpack.c.l.b16 %v827
  %v4113 = vunpack.c.h.b16 %v827
  %v4114 = vunpack.c.l.b16 %v828
  %v4115 = vunpack.c.h.b16 %v828
  %v4116 = vunpack.c.l.b16 %v829
  %v4117 = vunpack.c.h.b16 %v829
  %v4118 = vunpack.c.l.b16 %v830
  %v4119 = vunpack.c.h.b16 %v830
  %v4120 = vunpack.c.l.b16 %v831
  %v4121 = vunpack.c.h.b16 %v831
  %v4122 = vunpack.c.l.b16 %v832
  %v4123 = vunpack.c.h.b16 %v832
  %v4124 = vunpack.c.l.b16 %v833
  %v4125 = vunpack.c.h.b16 %v833
  %v4126 = vunpack.c.l.b16 %v834
  %v4127 = vunpack.c.h.b16 %v834
  %v4128 = vunpack.c.l.b16 %v835
  %v4129 = vunpack.c.h.b16 %v835
  %v4130 = vunpack.c.l.b16 %v836
  %v4131 = vunpack.c.h.b16 %v836
  %v4132 = vunpack.c.l.b16 %v837
  %v4133 = vunpack.c.h.b16 %v837
  %v4134 = vunpack.c.l.b16 %v838
  %v4135 = vunpack.c.h.b16 %v838
  %v4136 = vunpack.c.l.b16 %v839
  %v4137 = vunpack.c.h.b16 %v839
  %v4138 = vunpack.c.l.b16 %v840
  %v4139 = vunpack.c.h.b16 %v840
  %v4140 = vunpack.c.l.b16 %v841
  %v4141 = vunpack.c.h.b16 %v841
  %v4142 = vunpack.c.l.b16 %v842
  %v4143 = vunpack.c.h.b16 %v842
  %v4144 = vunpack.c.l.b16 %v843
  %v4145 = vunpack.c.h.b16 %v843
  %v4146 = vunpack.c.l.b16 %v844
  %v4147 = vunpack.c.h.b16 %v844
  %v4148 = vunpack.c.l.b16 %v845
  %v4149 = vunpack.c.h.b16 %v845
  %v4150 = vunpack.c.l.b16 %v846
  %v4151 = vunpack.c.h.b16 %v846
  %v4152 = vunpack.c.l.b16 %v847
  %v4153 = vunpack.c.h.b16 %v847
  %v4154 = vunpack.c.l.b16 %v848
  %v4155 = vunpack.c.h.b16 %v848
  %v4156 = vunpack.c.l.b16 %v849
  %v4157 = vunpack.c.h.b16 %v849
  %v4158 = vunpack.c.l.b16 %v850
  %v4159 = vunpack.c.h.b16 %v850
  %v4160 = vunpack.c.l.b16 %v851
  %v4161 = vunpack.c.h.b16 %v851
  %v4162 = vunpack.c.l.b16 %v852
  %v4163 = vunpack.c.h.b16 %v852
  %v4164 = vunpack.c.l.b16 %v853
  %v4165 = vunpack.c.h.b16 %v853
  %v4166 = vunpack.c.l.b16 %v854
  %v4167 = vunpack.c.h.b16 %v854
  %v4168 = vunpack.c.l.b16 %v855
  %v4169 = vunpack.c.h.b16 %v855
  %v4170 = vunpack.c.l.b16 %v856
  %v4171 = vunpack.c.h.b16 %v856
  %v4172 = vunpack.c.l.b16 %v857
  %v4173 = vunpack.c.h.b16 %v857
  %v4174 = vunpack.c.l.b16 %v858
  %v4175 = vunpack.c.h.b16 %v858
  %v4176 = vunpack.c.l.b16 %v859
  %v4177 = vunpack.c.h.b16 %v859
  %v4178 = vunpack.c.l.b16 %v860
  %v4179 = vunpack.c.h.b16 %v860
  %v4180 = vunpack.c.l.b16 %v861
  %v4181 = vunpack.c.h.b16 %v861
  %v4182 = vunpack.c.l.b16 %v862
  %v4183 = vunpack.c.h.b16 %v862
  %v4184 = vunpack.c.l.b16 %v863
  %v4185 = vunpack.c.h.b16 %v863
  %v4186 = vunpack.c.l.b16 %v864
  %v4187 = vunpack.c.h.b16 %v864
  %v4188 = vunpack.c.l.b16 %v865
  %v4189 = vunpack.c.h.b16 %v865
  %v4190 = vunpack.c.l.b16 %v866
  %v4191 = vunpack.c.h.b16 %v866
  %v4192 = vunpack.c.l.b16 %v867
  %v4193 = vunpack.c.h.b16 %v867
  %v4194 = vunpack.c.l.b16 %v868
  %v4195 = vunpack.c.h.b16 %v868
  %v4196 = vunpack.c.l.b16 %v869
  %v4197 = vunpack.c.h.b16 %v869
  %v4198 = vunpack.c.l.b16 %v870
  %v4199 = vunpack.c.h.b16 %v870
  %v4200 = vunpack.c.l.b16 %v871
  %v4201 = vunpack.c.h.b16 %v871
  %v4202 = vunpack.c.l.b16 %v872
  %v4203 = vunpack.c.h.b16 %v872
  %v4204 = vunpack.c.l.b16 %v873
  %v4205 = vunpack.c.h.b16 %v873
  %v4206 = vunpack.c.l.b16 %v874
  %v4207 = vunpack.c.h.b16 %v874
  %v4208 = vunpack.c.l.b16 %v875
  %v4209 = vunpack.c.h.b16 %v875
  %v4210 = vunpack.c.l.b16 %v876
  %v4211 = vunpack.c.h.b16 %v876
  %v4212 = vunpack.c.l.b16 %v877
  %v4213 = vunpack.c.h.b16 %v877
  %v4214 = vunpack.c.l.b16 %v878
  %v4215 = vunpack.c.h.b16 %v878
  %v4216 = vunpack.c.l.b16 %v879
  %v4217 = vunpack.c.h.b16 %v879
  %v4218 = vunpack.c.l.b16 %v880
  %v4219 = vunpack.c.h.b16 %v880
  %v4220 = vunpack.c.l.b16 %v881
  %v4221 = vunpack.c.h.b16 %v881
  %v4222 = vunpack.c.l.b16 %v882
  %v4223 = vunpack.c.h.b16 %v882
  %v4224 = vunpack.c.l.b16 %v883
  %v4225 = vunpack.c.h.b16 %v883
  %v4226 = vunpack.c.l.b16 %v884
  %v4227 = vunpack.c.h.b16 %v884
  %v4228 = vunpack.c.l.b16 %v885
  %v4229 = vunpack.c.h.b16 %v885
  %v4230 = vunpack.c.l.b16 %v886
  %v4231 = vunpack.c.h.b16 %v886
  %v4232 = vunpack.c.l.b16 %v887
  %v4233 = vunpack.c.h.b16 %v887
  %v4234 = vunpack.c.l.b16 %v888
  %v4235 = vunpack.c.h.b16 %v888
  %v4236 = vunpack.c.l.b16 %v889
  %v4237 = vunpack.c.h.b16 %v889
  %v4238 = vunpack.c.l.b16 %v890
  %v4239 = vunpack.c.h.b16 %v890
  %v4240 = vunpack.c.l.b16 %v891
  %v4241 = vunpack.c.h.b16 %v891
  %v4242 = vunpack.c.l.b16 %v892
  %v4243 = vunpack.c.h.b16 %v892
  %v4244 = vunpack.c.l.b16 %v893
  %v4245 = vunpack.c.h.b16 %v893
  %v4246 = vunpack.c.l.b16 %v894
  %v4247 = vunpack.c.h.b16 %v894
  %v4248 = vunpack.c.l.b16 %v895
  %v4249 = vunpack.c.h.b16 %v895
  %v4250 = vunpack.c.l.b16 %v896
  %v4251 = vunpack.c.h.b16 %v896
  %v4252 = vunpack.c.l.b16 %v897
  %v4253 = vunpack.c.h.b16 %v897
  %v4254 = vunpack.c.l.b16 %v898
  %v4255 = vunpack.c.h.b16 %v898
  %v4256 = vunpack.c.l.b16 %v899
  %v4257 = vunpack.c.h.b16 %v899
  %v4258 = vunpack.c.l.b16 %v900
  %v4259 = vunpack.c.h.b16 %v900
  %v4260 = vunpack.c.l.b16 %v901
  %v4261 = vunpack.c.h.b16 %v901
  %v4262 = vunpack.c.l.b16 %v902
  %v4263 = vunpack.c.h.b16 %v902
  %v4264 = vunpack.c.l.b16 %v903
  %v4265 = vunpack.c.h.b16 %v903
  %v4266 = vunpack.c.l.b16 %v904
  %v4267 = vunpack.c.h.b16 %v904
  %v4268 = vunpack.c.l.b16 %v905
  %v4269 = vunpack.c.h.b16 %v905
  %v4270 = vunpack.c.l.b16 %v906
  %v4271 = vunpack.c.h.b16 %v906
  %v4272 = vunpack.c.l.b16 %v907
  %v4273 = vunpack.c.h.b16 %v907
  %v4274 = vunpack.c.l.b16 %v908
  %v4275 = vunpack.c.h.b16 %v908
  %v4276 = vunpack.c.l.b16 %v909
  %v4277 = vunpack.c.h.b16 %v909
  %v4278 = vunpack.c.l.b16 %v910
  %v4279 = vunpack.c.h.b16 %v910
  %v4280 = vunpack.c.l.b16 %v911
  %v4281 = vunpack.c.h.b16 %v911
  %v4282 = vunpack.c.l.b16 %v912
  %v4283 = vunpack.c.h.b16 %v912
  %v4284 = vunpack.c.l.b16 %v913
  %v4285 = vunpack.c.h.b16 %v913
  %v4286 = vunpack.c.l.b16 %v914
  %v4287 = vunpack.c.h.b16 %v914
  %v4288 = vunpack.c.l.b16 %v915
  %v4289 = vunpack.c.h.b16 %v915
  %v4290 = vunpack.c.l.b16 %v916
  %v4291 = vunpack.c.h.b16 %v916
  %v4292 = vunpack.c.l.b16 %v917
  %v4293 = vunpack.c.h.b16 %v917
  %v4294 = vunpack.c.l.b16 %v918
  %v4295 = vunpack.c.h.b16 %v918
  %v4296 = vunpack.c.l.b16 %v919
  %v4297 = vunpack.c.h.b16 %v919
  %v4298 = vunpack.c.l.b16 %v920
  %v4299 = vunpack.c.h.b16 %v920
  %v4300 = vunpack.c.l.b16 %v921
  %v4301 = vunpack.c.h.b16 %v921
  %v4302 = vunpack.c.l.b16 %v922
  %v4303 = vunpack.c.h.b16 %v922
  %v4304 = vunpack.c.l.b16 %v923
  %v4305 = vunpack.c.h.b16 %v923
  %v4306 = vunpack.c.l.b16 %v924
  %v4307 = vunpack.c.h.b16 %v924
  %v4308 = vunpack.c.l.b16 %v925
  %v4309 = vunpack.c.h.b16 %v925
  %v4310 = vunpack.c.l.b16 %v926
  %v4311 = vunpack.c.h.b16 %v926
  %v4312 = vunpack.c.l.b16 %v927
  %v4313 = vunpack.c.h.b16 %v927
  %v4314 = vunpack.c.l.b16 %v928
  %v4315 = vunpack.c.h.b16 %v928
  %v4316 = vunpack.c.l.b16 %v929
  %v4317 = vunpack.c.h.b16 %v929
  %v4318 = vunpack.c.l.b16 %v930
  %v4319 = vunpack.c.h.b16 %v930
  %v4320 = vunpack.c.l.b16 %v931
  %v4321 = vunpack.c.h.b16 %v931
  %v4322 = vunpack.c.l.b16 %v932
  %v4323 = vunpack.c.h.b16 %v932
  %v4324 = vunpack.c.l.b16 %v933
  %v4325 = vunpack.c.h.b16 %v933
  %v4326 = vunpack.c.l.b16 %v934
  %v4327 = vunpack.c.h.b16 %v934
  %v4328 = vunpack.c.l.b16 %v935
  %v4329 = vunpack.c.h.b16 %v935
  %v4330 = vunpack.c.l.b16 %v936
  %v4331 = vunpack.c.h.b16 %v936
  %v4332 = vunpack.c.l.b16 %v937
  %v4333 = vunpack.c.h.b16 %v937
  %v4334 = vunpack.c.l.b16 %v938
  %v4335 = vunpack.c.h.b16 %v938
  %v4336 = vunpack.c.l.b16 %v939
  %v4337 = vunpack.c.h.b16 %v939
  %v4338 = vunpack.c.l.b16 %v940
  %v4339 = vunpack.c.h.b16 %v940
  %v4340 = vunpack.c.l.b16 %v941
  %v4341 = vunpack.c.h.b16 %v941
  %v4342 = vunpack.c.l.b16 %v942
  %v4343 = vunpack.c.h.b16 %v942
  %v4344 = vunpack.c.l.b16 %v943
  %v4345 = vunpack.c.h.b16 %v943
  %v4346 = vunpack.c.l.b16 %v944
  %v4347 = vunpack.c.h.b16 %v944
  %v4348 = vunpack.c.l.b16 %v945
  %v4349 = vunpack.c.h.b16 %v945
  %v4350 = vunpack.c.l.b16 %v946
  %v4351 = vunpack.c.h.b16 %v946
  %v4352 = vunpack.c.l.b16 %v947
  %v4353 = vunpack.c.h.b16 %v947
  %v4354 = vunpack.c.l.b16 %v948
  %v4355 = vunpack.c.h.b16 %v948
  %v4356 = vunpack.c.l.b16 %v949
  %v4357 = vunpack.c.h.b16 %v949
  %v4358 = vunpack.c.l.b16 %v950
  %v4359 = vunpack.c.h.b16 %v950
  %v4360 = vunpack.c.l.b16 %v951
  %v4361 = vunpack.c.h.b16 %v951
  %v4362 = vunpack.c.l.b16 %v952
  %v4363 = vunpack.c.h.b16 %v952
  %v4364 = vunpack.c.l.b16 %v953
  %v4365 = vunpack.c.h.b16 %v953
  %v4366 = vunpack.c.l.b16 %v954
  %v4367 = vunpack.c.h.b16 %v954
  %v4368 = vunpack.c.l.b16 %v955
  %v4369 = vunpack.c.h.b16 %v955
  %v4370 = vunpack.c.l.b16 %v956
  %v4371 = vunpack.c.h.b16 %v956
  %v4372 = vunpack.c.l.b16 %v957
  %v4373 = vunpack.c.h.b16 %v957
  %v4374 = vunpack.c.l.b16 %v958
  %v4375 = vunpack.c.h.b16 %v958
  %v4376 = vunpack.c.l.b16 %v959
  %v4377 = vunpack.c.h.b16 %v959
  %v4378 = vunpack.c.l.b16 %v960
  %v4379 = vunpack.c.h.b16 %v960
  %v4380 = vunpack.c.l.b16 %v961
  %v4381 = vunpack.c.h.b16 %v961
  %v4382 = vunpack.c.l.b16 %v962
  %v4383 = vunpack.c.h.b16 %v962
  %v4384 = vunpack.c.l.b16 %v963
  %v4385 = vunpack.c.h.b16 %v963
  %v4386 = vunpack.c.l.b16 %v964
  %v4387 = vunpack.c.h.b16 %v964
  %v4388 = vunpack.c.l.b16 %v965
  %v4389 = vunpack.c.h.b16 %v965
  %v4390 = vunpack.c.l.b16 %v966
  %v4391 = vunpack.c.h.b16 %v966
  %v4392 = vunpack.c.l.b16 %v967
  %v4393 = vunpack.c.h.b16 %v967
  %v4394 = vunpack.c.l.b16 %v968
  %v4395 = vunpack.c.h.b16 %v968
  %v4396 = vunpack.c.l.b16 %v969
  %v4397 = vunpack.c.h.b16 %v969
  %v4398 = vunpack.c.l.b16 %v970
  %v4399 = vunpack.c.h.b16 %v970
  %v4400 = vunpack.c.l.b16 %v971
  %v4401 = vunpack.c.h.b16 %v971
  %v4402 = vunpack.c.l.b16 %v972
  %v4403 = vunpack.c.h.b16 %v972
  %v4404 = vunpack.c.l.b16 %v973
  %v4405 = vunpack.c.h.b16 %v973
  %v4406 = vunpack.c.l.b16 %v974
  %v4407 = vunpack.c.h.b16 %v974
  %v4408 = vunpack.c.l.b16 %v975
  %v4409 = vunpack.c.h.b16 %v975
  %v4410 = vunpack.c.l.b16 %v976
  %v4411 = vunpack.c.h.b16 %v976
  %v4412 = vunpack.c.l.b16 %v977
  %v4413 = vunpack.c.h.b16 %v977
  %v4414 = vunpack.c.l.b16 %v978
  %v4415 = vunpack.c.h.b16 %v978
  %v4416 = vunpack.c.l.b16 %v979
  %v4417 = vunpack.c.h.b16 %v979
  %v4418 = vunpack.c.l.b16 %v980
  %v4419 = vunpack.c.h.b16 %v980
  %v4420 = vunpack.c.l.b16 %v981
  %v4421 = vunpack.c.h.b16 %v981
  %v4422 = vunpack.c.l.b16 %v982
  %v4423 = vunpack.c.h.b16 %v982
  %v4424 = vunpack.c.l.b16 %v983
  %v4425 = vunpack.c.h.b16 %v983
  %v4426 = vunpack.c.l.b16 %v984
  %v4427 = vunpack.c.h.b16 %v984
  %v4428 = vunpack.c.l.b16 %v985
  %v4429 = vunpack.c.h.b16 %v985
  %v4430 = vunpack.c.l.b16 %v986
  %v4431 = vunpack.c.h.b16 %v986
  %v4432 = vunpack.c.l.b16 %v987
  %v4433 = vunpack.c.h.b16 %v987
  %v4434 = vunpack.c.l.b16 %v988
  %v4435 = vunpack.c.h.b16 %v988
  %v4436 = vunpack.c.l.b16 %v989
  %v4437 = vunpack.c.h.b16 %v989
  %v4438 = vunpack.c.l.b16 %v990
  %v4439 = vunpack.c.h.b16 %v990
  %v4440 = vunpack.c.l.b16 %v991
  %v4441 = vunpack.c.h.b16 %v991
  %v4442 = vunpack.c.l.b16 %v992
  %v4443 = vunpack.c.h.b16 %v992
  %v4444 = vunpack.c.l.b16 %v993
  %v4445 = vunpack.c.h.b16 %v993
  %v4446 = vunpack.c.l.b16 %v994
  %v4447 = vunpack.c.h.b16 %v994
  %v4448 = vunpack.c.l.b16 %v995
  %v4449 = vunpack.c.h.b16 %v995
  %v4450 = vunpack.c.l.b16 %v996
  %v4451 = vunpack.c.h.b16 %v996
  %v4452 = vunpack.c.l.b16 %v997
  %v4453 = vunpack.c.h.b16 %v997
  %v4454 = vunpack.c.l.b16 %v998
  %v4455 = vunpack.c.h.b16 %v998
  %v4456 = vunpack.c.l.b16 %v999
  %v4457 = vunpack.c.h.b16 %v999
  %v4458 = vunpack.c.l.b16 %v1000
  %v4459 = vunpack.c.h.b16 %v1000
  %v4460 = vunpack.c.l.b16 %v1001
  %v4461 = vunpack.c.h.b16 %v1001
  %v4462 = vunpack.c.l.b16 %v1002
  %v4463 = vunpack.c.h.b16 %v1002
  %v4464 = vunpack.c.l.b16 %v1003
  %v4465 = vunpack.c.h.b16 %v1003
  %v4466 = vunpack.c.l.b16 %v1004
  %v4467 = vunpack.c.h.b16 %v1004
  %v4468 = vunpack.c.l.b16 %v1005
  %v4469 = vunpack.c.h.b16 %v1005
  %v4470 = vunpack.c.l.b16 %v1006
  %v4471 = vunpack.c.h.b16 %v1006
  %v4472 = vunpack.c.l.b16 %v1007
  %v4473 = vunpack.c.h.b16 %v1007
  %v4474 = vunpack.c.l.b16 %v1008
  %v4475 = vunpack.c.h.b16 %v1008
  %v4476 = vunpack.c.l.b16 %v1009
  %v4477 = vunpack.c.h.b16 %v1009
  %v4478 = vunpack.c.l.b16 %v1010
  %v4479 = vunpack.c.h.b16 %v1010
  %v4480 = vunpack.c.l.b16 %v1011
  %v4481 = vunpack.c.h.b16 %v1011
  %v4482 = vunpack.c.l.b16 %v1012
  %v4483 = vunpack.c.h.b16 %v1012
  %v4484 = vunpack.c.l.b16 %v1013
  %v4485 = vunpack.c.h.b16 %v1013
  %v4486 = vunpack.c.l.b16 %v1014
  %v4487 = vunpack.c.h.b16 %v1014
  %v4488 = vunpack.c.l.b16 %v1015
  %v4489 = vunpack.c.h.b16 %v1015
  %v4490 = vunpack.c.l.b16 %v1016
  %v4491 = vunpack.c.h.b16 %v1016
  %v4492 = vunpack.c.l.b16 %v1017
  %v4493 = vunpack.c.h.b16 %v1017
  %v4494 = vunpack.c.l.b16 %v1018
  %v4495 = vunpack.c.h.b16 %v1018
  %v4496 = vunpack.c.l.b16 %v1019
  %v4497 = vunpack.c.h.b16 %v1019
  %v4498 = vunpack.c.l.b16 %v1020
  %v4499 = vunpack.c.h.b16 %v1020
  %v4500 = vunpack.c.l.b16 %v1021
  %v4501 = vunpack.c.h.b16 %v1021
  %v4502 = vunpack.c.l.b16 %v1022
  %v4503 = vunpack.c.h.b16 %v1022
  %v4504 = vunpack.c.l.b16 %v1023
  %v4505 = vunpack.c.h.b16 %v1023
  %v4506 = vunpack.c.l.b16 %v1024
  %v4507 = vunpack.c.h.b16 %v1024
  %v4508 = vunpack.c.l.b16 %v1025
  %v4509 = vunpack.c.h.b16 %v1025
  %v4510 = vunpack.c.l.b16 %v1026
  %v4511 = vunpack.c.h.b16 %v1026
  %v4512 = vunpack.c.l.b16 %v1027
  %v4513 = vunpack.c.h.b16 %v1027
  %v4514 = vunpack.c.l.b16 %v1028
  %v4515 = vunpack.c.h.b16 %v1028
  %v4516 = vunpack.c.l.b16 %v1029
  %v4517 = vunpack.c.h.b16 %v1029
  %v4518 = vunpack.c.l.b16 %v1030
  %v4519 = vunpack.c.h.b16 %v1030
  %v4520 = vunpack.c.l.b16 %v1031
  %v4521 = vunpack.c.h.b16 %v1031
  %v4522 = vunpack.c.l.b16 %v1032
  %v4523 = vunpack.c.h.b16 %v1032
  %v4524 = vunpack.c.l.b16 %v1033
  %v4525 = vunpack.c.h.b16 %v1033
  %v4526 = vunpack.c.l.b16 %v1034
  %v4527 = vunpack.c.h.b16 %v1034
  %v4528 = vunpack.c.l.b16 %v1035
  %v4529 = vunpack.c.h.b16 %v1035
  %v4530 = vunpack.c.l.b16 %v1036
  %v4531 = vunpack.c.h.b16 %v1036
  %v4532 = vunpack.c.l.b16 %v1037
  %v4533 = vunpack.c.h.b16 %v1037
  %v4534 = vunpack.c.l.b16 %v1038
  %v4535 = vunpack.c.h.b16 %v1038
  %v4536 = vunpack.c.l.b16 %v1039
  %v4537 = vunpack.c.h.b16 %v1039
  %v4538 = vunpack.c.l.b16 %v1040
  %v4539 = vunpack.c.h.b16 %v1040
  %v4540 = vunpack.c.l.b16 %v1041
  %v4541 = vunpack.c.h.b16 %v1041
  %v4542 = vunpack.c.l.b16 %v1042
  %v4543 = vunpack.c.h.b16 %v1042
  %v4544 = vunpack.c.l.b16 %v1043
  %v4545 = vunpack.c.h.b16 %v1043
  %v4546 = vunpack.c.l.b16 %v1044
  %v4547 = vunpack.c.h.b16 %v1044
  %v4548 = vunpack.c.l.b16 %v1045
  %v4549 = vunpack.c.h.b16 %v1045
  %v4550 = vunpack.c.l.b16 %v1046
  %v4551 = vunpack.c.h.b16 %v1046
  %v4552 = vunpack.c.l.b16 %v1047
  %v4553 = vunpack.c.h.b16 %v1047
  %v4554 = vunpack.c.l.b16 %v1048
  %v4555 = vunpack.c.h.b16 %v1048
  %v4556 = vunpack.c.l.b16 %v1049
  %v4557 = vunpack.c.h.b16 %v1049
  %v4558 = vunpack.c.l.b16 %v1050
  %v4559 = vunpack.c.h.b16 %v1050
  %v4560 = vunpack.c.l.b16 %v1051
  %v4561 = vunpack.c.h.b16 %v1051
  %v4562 = vunpack.c.l.b16 %v1052
  %v4563 = vunpack.c.h.b16 %v1052
  %v4564 = vunpack.c.l.b16 %v1053
  %v4565 = vunpack.c.h.b16 %v1053
  %v4566 = vunpack.c.l.b16 %v1054
  %v4567 = vunpack.c.h.b16 %v1054
  %v4568 = vunpack.c.l.b16 %v1055
  %v4569 = vunpack.c.h.b16 %v1055
  %v4570 = vunpack.c.l.b16 %v1056
  %v4571 = vunpack.c.h.b16 %v1056
  %v4572 = vunpack.c.l.b16 %v1057
  %v4573 = vunpack.c.h.b16 %v1057
  %v4574 = vunpack.c.l.b16 %v1058
  %v4575 = vunpack.c.h.b16 %v1058
  %v4576 = vunpack.c.l.b16 %v1059
  %v4577 = vunpack.c.h.b16 %v1059
  %v4578 = vunpack.c.l.b16 %v1060
  %v4579 = vunpack.c.h.b16 %v1060
  %v4580 = vunpack.c.l.b16 %v1061
  %v4581 = vunpack.c.h.b16 %v1061
  %v4582 = vunpack.c.l.b16 %v1062
  %v4583 = vunpack.c.h.b16 %v1062
  %v4584 = vunpack.c.l.b16 %v1063
  %v4585 = vunpack.c.h.b16 %v1063
  %v4586 = vunpack.c.l.b16 %v1064
  %v4587 = vunpack.c.h.b16 %v1064
  %v4588 = vunpack.c.l.b16 %v1065
  %v4589 = vunpack.c.h.b16 %v1065
  %v4590 = vunpack.c.l.b16 %v1066
  %v4591 = vunpack.c.h.b16 %v1066
  %v4592 = vunpack.c.l.b16 %v1067
  %v4593 = vunpack.c.h.b16 %v1067
  %v4594 = vunpack.c.l.b16 %v1068
  %v4595 = vunpack.c.h.b16 %v1068
  %v4596 = vunpack.c.l.b16 %v1069
  %v4597 = vunpack.c.h.b16 %v1069
  %v4598 = vunpack.c.l.b16 %v1070
  %v4599 = vunpack.c.h.b16 %v1070
  %v4600 = vunpack.c.l.b16 %v1071
  %v4601 = vunpack.c.h.b16 %v1071
  %v4602 = vunpack.c.l.b16 %v1072
  %v4603 = vunpack.c.h.b16 %v1072
  %v4604 = vunpack.c.l.b16 %v1073
  %v4605 = vunpack.c.h.b16 %v1073
  %v4606 = vunpack.c.l.b16 %v1074
  %v4607 = vunpack.c.h.b16 %v1074
  %v4608 = vunpack.c.l.b16 %v1075
  %v4609 = vunpack.c.h.b16 %v1075
  %v4610 = vunpack.c.l.b16 %v1076
  %v4611 = vunpack.c.h.b16 %v1076
  %v4612 = vunpack.c.l.b16 %v1077
  %v4613 = vunpack.c.h.b16 %v1077
  %v4614 = vunpack.c.l.b16 %v1078
  %v4615 = vunpack.c.h.b16 %v1078
  %v4616 = vunpack.c.l.b16 %v1079
  %v4617 = vunpack.c.h.b16 %v1079
  %v4618 = vunpack.c.l.b16 %v1080
  %v4619 = vunpack.c.h.b16 %v1080
  %v4620 = vunpack.c.l.b16 %v1081
  %v4621 = vunpack.c.h.b16 %v1081
  %v4622 = vunpack.c.l.b16 %v1082
  %v4623 = vunpack.c.h.b16 %v1082
  %v4624 = vunpack.c.l.b16 %v1083
  %v4625 = vunpack.c.h.b16 %v1083
  %v4626 = vunpack.c.l.b16 %v1084
  %v4627 = vunpack.c.h.b16 %v1084
  %v4628 = vunpack.c.l.b16 %v1085
  %v4629 = vunpack.c.h.b16 %v1085
  %v4630 = vunpack.c.l.b16 %v1086
  %v4631 = vunpack.c.h.b16 %v1086
  %v4632 = vunpack.c.l.b16 %v1087
  %v4633 = vunpack.c.h.b16 %v1087
  %v4634 = vunpack.c.l.b16 %v1088
  %v4635 = vunpack.c.h.b16 %v1088
  %v4636 = vunpack.c.l.b16 %v1089
  %v4637 = vunpack.c.h.b16 %v1089
  %v4638 = vunpack.c.l.b16 %v1090
  %v4639 = vunpack.c.h.b16 %v1090
  %v4640 = vunpack.c.l.b16 %v1091
  %v4641 = vunpack.c.h.b16 %v1091
  %v4642 = vunpack.c.l.b16 %v1092
  %v4643 = vunpack.c.h.b16 %v1092
  %v4644 = vunpack.c.l.b16 %v1093
  %v4645 = vunpack.c.h.b16 %v1093
  %v4646 = vunpack.c.l.b16 %v1094
  %v4647 = vunpack.c.h.b16 %v1094
  %v4648 = vunpack.c.l.b16 %v1095
  %v4649 = vunpack.c.h.b16 %v1095
  %v4650 = vunpack.c.l.b16 %v1096
  %v4651 = vunpack.c.h.b16 %v1096
  %v4652 = vunpack.c.l.b16 %v1097
  %v4653 = vunpack.c.h.b16 %v1097
  %v4654 = vunpack.c.l.b16 %v1098
  %v4655 = vunpack.c.h.b16 %v1098
  %v4656 = vunpack.c.l.b16 %v1099
  %v4657 = vunpack.c.h.b16 %v1099
  %v4658 = vunpack.c.l.b16 %v1100
  %v4659 = vunpack.c.h.b16 %v1100
  %v4660 = vunpack.c.l.b16 %v1101
  %v4661 = vunpack.c.h.b16 %v1101
  %v4662 = vunpack.c.l.b16 %v1102
  %v4663 = vunpack.c.h.b16 %v1102
  %v4664 = vunpack.c.l.b16 %v1103
  %v4665 = vunpack.c.h.b16 %v1103
  %v4666 = vunpack.c.l.b16 %v1104
  %v4667 = vunpack.c.h.b16 %v1104
  %v4668 = vunpack.c.l.b16 %v1105
  %v4669 = vunpack.c.h.b16 %v1105
  %v4670 = vunpack.c.l.b16 %v1106
  %v4671 = vunpack.c.h.b16 %v1106
  %v4672 = vunpack.c.l.b16 %v1107
  %v4673 = vunpack.c.h.b16 %v1107
  %v4674 = vunpack.c.l.b16 %v1108
  %v4675 = vunpack.c.h.b16 %v1108
  %v4676 = vunpack.c.l.b16 %v1109
  %v4677 = vunpack.c.h.b16 %v1109
  %v4678 = vunpack.c.l.b16 %v1110
  %v4679 = vunpack.c.h.b16 %v1110
  %v4680 = vunpack.c.l.b16 %v1111
  %v4681 = vunpack.c.h.b16 %v1111
  %v4682 = vunpack.c.l.b16 %v1112
  %v4683 = vunpack.c.h.b16 %v1112
  %v4684 = vunpack.c.l.b16 %v1113
  %v4685 = vunpack.c.h.b16 %v1113
  %v4686 = vunpack.c.l.b16 %v1114
  %v4687 = vunpack.c.h.b16 %v1114
  %v4688 = vunpack.c.l.b16 %v1115
  %v4689 = vunpack.c.h.b16 %v1115
  %v4690 = vunpack.c.l.b16 %v1116
  %v4691 = vunpack.c.h.b16 %v1116
  %v4692 = vunpack.c.l.b16 %v1117
  %v4693 = vunpack.c.h.b16 %v1117
  %v4694 = vunpack.c.l.b16 %v1118
  %v4695 = vunpack.c.h.b16 %v1118
  %v4696 = vunpack.c.l.b16 %v1119
  %v4697 = vunpack.c.h.b16 %v1119
  %v4698 = vunpack.c.l.b16 %v1120
  %v4699 = vunpack.c.h.b16 %v1120
  %v4700 = vunpack.c.l.b16 %v1121
  %v4701 = vunpack.c.h.b16 %v1121
  %v4702 = vunpack.c.l.b16 %v1122
  %v4703 = vunpack.c.h.b16 %v1122
  %v4704 = vunpack.c.l.b16 %v1123
  %v4705 = vunpack.c.h.b16 %v1123
  %v4706 = vunpack.c.l.b16 %v1124
  %v4707 = vunpack.c.h.b16 %v1124
  %v4708 = vunpack.c.l.b16 %v1125
  %v4709 = vunpack.c.h.b16 %v1125
  %v4710 = vunpack.c.l.b16 %v1126
  %v4711 = vunpack.c.h.b16 %v1126
  %v4712 = vunpack.c.l.b16 %v1127
  %v4713 = vunpack.c.h.b16 %v1127
  %v4714 = vunpack.c.l.b16 %v1128
  %v4715 = vunpack.c.h.b16 %v1128
  %v4716 = vunpack.c.l.b16 %v1129
  %v4717 = vunpack.c.h.b16 %v1129
  %v4718 = vunpack.c.l.b16 %v1130
  %v4719 = vunpack.c.h.b16 %v1130
  %v4720 = vunpack.c.l.b16 %v1131
  %v4721 = vunpack.c.h.b16 %v1131
  %v4722 = vunpack.c.l.b16 %v1132
  %v4723 = vunpack.c.h.b16 %v1132
  %v4724 = vunpack.c.l.b16 %v1133
  %v4725 = vunpack.c.h.b16 %v1133
  %v4726 = vunpack.c.l.b16 %v1134
  %v4727 = vunpack.c.h.b16 %v1134
  %v4728 = vunpack.c.l.b16 %v1135
  %v4729 = vunpack.c.h.b16 %v1135
  %v4730 = vunpack.c.l.b16 %v1136
  %v4731 = vunpack.c.h.b16 %v1136
  %v4732 = vunpack.c.l.b16 %v1137
  %v4733 = vunpack.c.h.b16 %v1137
  %v4734 = vunpack.c.l.b16 %v1138
  %v4735 = vunpack.c.h.b16 %v1138
  %v4736 = vunpack.c.l.b16 %v1139
  %v4737 = vunpack.c.h.b16 %v1139
  %v4738 = vunpack.c.l.b16 %v1140
  %v4739 = vunpack.c.h.b16 %v1140
  %v4740 = vunpack.c.l.b16 %v1141
  %v4741 = vunpack.c.h.b16 %v1141
  %v4742 = vunpack.c.l.b16 %v1142
  %v4743 = vunpack.c.h.b16 %v1142
  %v4744 = vunpack.c.l.b16 %v1143
  %v4745 = vunpack.c.h.b16 %v1143
  %v4746 = vunpack.c.l.b16 %v1144
  %v4747 = vunpack.c.h.b16 %v1144
  %v4748 = vunpack.c.l.b16 %v1145
  %v4749 = vunpack.c.h.b16 %v1145
  %v4750 = vunpack.c.l.b16 %v1146
  %v4751 = vunpack.c.h.b16 %v1146
  %v4752 = vunpack.c.l.b16 %v1147
  %v4753 = vunpack.c.h.b16 %v1147
  %v4754 = vunpack.c.l.b16 %v1148
  %v4755 = vunpack.c.h.b16 %v1148
  %v4756 = vunpack.c.l.b16 %v1149
  %v4757 = vunpack.c.h.b16 %v1149
  %v4758 = vunpack.c.l.b16 %v1150
  %v4759 = vunpack.c.h.b16 %v1150
  %v4760 = vunpack.c.l.b16 %v1151
  %v4761 = vunpack.c.h.b16 %v1151
  %v4762 = vunpack.c.l.b16 %v1152
  %v4763 = vunpack.c.h.b16 %v1152
  %v4764 = vunpack.c.l.b16 %v1153
  %v4765 = vunpack.c.h.b16 %v1153
  %v4766 = vunpack.c.l.b16 %v1154
  %v4767 = vunpack.c.h.b16 %v1154
  %v4768 = vunpack.c.l.b16 %v1155
  %v4769 = vunpack.c.h.b16 %v1155
  %v4770 = vunpack.c.l.b16 %v1156
  %v4771 = vunpack.c.h.b16 %v1156
  %v4772 = vunpack.c.l.b16 %v1157
  %v4773 = vunpack.c.h.b16 %v1157
  %v4774 = vunpack.c.l.b16 %v1158
  %v4775 = vunpack.c.h.b16 %v1158
  %v4776 = vunpack.c.l.b16 %v1159
  %v4777 = vunpack.c.h.b16 %v1159
  %v4778 = vunpack.c.l.b16 %v1160
  %v4779 = vunpack.c.h.b16 %v1160
  %v4780 = vunpack.c.l.b16 %v1161
  %v4781 = vunpack.c.h.b16 %v1161
  %v4782 = vunpack.c.l.b16 %v1162
  %v4783 = vunpack.c.h.b16 %v1162
  %v4784 = vunpack.c.l.b16 %v1163
  %v4785 = vunpack.c.h.b16 %v1163
  %v4786 = vunpack.c.l.b16 %v1164
  %v4787 = vunpack.c.h.b16 %v1164
  %v4788 = vunpack.c.l.b16 %v1165
  %v4789 = vunpack.c.h.b16 %v1165
  %v4790 = vunpack.c.l.b16 %v1166
  %v4791 = vunpack.c.h.b16 %v1166
  %v4792 = vunpack.c.l.b16 %v1167
  %v4793 = vunpack.c.h.b16 %v1167
  %v4794 = vunpack.c.l.b16 %v1168
  %v4795 = vunpack.c.h.b16 %v1168
  %v4796 = vunpack.c.l.b16 %v1169
  %v4797 = vunpack.c.h.b16 %v1169
  %v4798 = vunpack.c.l.b16 %v1170
  %v4799 = vunpack.c.h.b16 %v1170
  %v4800 = vunpack.c.l.b16 %v1171
  %v4801 = vunpack.c.h.b16 %v1171
  %v4802 = vunpack.c.l.b16 %v1172
  %v4803 = vunpack.c.h.b16 %v1172
  %v4804 = vunpack.c.l.b16 %v1173
  %v4805 = vunpack.c.h.b16 %v1173
  %v4806 = vunpack.c.l.b16 %v1174
  %v4807 = vunpack.c.h.b16 %v1174
  %v4808 = vunpack.c.l.b16 %v1175
  %v4809 = vunpack.c.h.b16 %v1175
  %v4810 = vunpack.c.l.b16 %v1176
  %v4811 = vunpack.c.h.b16 %v1176
  %v4812 = vunpack.c.l.b16 %v1177
  %v4813 = vunpack.c.h.b16 %v1177
  %v4814 = vunpack.c.l.b16 %v1178
  %v4815 = vunpack.c.h.b16 %v1178
  %v4816 = vunpack.c.l.b16 %v1179
  %v4817 = vunpack.c.h.b16 %v1179
  %v4818 = vunpack.c.l.b16 %v1180
  %v4819 = vunpack.c.h.b16 %v1180
  %v4820 = vunpack.c.l.b16 %v1181
  %v4821 = vunpack.c.h.b16 %v1181
  %v4822 = vunpack.c.l.b16 %v1182
  %v4823 = vunpack.c.h.b16 %v1182
  %v4824 = vunpack.c.l.b16 %v1183
  %v4825 = vunpack.c.h.b16 %v1183
  %v4826 = vunpack.c.l.b16 %v1184
  %v4827 = vunpack.c.h.b16 %v1184
  %v4828 = vunpack.c.l.b16 %v1185
  %v4829 = vunpack.c.h.b16 %v1185
  %v4830 = vunpack.c.l.b16 %v1186
  %v4831 = vunpack.c.h.b16 %v1186
  %v4832 = vunpack.c.l.b16 %v1187
  %v4833 = vunpack.c.h.b16 %v1187
  %v4834 = vunpack.c.l.b16 %v1188
  %v4835 = vunpack.c.h.b16 %v1188
  %v4836 = vunpack.c.l.b16 %v1189
  %v4837 = vunpack.c.h.b16 %v1189
  %v4838 = vunpack.c.l.b16 %v1190
  %v4839 = vunpack.c.h.b16 %v1190
  %v4840 = vunpack.c.l.b16 %v1191
  %v4841 = vunpack.c.h.b16 %v1191
  %v4842 = vunpack.c.l.b16 %v1192
  %v4843 = vunpack.c.h.b16 %v1192
  %v4844 = vunpack.c.l.b16 %v1193
  %v4845 = vunpack.c.h.b16 %v1193
  %v4846 = vunpack.c.l.b16 %v1194
  %v4847 = vunpack.c.h.b16 %v1194
  %v4848 = vunpack.c.l.b16 %v1195
  %v4849 = vunpack.c.h.b16 %v1195
  %v4850 = vunpack.c.l.b16 %v1196
  %v4851 = vunpack.c.h.b16 %v1196
  %v4852 = vunpack.c.l.b16 %v1197
  %v4853 = vunpack.c.h.b16 %v1197
  %v4854 = vunpack.c.l.b16 %v1198
  %v4855 = vunpack.c.h.b16 %v1198
  %v4856 = vunpack.c.l.b16 %v1199
  %v4857 = vunpack.c.h.b16 %v1199
  %v4858 = vunpack.c.l.b16 %v1200
  %v4859 = vunpack.c.h.b16 %v1200
  %v4860 = vunpack.c.l.b16 %v1201
  %v4861 = vunpack.c.h.b16 %v1201
  %v4862 = vunpack.c.l.b16 %v1202
  %v4863 = vunpack.c.h.b16 %v1202
  %v4864 = vunpack.c.l.b16 %v1203
  %v4865 = vunpack.c.h.b16 %v1203
  %v4866 = vunpack.c.l.b16 %v1204
  %v4867 = vunpack.c.h.b16 %v1204
  %v4868 = vunpack.c.l.b16 %v1205
  %v4869 = vunpack.c.h.b16 %v1205
  %v4870 = vunpack.c.l.b16 %v1206
  %v4871 = vunpack.c.h.b16 %v1206
  %v4872 = vunpack.c.l.b16 %v1207
  %v4873 = vunpack.c.h.b16 %v1207
  %v4874 = vunpack.c.l.b16 %v1208
  %v4875 = vunpack.c.h.b16 %v1208
  %v4876 = vunpack.c.l.b16 %v1209
  %v4877 = vunpack.c.h.b16 %v1209
  %v4878 = vunpack.c.l.b16 %v1210
  %v4879 = vunpack.c.h.b16 %v1210
  %v4880 = vunpack.c.l.b16 %v1211
  %v4881 = vunpack.c.h.b16 %v1211
  %v4882 = vunpack.c.l.b16 %v1212
  %v4883 = vunpack.c.h.b16 %v1212
  %v4884 = vunpack.c.l.b16 %v1213
  %v4885 = vunpack.c.h.b16 %v1213
  %v4886 = vunpack.c.l.b16 %v1214
  %v4887 = vunpack.c.h.b16 %v1214
  %v4888 = vunpack.c.l.b16 %v1215
  %v4889 = vunpack.c.h.b16 %v1215
  %v4890 = vunpack.c.l.b16 %v1216
  %v4891 = vunpack.c.h.b16 %v1216
  %v4892 = vunpack.c.l.b16 %v1217
  %v4893 = vunpack.c.h.b16 %v1217
  %v4894 = vunpack.c.l.b16 %v1218
  %v4895 = vunpack.c.h.b16 %v1218
  %v4896 = vunpack.c.l.b16 %v1219
  %v4897 = vunpack.c.h.b16 %v1219
  %v4898 = vunpack.c.l.b16 %v1220
  %v4899 = vunpack.c.h.b16 %v1220
  %v4900 = vunpack.c.l.b16 %v1221
  %v4901 = vunpack.c.h.b16 %v1221
  %v4902 = vunpack.c.l.b16 %v1222
  %v4903 = vunpack.c.h.b16 %v1222
  %v4904 = vunpack.c.l.b16 %v1223
  %v4905 = vunpack.c.h.b16 %v1223
  %v4906 = vunpack.c.l.b16 %v1224
  %v4907 = vunpack.c.h.b16 %v1224
  %v4908 = vunpack.c.l.b16 %v1225
  %v4909 = vunpack.c.h.b16 %v1225
  %v4910 = vunpack.c.l.b16 %v1226
  %v4911 = vunpack.c.h.b16 %v1226
  %v4912 = vunpack.c.l.b16 %v1227
  %v4913 = vunpack.c.h.b16 %v1227
  %v4914 = vunpack.c.l.b16 %v1228
  %v4915 = vunpack.c.h.b16 %v1228
  %v4916 = vunpack.c.l.b16 %v1229
  %v4917 = vunpack.c.h.b16 %v1229
  %v4918 = vunpack.c.l.b16 %v1230
  %v4919 = vunpack.c.h.b16 %v1230
  %v4920 = vunpack.c.l.b16 %v1231
  %v4921 = vunpack.c.h.b16 %v1231
  %v4922 = vunpack.c.l.b16 %v1232
  %v4923 = vunpack.c.h.b16 %v1232
  %v4924 = vunpack.c.l.b16 %v1233
  %v4925 = vunpack.c.h.b16 %v1233
  %v4926 = vunpack.c.l.b16 %v1234
  %v4927 = vunpack.c.h.b16 %v1234
  %v4928 = vunpack.c.l.b16 %v1235
  %v4929 = vunpack.c.h.b16 %v1235
  %v4930 = vunpack.c.l.b16 %v1236
  %v4931 = vunpack.c.h.b16 %v1236
  %v4932 = vunpack.c.l.b16 %v1237
  %v4933 = vunpack.c.h.b16 %v1237
  %v4934 = vunpack.c.l.b16 %v1238
  %v4935 = vunpack.c.h.b16 %v1238
  %v4936 = vunpack.c.l.b16 %v1239
  %v4937 = vunpack.c.h.b16 %v1239
  %v4938 = vunpack.c.l.b16 %v1240
  %v4939 = vunpack.c.h.b16 %v1240
  %v4940 = vunpack.c.l.b16 %v1241
  %v4941 = vunpack.c.h.b16 %v1241
  %v4942 = vunpack.c.l.b16 %v1242
  %v4943 = vunpack.c.h.b16 %v1242
  %v4944 = vunpack.c.l.b16 %v1243
  %v4945 = vunpack.c.h.b16 %v1243
  %v4946 = vunpack.c.l.b16 %v1244
  %v4947 = vunpack.c.h.b16 %v1244
  %v4948 = vunpack.c.l.b16 %v1245
  %v4949 = vunpack.c.h.b16 %v1245
  %v4950 = vunpack.c.l.b16 %v1246
  %v4951 = vunpack.c.h.b16 %v1246
  %v4952 = vunpack.c.l.b16 %v1247
  %v4953 = vunpack.c.h.b16 %v1247
  %v4954 = vunpack.c.l.b16 %v1248
  %v4955 = vunpack.c.h.b16 %v1248
  %v4956 = vunpack.c.l.b16 %v1249
  %v4957 = vunpack.c.h.b16 %v1249
  %v4958 = vunpack.c.l.b16 %v1250
  %v4959 = vunpack.c.h.b16 %v1250
  %v4960 = vunpack.c.l.b16 %v1251
  %v4961 = vunpack.c.h.b16 %v1251
  %v4962 = vunpack.c.l.b16 %v1252
  %v4963 = vunpack.c.h.b16 %v1252
  %v4964 = vunpack.c.l.b16 %v1253
  %v4965 = vunpack.c.h.b16 %v1253
  %v4966 = vunpack.c.l.b16 %v1254
  %v4967 = vunpack.c.h.b16 %v1254
  %v4968 = vunpack.c.l.b16 %v1255
  %v4969 = vunpack.c.h.b16 %v1255
  %v4970 = vunpack.c.l.b16 %v1256
  %v4971 = vunpack.c.h.b16 %v1256
  %v4972 = vunpack.c.l.b16 %v1257
  %v4973 = vunpack.c.h.b16 %v1257
  %v4974 = vunpack.c.l.b16 %v1258
  %v4975 = vunpack.c.h.b16 %v1258
  %v4976 = vunpack.c.l.b16 %v1259
  %v4977 = vunpack.c.h.b16 %v1259
  %v4978 = vunpack.c.l.b16 %v1260
  %v4979 = vunpack.c.h.b16 %v1260
  %v4980 = vunpack.c.l.b16 %v1261
  %v4981 = vunpack.c.h.b16 %v1261
  %v4982 = vunpack.c.l.b16 %v1262
  %v4983 = vunpack.c.h.b16 %v1262
  %v4984 = vunpack.c.l.b16 %v1263
  %v4985 = vunpack.c.h.b16 %v1263
  %v4986 = vunpack.c.l.b16 %v1264
  %v4987 = vunpack.c.h.b16 %v1264
  %v4988 = vunpack.c.l.b16 %v1265
  %v4989 = vunpack.c.h.b16 %v1265
  %v4990 = vunpack.c.l.b16 %v1266
  %v4991 = vunpack.c.h.b16 %v1266
  %v4992 = vunpack.c.l.b16 %v1267
  %v4993 = vunpack.c.h.b16 %v1267
  %v4994 = vunpack.c.l.b16 %v1268
  %v4995 = vunpack.c.h.b16 %v1268
  %v4996 = vunpack.c.l.b16 %v1269
  %v4997 = vunpack.c.h.b16 %v1269
  %v4998 = vunpack.c.l.b16 %v1270
  %v4999 = vunpack.c.h.b16 %v1270
  %v5000 = vunpack.c.l.b16 %v1271
  %v5001 = vunpack.c.h.b16 %v1271
  %v5002 = vunpack.c.l.b16 %v1272
  %v5003 = vunpack.c.h.b16 %v1272
  %v5004 = vunpack.c.l.b16 %v1273
  %v5005 = vunpack.c.h.b16 %v1273
  %v5006 = vunpack.c.l.b16 %v1274
  %v5007 = vunpack.c.h.b16 %v1274
  %v5008 = vunpack.c.l.b16 %v1275
  %v5009 = vunpack.c.h.b16 %v1275
  %v5010 = vunpack.c.l.b16 %v1276
  %v5011 = vunpack.c.h.b16 %v1276
  %v5012 = vunpack.c.l.b16 %v1277
  %v5013 = vunpack.c.h.b16 %v1277
  %v5014 = vunpack.c.l.b16 %v1278
  %v5015 = vunpack.c.h.b16 %v1278
  %v5016 = vunpack.c.l.b16 %v1279
  %v5017 = vunpack.c.h.b16 %v1279
  %v5018 = vunpack.c.l.b16 %v1280
  %v5019 = vunpack.c.h.b16 %v1280
  %v5020 = vunpack.c.l.b16 %v1281
  %v5021 = vunpack.c.h.b16 %v1281
  %v5022 = vunpack.c.l.b16 %v1282
  %v5023 = vunpack.c.h.b16 %v1282
  %v5024 = vunpack.c.l.b16 %v1283
  %v5025 = vunpack.c.h.b16 %v1283
  %v5026 = vunpack.c.l.b16 %v1284
  %v5027 = vunpack.c.h.b16 %v1284
  %v5028 = vunpack.c.l.b16 %v1285
  %v5029 = vunpack.c.h.b16 %v1285
  %v5030 = vunpack.c.l.b16 %v1286
  %v5031 = vunpack.c.h.b16 %v1286
  %v5032 = vunpack.c.l.b16 %v1287
  %v5033 = vunpack.c.h.b16 %v1287
  %v5034 = vunpack.c.l.b16 %v1288
  %v5035 = vunpack.c.h.b16 %v1288
  %v5036 = vunpack.c.l.b16 %v1289
  %v5037 = vunpack.c.h.b16 %v1289
  %v5038 = vunpack.c.l.b16 %v1290
  %v5039 = vunpack.c.h.b16 %v1290
  %v5040 = vunpack.c.l.b16 %v1291
  %v5041 = vunpack.c.h.b16 %v1291
  %v5042 = vunpack.c.l.b16 %v1292
  %v5043 = vunpack.c.h.b16 %v1292
  %v5044 = vunpack.c.l.b16 %v1293
  %v5045 = vunpack.c.h.b16 %v1293
  %v5046 = vunpack.c.l.b16 %v1294
  %v5047 = vunpack.c.h.b16 %v1294
  %v5048 = vunpack.c.l.b16 %v1295
  %v5049 = vunpack.c.h.b16 %v1295
  %v5050 = vunpack.c.l.b16 %v1296
  %v5051 = vunpack.c.h.b16 %v1296
  %v5052 = vunpack.c.l.b16 %v1297
  %v5053 = vunpack.c.h.b16 %v1297
  %v5054 = vunpack.c.l.b16 %v1298
  %v5055 = vunpack.c.h.b16 %v1298
  %v5056 = vunpack.c.l.b16 %v1299
  %v5057 = vunpack.c.h.b16 %v1299
  %v5058 = vunpack.c.l.b16 %v1300
  %v5059 = vunpack.c.h.b16 %v1300
  %v5060 = vunpack.c.l.b16 %v1301
  %v5061 = vunpack.c.h.b16 %v1301
  %v5062 = vunpack.c.l.b16 %v1302
  %v5063 = vunpack.c.h.b16 %v1302
  %v5064 = vunpack.c.l.b16 %v1303
  %v5065 = vunpack.c.h.b16 %v1303
  %v5066 = vunpack.c.l.b16 %v1304
  %v5067 = vunpack.c.h.b16 %v1304
  %v5068 = vunpack.c.l.b16 %v1305
  %v5069 = vunpack.c.h.b16 %v1305
  %v5070 = vunpack.c.l.b16 %v1306
  %v5071 = vunpack.c.h.b16 %v1306
  %v5072 = vunpack.c.l.b16 %v1307
  %v5073 = vunpack.c.h.b16 %v1307
  %v5074 = vunpack.c.l.b16 %v1308
  %v5075 = vunpack.c.h.b16 %v1308
  %v5076 = vunpack.c.l.b16 %v1309
  %v5077 = vunpack.c.h.b16 %v1309
  %v5078 = vunpack.c.l.b16 %v1310
  %v5079 = vunpack.c.h.b16 %v1310
  %v5080 = vunpack.c.l.b16 %v1311
  %v5081 = vunpack.c.h.b16 %v1311
  %v5082 = vunpack.c.l.b16 %v1312
  %v5083 = vunpack.c.h.b16 %v1312
  %v5084 = vunpack.c.l.b16 %v1313
  %v5085 = vunpack.c.h.b16 %v1313
  %v5086 = vunpack.c.l.b16 %v1314
  %v5087 = vunpack.c.h.b16 %v1314
  %v5088 = vunpack.c.l.b16 %v1315
  %v5089 = vunpack.c.h.b16 %v1315
  %v5090 = vunpack.c.l.b16 %v1316
  %v5091 = vunpack.c.h.b16 %v1316
  %v5092 = vunpack.c.l.b16 %v1317
  %v5093 = vunpack.c.h.b16 %v1317
  %v5094 = vunpack.c.l.b16 %v1318
  %v5095 = vunpack.c.h.b16 %v1318
  %v5096 = vunpack.c.l.b16 %v1319
  %v5097 = vunpack.c.h.b16 %v1319
  %v5098 = vunpack.c.l.b16 %v1320
  %v5099 = vunpack.c.h.b16 %v1320
  %v5100 = vunpack.c.l.b16 %v1321
  %v5101 = vunpack.c.h.b16 %v1321
  %v5102 = vunpack.c.l.b16 %v1322
  %v5103 = vunpack.c.h.b16 %v1322
  %v5104 = vunpack.c.l.b16 %v1323
  %v5105 = vunpack.c.h.b16 %v1323
  %v5106 = vunpack.c.l.b16 %v1324
  %v5107 = vunpack.c.h.b16 %v1324
  %v5108 = vunpack.c.l.b16 %v1325
  %v5109 = vunpack.c.h.b16 %v1325
  %v5110 = vunpack.c.l.b16 %v1326
  %v5111 = vunpack.c.h.b16 %v1326
  %v5112 = vunpack.c.l.b16 %v1327
  %v5113 = vunpack.c.h.b16 %v1327
  %v5114 = vunpack.c.l.b16 %v1328
  %v5115 = vunpack.c.h.b16 %v1328
  %v5116 = vunpack.c.l.b16 %v1329
  %v5117 = vunpack.c.h.b16 %v1329
  %v5118 = vunpack.c.l.b16 %v1330
  %v5119 = vunpack.c.h.b16 %v1330
  %v5120 = vunpack.c.l.b16 %v1331
  %v5121 = vunpack.c.h.b16 %v1331
  %v5122 = vunpack.c.l.b16 %v1332
  %v5123 = vunpack.c.h.b16 %v1332
  %v5124 = vunpack.c.l.b16 %v1333
  %v5125 = vunpack.c.h.b16 %v1333
  %v5126 = vunpack.c.l.b16 %v1334
  %v5127 = vunpack.c.h.b16 %v1334
  %v5128 = vunpack.c.l.b16 %v1335
  %v5129 = vunpack.c.h.b16 %v1335
  %v5130 = vunpack.c.l.b16 %v1336
  %v5131 = vunpack.c.h.b16 %v1336
  %v5132 = vunpack.c.l.b16 %v1337
  %v5133 = vunpack.c.h.b16 %v1337
  %v5134 = vunpack.c.l.b16 %v1338
  %v5135 = vunpack.c.h.b16 %v1338
  %v5136 = vunpack.c.l.b16 %v1339
  %v5137 = vunpack.c.h.b16 %v1339
  %v5138 = vunpack.c.l.b16 %v1340
  %v5139 = vunpack.c.h.b16 %v1340
  %v5140 = vunpack.c.l.b16 %v1341
  %v5141 = vunpack.c.h.b16 %v1341
  %v5142 = vunpack.c.l.b16 %v1342
  %v5143 = vunpack.c.h.b16 %v1342
  %v5144 = vunpack.c.l.b16 %v1343
  %v5145 = vunpack.c.h.b16 %v1343
  %v5146 = vunpack.c.l.b16 %v1344
  %v5147 = vunpack.c.h.b16 %v1344
  %v5148 = vunpack.c.l.b16 %v1345
  %v5149 = vunpack.c.h.b16 %v1345
  %v5150 = vunpack.c.l.b16 %v1346
  %v5151 = vunpack.c.h.b16 %v1346
  %v5152 = vunpack.c.l.b16 %v1347
  %v5153 = vunpack.c.h.b16 %v1347
  %v5154 = vunpack.c.l.b16 %v1348
  %v5155 = vunpack.c.h.b16 %v1348
  %v5156 = vunpack.c.l.b16 %v1349
  %v5157 = vunpack.c.h.b16 %v1349
  %v5158 = vunpack.c.l.b16 %v1350
  %v5159 = vunpack.c.h.b16 %v1350
  %v5160 = vunpack.c.l.b16 %v1351
  %v5161 = vunpack.c.h.b16 %v1351
  %v5162 = vunpack.c.l.b16 %v1352
  %v5163 = vunpack.c.h.b16 %v1352
  %v5164 = vunpack.c.l.b16 %v1353
  %v5165 = vunpack.c.h.b16 %v1353
  %v5166 = vunpack.c.l.b16 %v1354
  %v5167 = vunpack.c.h.b16 %v1354
  %v5168 = vunpack.c.l.b16 %v1355
  %v5169 = vunpack.c.h.b16 %v1355
  %v5170 = vunpack.c.l.b16 %v1356
  %v5171 = vunpack.c.h.b16 %v1356
  %v5172 = vunpack.c.l.b16 %v1357
  %v5173 = vunpack.c.h.b16 %v1357
  %v5174 = vunpack.c.l.b16 %v1358
  %v5175 = vunpack.c.h.b16 %v1358
  %v5176 = vunpack.c.l.b16 %v1359
  %v5177 = vunpack.c.h.b16 %v1359
  %v5178 = vunpack.c.l.b16 %v1360
  %v5179 = vunpack.c.h.b16 %v1360
  %v5180 = vunpack.c.l.b16 %v1361
  %v5181 = vunpack.c.h.b16 %v1361
  %v5182 = vunpack.c.l.b16 %v1362
  %v5183 = vunpack.c.h.b16 %v1362
  %v5184 = vunpack.c.l.b16 %v1363
  %v5185 = vunpack.c.h.b16 %v1363
  %v5186 = vunpack.c.l.b16 %v1364
  %v5187 = vunpack.c.h.b16 %v1364
  %v5188 = vunpack.c.l.b16 %v1365
  %v5189 = vunpack.c.h.b16 %v1365
  %v5190 = vunpack.c.l.b16 %v1366
  %v5191 = vunpack.c.h.b16 %v1366
  %v5192 = vunpack.c.l.b16 %v1367
  %v5193 = vunpack.c.h.b16 %v1367
  %v5194 = vunpack.c.l.b16 %v1368
  %v5195 = vunpack.c.h.b16 %v1368
  %v5196 = vunpack.c.l.b16 %v1369
  %v5197 = vunpack.c.h.b16 %v1369
  %v5198 = vunpack.c.l.b16 %v1370
  %v5199 = vunpack.c.h.b16 %v1370
  %v5200 = vunpack.c.l.b16 %v1371
  %v5201 = vunpack.c.h.b16 %v1371
  %v5202 = vunpack.c.l.b16 %v1372
  %v5203 = vunpack.c.h.b16 %v1372
  %v5204 = vunpack.c.l.b16 %v1373
  %v5205 = vunpack.c.h.b16 %v1373
  %v5206 = vunpack.c.l.b16 %v1374
  %v5207 = vunpack.c.h.b16 %v1374
  %v5208 = vunpack.c.l.b16 %v1375
  %v5209 = vunpack.c.h.b16 %v1375
  %v5210 = vunpack.c.l.b16 %v1376
  %v5211 = vunpack.c.h.b16 %v1376
  %v5212 = vunpack.c.l.b16 %v1377
  %v5213 = vunpack.c.h.b16 %v1377
  %v5214 = vunpack.c.l.b16 %v1378
  %v5215 = vunpack.c.h.b16 %v1378
  %v5216 = vunpack.c.l.b16 %v1379
  %v5217 = vunpack.c.h.b16 %v1379
  %v5218 = vunpack.c.l.b16 %v1380
  %v5219 = vunpack.c.h.b16 %v1380
  %v5220 = vunpack.c.l.b16 %v1381
  %v5221 = vunpack.c.h.b16 %v1381
  %v5222 = vunpack.c.l.b16 %v1382
  %v5223 = vunpack.c.h.b16 %v1382
  %v5224 = vunpack.c.l.b16 %v1383
  %v5225 = vunpack.c.h.b16 %v1383
  %v5226 = vunpack.c.l.b16 %v1384
  %v5227 = vunpack.c.h.b16 %v1384
  %v5228 = vunpack.c.l.b16 %v1385
  %v5229 = vunpack.c.h.b16 %v1385
  %v5230 = vunpack.c.l.b16 %v1386
  %v5231 = vunpack.c.h.b16 %v1386
  %v5232 = vunpack.c.l.b16 %v1387
  %v5233 = vunpack.c.h.b16 %v1387
  %v5234 = vunpack.c.l.b16 %v1388
  %v5235 = vunpack.c.h.b16 %v1388
  %v5236 = vunpack.c.l.b16 %v1389
  %v5237 = vunpack.c.h.b16 %v1389
  %v5238 = vunpack.c.l.b16 %v1390
  %v5239 = vunpack.c.h.b16 %v1390
  %v5240 = vunpack.c.l.b16 %v1391
  %v5241 = vunpack.c.h.b16 %v1391
  %v5242 = vpack.c.b16 %v2686, %v2682
  %v5243 = vpack.c.b16 %v2687, %v2683
  %v5244 = vpack.c.b16 %v2688, %v2684
  %v5245 = vpack.c.b16 %v2689, %v2685
  %v5246 = vpack.c.b16 %v2694, %v2690
  %v5247 = vpack.c.b16 %v2695, %v2691
  %v5248 = vpack.c.b16 %v2696, %v2692
  %v5249 = vpack.c.b16 %v2697, %v2693
  %v5250 = vpack.c.b16 %v2702, %v2698
  %v5251 = vpack.c.b16 %v2703, %v2699
  %v5252 = vpack.c.b16 %v2704, %v2700
  %v5253 = vpack.c.b16 %v2705, %v2701
  %v5254 = vpack.c.b16 %v2710, %v2706
  %v5255 = vpack.c.b16 %v2711, %v2707
  %v5256 = vpack.c.b16 %v2712, %v2708
  %v5257 = vpack.c.b16 %v2713, %v2709
  %v5258 = vpack.c.b16 %v2718, %v2714
  %v5259 = vpack.c.b16 %v2719, %v2715
  %v5260 = vpack.c.b16 %v2720, %v2716
  %v5261 = vpack.c.b16 %v2721, %v2717
  %v5262 = vpack.c.b16 %v2726, %v2722
  %v5263 = vpack.c.b16 %v2727, %v2723
  %v5264 = vpack.c.b16 %v2728, %v2724
  %v5265 = vpack.c.b16 %v2729, %v2725
  %v5266 = vpack.c.b16 %v2734, %v2730
  %v5267 = vpack.c.b16 %v2735, %v2731
  %v5268 = vpack.c.b16 %v2736, %v2732
  %v5269 = vpack.c.b16 %v2737, %v2733
  %v5270 = vpack.c.b16 %v2742, %v2738
  %v5271 = vpack.c.b16 %v2743, %v2739
  %v5272 = vpack.c.b16 %v2744, %v2740
  %v5273 = vpack.c.b16 %v2745, %v2741
  %v5274 = vpack.c.b16 %v2750, %v2746
  %v5275 = vpack.c.b16 %v2751, %v2747
  %v5276 = vpack.c.b16 %v2752, %v2748
  %v5277 = vpack.c.b16 %v2753, %v2749
  %v5278 = vpack.c.b16 %v2758, %v2754
  %v5279 = vpack.c.b16 %v2759, %v2755
  %v5280 = vpack.c.b16 %v2760, %v2756
  %v5281 = vpack.c.b16 %v2761, %v2757
  %v5282 = vpack.c.b16 %v2766, %v2762
  %v5283 = vpack.c.b16 %v2767, %v2763
  %v5284 = vpack.c.b16 %v2768, %v2764
  %v5285 = vpack.c.b16 %v2769, %v2765
  %v5286 = vpack.c.b16 %v2774, %v2770
  %v5287 = vpack.c.b16 %v2775, %v2771
  %v5288 = vpack.c.b16 %v2776, %v2772
  %v5289 = vpack.c.b16 %v2777, %v2773
  %v5290 = vpack.c.b16 %v2782, %v2778
  %v5291 = vpack.c.b16 %v2783, %v2779
  %v5292 = vpack.c.b16 %v2784, %v2780
  %v5293 = vpack.c.b16 %v2785, %v2781
  %v5294 = vpack.c.b16 %v2790, %v2786
  %v5295 = vpack.c.b16 %v2791, %v2787
  %v5296 = vpack.c.b16 %v2792, %v2788
  %v5297 = vpack.c.b16 %v2793, %v2789
  %v5298 = vpack.c.b16 %v2798, %v2794
  %v5299 = vpack.c.b16 %v2799, %v2795
  %v5300 = vpack.c.b16 %v2800, %v2796
  %v5301 = vpack.c.b16 %v2801, %v2797
  %v5302 = vpack.c.b16 %v2806, %v2802
  %v5303 = vpack.c.b16 %v2807, %v2803
  %v5304 = vpack.c.b16 %v2808, %v2804
  %v5305 = vpack.c.b16 %v2809, %v2805
  %v5306 = vpack.c.b16 %v2814, %v2810
  %v5307 = vpack.c.b16 %v2815, %v2811
  %v5308 = vpack.c.b16 %v2816, %v2812
  %v5309 = vpack.c.b16 %v2817, %v2813
  %v5310 = vpack.c.b16 %v2822, %v2818
  %v5311 = vpack.c.b16 %v2823, %v2819
  %v5312 = vpack.c.b16 %v2824, %v2820
  %v5313 = vpack.c.b16 %v2825, %v2821
  %v5314 = vpack.c.b16 %v2830, %v2826
  %v5315 = vpack.c.b16 %v2831, %v2827
  %v5316 = vpack.c.b16 %v2832, %v2828
  %v5317 = vpack.c.b16 %v2833, %v2829
  %v5318 = vpack.c.b16 %v2838, %v2834
  %v5319 = vpack.c.b16 %v2839, %v2835
  %v5320 = vpack.c.b16 %v2840, %v2836
  %v5321 = vpack.c.b16 %v2841, %v2837
  %v5322 = vpack.c.b16 %v2846, %v2842
  %v5323 = vpack.c.b16 %v2847, %v2843
  %v5324 = vpack.c.b16 %v2848, %v2844
  %v5325 = vpack.c.b16 %v2849, %v2845
  %v5326 = vpack.c.b16 %v2854, %v2850
  %v5327 = vpack.c.b16 %v2855, %v2851
  %v5328 = vpack.c.b16 %v2856, %v2852
  %v5329 = vpack.c.b16 %v2857, %v2853
  %v5330 = vpack.c.b16 %v2862, %v2858
  %v5331 = vpack.c.b16 %v2863, %v2859
  %v5332 = vpack.c.b16 %v2864, %v2860
  %v5333 = vpack.c.b16 %v2865, %v2861
  %v5334 = vpack.c.b16 %v2870, %v2866
  %v5335 = vpack.c.b16 %v2871, %v2867
  %v5336 = vpack.c.b16 %v2872, %v2868
  %v5337 = vpack.c.b16 %v2873, %v2869
  %v5338 = vpack.c.b16 %v2878, %v2874
  %v5339 = vpack.c.b16 %v2879, %v2875
  %v5340 = vpack.c.b16 %v2880, %v2876
  %v5341 = vpack.c.b16 %v2881, %v2877
  %v5342 = vpack.c.b16 %v2886, %v2882
  %v5343 = vpack.c.b16 %v2887, %v2883
  %v5344 = vpack.c.b16 %v2888, %v2884
  %v5345 = vpack.c.b16 %v2889, %v2885
  %v5346 = vpack.c.b16 %v2894, %v2890
  %v5347 = vpack.c.b16 %v2895, %v2891
  %v5348 = vpack.c.b16 %v2896, %v2892
  %v5349 = vpack.c.b16 %v2897, %v2893
  %v5350 = vpack.c.b16 %v2902, %v2898
  %v5351 = vpack.c.b16 %v2903, %v2899
  %v5352 = vpack.c.b16 %v2904, %v2900
  %v5353 = vpack.c.b16 %v2905, %v2901
  %v5354 = vpack.c.b16 %v2910, %v2906
  %v5355 = vpack.c.b16 %v2911, %v2907
  %v5356 = vpack.c.b16 %v2912, %v2908
  %v5357 = vpack.c.b16 %v2913, %v2909
  %v5358 = vpack.c.b16 %v2918, %v2914
  %v5359 = vpack.c.b16 %v2919, %v2915
  %v5360 = vpack.c.b16 %v2920, %v2916
  %v5361 = vpack.c.b16 %v2921, %v2917
  %v5362 = vpack.c.b16 %v2926, %v2922
  %v5363 = vpack.c.b16 %v2927, %v2923
  %v5364 = vpack.c.b16 %v2928, %v2924
  %v5365 = vpack.c.b16 %v2929, %v2925
  %v5366 = vpack.c.b16 %v2934, %v2930
  %v5367 = vpack.c.b16 %v2935, %v2931
  %v5368 = vpack.c.b16 %v2936, %v2932
  %v5369 = vpack.c.b16 %v2937, %v2933
  %v5370 = vpack.c.b16 %v2942, %v2938
  %v5371 = vpack.c.b16 %v2943, %v2939
  %v5372 = vpack.c.b16 %v2944, %v2940
  %v5373 = vpack.c.b16 %v2945, %v2941
  %v5374 = vpack.c.b16 %v2950, %v2946
  %v5375 = vpack.c.b16 %v2951, %v2947
  %v5376 = vpack.c.b16 %v2952, %v2948
  %v5377 = vpack.c.b16 %v2953, %v2949
  %v5378 = vpack.c.b16 %v2958, %v2954
  %v5379 = vpack.c.b16 %v2959, %v2955
  %v5380 = vpack.c.b16 %v2960, %v2956
  %v5381 = vpack.c.b16 %v2961, %v2957
  %v5382 = vpack.c.b16 %v2966, %v2962
  %v5383 = vpack.c.b16 %v2967, %v2963
  %v5384 = vpack.c.b16 %v2968, %v2964
  %v5385 = vpack.c.b16 %v2969, %v2965
  %v5386 = vpack.c.b16 %v2974, %v2970
  %v5387 = vpack.c.b16 %v2975, %v2971
  %v5388 = vpack.c.b16 %v2976, %v2972
  %v5389 = vpack.c.b16 %v2977, %v2973
  %v5390 = vpack.c.b16 %v2982, %v2978
  %v5391 = vpack.c.b16 %v2983, %v2979
  %v5392 = vpack.c.b16 %v2984, %v2980
  %v5393 = vpack.c.b16 %v2985, %v2981
  %v5394 = vpack.c.b16 %v2990, %v2986
  %v5395 = vpack.c.b16 %v2991, %v2987
  %v5396 = vpack.c.b16 %v2992, %v2988
  %v5397 = vpack.c.b16 %v2993, %v2989
  %v5398 = vpack.c.b16 %v2998, %v2994
  %v5399 = vpack.c.b16 %v2999, %v2995
  %v5400 = vpack.c.b16 %v3000, %v2996
  %v5401 = vpack.c.b16 %v3001, %v2997
  %v5402 = vpack.c.b16 %v3006, %v3002
  %v5403 = vpack.c.b16 %v3007, %v3003
  %v5404 = vpack.c.b16 %v3008, %v3004
  %v5405 = vpack.c.b16 %v3009, %v3005
  %v5406 = vpack.c.b16 %v3014, %v3010
  %v5407 = vpack.c.b16 %v3015, %v3011
  %v5408 = vpack.c.b16 %v3016, %v3012
  %v5409 = vpack.c.b16 %v3017, %v3013
  %v5410 = vpack.c.b16 %v3022, %v3018
  %v5411 = vpack.c.b16 %v3023, %v3019
  %v5412 = vpack.c.b16 %v3024, %v3020
  %v5413 = vpack.c.b16 %v3025, %v3021
  %v5414 = vpack.c.b16 %v3030, %v3026
  %v5415 = vpack.c.b16 %v3031, %v3027
  %v5416 = vpack.c.b16 %v3032, %v3028
  %v5417 = vpack.c.b16 %v3033, %v3029
  %v5418 = vpack.c.b16 %v3038, %v3034
  %v5419 = vpack.c.b16 %v3039, %v3035
  %v5420 = vpack.c.b16 %v3040, %v3036
  %v5421 = vpack.c.b16 %v3041, %v3037
  %v5422 = vpack.c.b16 %v3046, %v3042
  %v5423 = vpack.c.b16 %v3047, %v3043
  %v5424 = vpack.c.b16 %v3048, %v3044
  %v5425 = vpack.c.b16 %v3049, %v3045
  %v5426 = vpack.c.b16 %v3054, %v3050
  %v5427 = vpack.c.b16 %v3055, %v3051
  %v5428 = vpack.c.b16 %v3056, %v3052
  %v5429 = vpack.c.b16 %v3057, %v3053
  %v5430 = vpack.c.b16 %v3062, %v3058
  %v5431 = vpack.c.b16 %v3063, %v3059
  %v5432 = vpack.c.b16 %v3064, %v3060
  %v5433 = vpack.c.b16 %v3065, %v3061
  %v5434 = vpack.c.b16 %v3070, %v3066
  %v5435 = vpack.c.b16 %v3071, %v3067
  %v5436 = vpack.c.b16 %v3072, %v3068
  %v5437 = vpack.c.b16 %v3073, %v3069
  %v5438 = vpack.c.b16 %v3078, %v3074
  %v5439 = vpack.c.b16 %v3079, %v3075
  %v5440 = vpack.c.b16 %v3080, %v3076
  %v5441 = vpack.c.b16 %v3081, %v3077
  %v5442 = vpack.c.b16 %v3086, %v3082
  %v5443 = vpack.c.b16 %v3087, %v3083
  %v5444 = vpack.c.b16 %v3088, %v3084
  %v5445 = vpack.c.b16 %v3089, %v3085
  %v5446 = vpack.c.b16 %v3094, %v3090
  %v5447 = vpack.c.b16 %v3095, %v3091
  %v5448 = vpack.c.b16 %v3096, %v3092
  %v5449 = vpack.c.b16 %v3097, %v3093
  %v5450 = vpack.c.b16 %v3102, %v3098
  %v5451 = vpack.c.b16 %v3103, %v3099
  %v5452 = vpack.c.b16 %v3104, %v3100
  %v5453 = vpack.c.b16 %v3105, %v3101
  %v5454 = vpack.c.b16 %v3110, %v3106
  %v5455 = vpack.c.b16 %v3111, %v3107
  %v5456 = vpack.c.b16 %v3112, %v3108
  %v5457 = vpack.c.b16 %v3113, %v3109
  %v5458 = vpack.c.b16 %v3118, %v3114
  %v5459 = vpack.c.b16 %v3119, %v3115
  %v5460 = vpack.c.b16 %v3120, %v3116
  %v5461 = vpack.c.b16 %v3121, %v3117
  %v5462 = vpack.c.b16 %v3126, %v3122
  %v5463 = vpack.c.b16 %v3127, %v3123
  %v5464 = vpack.c.b16 %v3128, %v3124
  %v5465 = vpack.c.b16 %v3129, %v3125
  %v5466 = vpack.c.b16 %v3134, %v3130
  %v5467 = vpack.c.b16 %v3135, %v3131
  %v5468 = vpack.c.b16 %v3136, %v3132
  %v5469 = vpack.c.b16 %v3137, %v3133
  %v5470 = vpack.c.b16 %v3142, %v3138
  %v5471 = vpack.c.b16 %v3143, %v3139
  %v5472 = vpack.c.b16 %v3144, %v3140
  %v5473 = vpack.c.b16 %v3145, %v3141
  %v5474 = vpack.c.b16 %v3150, %v3146
  %v5475 = vpack.c.b16 %v3151, %v3147
  %v5476 = vpack.c.b16 %v3152, %v3148
  %v5477 = vpack.c.b16 %v3153, %v3149
  %v5478 = vpack.c.b16 %v3158, %v3154
  %v5479 = vpack.c.b16 %v3159, %v3155
  %v5480 = vpack.c.b16 %v3160, %v3156
  %v5481 = vpack.c.b16 %v3161, %v3157
  %v5482 = vpack.c.b16 %v3166, %v3162
  %v5483 = vpack.c.b16 %v3167, %v3163
  %v5484 = vpack.c.b16 %v3168, %v3164
  %v5485 = vpack.c.b16 %v3169, %v3165
  %v5486 = vpack.c.b16 %v3174, %v3170
  %v5487 = vpack.c.b16 %v3175, %v3171
  %v5488 = vpack.c.b16 %v3176, %v3172
  %v5489 = vpack.c.b16 %v3177, %v3173
  %v5490 = vpack.c.b16 %v3182, %v3178
  %v5491 = vpack.c.b16 %v3183, %v3179
  %v5492 = vpack.c.b16 %v3184, %v3180
  %v5493 = vpack.c.b16 %v3185, %v3181
  %v5494 = vpack.c.b16 %v3190, %v3186
  %v5495 = vpack.c.b16 %v3191, %v3187
  %v5496 = vpack.c.b16 %v3192, %v3188
  %v5497 = vpack.c.b16 %v3193, %v3189
  %v5498 = vpack.c.b16 %v3198, %v3194
  %v5499 = vpack.c.b16 %v3199, %v3195
  %v5500 = vpack.c.b16 %v3200, %v3196
  %v5501 = vpack.c.b16 %v3201, %v3197
  %v5502 = vpack.c.b16 %v3206, %v3202
  %v5503 = vpack.c.b16 %v3207, %v3203
  %v5504 = vpack.c.b16 %v3208, %v3204
  %v5505 = vpack.c.b16 %v3209, %v3205
  %v5506 = vpack.c.b16 %v3214, %v3210
  %v5507 = vpack.c.b16 %v3215, %v3211
  %v5508 = vpack.c.b16 %v3216, %v3212
  %v5509 = vpack.c.b16 %v3217, %v3213
  %v5510 = vpack.c.b16 %v3222, %v3218
  %v5511 = vpack.c.b16 %v3223, %v3219
  %v5512 = vpack.c.b16 %v3224, %v3220
  %v5513 = vpack.c.b16 %v3225, %v3221
  %v5514 = vpack.c.b16 %v3230, %v3226
  %v5515 = vpack.c.b16 %v3231, %v3227
  %v5516 = vpack.c.b16 %v3232, %v3228
  %v5517 = vpack.c.b16 %v3233, %v3229
  %v5518 = vpack.c.b16 %v3238, %v3234
  %v5519 = vpack.c.b16 %v3239, %v3235
  %v5520 = vpack.c.b16 %v3240, %v3236
  %v5521 = vpack.c.b16 %v3241, %v3237
  %v5522 = vpack.c.b16 %v3246, %v3242
  %v5523 = vpack.c.b16 %v3247, %v3243
  %v5524 = vpack.c.b16 %v3248, %v3244
  %v5525 = vpack.c.b16 %v3249, %v3245
  %v5526 = vpack.c.b16 %v3254, %v3250
  %v5527 = vpack.c.b16 %v3255, %v3251
  %v5528 = vpack.c.b16 %v3256, %v3252
  %v5529 = vpack.c.b16 %v3257, %v3253
  %v5530 = vpack.c.b16 %v3262, %v3258
  %v5531 = vpack.c.b16 %v3263, %v3259
  %v5532 = vpack.c.b16 %v3264, %v3260
  %v5533 = vpack.c.b16 %v3265, %v3261
  %v5534 = vpack.c.b16 %v3270, %v3266
  %v5535 = vpack.c.b16 %v3271, %v3267
  %v5536 = vpack.c.b16 %v3272, %v3268
  %v5537 = vpack.c.b16 %v3273, %v3269
  %v5538 = vpack.c.b16 %v3278, %v3274
  %v5539 = vpack.c.b16 %v3279, %v3275
  %v5540 = vpack.c.b16 %v3280, %v3276
  %v5541 = vpack.c.b16 %v3281, %v3277
  %v5542 = vpack.c.b16 %v3286, %v3282
  %v5543 = vpack.c.b16 %v3287, %v3283
  %v5544 = vpack.c.b16 %v3288, %v3284
  %v5545 = vpack.c.b16 %v3289, %v3285
  %v5546 = vpack.c.b16 %v3294, %v3290
  %v5547 = vpack.c.b16 %v3295, %v3291
  %v5548 = vpack.c.b16 %v3296, %v3292
  %v5549 = vpack.c.b16 %v3297, %v3293
  %v5550 = vpack.c.b16 %v3302, %v3298
  %v5551 = vpack.c.b16 %v3303, %v3299
  %v5552 = vpack.c.b16 %v3304, %v3300
  %v5553 = vpack.c.b16 %v3305, %v3301
  %v5554 = vpack.c.b16 %v3310, %v3306
  %v5555 = vpack.c.b16 %v3311, %v3307
  %v5556 = vpack.c.b16 %v3312, %v3308
  %v5557 = vpack.c.b16 %v3313, %v3309
  %v5558 = vpack.c.b16 %v3318, %v3314
  %v5559 = vpack.c.b16 %v3319, %v3315
  %v5560 = vpack.c.b16 %v3320, %v3316
  %v5561 = vpack.c.b16 %v3321, %v3317
  %v5562 = vpack.c.b16 %v3326, %v3322
  %v5563 = vpack.c.b16 %v3327, %v3323
  %v5564 = vpack.c.b16 %v3328, %v3324
  %v5565 = vpack.c.b16 %v3329, %v3325
  %v5566 = vpack.c.b16 %v3334, %v3330
  %v5567 = vpack.c.b16 %v3335, %v3331
  %v5568 = vpack.c.b16 %v3336, %v3332
  %v5569 = vpack.c.b16 %v3337, %v3333
  %v5570 = vpack.c.b16 %v3342, %v3338
  %v5571 = vpack.c.b16 %v3343, %v3339
  %v5572 = vpack.c.b16 %v3344, %v3340
  %v5573 = vpack.c.b16 %v3345, %v3341
  %v5574 = vpack.c.b16 %v3350, %v3346
  %v5575 = vpack.c.b16 %v3351, %v3347
  %v5576 = vpack.c.b16 %v3352, %v3348
  %v5577 = vpack.c.b16 %v3353, %v3349
  %v5578 = vpack.c.b16 %v3358, %v3354
  %v5579 = vpack.c.b16 %v3359, %v3355
  %v5580 = vpack.c.b16 %v3360, %v3356
  %v5581 = vpack.c.b16 %v3361, %v3357
  %v5582 = vpack.c.b16 %v3366, %v3362
  %v5583 = vpack.c.b16 %v3367, %v3363
  %v5584 = vpack.c.b16 %v3368, %v3364
  %v5585 = vpack.c.b16 %v3369, %v3365
  %v5586 = vpack.c.b16 %v3374, %v3370
  %v5587 = vpack.c.b16 %v3375, %v3371
  %v5588 = vpack.c.b16 %v3376, %v3372
  %v5589 = vpack.c.b16 %v3377, %v3373
  %v5590 = vpack.c.b16 %v3382, %v3378
  %v5591 = vpack.c.b16 %v3383, %v3379
  %v5592 = vpack.c.b16 %v3384, %v3380
  %v5593 = vpack.c.b16 %v3385, %v3381
  %v5594 = vpack.c.b16 %v3390, %v3386
  %v5595 = vpack.c.b16 %v3391, %v3387
  %v5596 = vpack.c.b16 %v3392, %v3388
  %v5597 = vpack.c.b16 %v3393, %v3389
  %v5598 = vpack.c.b16 %v3398, %v3394
  %v5599 = vpack.c.b16 %v3399, %v3395
  %v5600 = vpack.c.b16 %v3400, %v3396
  %v5601 = vpack.c.b16 %v3401, %v3397
  %v5602 = vpack.c.b16 %v3406, %v3402
  %v5603 = vpack.c.b16 %v3407, %v3403
  %v5604 = vpack.c.b16 %v3408, %v3404
  %v5605 = vpack.c.b16 %v3409, %v3405
  %v5606 = vpack.c.b16 %v3414, %v3410
  %v5607 = vpack.c.b16 %v3415, %v3411
  %v5608 = vpack.c.b16 %v3416, %v3412
  %v5609 = vpack.c.b16 %v3417, %v3413
  %v5610 = vpack.c.b16 %v3422, %v3418
  %v5611 = vpack.c.b16 %v3423, %v3419
  %v5612 = vpack.c.b16 %v3424, %v3420
  %v5613 = vpack.c.b16 %v3425, %v3421
  %v5614 = vpack.c.b16 %v3430, %v3426
  %v5615 = vpack.c.b16 %v3431, %v3427
  %v5616 = vpack.c.b16 %v3432, %v3428
  %v5617 = vpack.c.b16 %v3433, %v3429
  %v5618 = vpack.c.b16 %v3438, %v3434
  %v5619 = vpack.c.b16 %v3439, %v3435
  %v5620 = vpack.c.b16 %v3440, %v3436
  %v5621 = vpack.c.b16 %v3441, %v3437
  %v5622 = vpack.c.b16 %v3446, %v3442
  %v5623 = vpack.c.b16 %v3447, %v3443
  %v5624 = vpack.c.b16 %v3448, %v3444
  %v5625 = vpack.c.b16 %v3449, %v3445
  %v5626 = vpack.c.b16 %v3454, %v3450
  %v5627 = vpack.c.b16 %v3455, %v3451
  %v5628 = vpack.c.b16 %v3456, %v3452
  %v5629 = vpack.c.b16 %v3457, %v3453
  %v5630 = vpack.c.b16 %v3462, %v3458
  %v5631 = vpack.c.b16 %v3463, %v3459
  %v5632 = vpack.c.b16 %v3464, %v3460
  %v5633 = vpack.c.b16 %v3465, %v3461
  %v5634 = vpack.c.b16 %v3470, %v3466
  %v5635 = vpack.c.b16 %v3471, %v3467
  %v5636 = vpack.c.b16 %v3472, %v3468
  %v5637 = vpack.c.b16 %v3473, %v3469
  %v5638 = vpack.c.b16 %v3478, %v3474
  %v5639 = vpack.c.b16 %v3479, %v3475
  %v5640 = vpack.c.b16 %v3480, %v3476
  %v5641 = vpack.c.b16 %v3481, %v3477
  %v5642 = vpack.c.b16 %v3486, %v3482
  %v5643 = vpack.c.b16 %v3487, %v3483
  %v5644 = vpack.c.b16 %v3488, %v3484
  %v5645 = vpack.c.b16 %v3489, %v3485
  %v5646 = vpack.c.b16 %v3494, %v3490
  %v5647 = vpack.c.b16 %v3495, %v3491
  %v5648 = vpack.c.b16 %v3496, %v3492
  %v5649 = vpack.c.b16 %v3497, %v3493
  %v5650 = vpack.c.b16 %v3502, %v3498
  %v5651 = vpack.c.b16 %v3503, %v3499
  %v5652 = vpack.c.b16 %v3504, %v3500
  %v5653 = vpack.c.b16 %v3505, %v3501
  %v5654 = vpack.c.b16 %v3510, %v3506
  %v5655 = vpack.c.b16 %v3511, %v3507
  %v5656 = vpack.c.b16 %v3512, %v3508
  %v5657 = vpack.c.b16 %v3513, %v3509
  %v5658 = vpack.c.b16 %v3518, %v3514
  %v5659 = vpack.c.b16 %v3519, %v3515
  %v5660 = vpack.c.b16 %v3520, %v3516
  %v5661 = vpack.c.b16 %v3521, %v3517
  %v5662 = vpack.c.b16 %v3526, %v3522
  %v5663 = vpack.c.b16 %v3527, %v3523
  %v5664 = vpack.c.b16 %v3528, %v3524
  %v5665 = vpack.c.b16 %v3529, %v3525
  %v5666 = vpack.c.b16 %v3534, %v3530
  %v5667 = vpack.c.b16 %v3535, %v3531
  %v5668 = vpack.c.b16 %v3536, %v3532
  %v5669 = vpack.c.b16 %v3537, %v3533
  %v5670 = vpack.c.b16 %v3542, %v3538
  %v5671 = vpack.c.b16 %v3543, %v3539
  %v5672 = vpack.c.b16 %v3544, %v3540
  %v5673 = vpack.c.b16 %v3545, %v3541
  %v5674 = vpack.c.b16 %v3550, %v3546
  %v5675 = vpack.c.b16 %v3551, %v3547
  %v5676 = vpack.c.b16 %v3552, %v3548
  %v5677 = vpack.c.b16 %v3553, %v3549
  %v5678 = vpack.c.b16 %v3558, %v3554
  %v5679 = vpack.c.b16 %v3559, %v3555
  %v5680 = vpack.c.b16 %v3560, %v3556
  %v5681 = vpack.c.b16 %v3561, %v3557
  %v5682 = vpack.c.b16 %v3566, %v3562
  %v5683 = vpack.c.b16 %v3567, %v3563
  %v5684 = vpack.c.b16 %v3568, %v3564
  %v5685 = vpack.c.b16 %v3569, %v3565
  %v5686 = vpack.c.b16 %v3574, %v3570
  %v5687 = vpack.c.b16 %v3575, %v3571
  %v5688 = vpack.c.b16 %v3576, %v3572
  %v5689 = vpack.c.b16 %v3577, %v3573
  %v5690 = vpack.c.b16 %v3582, %v3578
  %v5691 = vpack.c.b16 %v3583, %v3579
  %v5692 = vpack.c.b16 %v3584, %v3580
  %v5693 = vpack.c.b16 %v3585, %v3581
  %v5694 = vpack.c.b16 %v3590, %v3586
  %v5695 = vpack.c.b16 %v3591, %v3587
  %v5696 = vpack.c.b16 %v3592, %v3588
  %v5697 = vpack.c.b16 %v3593, %v3589
  %v5698 = vpack.c.b16 %v3598, %v3594
  %v5699 = vpack.c.b16 %v3599, %v3595
  %v5700 = vpack.c.b16 %v3600, %v3596
  %v5701 = vpack.c.b16 %v3601, %v3597
  %v5702 = vpack.c.b16 %v3606, %v3602
  %v5703 = vpack.c.b16 %v3607, %v3603
  %v5704 = vpack.c.b16 %v3608, %v3604
  %v5705 = vpack.c.b16 %v3609, %v3605
  %v5706 = vpack.c.b16 %v3614, %v3610
  %v5707 = vpack.c.b16 %v3615, %v3611
  %v5708 = vpack.c.b16 %v3616, %v3612
  %v5709 = vpack.c.b16 %v3617, %v3613
  %v5710 = vpack.c.b16 %v3622, %v3618
  %v5711 = vpack.c.b16 %v3623, %v3619
  %v5712 = vpack.c.b16 %v3624, %v3620
  %v5713 = vpack.c.b16 %v3625, %v3621
  %v5714 = vpack.c.b16 %v3630, %v3626
  %v5715 = vpack.c.b16 %v3631, %v3627
  %v5716 = vpack.c.b16 %v3632, %v3628
  %v5717 = vpack.c.b16 %v3633, %v3629
  %v5718 = vpack.c.b16 %v3638, %v3634
  %v5719 = vpack.c.b16 %v3639, %v3635
  %v5720 = vpack.c.b16 %v3640, %v3636
  %v5721 = vpack.c.b16 %v3641, %v3637
  %v5722 = vpack.c.b16 %v3646, %v3642
  %v5723 = vpack.c.b16 %v3647, %v3643
  %v5724 = vpack.c.b16 %v3648, %v3644
  %v5725 = vpack.c.b16 %v3649, %v3645
  %v5726 = vpack.c.b16 %v3654, %v3650
  %v5727 = vpack.c.b16 %v3655, %v3651
  %v5728 = vpack.c.b16 %v3656, %v3652
  %v5729 = vpack.c.b16 %v3657, %v3653
  %v5730 = vpack.c.b16 %v3662, %v3658
  %v5731 = vpack.c.b16 %v3663, %v3659
  %v5732 = vpack.c.b16 %v3664, %v3660
  %v5733 = vpack.c.b16 %v3665, %v3661
  %v5734 = vpack.c.b16 %v3670, %v3666
  %v5735 = vpack.c.b16 %v3671, %v3667
  %v5736 = vpack.c.b16 %v3672, %v3668
  %v5737 = vpack.c.b16 %v3673, %v3669
  %v5738 = vpack.c.b16 %v3678, %v3674
  %v5739 = vpack.c.b16 %v3679, %v3675
  %v5740 = vpack.c.b16 %v3680, %v3676
  %v5741 = vpack.c.b16 %v3681, %v3677
  %v5742 = vpack.c.b16 %v3686, %v3682
  %v5743 = vpack.c.b16 %v3687, %v3683
  %v5744 = vpack.c.b16 %v3688, %v3684
  %v5745 = vpack.c.b16 %v3689, %v3685
  %v5746 = vpack.c.b16 %v3694, %v3690
  %v5747 = vpack.c.b16 %v3695, %v3691
  %v5748 = vpack.c.b16 %v3696, %v3692
  %v5749 = vpack.c.b16 %v3697, %v3693
  %v5750 = vpack.c.b16 %v3702, %v3698
  %v5751 = vpack.c.b16 %v3703, %v3699
  %v5752 = vpack.c.b16 %v3704, %v3700
  %v5753 = vpack.c.b16 %v3705, %v3701
  %v5754 = vpack.c.b16 %v3710, %v3706
  %v5755 = vpack.c.b16 %v3711, %v3707
  %v5756 = vpack.c.b16 %v3712, %v3708
  %v5757 = vpack.c.b16 %v3713, %v3709
  %v5758 = vpack.c.b16 %v3718, %v3714
  %v5759 = vpack.c.b16 %v3719, %v3715
  %v5760 = vpack.c.b16 %v3720, %v3716
  %v5761 = vpack.c.b16 %v3721, %v3717
  %v5762 = vpack.c.b16 %v3726, %v3722
  %v5763 = vpack.c.b16 %v3727, %v3723
  %v5764 = vpack.c.b16 %v3728, %v3724
  %v5765 = vpack.c.b16 %v3729, %v3725
  %v5766 = vpack.c.b16 %v3734, %v3730
  %v5767 = vpack.c.b16 %v3735, %v3731
  %v5768 = vpack.c.b16 %v3736, %v3732
  %v5769 = vpack.c.b16 %v3737, %v3733
  %v5770 = vpack.c.b16 %v3742, %v3738
  %v5771 = vpack.c.b16 %v3743, %v3739
  %v5772 = vpack.c.b16 %v3744, %v3740
  %v5773 = vpack.c.b16 %v3745, %v3741
  %v5774 = vpack.c.b16 %v3750, %v3746
  %v5775 = vpack.c.b16 %v3751, %v3747
  %v5776 = vpack.c.b16 %v3752, %v3748
  %v5777 = vpack.c.b16 %v3753, %v3749
  %v5778 = vpack.c.b16 %v3758, %v3754
  %v5779 = vpack.c.b16 %v3759, %v3755
  %v5780 = vpack.c.b16 %v3760, %v3756
  %v5781 = vpack.c.b16 %v3761, %v3757
  %v5782 = vpack.c.b16 %v3766, %v3762
  %v5783 = vpack.c.b16 %v3767, %v3763
  %v5784 = vpack.c.b16 %v3768, %v3764
  %v5785 = vpack.c.b16 %v3769, %v3765
  %v5786 = vpack.c.b16 %v3774, %v3770
  %v5787 = vpack.c.b16 %v3775, %v3771
  %v5788 = vpack.c.b16 %v3776, %v3772
  %v5789 = vpack.c.b16 %v3777, %v3773
  %v5790 = vpack.c.b16 %v3782, %v3778
  %v5791 = vpack.c.b16 %v3783, %v3779
  %v5792 = vpack.c.b16 %v3784, %v3780
  %v5793 = vpack.c.b16 %v3785, %v3781
  %v5794 = vpack.c.b16 %v3790, %v3786
  %v5795 = vpack.c.b16 %v3791, %v3787
  %v5796 = vpack.c.b16 %v3792, %v3788
  %v5797 = vpack.c.b16 %v3793, %v3789
  %v5798 = vpack.c.b16 %v3798, %v3794
  %v5799 = vpack.c.b16 %v3799, %v3795
  %v5800 = vpack.c.b16 %v3800, %v3796
  %v5801 = vpack.c.b16 %v3801, %v3797
  %v5802 = vpack.c.b16 %v3806, %v3802
  %v5803 = vpack.c.b16 %v3807, %v3803
  %v5804 = vpack.c.b16 %v3808, %v3804
  %v5805 = vpack.c.b16 %v3809, %v3805
  %v5806 = vpack.c.b16 %v3814, %v3810
  %v5807 = vpack.c.b16 %v3815, %v3811
  %v5808 = vpack.c.b16 %v3816, %v3812
  %v5809 = vpack.c.b16 %v3817, %v3813
  %v5810 = vpack.c.b16 %v3822, %v3818
  %v5811 = vpack.c.b16 %v3823, %v3819
  %v5812 = vpack.c.b16 %v3824, %v3820
  %v5813 = vpack.c.b16 %v3825, %v3821
  %v5814 = vpack.c.b16 %v3830, %v3826
  %v5815 = vpack.c.b16 %v3831, %v3827
  %v5816 = vpack.c.b16 %v3832, %v3828
  %v5817 = vpack.c.b16 %v3833, %v3829
  %v5818 = vpack.c.b16 %v3838, %v3834
  %v5819 = vpack.c.b16 %v3839, %v3835
  %v5820 = vpack.c.b16 %v3840, %v3836
  %v5821 = vpack.c.b16 %v3841, %v3837
  %v5822 = vpack.c.b16 %v3846, %v3842
  %v5823 = vpack.c.b16 %v3847, %v3843
  %v5824 = vpack.c.b16 %v3848, %v3844
  %v5825 = vpack.c.b16 %v3849, %v3845
  %v5826 = vpack.c.b16 %v3854, %v3850
  %v5827 = vpack.c.b16 %v3855, %v3851
  %v5828 = vpack.c.b16 %v3856, %v3852
  %v5829 = vpack.c.b16 %v3857, %v3853
  %v5830 = vpack.c.b16 %v3862, %v3858
  %v5831 = vpack.c.b16 %v3863, %v3859
  %v5832 = vpack.c.b16 %v3864, %v3860
  %v5833 = vpack.c.b16 %v3865, %v3861
  %v5834 = vpack.c.b16 %v3870, %v3866
  %v5835 = vpack.c.b16 %v3871, %v3867
  %v5836 = vpack.c.b16 %v3872, %v3868
  %v5837 = vpack.c.b16 %v3873, %v3869
  %v5838 = vpack.c.b16 %v3878, %v3874
  %v5839 = vpack.c.b16 %v3879, %v3875
  %v5840 = vpack.c.b16 %v3880, %v3876
  %v5841 = vpack.c.b16 %v3881, %v3877
  %v5842 = vpack.c.b16 %v3886, %v3882
  %v5843 = vpack.c.b16 %v3887, %v3883
  %v5844 = vpack.c.b16 %v3888, %v3884
  %v5845 = vpack.c.b16 %v3889, %v3885
  %v5846 = vpack.c.b16 %v3894, %v3890
  %v5847 = vpack.c.b16 %v3895, %v3891
  %v5848 = vpack.c.b16 %v3896, %v3892
  %v5849 = vpack.c.b16 %v3897, %v3893
  %v5850 = vpack.c.b16 %v3902, %v3898
  %v5851 = vpack.c.b16 %v3903, %v3899
  %v5852 = vpack.c.b16 %v3904, %v3900
  %v5853 = vpack.c.b16 %v3905, %v3901
  %v5854 = vpack.c.b16 %v3910, %v3906
  %v5855 = vpack.c.b16 %v3911, %v3907
  %v5856 = vpack.c.b16 %v3912, %v3908
  %v5857 = vpack.c.b16 %v3913, %v3909
  %v5858 = vpack.c.b16 %v3918, %v3914
  %v5859 = vpack.c.b16 %v3919, %v3915
  %v5860 = vpack.c.b16 %v3920, %v3916
  %v5861 = vpack.c.b16 %v3921, %v3917
  %v5862 = vpack.c.b16 %v3926, %v3922
  %v5863 = vpack.c.b16 %v3927, %v3923
  %v5864 = vpack.c.b16 %v3928, %v3924
  %v5865 = vpack.c.b16 %v3929, %v3925
  %v5866 = vpack.c.b16 %v3934, %v3930
  %v5867 = vpack.c.b16 %v3935, %v3931
  %v5868 = vpack.c.b16 %v3936, %v3932
  %v5869 = vpack.c.b16 %v3937, %v3933
  %v5870 = vpack.c.b16 %v3942, %v3938
  %v5871 = vpack.c.b16 %v3943, %v3939
  %v5872 = vpack.c.b16 %v3944, %v3940
  %v5873 = vpack.c.b16 %v3945, %v3941
  %v5874 = vpack.c.b16 %v3950, %v3946
  %v5875 = vpack.c.b16 %v3951, %v3947
  %v5876 = vpack.c.b16 %v3952, %v3948
  %v5877 = vpack.c.b16 %v3953, %v3949
  %v5878 = vpack.c.b16 %v3958, %v3954
  %v5879 = vpack.c.b16 %v3959, %v3955
  %v5880 = vpack.c.b16 %v3960, %v3956
  %v5881 = vpack.c.b16 %v3961, %v3957
  %v5882 = vpack.c.b16 %v3966, %v3962
  %v5883 = vpack.c.b16 %v3967, %v3963
  %v5884 = vpack.c.b16 %v3968, %v3964
  %v5885 = vpack.c.b16 %v3969, %v3965
  %v5886 = vpack.c.b16 %v3974, %v3970
  %v5887 = vpack.c.b16 %v3975, %v3971
  %v5888 = vpack.c.b16 %v3976, %v3972
  %v5889 = vpack.c.b16 %v3977, %v3973
  %v5890 = vpack.c.b16 %v3982, %v3978
  %v5891 = vpack.c.b16 %v3983, %v3979
  %v5892 = vpack.c.b16 %v3984, %v3980
  %v5893 = vpack.c.b16 %v3985, %v3981
  %v5894 = vpack.c.b16 %v3990, %v3986
  %v5895 = vpack.c.b16 %v3991, %v3987
  %v5896 = vpack.c.b16 %v3992, %v3988
  %v5897 = vpack.c.b16 %v3993, %v3989
  %v5898 = vpack.c.b16 %v3998, %v3994
  %v5899 = vpack.c.b16 %v3999, %v3995
  %v5900 = vpack.c.b16 %v4000, %v3996
  %v5901 = vpack.c.b16 %v4001, %v3997
  %v5902 = vpack.c.b16 %v4006, %v4002
  %v5903 = vpack.c.b16 %v4007, %v4003
  %v5904 = vpack.c.b16 %v4008, %v4004
  %v5905 = vpack.c.b16 %v4009, %v4005
  %v5906 = vpack.c.b16 %v4014, %v4010
  %v5907 = vpack.c.b16 %v4015, %v4011
  %v5908 = vpack.c.b16 %v4016, %v4012
  %v5909 = vpack.c.b16 %v4017, %v4013
  %v5910 = vpack.c.b16 %v4022, %v4018
  %v5911 = vpack.c.b16 %v4023, %v4019
  %v5912 = vpack.c.b16 %v4024, %v4020
  %v5913 = vpack.c.b16 %v4025, %v4021
  %v5914 = vpack.c.b16 %v4030, %v4026
  %v5915 = vpack.c.b16 %v4031, %v4027
  %v5916 = vpack.c.b16 %v4032, %v4028
  %v5917 = vpack.c.b16 %v4033, %v4029
  %v5918 = vpack.c.b16 %v4038, %v4034
  %v5919 = vpack.c.b16 %v4039, %v4035
  %v5920 = vpack.c.b16 %v4040, %v4036
  %v5921 = vpack.c.b16 %v4041, %v4037
  %v5922 = vpack.c.b16 %v4046, %v4042
  %v5923 = vpack.c.b16 %v4047, %v4043
  %v5924 = vpack.c.b16 %v4048, %v4044
  %v5925 = vpack.c.b16 %v4049, %v4045
  %v5926 = vpack.c.b16 %v4054, %v4050
  %v5927 = vpack.c.b16 %v4055, %v4051
  %v5928 = vpack.c.b16 %v4056, %v4052
  %v5929 = vpack.c.b16 %v4057, %v4053
  %v5930 = vpack.c.b16 %v4062, %v4058
  %v5931 = vpack.c.b16 %v4063, %v4059
  %v5932 = vpack.c.b16 %v4064, %v4060
  %v5933 = vpack.c.b16 %v4065, %v4061
  %v5934 = vpack.c.b16 %v4070, %v4066
  %v5935 = vpack.c.b16 %v4071, %v4067
  %v5936 = vpack.c.b16 %v4072, %v4068
  %v5937 = vpack.c.b16 %v4073, %v4069
  %v5938 = vpack.c.b16 %v4078, %v4074
  %v5939 = vpack.c.b16 %v4079, %v4075
  %v5940 = vpack.c.b16 %v4080, %v4076
  %v5941 = vpack.c.b16 %v4081, %v4077
  %v5942 = vpack.c.b16 %v4086, %v4082
  %v5943 = vpack.c.b16 %v4087, %v4083
  %v5944 = vpack.c.b16 %v4088, %v4084
  %v5945 = vpack.c.b16 %v4089, %v4085
  %v5946 = vpack.c.b16 %v4094, %v4090
  %v5947 = vpack.c.b16 %v4095, %v4091
  %v5948 = vpack.c.b16 %v4096, %v4092
  %v5949 = vpack.c.b16 %v4097, %v4093
  %v5950 = vpack.c.b16 %v4102, %v4098
  %v5951 = vpack.c.b16 %v4103, %v4099
  %v5952 = vpack.c.b16 %v4104, %v4100
  %v5953 = vpack.c.b16 %v4105, %v4101
  %v5954 = vpack.c.b16 %v4110, %v4106
  %v5955 = vpack.c.b16 %v4111, %v4107
  %v5956 = vpack.c.b16 %v4112, %v4108
  %v5957 = vpack.c.b16 %v4113, %v4109
  %v5958 = vpack.c.b16 %v4118, %v4114
  %v5959 = vpack.c.b16 %v4119, %v4115
  %v5960 = vpack.c.b16 %v4120, %v4116
  %v5961 = vpack.c.b16 %v4121, %v4117
  %v5962 = vpack.c.b16 %v4126, %v4122
  %v5963 = vpack.c.b16 %v4127, %v4123
  %v5964 = vpack.c.b16 %v4128, %v4124
  %v5965 = vpack.c.b16 %v4129, %v4125
  %v5966 = vpack.c.b16 %v4134, %v4130
  %v5967 = vpack.c.b16 %v4135, %v4131
  %v5968 = vpack.c.b16 %v4136, %v4132
  %v5969 = vpack.c.b16 %v4137, %v4133
  %v5970 = vpack.c.b16 %v4142, %v4138
  %v5971 = vpack.c.b16 %v4143, %v4139
  %v5972 = vpack.c.b16 %v4144, %v4140
  %v5973 = vpack.c.b16 %v4145, %v4141
  %v5974 = vpack.c.b16 %v4150, %v4146
  %v5975 = vpack.c.b16 %v4151, %v4147
  %v5976 = vpack.c.b16 %v4152, %v4148
  %v5977 = vpack.c.b16 %v4153, %v4149
  %v5978 = vpack.c.b16 %v4158, %v4154
  %v5979 = vpack.c.b16 %v4159, %v4155
  %v5980 = vpack.c.b16 %v4160, %v4156
  %v5981 = vpack.c.b16 %v4161, %v4157
  %v5982 = vpack.c.b16 %v4166, %v4162
  %v5983 = vpack.c.b16 %v4167, %v4163
  %v5984 = vpack.c.b16 %v4168, %v4164
  %v5985 = vpack.c.b16 %v4169, %v4165
  %v5986 = vpack.c.b16 %v4174, %v4170
  %v5987 = vpack.c.b16 %v4175, %v4171
  %v5988 = vpack.c.b16 %v4176, %v4172
  %v5989 = vpack.c.b16 %v4177, %v4173
  %v5990 = vpack.c.b16 %v4182, %v4178
  %v5991 = vpack.c.b16 %v4183, %v4179
  %v5992 = vpack.c.b16 %v4184, %v4180
  %v5993 = vpack.c.b16 %v4185, %v4181
  %v5994 = vpack.c.b16 %v4190, %v4186
  %v5995 = vpack.c.b16 %v4191, %v4187
  %v5996 = vpack.c.b16 %v4192, %v4188
  %v5997 = vpack.c.b16 %v4193, %v4189
  %v5998 = vpack.c.b16 %v4198, %v4194
  %v5999 = vpack.c.b16 %v4199, %v4195
  %v6000 = vpack.c.b16 %v4200, %v4196
  %v6001 = vpack.c.b16 %v4201, %v4197
  %v6002 = vpack.c.b16 %v4206, %v4202
  %v6003 = vpack.c.b16 %v4207, %v4203
  %v6004 = vpack.c.b16 %v4208, %v4204
  %v6005 = vpack.c.b16 %v4209, %v4205
  %v6006 = vpack.c.b16 %v4214, %v4210
  %v6007 = vpack.c.b16 %v4215, %v4211
  %v6008 = vpack.c.b16 %v4216, %v4212
  %v6009 = vpack.c.b16 %v4217, %v4213
  %v6010 = vpack.c.b16 %v4222, %v4218
  %v6011 = vpack.c.b16 %v4223, %v4219
  %v6012 = vpack.c.b16 %v4224, %v4220
  %v6013 = vpack.c.b16 %v4225, %v4221
  %v6014 = vpack.c.b16 %v4230, %v4226
  %v6015 = vpack.c.b16 %v4231, %v4227
  %v6016 = vpack.c.b16 %v4232, %v4228
  %v6017 = vpack.c.b16 %v4233, %v4229
  %v6018 = vpack.c.b16 %v4238, %v4234
  %v6019 = vpack.c.b16 %v4239, %v4235
  %v6020 = vpack.c.b16 %v4240, %v4236
  %v6021 = vpack.c.b16 %v4241, %v4237
  %v6022 = vpack.c.b16 %v4246, %v4242
  %v6023 = vpack.c.b16 %v4247, %v4243
  %v6024 = vpack.c.b16 %v4248, %v4244
  %v6025 = vpack.c.b16 %v4249, %v4245
  %v6026 = vpack.c.b16 %v4254, %v4250
  %v6027 = vpack.c.b16 %v4255, %v4251
  %v6028 = vpack.c.b16 %v4256, %v4252
  %v6029 = vpack.c.b16 %v4257, %v4253
  %v6030 = vpack.c.b16 %v4262, %v4258
  %v6031 = vpack.c.b16 %v4263, %v4259
  %v6032 = vpack.c.b16 %v4264, %v4260
  %v6033 = vpack.c.b16 %v4265, %v4261
  %v6034 = vpack.c.b16 %v4270, %v4266
  %v6035 = vpack.c.b16 %v4271, %v4267
  %v6036 = vpack.c.b16 %v4272, %v4268
  %v6037 = vpack.c.b16 %v4273, %v4269
  %v6038 = vpack.c.b16 %v4278, %v4274
  %v6039 = vpack.c.b16 %v4279, %v4275
  %v6040 = vpack.c.b16 %v4280, %v4276
  %v6041 = vpack.c.b16 %v4281, %v4277
  %v6042 = vpack.c.b16 %v4286, %v4282
  %v6043 = vpack.c.b16 %v4287, %v4283
  %v6044 = vpack.c.b16 %v4288, %v4284
  %v6045 = vpack.c.b16 %v4289, %v4285
  %v6046 = vpack.c.b16 %v4294, %v4290
  %v6047 = vpack.c.b16 %v4295, %v4291
  %v6048 = vpack.c.b16 %v4296, %v4292
  %v6049 = vpack.c.b16 %v4297, %v4293
  %v6050 = vpack.c.b16 %v4302, %v4298
  %v6051 = vpack.c.b16 %v4303, %v4299
  %v6052 = vpack.c.b16 %v4304, %v4300
  %v6053 = vpack.c.b16 %v4305, %v4301
  %v6054 = vpack.c.b16 %v4310, %v4306
  %v6055 = vpack.c.b16 %v4311, %v4307
  %v6056 = vpack.c.b16 %v4312, %v4308
  %v6057 = vpack.c.b16 %v4313, %v4309
  %v6058 = vpack.c.b16 %v4318, %v4314
  %v6059 = vpack.c.b16 %v4319, %v4315
  %v6060 = vpack.c.b16 %v4320, %v4316
  %v6061 = vpack.c.b16 %v4321, %v4317
  %v6062 = vpack.c.b16 %v4326, %v4322
  %v6063 = vpack.c.b16 %v4327, %v4323
  %v6064 = vpack.c.b16 %v4328, %v4324
  %v6065 = vpack.c.b16 %v4329, %v4325
  %v6066 = vpack.c.b16 %v4334, %v4330
  %v6067 = vpack.c.b16 %v4335, %v4331
  %v6068 = vpack.c.b16 %v4336, %v4332
  %v6069 = vpack.c.b16 %v4337, %v4333
  %v6070 = vpack.c.b16 %v4342, %v4338
  %v6071 = vpack.c.b16 %v4343, %v4339
  %v6072 = vpack.c.b16 %v4344, %v4340
  %v6073 = vpack.c.b16 %v4345, %v4341
  %v6074 = vpack.c.b16 %v4350, %v4346
  %v6075 = vpack.c.b16 %v4351, %v4347
  %v6076 = vpack.c.b16 %v4352, %v4348
  %v6077 = vpack.c.b16 %v4353, %v4349
  %v6078 = vpack.c.b16 %v4358, %v4354
  %v6079 = vpack.c.b16 %v4359, %v4355
  %v6080 = vpack.c.b16 %v4360, %v4356
  %v6081 = vpack.c.b16 %v4361, %v4357
  %v6082 = vpack.c.b16 %v4366, %v4362
  %v6083 = vpack.c.b16 %v4367, %v4363
  %v6084 = vpack.c.b16 %v4368, %v4364
  %v6085 = vpack.c.b16 %v4369, %v4365
  %v6086 = vpack.c.b16 %v4374, %v4370
  %v6087 = vpack.c.b16 %v4375, %v4371
  %v6088 = vpack.c.b16 %v4376, %v4372
  %v6089 = vpack.c.b16 %v4377, %v4373
  %v6090 = vpack.c.b16 %v4382, %v4378
  %v6091 = vpack.c.b16 %v4383, %v4379
  %v6092 = vpack.c.b16 %v4384, %v4380
  %v6093 = vpack.c.b16 %v4385, %v4381
  %v6094 = vpack.c.b16 %v4390, %v4386
  %v6095 = vpack.c.b16 %v4391, %v4387
  %v6096 = vpack.c.b16 %v4392, %v4388
  %v6097 = vpack.c.b16 %v4393, %v4389
  %v6098 = vpack.c.b16 %v4398, %v4394
  %v6099 = vpack.c.b16 %v4399, %v4395
  %v6100 = vpack.c.b16 %v4400, %v4396
  %v6101 = vpack.c.b16 %v4401, %v4397
  %v6102 = vpack.c.b16 %v4406, %v4402
  %v6103 = vpack.c.b16 %v4407, %v4403
  %v6104 = vpack.c.b16 %v4408, %v4404
  %v6105 = vpack.c.b16 %v4409, %v4405
  %v6106 = vpack.c.b16 %v4414, %v4410
  %v6107 = vpack.c.b16 %v4415, %v4411
  %v6108 = vpack.c.b16 %v4416, %v4412
  %v6109 = vpack.c.b16 %v4417, %v4413
  %v6110 = vpack.c.b16 %v4422, %v4418
  %v6111 = vpack.c.b16 %v4423, %v4419
  %v6112 = vpack.c.b16 %v4424, %v4420
  %v6113 = vpack.c.b16 %v4425, %v4421
  %v6114 = vpack.c.b16 %v4430, %v4426
  %v6115 = vpack.c.b16 %v4431, %v4427
  %v6116 = vpack.c.b16 %v4432, %v4428
  %v6117 = vpack.c.b16 %v4433, %v4429
  %v6118 = vpack.c.b16 %v4438, %v4434
  %v6119 = vpack.c.b16 %v4439, %v4435
  %v6120 = vpack.c.b16 %v4440, %v4436
  %v6121 = vpack.c.b16 %v4441, %v4437
  %v6122 = vpack.c.b16 %v4446, %v4442
  %v6123 = vpack.c.b16 %v4447, %v4443
  %v6124 = vpack.c.b16 %v4448, %v4444
  %v6125 = vpack.c.b16 %v4449, %v4445
  %v6126 = vpack.c.b16 %v4454, %v4450
  %v6127 = vpack.c.b16 %v4455, %v4451
  %v6128 = vpack.c.b16 %v4456, %v4452
  %v6129 = vpack.c.b16 %v4457, %v4453
  %v6130 = vpack.c.b16 %v4462, %v4458
  %v6131 = vpack.c.b16 %v4463, %v4459
  %v6132 = vpack.c.b16 %v4464, %v4460
  %v6133 = vpack.c.b16 %v4465, %v4461
  %v6134 = vpack.c.b16 %v4470, %v4466
  %v6135 = vpack.c.b16 %v4471, %v4467
  %v6136 = vpack.c.b16 %v4472, %v4468
  %v6137 = vpack.c.b16 %v4473, %v4469
  %v6138 = vpack.c.b16 %v4478, %v4474
  %v6139 = vpack.c.b16 %v4479, %v4475
  %v6140 = vpack.c.b16 %v4480, %v4476
  %v6141 = vpack.c.b16 %v4481, %v4477
  %v6142 = vpack.c.b16 %v4486, %v4482
  %v6143 = vpack.c.b16 %v4487, %v4483
  %v6144 = vpack.c.b16 %v4488, %v4484
  %v6145 = vpack.c.b16 %v4489, %v4485
  %v6146 = vpack.c.b16 %v4494, %v4490
  %v6147 = vpack.c.b16 %v4495, %v4491
  %v6148 = vpack.c.b16 %v4496, %v4492
  %v6149 = vpack.c.b16 %v4497, %v4493
  %v6150 = vpack.c.b16 %v4502, %v4498
  %v6151 = vpack.c.b16 %v4503, %v4499
  %v6152 = vpack.c.b16 %v4504, %v4500
  %v6153 = vpack.c.b16 %v4505, %v4501
  %v6154 = vpack.c.b16 %v4510, %v4506
  %v6155 = vpack.c.b16 %v4511, %v4507
  %v6156 = vpack.c.b16 %v4512, %v4508
  %v6157 = vpack.c.b16 %v4513, %v4509
  %v6158 = vpack.c.b16 %v4518, %v4514
  %v6159 = vpack.c.b16 %v4519, %v4515
  %v6160 = vpack.c.b16 %v4520, %v4516
  %v6161 = vpack.c.b16 %v4521, %v4517
  %v6162 = vpack.c.b16 %v4526, %v4522
  %v6163 = vpack.c.b16 %v4527, %v4523
  %v6164 = vpack.c.b16 %v4528, %v4524
  %v6165 = vpack.c.b16 %v4529, %v4525
  %v6166 = vpack.c.b16 %v4534, %v4530
  %v6167 = vpack.c.b16 %v4535, %v4531
  %v6168 = vpack.c.b16 %v4536, %v4532
  %v6169 = vpack.c.b16 %v4537, %v4533
  %v6170 = vpack.c.b16 %v4542, %v4538
  %v6171 = vpack.c.b16 %v4543, %v4539
  %v6172 = vpack.c.b16 %v4544, %v4540
  %v6173 = vpack.c.b16 %v4545, %v4541
  %v6174 = vpack.c.b16 %v4550, %v4546
  %v6175 = vpack.c.b16 %v4551, %v4547
  %v6176 = vpack.c.b16 %v4552, %v4548
  %v6177 = vpack.c.b16 %v4553, %v4549
  %v6178 = vpack.c.b16 %v4558, %v4554
  %v6179 = vpack.c.b16 %v4559, %v4555
  %v6180 = vpack.c.b16 %v4560, %v4556
  %v6181 = vpack.c.b16 %v4561, %v4557
  %v6182 = vpack.c.b16 %v4566, %v4562
  %v6183 = vpack.c.b16 %v4567, %v4563
  %v6184 = vpack.c.b16 %v4568, %v4564
  %v6185 = vpack.c.b16 %v4569, %v4565
  %v6186 = vpack.c.b16 %v4574, %v4570
  %v6187 = vpack.c.b16 %v4575, %v4571
  %v6188 = vpack.c.b16 %v4576, %v4572
  %v6189 = vpack.c.b16 %v4577, %v4573
  %v6190 = vpack.c.b16 %v4582, %v4578
  %v6191 = vpack.c.b16 %v4583, %v4579
  %v6192 = vpack.c.b16 %v4584, %v4580
  %v6193 = vpack.c.b16 %v4585, %v4581
  %v6194 = vpack.c.b16 %v4590, %v4586
  %v6195 = vpack.c.b16 %v4591, %v4587
  %v6196 = vpack.c.b16 %v4592, %v4588
  %v6197 = vpack.c.b16 %v4593, %v4589
  %v6198 = vpack.c.b16 %v4598, %v4594
  %v6199 = vpack.c.b16 %v4599, %v4595
  %v6200 = vpack.c.b16 %v4600, %v4596
  %v6201 = vpack.c.b16 %v4601, %v4597
  %v6202 = vpack.c.b16 %v4606, %v4602
  %v6203 = vpack.c.b16 %v4607, %v4603
  %v6204 = vpack.c.b16 %v4608, %v4604
  %v6205 = vpack.c.b16 %v4609, %v4605
  %v6206 = vpack.c.b16 %v4614, %v4610
  %v6207 = vpack.c.b16 %v4615, %v4611
  %v6208 = vpack.c.b16 %v4616, %v4612
  %v6209 = vpack.c.b16 %v4617, %v4613
  %v6210 = vpack.c.b16 %v4622, %v4618
  %v6211 = vpack.c.b16 %v4623, %v4619
  %v6212 = vpack.c.b16 %v4624, %v4620
  %v6213 = vpack.c.b16 %v4625, %v4621
  %v6214 = vpack.c.b16 %v4630, %v4626
  %v6215 = vpack.c.b16 %v4631, %v4627
  %v6216 = vpack.c.b16 %v4632, %v4628
  %v6217 = vpack.c.b16 %v4633, %v4629
  %v6218 = vpack.c.b16 %v4638, %v4634
  %v6219 = vpack.c.b16 %v4639, %v4635
  %v6220 = vpack.c.b16 %v4640, %v4636
  %v6221 = vpack.c.b16 %v4641, %v4637
  %v6222 = vpack.c.b16 %v4646, %v4642
  %v6223 = vpack.c.b16 %v4647, %v4643
  %v6224 = vpack.c.b16 %v4648, %v4644
  %v6225 = vpack.c.b16 %v4649, %v4645
  %v6226 = vpack.c.b16 %v4654, %v4650
  %v6227 = vpack.c.b16 %v4655, %v4651
  %v6228 = vpack.c.b16 %v4656, %v4652
  %v6229 = vpack.c.b16 %v4657, %v4653
  %v6230 = vpack.c.b16 %v4662, %v4658
  %v6231 = vpack.c.b16 %v4663, %v4659
  %v6232 = vpack.c.b16 %v4664, %v4660
  %v6233 = vpack.c.b16 %v4665, %v4661
  %v6234 = vpack.c.b16 %v4670, %v4666
  %v6235 = vpack.c.b16 %v4671, %v4667
  %v6236 = vpack.c.b16 %v4672, %v4668
  %v6237 = vpack.c.b16 %v4673, %v4669
  %v6238 = vpack.c.b16 %v4678, %v4674
  %v6239 = vpack.c.b16 %v4679, %v4675
  %v6240 = vpack.c.b16 %v4680, %v4676
  %v6241 = vpack.c.b16 %v4681, %v4677
  %v6242 = vpack.c.b16 %v4686, %v4682
  %v6243 = vpack.c.b16 %v4687, %v4683
  %v6244 = vpack.c.b16 %v4688, %v4684
  %v6245 = vpack.c.b16 %v4689, %v4685
  %v6246 = vpack.c.b16 %v4694, %v4690
  %v6247 = vpack.c.b16 %v4695, %v4691
  %v6248 = vpack.c.b16 %v4696, %v4692
  %v6249 = vpack.c.b16 %v4697, %v4693
  %v6250 = vpack.c.b16 %v4702, %v4698
  %v6251 = vpack.c.b16 %v4703, %v4699
  %v6252 = vpack.c.b16 %v4704, %v4700
  %v6253 = vpack.c.b16 %v4705, %v4701
  %v6254 = vpack.c.b16 %v4710, %v4706
  %v6255 = vpack.c.b16 %v4711, %v4707
  %v6256 = vpack.c.b16 %v4712, %v4708
  %v6257 = vpack.c.b16 %v4713, %v4709
  %v6258 = vpack.c.b16 %v4718, %v4714
  %v6259 = vpack.c.b16 %v4719, %v4715
  %v6260 = vpack.c.b16 %v4720, %v4716
  %v6261 = vpack.c.b16 %v4721, %v4717
  %v6262 = vpack.c.b16 %v4726, %v4722
  %v6263 = vpack.c.b16 %v4727, %v4723
  %v6264 = vpack.c.b16 %v4728, %v4724
  %v6265 = vpack.c.b16 %v4729, %v4725
  %v6266 = vpack.c.b16 %v4734, %v4730
  %v6267 = vpack.c.b16 %v4735, %v4731
  %v6268 = vpack.c.b16 %v4736, %v4732
  %v6269 = vpack.c.b16 %v4737, %v4733
  %v6270 = vpack.c.b16 %v4742, %v4738
  %v6271 = vpack.c.b16 %v4743, %v4739
  %v6272 = vpack.c.b16 %v4744, %v4740
  %v6273 = vpack.c.b16 %v4745, %v4741
  %v6274 = vpack.c.b16 %v4750, %v4746
  %v6275 = vpack.c.b16 %v4751, %v4747
  %v6276 = vpack.c.b16 %v4752, %v4748
  %v6277 = vpack.c.b16 %v4753, %v4749
  %v6278 = vpack.c.b16 %v4758, %v4754
  %v6279 = vpack.c.b16 %v4759, %v4755
  %v6280 = vpack.c.b16 %v4760, %v4756
  %v6281 = vpack.c.b16 %v4761, %v4757
  %v6282 = vpack.c.b16 %v4766, %v4762
  %v6283 = vpack.c.b16 %v4767, %v4763
  %v6284 = vpack.c.b16 %v4768, %v4764
  %v6285 = vpack.c.b16 %v4769, %v4765
  %v6286 = vpack.c.b16 %v4774, %v4770
  %v6287 = vpack.c.b16 %v4775, %v4771
  %v6288 = vpack.c.b16 %v4776, %v4772
  %v6289 = vpack.c.b16 %v4777, %v4773
  %v6290 = vpack.c.b16 %v4782, %v4778
  %v6291 = vpack.c.b16 %v4783, %v4779
  %v6292 = vpack.c.b16 %v4784, %v4780
  %v6293 = vpack.c.b16 %v4785, %v4781
  %v6294 = vpack.c.b16 %v4790, %v4786
  %v6295 = vpack.c.b16 %v4791, %v4787
  %v6296 = vpack.c.b16 %v4792, %v4788
  %v6297 = vpack.c.b16 %v4793, %v4789
  %v6298 = vpack.c.b16 %v4798, %v4794
  %v6299 = vpack.c.b16 %v4799, %v4795
  %v6300 = vpack.c.b16 %v4800, %v4796
  %v6301 = vpack.c.b16 %v4801, %v4797
  %v6302 = vpack.c.b16 %v4806, %v4802
  %v6303 = vpack.c.b16 %v4807, %v4803
  %v6304 = vpack.c.b16 %v4808, %v4804
  %v6305 = vpack.c.b16 %v4809, %v4805
  %v6306 = vpack.c.b16 %v4814, %v4810
  %v6307 = vpack.c.b16 %v4815, %v4811
  %v6308 = vpack.c.b16 %v4816, %v4812
  %v6309 = vpack.c.b16 %v4817, %v4813
  %v6310 = vpack.c.b16 %v4822, %v4818
  %v6311 = vpack.c.b16 %v4823, %v4819
  %v6312 = vpack.c.b16 %v4824, %v4820
  %v6313 = vpack.c.b16 %v4825, %v4821
  %v6314 = vpack.c.b16 %v4830, %v4826
  %v6315 = vpack.c.b16 %v4831, %v4827
  %v6316 = vpack.c.b16 %v4832, %v4828
  %v6317 = vpack.c.b16 %v4833, %v4829
  %v6318 = vpack.c.b16 %v4838, %v4834
  %v6319 = vpack.c.b16 %v4839, %v4835
  %v6320 = vpack.c.b16 %v4840, %v4836
  %v6321 = vpack.c.b16 %v4841, %v4837
  %v6322 = vpack.c.b16 %v4846, %v4842
  %v6323 = vpack.c.b16 %v4847, %v4843
  %v6324 = vpack.c.b16 %v4848, %v4844
  %v6325 = vpack.c.b16 %v4849, %v4845
  %v6326 = vpack.c.b16 %v4854, %v4850
  %v6327 = vpack.c.b16 %v4855, %v4851
  %v6328 = vpack.c.b16 %v4856, %v4852
  %v6329 = vpack.c.b16 %v4857, %v4853
  %v6330 = vpack.c.b16 %v4862, %v4858
  %v6331 = vpack.c.b16 %v4863, %v4859
  %v6332 = vpack.c.b16 %v4864, %v4860
  %v6333 = vpack.c.b16 %v4865, %v4861
  %v6334 = vpack.c.b16 %v4870, %v4866
  %v6335 = vpack.c.b16 %v4871, %v4867
  %v6336 = vpack.c.b16 %v4872, %v4868
  %v6337 = vpack.c.b16 %v4873, %v4869
  %v6338 = vpack.c.b16 %v4878, %v4874
  %v6339 = vpack.c.b16 %v4879, %v4875
  %v6340 = vpack.c.b16 %v4880, %v4876
  %v6341 = vpack.c.b16 %v4881, %v4877
  %v6342 = vpack.c.b16 %v4886, %v4882
  %v6343 = vpack.c.b16 %v4887, %v4883
  %v6344 = vpack.c.b16 %v4888, %v4884
  %v6345 = vpack.c.b16 %v4889, %v4885
  %v6346 = vpack.c.b16 %v4894, %v4890
  %v6347 = vpack.c.b16 %v4895, %v4891
  %v6348 = vpack.c.b16 %v4896, %v4892
  %v6349 = vpack.c.b16 %v4897, %v4893
  %v6350 = vpack.c.b16 %v4902, %v4898
  %v6351 = vpack.c.b16 %v4903, %v4899
  %v6352 = vpack.c.b16 %v4904, %v4900
  %v6353 = vpack.c.b16 %v4905, %v4901
  %v6354 = vpack.c.b16 %v4910, %v4906
  %v6355 = vpack.c.b16 %v4911, %v4907
  %v6356 = vpack.c.b16 %v4912, %v4908
  %v6357 = vpack.c.b16 %v4913, %v4909
  %v6358 = vpack.c.b16 %v4918, %v4914
  %v6359 = vpack.c.b16 %v4919, %v4915
  %v6360 = vpack.c.b16 %v4920, %v4916
  %v6361 = vpack.c.b16 %v4921, %v4917
  %v6362 = vpack.c.b16 %v4926, %v4922
  %v6363 = vpack.c.b16 %v4927, %v4923
  %v6364 = vpack.c.b16 %v4928, %v4924
  %v6365 = vpack.c.b16 %v4929, %v4925
  %v6366 = vpack.c.b16 %v4934, %v4930
  %v6367 = vpack.c.b16 %v4935, %v4931
  %v6368 = vpack.c.b16 %v4936, %v4932
  %v6369 = vpack.c.b16 %v4937, %v4933
  %v6370 = vpack.c.b16 %v4942, %v4938
  %v6371 = vpack.c.b16 %v4943, %v4939
  %v6372 = vpack.c.b16 %v4944, %v4940
  %v6373 = vpack.c.b16 %v4945, %v4941
  %v6374 = vpack.c.b16 %v4950, %v4946
  %v6375 = vpack.c.b16 %v4951, %v4947
  %v6376 = vpack.c.b16 %v4952, %v4948
  %v6377 = vpack.c.b16 %v4953, %v4949
  %v6378 = vpack.c.b16 %v4958, %v4954
  %v6379 = vpack.c.b16 %v4959, %v4955
  %v6380 = vpack.c.b16 %v4960, %v4956
  %v6381 = vpack.c.b16 %v4961, %v4957
  %v6382 = vpack.c.b16 %v4966, %v4962
  %v6383 = vpack.c.b16 %v4967, %v4963
  %v6384 = vpack.c.b16 %v4968, %v4964
  %v6385 = vpack.c.b16 %v4969, %v4965
  %v6386 = vpack.c.b16 %v4974, %v4970
  %v6387 = vpack.c.b16 %v4975, %v4971
  %v6388 = vpack.c.b16 %v4976, %v4972
  %v6389 = vpack.c.b16 %v4977, %v4973
  %v6390 = vpack.c.b16 %v4982, %v4978
  %v6391 = vpack.c.b16 %v4983, %v4979
  %v6392 = vpack.c.b16 %v4984, %v4980
  %v6393 = vpack.c.b16 %v4985, %v4981
  %v6394 = vpack.c.b16 %v4990, %v4986
  %v6395 = vpack.c.b16 %v4991, %v4987
  %v6396 = vpack.c.b16 %v4992, %v4988
  %v6397 = vpack.c.b16 %v4993, %v4989
  %v6398 = vpack.c.b16 %v4998, %v4994
  %v6399 = vpack.c.b16 %v4999, %v4995
  %v6400 = vpack.c.b16 %v5000, %v4996
  %v6401 = vpack.c.b16 %v5001, %v4997
  %v6402 = vpack.c.b16 %v5006, %v5002
  %v6403 = vpack.c.b16 %v5007, %v5003
  %v6404 = vpack.c.b16 %v5008, %v5004
  %v6405 = vpack.c.b16 %v5009, %v5005
  %v6406 = vpack.c.b16 %v5014, %v5010
  %v6407 = vpack.c.b16 %v5015, %v5011
  %v6408 = vpack.c.b16 %v5016, %v5012
  %v6409 = vpack.c.b16 %v5017, %v5013
  %v6410 = vpack.c.b16 %v5022, %v5018
  %v6411 = vpack.c.b16 %v5023, %v5019
  %v6412 = vpack.c.b16 %v5024, %v5020
  %v6413 = vpack.c.b16 %v5025, %v5021
  %v6414 = vpack.c.b16 %v5030, %v5026
  %v6415 = vpack.c.b16 %v5031, %v5027
  %v6416 = vpack.c.b16 %v5032, %v5028
  %v6417 = vpack.c.b16 %v5033, %v5029
  %v6418 = vpack.c.b16 %v5038, %v5034
  %v6419 = vpack.c.b16 %v5039, %v5035
  %v6420 = vpack.c.b16 %v5040, %v5036
  %v6421 = vpack.c.b16 %v5041, %v5037
  %v6422 = vpack.c.b16 %v5046, %v5042
  %v6423 = vpack.c.b16 %v5047, %v5043
  %v6424 = vpack.c.b16 %v5048, %v5044
  %v6425 = vpack.c.b16 %v5049, %v5045
  %v6426 = vpack.c.b16 %v5054, %v5050
  %v6427 = vpack.c.b16 %v5055, %v5051
  %v6428 = vpack.c.b16 %v5056, %v5052
  %v6429 = vpack.c.b16 %v5057, %v5053
  %v6430 = vpack.c.b16 %v5062, %v5058
  %v6431 = vpack.c.b16 %v5063, %v5059
  %v6432 = vpack.c.b16 %v5064, %v5060
  %v6433 = vpack.c.b16 %v5065, %v5061
  %v6434 = vpack.c.b16 %v5070, %v5066
  %v6435 = vpack.c.b16 %v5071, %v5067
  %v6436 = vpack.c.b16 %v5072, %v5068
  %v6437 = vpack.c.b16 %v5073, %v5069
  %v6438 = vpack.c.b16 %v5078, %v5074
  %v6439 = vpack.c.b16 %v5079, %v5075
  %v6440 = vpack.c.b16 %v5080, %v5076
  %v6441 = vpack.c.b16 %v5081, %v5077
  %v6442 = vpack.c.b16 %v5086, %v5082
  %v6443 = vpack.c.b16 %v5087, %v5083
  %v6444 = vpack.c.b16 %v5088, %v5084
  %v6445 = vpack.c.b16 %v5089, %v5085
  %v6446 = vpack.c.b16 %v5094, %v5090
  %v6447 = vpack.c.b16 %v5095, %v5091
  %v6448 = vpack.c.b16 %v5096, %v5092
  %v6449 = vpack.c.b16 %v5097, %v5093
  %v6450 = vpack.c.b16 %v5102, %v5098
  %v6451 = vpack.c.b16 %v5103, %v5099
  %v6452 = vpack.c.b16 %v5104, %v5100
  %v6453 = vpack.c.b16 %v5105, %v5101
  %v6454 = vpack.c.b16 %v5110, %v5106
  %v6455 = vpack.c.b16 %v5111, %v5107
  %v6456 = vpack.c.b16 %v5112, %v5108
  %v6457 = vpack.c.b16 %v5113, %v5109
  %v6458 = vpack.c.b16 %v5118, %v5114
  %v6459 = vpack.c.b16 %v5119, %v5115
  %v6460 = vpack.c.b16 %v5120, %v5116
  %v6461 = vpack.c.b16 %v5121, %v5117
  %v6462 = vpack.c.b16 %v5126, %v5122
  %v6463 = vpack.c.b16 %v5127, %v5123
  %v6464 = vpack.c.b16 %v5128, %v5124
  %v6465 = vpack.c.b16 %v5129, %v5125
  %v6466 = vpack.c.b16 %v5134, %v5130
  %v6467 = vpack.c.b16 %v5135, %v5131
  %v6468 = vpack.c.b16 %v5136, %v5132
  %v6469 = vpack.c.b16 %v5137, %v5133
  %v6470 = vpack.c.b16 %v5142, %v5138
  %v6471 = vpack.c.b16 %v5143, %v5139
  %v6472 = vpack.c.b16 %v5144, %v5140
  %v6473 = vpack.c.b16 %v5145, %v5141
  %v6474 = vpack.c.b16 %v5150, %v5146
  %v6475 = vpack.c.b16 %v5151, %v5147
  %v6476 = vpack.c.b16 %v5152, %v5148
  %v6477 = vpack.c.b16 %v5153, %v5149
  %v6478 = vpack.c.b16 %v5158, %v5154
  %v6479 = vpack.c.b16 %v5159, %v5155
  %v6480 = vpack.c.b16 %v5160, %v5156
  %v6481 = vpack.c.b16 %v5161, %v5157
  %v6482 = vpack.c.b16 %v5166, %v5162
  %v6483 = vpack.c.b16 %v5167, %v5163
  %v6484 = vpack.c.b16 %v5168, %v5164
  %v6485 = vpack.c.b16 %v5169, %v5165
  %v6486 = vpack.c.b16 %v5174, %v5170
  %v6487 = vpack.c.b16 %v5175, %v5171
  %v6488 = vpack.c.b16 %v5176, %v5172
  %v6489 = vpack.c.b16 %v5177, %v5173
  %v6490 = vpack.c.b16 %v5182, %v5178
  %v6491 = vpack.c.b16 %v5183, %v5179
  %v6492 = vpack.c.b16 %v5184, %v5180
  %v6493 = vpack.c.b16 %v5185, %v5181
  %v6494 = vpack.c.b16 %v5190, %v5186
  %v6495 = vpack.c.b16 %v5191, %v5187
  %v6496 = vpack.c.b16 %v5192, %v5188
  %v6497 = vpack.c.b16 %v5193, %v5189
  %v6498 = vpack.c.b16 %v5198, %v5194
  %v6499 = vpack.c.b16 %v5199, %v5195
  %v6500 = vpack.c.b16 %v5200, %v5196
  %v6501 = vpack.c.b16 %v5201, %v5197
  %v6502 = vpack.c.b16 %v5206, %v5202
  %v6503 = vpack.c.b16 %v5207, %v5203
  %v6504 = vpack.c.b16 %v5208, %v5204
  %v6505 = vpack.c.b16 %v5209, %v5205
  %v6506 = vpack.c.b16 %v5214, %v5210
  %v6507 = vpack.c.b16 %v5215, %v5211
  %v6508 = vpack.c.b16 %v5216, %v5212
  %v6509 = vpack.c.b16 %v5217, %v5213
  %v6510 = vpack.c.b16 %v5222, %v5218
  %v6511 = vpack.c.b16 %v5223, %v5219
  %v6512 = vpack.c.b16 %v5224, %v5220
  %v6513 = vpack.c.b16 %v5225, %v5221
  %v6514 = vpack.c.b16 %v5230, %v5226
  %v6515 = vpack.c.b16 %v5231, %v5227
  %v6516 = vpack.c.b16 %v5232, %v5228
  %v6517 = vpack.c.b16 %v5233, %v5229
  %v6518 = vpack.c.b16 %v5238, %v5234
  %v6519 = vpack.c.b16 %v5239, %v5235
  %v6520 = vpack.c.b16 %v5240, %v5236
  %v6521 = vpack.c.b16 %v5241, %v5237
  %7802 = vmatpush.bf16.msra.mxu0 %v5270
  %7803 = vmatpush.bf16.msra.mxu0 %v5266
  %7804 = vmatpush.bf16.msra.mxu0 %v5262
  %7805 = vmatpush.bf16.msra.mxu0 %v5258
  %7806 = vmatpush.bf16.msra.mxu0 %v5254
  %7807 = vmatpush.bf16.msra.mxu0 %v5250
  %7808 = vmatpush.bf16.msra.mxu0 %v5246
  %7809 = vmatpush.bf16.msra.mxu0 %v5242
  %7810 = vmatmul.bf16.gmra.mxu0 %v72
  %v7811 = vpop.f32.mrf.mxu0
  %v7812 = vadd.f32 %v1394, %v7811
  %v7813 = vpop.f32.mrf.mxu0
  %7814 = vdwg.mxu0
  %7815 = vmatpush.bf16.msra.mxu0 %v5302
  %7816 = vmatpush.bf16.msra.mxu0 %v5298
  %7817 = vmatpush.bf16.msra.mxu0 %v5294
  %7818 = vmatpush.bf16.msra.mxu0 %v5290
  %7819 = vmatpush.bf16.msra.mxu0 %v5286
  %7820 = vmatpush.bf16.msra.mxu0 %v5282
  %7821 = vmatpush.bf16.msra.mxu0 %v5278
  %7822 = vmatpush.bf16.msra.mxu0 %v5274
  %7823 = vmatmul.bf16.gmra.mxu0 %v73
  %v7824 = vpop.f32.mrf.mxu0
  %v7825 = vadd.f32 %v7812, %v7824
  %v7826 = vpop.f32.mrf.mxu0
  %7827 = vdwg.mxu0
  %7828 = vmatpush.bf16.msra.mxu0 %v5334
  %7829 = vmatpush.bf16.msra.mxu0 %v5330
  %7830 = vmatpush.bf16.msra.mxu0 %v5326
  %7831 = vmatpush.bf16.msra.mxu0 %v5322
  %7832 = vmatpush.bf16.msra.mxu0 %v5318
  %7833 = vmatpush.bf16.msra.mxu0 %v5314
  %7834 = vmatpush.bf16.msra.mxu0 %v5310
  %7835 = vmatpush.bf16.msra.mxu0 %v5306
  %7836 = vmatmul.bf16.gmra.mxu0 %v74
  %v7837 = vpop.f32.mrf.mxu0
  %v7838 = vadd.f32 %v7825, %v7837
  %v7839 = vpop.f32.mrf.mxu0
  %7840 = vdwg.mxu0
  %7841 = vmatpush.bf16.msra.mxu0 %v5366
  %7842 = vmatpush.bf16.msra.mxu0 %v5362
  %7843 = vmatpush.bf16.msra.mxu0 %v5358
  %7844 = vmatpush.bf16.msra.mxu0 %v5354
  %7845 = vmatpush.bf16.msra.mxu0 %v5350
  %7846 = vmatpush.bf16.msra.mxu0 %v5346
  %7847 = vmatpush.bf16.msra.mxu0 %v5342
  %7848 = vmatpush.bf16.msra.mxu0 %v5338
  %7849 = vmatmul.bf16.gmra.mxu0 %v75
  %v7850 = vpop.f32.mrf.mxu0
  %v7851 = vadd.f32 %v7838, %v7850
  %v7852 = vpop.f32.mrf.mxu0
  %7853 = vdwg.mxu0
  %7854 = vmatpush.bf16.msra.mxu0 %v5398
  %7855 = vmatpush.bf16.msra.mxu0 %v5394
  %7856 = vmatpush.bf16.msra.mxu0 %v5390
  %7857 = vmatpush.bf16.msra.mxu0 %v5386
  %7858 = vmatpush.bf16.msra.mxu0 %v5382
  %7859 = vmatpush.bf16.msra.mxu0 %v5378
  %7860 = vmatpush.bf16.msra.mxu0 %v5374
  %7861 = vmatpush.bf16.msra.mxu0 %v5370
  %7862 = vmatmul.bf16.gmra.mxu0 %v76
  %v7863 = vpop.f32.mrf.mxu0
  %v7864 = vadd.f32 %v7851, %v7863
  %v7865 = vpop.f32.mrf.mxu0
  %7866 = vdwg.mxu0
  %7867 = vmatpush.bf16.msra.mxu0 %v5430
  %7868 = vmatpush.bf16.msra.mxu0 %v5426
  %7869 = vmatpush.bf16.msra.mxu0 %v5422
  %7870 = vmatpush.bf16.msra.mxu0 %v5418
  %7871 = vmatpush.bf16.msra.mxu0 %v5414
  %7872 = vmatpush.bf16.msra.mxu0 %v5410
  %7873 = vmatpush.bf16.msra.mxu0 %v5406
  %7874 = vmatpush.bf16.msra.mxu0 %v5402
  %7875 = vmatmul.bf16.gmra.mxu0 %v77
  %v7876 = vpop.f32.mrf.mxu0
  %v7877 = vadd.f32 %v7864, %v7876
  %v7878 = vpop.f32.mrf.mxu0
  %7879 = vdwg.mxu0
  %7880 = vmatpush.bf16.msra.mxu0 %v5462
  %7881 = vmatpush.bf16.msra.mxu0 %v5458
  %7882 = vmatpush.bf16.msra.mxu0 %v5454
  %7883 = vmatpush.bf16.msra.mxu0 %v5450
  %7884 = vmatpush.bf16.msra.mxu0 %v5446
  %7885 = vmatpush.bf16.msra.mxu0 %v5442
  %7886 = vmatpush.bf16.msra.mxu0 %v5438
  %7887 = vmatpush.bf16.msra.mxu0 %v5434
  %7888 = vmatmul.bf16.gmra.mxu0 %v78
  %v7889 = vpop.f32.mrf.mxu0
  %v7890 = vadd.f32 %v7877, %v7889
  %v7891 = vpop.f32.mrf.mxu0
  %7892 = vdwg.mxu0
  %7893 = vmatpush.bf16.msra.mxu0 %v5494
  %7894 = vmatpush.bf16.msra.mxu0 %v5490
  %7895 = vmatpush.bf16.msra.mxu0 %v5486
  %7896 = vmatpush.bf16.msra.mxu0 %v5482
  %7897 = vmatpush.bf16.msra.mxu0 %v5478
  %7898 = vmatpush.bf16.msra.mxu0 %v5474
  %7899 = vmatpush.bf16.msra.mxu0 %v5470
  %7900 = vmatpush.bf16.msra.mxu0 %v5466
  %7901 = vmatmul.bf16.gmra.mxu0 %v79
  %v7902 = vpop.f32.mrf.mxu0
  %v7903 = vadd.f32 %v7890, %v7902
  %v7904 = vpop.f32.mrf.mxu0
  %7905 = vdwg.mxu0
  %7906 = vmatpush.bf16.msra.mxu0 %v5526
  %7907 = vmatpush.bf16.msra.mxu0 %v5522
  %7908 = vmatpush.bf16.msra.mxu0 %v5518
  %7909 = vmatpush.bf16.msra.mxu0 %v5514
  %7910 = vmatpush.bf16.msra.mxu0 %v5510
  %7911 = vmatpush.bf16.msra.mxu0 %v5506
  %7912 = vmatpush.bf16.msra.mxu0 %v5502
  %7913 = vmatpush.bf16.msra.mxu0 %v5498
  %7914 = vmatmul.bf16.gmra.mxu0 %v80
  %v7915 = vpop.f32.mrf.mxu0
  %v7916 = vadd.f32 %v7903, %v7915
  %v7917 = vpop.f32.mrf.mxu0
  %7918 = vdwg.mxu0
  %7919 = vmatpush.bf16.msra.mxu0 %v5558
  %7920 = vmatpush.bf16.msra.mxu0 %v5554
  %7921 = vmatpush.bf16.msra.mxu0 %v5550
  %7922 = vmatpush.bf16.msra.mxu0 %v5546
  %7923 = vmatpush.bf16.msra.mxu0 %v5542
  %7924 = vmatpush.bf16.msra.mxu0 %v5538
  %7925 = vmatpush.bf16.msra.mxu0 %v5534
  %7926 = vmatpush.bf16.msra.mxu0 %v5530
  %7927 = vmatmul.bf16.gmra.mxu0 %v81
  %v7928 = vpop.f32.mrf.mxu0
  %v7929 = vadd.f32 %v7916, %v7928
  %v7930 = vpop.f32.mrf.mxu0
  %7931 = vdwg.mxu0
  %7932 = vmatpush.bf16.msra.mxu0 %v5590
  %7933 = vmatpush.bf16.msra.mxu0 %v5586
  %7934 = vmatpush.bf16.msra.mxu0 %v5582
  %7935 = vmatpush.bf16.msra.mxu0 %v5578
  %7936 = vmatpush.bf16.msra.mxu0 %v5574
  %7937 = vmatpush.bf16.msra.mxu0 %v5570
  %7938 = vmatpush.bf16.msra.mxu0 %v5566
  %7939 = vmatpush.bf16.msra.mxu0 %v5562
  %7940 = vmatmul.bf16.gmra.mxu0 %v82
  %v7941 = vpop.f32.mrf.mxu0
  %v7942 = vadd.f32 %v7929, %v7941
  %v7943 = vpop.f32.mrf.mxu0
  %7944 = vdwg.mxu0
  %7945 = vmatpush.bf16.msra.mxu0 %v5622
  %7946 = vmatpush.bf16.msra.mxu0 %v5618
  %7947 = vmatpush.bf16.msra.mxu0 %v5614
  %7948 = vmatpush.bf16.msra.mxu0 %v5610
  %7949 = vmatpush.bf16.msra.mxu0 %v5606
  %7950 = vmatpush.bf16.msra.mxu0 %v5602
  %7951 = vmatpush.bf16.msra.mxu0 %v5598
  %7952 = vmatpush.bf16.msra.mxu0 %v5594
  %7953 = vmatmul.bf16.gmra.mxu0 %v83
  %v7954 = vpop.f32.mrf.mxu0
  %v7955 = vadd.f32 %v7942, %v7954
  %v7956 = vpop.f32.mrf.mxu0
  %7957 = vdwg.mxu0
  %7958 = vmatpush.bf16.msra.mxu0 %v5654
  %7959 = vmatpush.bf16.msra.mxu0 %v5650
  %7960 = vmatpush.bf16.msra.mxu0 %v5646
  %7961 = vmatpush.bf16.msra.mxu0 %v5642
  %7962 = vmatpush.bf16.msra.mxu0 %v5638
  %7963 = vmatpush.bf16.msra.mxu0 %v5634
  %7964 = vmatpush.bf16.msra.mxu0 %v5630
  %7965 = vmatpush.bf16.msra.mxu0 %v5626
  %7966 = vmatmul.bf16.gmra.mxu0 %v84
  %v7967 = vpop.f32.mrf.mxu0
  %v7968 = vadd.f32 %v7955, %v7967
  %v7969 = vpop.f32.mrf.mxu0
  %7970 = vdwg.mxu0
  %7971 = vmatpush.bf16.msra.mxu0 %v5686
  %7972 = vmatpush.bf16.msra.mxu0 %v5682
  %7973 = vmatpush.bf16.msra.mxu0 %v5678
  %7974 = vmatpush.bf16.msra.mxu0 %v5674
  %7975 = vmatpush.bf16.msra.mxu0 %v5670
  %7976 = vmatpush.bf16.msra.mxu0 %v5666
  %7977 = vmatpush.bf16.msra.mxu0 %v5662
  %7978 = vmatpush.bf16.msra.mxu0 %v5658
  %7979 = vmatmul.bf16.gmra.mxu0 %v85
  %v7980 = vpop.f32.mrf.mxu0
  %v7981 = vadd.f32 %v7968, %v7980
  %v7982 = vpop.f32.mrf.mxu0
  %7983 = vdwg.mxu0
  %7984 = vmatpush.bf16.msra.mxu0 %v5718
  %7985 = vmatpush.bf16.msra.mxu0 %v5714
  %7986 = vmatpush.bf16.msra.mxu0 %v5710
  %7987 = vmatpush.bf16.msra.mxu0 %v5706
  %7988 = vmatpush.bf16.msra.mxu0 %v5702
  %7989 = vmatpush.bf16.msra.mxu0 %v5698
  %7990 = vmatpush.bf16.msra.mxu0 %v5694
  %7991 = vmatpush.bf16.msra.mxu0 %v5690
  %7992 = vmatmul.bf16.gmra.mxu0 %v86
  %v7993 = vpop.f32.mrf.mxu0
  %v7994 = vadd.f32 %v7981, %v7993
  %v7995 = vpop.f32.mrf.mxu0
  %7996 = vdwg.mxu0
  %7997 = vmatpush.bf16.msra.mxu0 %v5750
  %7998 = vmatpush.bf16.msra.mxu0 %v5746
  %7999 = vmatpush.bf16.msra.mxu0 %v5742
  %8000 = vmatpush.bf16.msra.mxu0 %v5738
  %8001 = vmatpush.bf16.msra.mxu0 %v5734
  %8002 = vmatpush.bf16.msra.mxu0 %v5730
  %8003 = vmatpush.bf16.msra.mxu0 %v5726
  %8004 = vmatpush.bf16.msra.mxu0 %v5722
  %8005 = vmatmul.bf16.gmra.mxu0 %v87
  %v8006 = vpop.f32.mrf.mxu0
  %v8007 = vadd.f32 %v7994, %v8006
  %v8008 = vpop.f32.mrf.mxu0
  %8009 = vdwg.mxu0
  %8010 = vmatpush.bf16.msra.mxu0 %v5782
  %8011 = vmatpush.bf16.msra.mxu0 %v5778
  %8012 = vmatpush.bf16.msra.mxu0 %v5774
  %8013 = vmatpush.bf16.msra.mxu0 %v5770
  %8014 = vmatpush.bf16.msra.mxu0 %v5766
  %8015 = vmatpush.bf16.msra.mxu0 %v5762
  %8016 = vmatpush.bf16.msra.mxu0 %v5758
  %8017 = vmatpush.bf16.msra.mxu0 %v5754
  %8018 = vmatmul.bf16.gmra.mxu0 %v88
  %v8019 = vpop.f32.mrf.mxu0
  %v8020 = vadd.f32 %v8007, %v8019
  %v8021 = vpop.f32.mrf.mxu0
  %8022 = vdwg.mxu0
  %8023 = vmatpush.bf16.msra.mxu0 %v5814
  %8024 = vmatpush.bf16.msra.mxu0 %v5810
  %8025 = vmatpush.bf16.msra.mxu0 %v5806
  %8026 = vmatpush.bf16.msra.mxu0 %v5802
  %8027 = vmatpush.bf16.msra.mxu0 %v5798
  %8028 = vmatpush.bf16.msra.mxu0 %v5794
  %8029 = vmatpush.bf16.msra.mxu0 %v5790
  %8030 = vmatpush.bf16.msra.mxu0 %v5786
  %8031 = vmatmul.bf16.gmra.mxu0 %v89
  %v8032 = vpop.f32.mrf.mxu0
  %v8033 = vadd.f32 %v8020, %v8032
  %v8034 = vpop.f32.mrf.mxu0
  %8035 = vdwg.mxu0
  %8036 = vmatpush.bf16.msra.mxu0 %v5846
  %8037 = vmatpush.bf16.msra.mxu0 %v5842
  %8038 = vmatpush.bf16.msra.mxu0 %v5838
  %8039 = vmatpush.bf16.msra.mxu0 %v5834
  %8040 = vmatpush.bf16.msra.mxu0 %v5830
  %8041 = vmatpush.bf16.msra.mxu0 %v5826
  %8042 = vmatpush.bf16.msra.mxu0 %v5822
  %8043 = vmatpush.bf16.msra.mxu0 %v5818
  %8044 = vmatmul.bf16.gmra.mxu0 %v90
  %v8045 = vpop.f32.mrf.mxu0
  %v8046 = vadd.f32 %v8033, %v8045
  %v8047 = vpop.f32.mrf.mxu0
  %8048 = vdwg.mxu0
  %8049 = vmatpush.bf16.msra.mxu0 %v5878
  %8050 = vmatpush.bf16.msra.mxu0 %v5874
  %8051 = vmatpush.bf16.msra.mxu0 %v5870
  %8052 = vmatpush.bf16.msra.mxu0 %v5866
  %8053 = vmatpush.bf16.msra.mxu0 %v5862
  %8054 = vmatpush.bf16.msra.mxu0 %v5858
  %8055 = vmatpush.bf16.msra.mxu0 %v5854
  %8056 = vmatpush.bf16.msra.mxu0 %v5850
  %8057 = vmatmul.bf16.gmra.mxu0 %v91
  %v8058 = vpop.f32.mrf.mxu0
  %v8059 = vadd.f32 %v8046, %v8058
  %v8060 = vpop.f32.mrf.mxu0
  %8061 = vdwg.mxu0
  %8062 = vmatpush.bf16.msra.mxu0 %v5910
  %8063 = vmatpush.bf16.msra.mxu0 %v5906
  %8064 = vmatpush.bf16.msra.mxu0 %v5902
  %8065 = vmatpush.bf16.msra.mxu0 %v5898
  %8066 = vmatpush.bf16.msra.mxu0 %v5894
  %8067 = vmatpush.bf16.msra.mxu0 %v5890
  %8068 = vmatpush.bf16.msra.mxu0 %v5886
  %8069 = vmatpush.bf16.msra.mxu0 %v5882
  %8070 = vmatmul.bf16.gmra.mxu0 %v92
  %v8071 = vpop.f32.mrf.mxu0
  %v8072 = vadd.f32 %v8059, %v8071
  %v8073 = vpop.f32.mrf.mxu0
  %8074 = vdwg.mxu0
  %8075 = vmatpush.bf16.msra.mxu0 %v5942
  %8076 = vmatpush.bf16.msra.mxu0 %v5938
  %8077 = vmatpush.bf16.msra.mxu0 %v5934
  %8078 = vmatpush.bf16.msra.mxu0 %v5930
  %8079 = vmatpush.bf16.msra.mxu0 %v5926
  %8080 = vmatpush.bf16.msra.mxu0 %v5922
  %8081 = vmatpush.bf16.msra.mxu0 %v5918
  %8082 = vmatpush.bf16.msra.mxu0 %v5914
  %8083 = vmatmul.bf16.gmra.mxu0 %v93
  %v8084 = vpop.f32.mrf.mxu0
  %v8085 = vadd.f32 %v8072, %v8084
  %v8086 = vpop.f32.mrf.mxu0
  %8087 = vdwg.mxu0
  %8088 = vmatpush.bf16.msra.mxu0 %v5974
  %8089 = vmatpush.bf16.msra.mxu0 %v5970
  %8090 = vmatpush.bf16.msra.mxu0 %v5966
  %8091 = vmatpush.bf16.msra.mxu0 %v5962
  %8092 = vmatpush.bf16.msra.mxu0 %v5958
  %8093 = vmatpush.bf16.msra.mxu0 %v5954
  %8094 = vmatpush.bf16.msra.mxu0 %v5950
  %8095 = vmatpush.bf16.msra.mxu0 %v5946
  %8096 = vmatmul.bf16.gmra.mxu0 %v94
  %v8097 = vpop.f32.mrf.mxu0
  %v8098 = vadd.f32 %v8085, %v8097
  %v8099 = vpop.f32.mrf.mxu0
  %8100 = vdwg.mxu0
  %8101 = vmatpush.bf16.msra.mxu0 %v6006
  %8102 = vmatpush.bf16.msra.mxu0 %v6002
  %8103 = vmatpush.bf16.msra.mxu0 %v5998
  %8104 = vmatpush.bf16.msra.mxu0 %v5994
  %8105 = vmatpush.bf16.msra.mxu0 %v5990
  %8106 = vmatpush.bf16.msra.mxu0 %v5986
  %8107 = vmatpush.bf16.msra.mxu0 %v5982
  %8108 = vmatpush.bf16.msra.mxu0 %v5978
  %8109 = vmatmul.bf16.gmra.mxu0 %v95
  %v8110 = vpop.f32.mrf.mxu0
  %v8111 = vadd.f32 %v8098, %v8110
  %v8112 = vpop.f32.mrf.mxu0
  %8113 = vdwg.mxu0
  %8114 = vmatpush.bf16.msra.mxu0 %v6038
  %8115 = vmatpush.bf16.msra.mxu0 %v6034
  %8116 = vmatpush.bf16.msra.mxu0 %v6030
  %8117 = vmatpush.bf16.msra.mxu0 %v6026
  %8118 = vmatpush.bf16.msra.mxu0 %v6022
  %8119 = vmatpush.bf16.msra.mxu0 %v6018
  %8120 = vmatpush.bf16.msra.mxu0 %v6014
  %8121 = vmatpush.bf16.msra.mxu0 %v6010
  %8122 = vmatmul.bf16.gmra.mxu0 %v96
  %v8123 = vpop.f32.mrf.mxu0
  %v8124 = vadd.f32 %v8111, %v8123
  %v8125 = vpop.f32.mrf.mxu0
  %8126 = vdwg.mxu0
  %8127 = vmatpush.bf16.msra.mxu0 %v6070
  %8128 = vmatpush.bf16.msra.mxu0 %v6066
  %8129 = vmatpush.bf16.msra.mxu0 %v6062
  %8130 = vmatpush.bf16.msra.mxu0 %v6058
  %8131 = vmatpush.bf16.msra.mxu0 %v6054
  %8132 = vmatpush.bf16.msra.mxu0 %v6050
  %8133 = vmatpush.bf16.msra.mxu0 %v6046
  %8134 = vmatpush.bf16.msra.mxu0 %v6042
  %8135 = vmatmul.bf16.gmra.mxu0 %v97
  %v8136 = vpop.f32.mrf.mxu0
  %v8137 = vadd.f32 %v8124, %v8136
  %v8138 = vpop.f32.mrf.mxu0
  %8139 = vdwg.mxu0
  %8140 = vmatpush.bf16.msra.mxu0 %v6102
  %8141 = vmatpush.bf16.msra.mxu0 %v6098
  %8142 = vmatpush.bf16.msra.mxu0 %v6094
  %8143 = vmatpush.bf16.msra.mxu0 %v6090
  %8144 = vmatpush.bf16.msra.mxu0 %v6086
  %8145 = vmatpush.bf16.msra.mxu0 %v6082
  %8146 = vmatpush.bf16.msra.mxu0 %v6078
  %8147 = vmatpush.bf16.msra.mxu0 %v6074
  %8148 = vmatmul.bf16.gmra.mxu0 %v98
  %v8149 = vpop.f32.mrf.mxu0
  %v8150 = vadd.f32 %v8137, %v8149
  %v8151 = vpop.f32.mrf.mxu0
  %8152 = vdwg.mxu0
  %8153 = vmatpush.bf16.msra.mxu0 %v6134
  %8154 = vmatpush.bf16.msra.mxu0 %v6130
  %8155 = vmatpush.bf16.msra.mxu0 %v6126
  %8156 = vmatpush.bf16.msra.mxu0 %v6122
  %8157 = vmatpush.bf16.msra.mxu0 %v6118
  %8158 = vmatpush.bf16.msra.mxu0 %v6114
  %8159 = vmatpush.bf16.msra.mxu0 %v6110
  %8160 = vmatpush.bf16.msra.mxu0 %v6106
  %8161 = vmatmul.bf16.gmra.mxu0 %v99
  %v8162 = vpop.f32.mrf.mxu0
  %v8163 = vadd.f32 %v8150, %v8162
  %v8164 = vpop.f32.mrf.mxu0
  %8165 = vdwg.mxu0
  %8166 = vmatpush.bf16.msra.mxu0 %v6166
  %8167 = vmatpush.bf16.msra.mxu0 %v6162
  %8168 = vmatpush.bf16.msra.mxu0 %v6158
  %8169 = vmatpush.bf16.msra.mxu0 %v6154
  %8170 = vmatpush.bf16.msra.mxu0 %v6150
  %8171 = vmatpush.bf16.msra.mxu0 %v6146
  %8172 = vmatpush.bf16.msra.mxu0 %v6142
  %8173 = vmatpush.bf16.msra.mxu0 %v6138
  %8174 = vmatmul.bf16.gmra.mxu0 %v100
  %v8175 = vpop.f32.mrf.mxu0
  %v8176 = vadd.f32 %v8163, %v8175
  %v8177 = vpop.f32.mrf.mxu0
  %8178 = vdwg.mxu0
  %8179 = vmatpush.bf16.msra.mxu0 %v6198
  %8180 = vmatpush.bf16.msra.mxu0 %v6194
  %8181 = vmatpush.bf16.msra.mxu0 %v6190
  %8182 = vmatpush.bf16.msra.mxu0 %v6186
  %8183 = vmatpush.bf16.msra.mxu0 %v6182
  %8184 = vmatpush.bf16.msra.mxu0 %v6178
  %8185 = vmatpush.bf16.msra.mxu0 %v6174
  %8186 = vmatpush.bf16.msra.mxu0 %v6170
  %8187 = vmatmul.bf16.gmra.mxu0 %v101
  %v8188 = vpop.f32.mrf.mxu0
  %v8189 = vadd.f32 %v8176, %v8188
  %v8190 = vpop.f32.mrf.mxu0
  %8191 = vdwg.mxu0
  %8192 = vmatpush.bf16.msra.mxu0 %v6230
  %8193 = vmatpush.bf16.msra.mxu0 %v6226
  %8194 = vmatpush.bf16.msra.mxu0 %v6222
  %8195 = vmatpush.bf16.msra.mxu0 %v6218
  %8196 = vmatpush.bf16.msra.mxu0 %v6214
  %8197 = vmatpush.bf16.msra.mxu0 %v6210
  %8198 = vmatpush.bf16.msra.mxu0 %v6206
  %8199 = vmatpush.bf16.msra.mxu0 %v6202
  %8200 = vmatmul.bf16.gmra.mxu0 %v102
  %v8201 = vpop.f32.mrf.mxu0
  %v8202 = vadd.f32 %v8189, %v8201
  %v8203 = vpop.f32.mrf.mxu0
  %8204 = vdwg.mxu0
  %8205 = vmatpush.bf16.msra.mxu0 %v6262
  %8206 = vmatpush.bf16.msra.mxu0 %v6258
  %8207 = vmatpush.bf16.msra.mxu0 %v6254
  %8208 = vmatpush.bf16.msra.mxu0 %v6250
  %8209 = vmatpush.bf16.msra.mxu0 %v6246
  %8210 = vmatpush.bf16.msra.mxu0 %v6242
  %8211 = vmatpush.bf16.msra.mxu0 %v6238
  %8212 = vmatpush.bf16.msra.mxu0 %v6234
  %8213 = vmatmul.bf16.gmra.mxu0 %v103
  %v8214 = vpop.f32.mrf.mxu0
  %v8215 = vadd.f32 %v8202, %v8214
  %v8216 = vpop.f32.mrf.mxu0
  %8217 = vdwg.mxu0
  %8218 = vmatpush.bf16.msra.mxu0 %v6294
  %8219 = vmatpush.bf16.msra.mxu0 %v6290
  %8220 = vmatpush.bf16.msra.mxu0 %v6286
  %8221 = vmatpush.bf16.msra.mxu0 %v6282
  %8222 = vmatpush.bf16.msra.mxu0 %v6278
  %8223 = vmatpush.bf16.msra.mxu0 %v6274
  %8224 = vmatpush.bf16.msra.mxu0 %v6270
  %8225 = vmatpush.bf16.msra.mxu0 %v6266
  %8226 = vmatmul.bf16.gmra.mxu0 %v104
  %v8227 = vpop.f32.mrf.mxu0
  %v8228 = vadd.f32 %v8215, %v8227
  %v8229 = vpop.f32.mrf.mxu0
  %8230 = vdwg.mxu0
  %8231 = vmatpush.bf16.msra.mxu0 %v6326
  %8232 = vmatpush.bf16.msra.mxu0 %v6322
  %8233 = vmatpush.bf16.msra.mxu0 %v6318
  %8234 = vmatpush.bf16.msra.mxu0 %v6314
  %8235 = vmatpush.bf16.msra.mxu0 %v6310
  %8236 = vmatpush.bf16.msra.mxu0 %v6306
  %8237 = vmatpush.bf16.msra.mxu0 %v6302
  %8238 = vmatpush.bf16.msra.mxu0 %v6298
  %8239 = vmatmul.bf16.gmra.mxu0 %v105
  %v8240 = vpop.f32.mrf.mxu0
  %v8241 = vadd.f32 %v8228, %v8240
  %v8242 = vpop.f32.mrf.mxu0
  %8243 = vdwg.mxu0
  %8244 = vmatpush.bf16.msra.mxu0 %v6358
  %8245 = vmatpush.bf16.msra.mxu0 %v6354
  %8246 = vmatpush.bf16.msra.mxu0 %v6350
  %8247 = vmatpush.bf16.msra.mxu0 %v6346
  %8248 = vmatpush.bf16.msra.mxu0 %v6342
  %8249 = vmatpush.bf16.msra.mxu0 %v6338
  %8250 = vmatpush.bf16.msra.mxu0 %v6334
  %8251 = vmatpush.bf16.msra.mxu0 %v6330
  %8252 = vmatmul.bf16.gmra.mxu0 %v106
  %v8253 = vpop.f32.mrf.mxu0
  %v8254 = vadd.f32 %v8241, %v8253
  %v8255 = vpop.f32.mrf.mxu0
  %8256 = vdwg.mxu0
  %8257 = vmatpush.bf16.msra.mxu0 %v6390
  %8258 = vmatpush.bf16.msra.mxu0 %v6386
  %8259 = vmatpush.bf16.msra.mxu0 %v6382
  %8260 = vmatpush.bf16.msra.mxu0 %v6378
  %8261 = vmatpush.bf16.msra.mxu0 %v6374
  %8262 = vmatpush.bf16.msra.mxu0 %v6370
  %8263 = vmatpush.bf16.msra.mxu0 %v6366
  %8264 = vmatpush.bf16.msra.mxu0 %v6362
  %8265 = vmatmul.bf16.gmra.mxu0 %v107
  %v8266 = vpop.f32.mrf.mxu0
  %v8267 = vadd.f32 %v8254, %v8266
  %v8268 = vpop.f32.mrf.mxu0
  %8269 = vdwg.mxu0
  %8270 = vmatpush.bf16.msra.mxu0 %v6422
  %8271 = vmatpush.bf16.msra.mxu0 %v6418
  %8272 = vmatpush.bf16.msra.mxu0 %v6414
  %8273 = vmatpush.bf16.msra.mxu0 %v6410
  %8274 = vmatpush.bf16.msra.mxu0 %v6406
  %8275 = vmatpush.bf16.msra.mxu0 %v6402
  %8276 = vmatpush.bf16.msra.mxu0 %v6398
  %8277 = vmatpush.bf16.msra.mxu0 %v6394
  %8278 = vmatmul.bf16.gmra.mxu0 %v108
  %v8279 = vpop.f32.mrf.mxu0
  %v8280 = vadd.f32 %v8267, %v8279
  %v8281 = vpop.f32.mrf.mxu0
  %8282 = vdwg.mxu0
  %8283 = vmatpush.bf16.msra.mxu0 %v6454
  %8284 = vmatpush.bf16.msra.mxu0 %v6450
  %8285 = vmatpush.bf16.msra.mxu0 %v6446
  %8286 = vmatpush.bf16.msra.mxu0 %v6442
  %8287 = vmatpush.bf16.msra.mxu0 %v6438
  %8288 = vmatpush.bf16.msra.mxu0 %v6434
  %8289 = vmatpush.bf16.msra.mxu0 %v6430
  %8290 = vmatpush.bf16.msra.mxu0 %v6426
  %8291 = vmatmul.bf16.gmra.mxu0 %v109
  %v8292 = vpop.f32.mrf.mxu0
  %v8293 = vadd.f32 %v8280, %v8292
  %v8294 = vpop.f32.mrf.mxu0
  %8295 = vdwg.mxu0
  %8296 = vmatpush.bf16.msra.mxu0 %v6486
  %8297 = vmatpush.bf16.msra.mxu0 %v6482
  %8298 = vmatpush.bf16.msra.mxu0 %v6478
  %8299 = vmatpush.bf16.msra.mxu0 %v6474
  %8300 = vmatpush.bf16.msra.mxu0 %v6470
  %8301 = vmatpush.bf16.msra.mxu0 %v6466
  %8302 = vmatpush.bf16.msra.mxu0 %v6462
  %8303 = vmatpush.bf16.msra.mxu0 %v6458
  %8304 = vmatmul.bf16.gmra.mxu0 %v110
  %v8305 = vpop.f32.mrf.mxu0
  %v8306 = vadd.f32 %v8293, %v8305
  %v8307 = vpop.f32.mrf.mxu0
  %8308 = vdwg.mxu0
  %8309 = vmatpush.bf16.msra.mxu0 %v6518
  %8310 = vmatpush.bf16.msra.mxu0 %v6514
  %8311 = vmatpush.bf16.msra.mxu0 %v6510
  %8312 = vmatpush.bf16.msra.mxu0 %v6506
  %8313 = vmatpush.bf16.msra.mxu0 %v6502
  %8314 = vmatpush.bf16.msra.mxu0 %v6498
  %8315 = vmatpush.bf16.msra.mxu0 %v6494
  %8316 = vmatpush.bf16.msra.mxu0 %v6490
  %8317 = vmatmul.bf16.gmra.mxu0 %v111
  %v8318 = vpop.f32.mrf.mxu0
  %v8319 = vadd.f32 %v8306, %v8318
  %v8320 = vpop.f32.mrf.mxu0
  %8321 = vdwg.mxu0
  %8322 = vmatpush.bf16.msra.mxu0 %v5271
  %8323 = vmatpush.bf16.msra.mxu0 %v5267
  %8324 = vmatpush.bf16.msra.mxu0 %v5263
  %8325 = vmatpush.bf16.msra.mxu0 %v5259
  %8326 = vmatpush.bf16.msra.mxu0 %v5255
  %8327 = vmatpush.bf16.msra.mxu0 %v5251
  %8328 = vmatpush.bf16.msra.mxu0 %v5247
  %8329 = vmatpush.bf16.msra.mxu0 %v5243
  %8330 = vmatmul.bf16.gmra.mxu0 %v72
  %v8331 = vpop.f32.mrf.mxu0
  %v8332 = vadd.f32 %v1395, %v8331
  %v8333 = vpop.f32.mrf.mxu0
  %8334 = vdwg.mxu0
  %8335 = vmatpush.bf16.msra.mxu0 %v5303
  %8336 = vmatpush.bf16.msra.mxu0 %v5299
  %8337 = vmatpush.bf16.msra.mxu0 %v5295
  %8338 = vmatpush.bf16.msra.mxu0 %v5291
  %8339 = vmatpush.bf16.msra.mxu0 %v5287
  %8340 = vmatpush.bf16.msra.mxu0 %v5283
  %8341 = vmatpush.bf16.msra.mxu0 %v5279
  %8342 = vmatpush.bf16.msra.mxu0 %v5275
  %8343 = vmatmul.bf16.gmra.mxu0 %v73
  %v8344 = vpop.f32.mrf.mxu0
  %v8345 = vadd.f32 %v8332, %v8344
  %v8346 = vpop.f32.mrf.mxu0
  %8347 = vdwg.mxu0
  %8348 = vmatpush.bf16.msra.mxu0 %v5335
  %8349 = vmatpush.bf16.msra.mxu0 %v5331
  %8350 = vmatpush.bf16.msra.mxu0 %v5327
  %8351 = vmatpush.bf16.msra.mxu0 %v5323
  %8352 = vmatpush.bf16.msra.mxu0 %v5319
  %8353 = vmatpush.bf16.msra.mxu0 %v5315
  %8354 = vmatpush.bf16.msra.mxu0 %v5311
  %8355 = vmatpush.bf16.msra.mxu0 %v5307
  %8356 = vmatmul.bf16.gmra.mxu0 %v74
  %v8357 = vpop.f32.mrf.mxu0
  %v8358 = vadd.f32 %v8345, %v8357
  %v8359 = vpop.f32.mrf.mxu0
  %8360 = vdwg.mxu0
  %8361 = vmatpush.bf16.msra.mxu0 %v5367
  %8362 = vmatpush.bf16.msra.mxu0 %v5363
  %8363 = vmatpush.bf16.msra.mxu0 %v5359
  %8364 = vmatpush.bf16.msra.mxu0 %v5355
  %8365 = vmatpush.bf16.msra.mxu0 %v5351
  %8366 = vmatpush.bf16.msra.mxu0 %v5347
  %8367 = vmatpush.bf16.msra.mxu0 %v5343
  %8368 = vmatpush.bf16.msra.mxu0 %v5339
  %8369 = vmatmul.bf16.gmra.mxu0 %v75
  %v8370 = vpop.f32.mrf.mxu0
  %v8371 = vadd.f32 %v8358, %v8370
  %v8372 = vpop.f32.mrf.mxu0
  %8373 = vdwg.mxu0
  %8374 = vmatpush.bf16.msra.mxu0 %v5399
  %8375 = vmatpush.bf16.msra.mxu0 %v5395
  %8376 = vmatpush.bf16.msra.mxu0 %v5391
  %8377 = vmatpush.bf16.msra.mxu0 %v5387
  %8378 = vmatpush.bf16.msra.mxu0 %v5383
  %8379 = vmatpush.bf16.msra.mxu0 %v5379
  %8380 = vmatpush.bf16.msra.mxu0 %v5375
  %8381 = vmatpush.bf16.msra.mxu0 %v5371
  %8382 = vmatmul.bf16.gmra.mxu0 %v76
  %v8383 = vpop.f32.mrf.mxu0
  %v8384 = vadd.f32 %v8371, %v8383
  %v8385 = vpop.f32.mrf.mxu0
  %8386 = vdwg.mxu0
  %8387 = vmatpush.bf16.msra.mxu0 %v5431
  %8388 = vmatpush.bf16.msra.mxu0 %v5427
  %8389 = vmatpush.bf16.msra.mxu0 %v5423
  %8390 = vmatpush.bf16.msra.mxu0 %v5419
  %8391 = vmatpush.bf16.msra.mxu0 %v5415
  %8392 = vmatpush.bf16.msra.mxu0 %v5411
  %8393 = vmatpush.bf16.msra.mxu0 %v5407
  %8394 = vmatpush.bf16.msra.mxu0 %v5403
  %8395 = vmatmul.bf16.gmra.mxu0 %v77
  %v8396 = vpop.f32.mrf.mxu0
  %v8397 = vadd.f32 %v8384, %v8396
  %v8398 = vpop.f32.mrf.mxu0
  %8399 = vdwg.mxu0
  %8400 = vmatpush.bf16.msra.mxu0 %v5463
  %8401 = vmatpush.bf16.msra.mxu0 %v5459
  %8402 = vmatpush.bf16.msra.mxu0 %v5455
  %8403 = vmatpush.bf16.msra.mxu0 %v5451
  %8404 = vmatpush.bf16.msra.mxu0 %v5447
  %8405 = vmatpush.bf16.msra.mxu0 %v5443
  %8406 = vmatpush.bf16.msra.mxu0 %v5439
  %8407 = vmatpush.bf16.msra.mxu0 %v5435
  %8408 = vmatmul.bf16.gmra.mxu0 %v78
  %v8409 = vpop.f32.mrf.mxu0
  %v8410 = vadd.f32 %v8397, %v8409
  %v8411 = vpop.f32.mrf.mxu0
  %8412 = vdwg.mxu0
  %8413 = vmatpush.bf16.msra.mxu0 %v5495
  %8414 = vmatpush.bf16.msra.mxu0 %v5491
  %8415 = vmatpush.bf16.msra.mxu0 %v5487
  %8416 = vmatpush.bf16.msra.mxu0 %v5483
  %8417 = vmatpush.bf16.msra.mxu0 %v5479
  %8418 = vmatpush.bf16.msra.mxu0 %v5475
  %8419 = vmatpush.bf16.msra.mxu0 %v5471
  %8420 = vmatpush.bf16.msra.mxu0 %v5467
  %8421 = vmatmul.bf16.gmra.mxu0 %v79
  %v8422 = vpop.f32.mrf.mxu0
  %v8423 = vadd.f32 %v8410, %v8422
  %v8424 = vpop.f32.mrf.mxu0
  %8425 = vdwg.mxu0
  %8426 = vmatpush.bf16.msra.mxu0 %v5527
  %8427 = vmatpush.bf16.msra.mxu0 %v5523
  %8428 = vmatpush.bf16.msra.mxu0 %v5519
  %8429 = vmatpush.bf16.msra.mxu0 %v5515
  %8430 = vmatpush.bf16.msra.mxu0 %v5511
  %8431 = vmatpush.bf16.msra.mxu0 %v5507
  %8432 = vmatpush.bf16.msra.mxu0 %v5503
  %8433 = vmatpush.bf16.msra.mxu0 %v5499
  %8434 = vmatmul.bf16.gmra.mxu0 %v80
  %v8435 = vpop.f32.mrf.mxu0
  %v8436 = vadd.f32 %v8423, %v8435
  %v8437 = vpop.f32.mrf.mxu0
  %8438 = vdwg.mxu0
  %8439 = vmatpush.bf16.msra.mxu0 %v5559
  %8440 = vmatpush.bf16.msra.mxu0 %v5555
  %8441 = vmatpush.bf16.msra.mxu0 %v5551
  %8442 = vmatpush.bf16.msra.mxu0 %v5547
  %8443 = vmatpush.bf16.msra.mxu0 %v5543
  %8444 = vmatpush.bf16.msra.mxu0 %v5539
  %8445 = vmatpush.bf16.msra.mxu0 %v5535
  %8446 = vmatpush.bf16.msra.mxu0 %v5531
  %8447 = vmatmul.bf16.gmra.mxu0 %v81
  %v8448 = vpop.f32.mrf.mxu0
  %v8449 = vadd.f32 %v8436, %v8448
  %v8450 = vpop.f32.mrf.mxu0
  %8451 = vdwg.mxu0
  %8452 = vmatpush.bf16.msra.mxu0 %v5591
  %8453 = vmatpush.bf16.msra.mxu0 %v5587
  %8454 = vmatpush.bf16.msra.mxu0 %v5583
  %8455 = vmatpush.bf16.msra.mxu0 %v5579
  %8456 = vmatpush.bf16.msra.mxu0 %v5575
  %8457 = vmatpush.bf16.msra.mxu0 %v5571
  %8458 = vmatpush.bf16.msra.mxu0 %v5567
  %8459 = vmatpush.bf16.msra.mxu0 %v5563
  %8460 = vmatmul.bf16.gmra.mxu0 %v82
  %v8461 = vpop.f32.mrf.mxu0
  %v8462 = vadd.f32 %v8449, %v8461
  %v8463 = vpop.f32.mrf.mxu0
  %8464 = vdwg.mxu0
  %8465 = vmatpush.bf16.msra.mxu0 %v5623
  %8466 = vmatpush.bf16.msra.mxu0 %v5619
  %8467 = vmatpush.bf16.msra.mxu0 %v5615
  %8468 = vmatpush.bf16.msra.mxu0 %v5611
  %8469 = vmatpush.bf16.msra.mxu0 %v5607
  %8470 = vmatpush.bf16.msra.mxu0 %v5603
  %8471 = vmatpush.bf16.msra.mxu0 %v5599
  %8472 = vmatpush.bf16.msra.mxu0 %v5595
  %8473 = vmatmul.bf16.gmra.mxu0 %v83
  %v8474 = vpop.f32.mrf.mxu0
  %v8475 = vadd.f32 %v8462, %v8474
  %v8476 = vpop.f32.mrf.mxu0
  %8477 = vdwg.mxu0
  %8478 = vmatpush.bf16.msra.mxu0 %v5655
  %8479 = vmatpush.bf16.msra.mxu0 %v5651
  %8480 = vmatpush.bf16.msra.mxu0 %v5647
  %8481 = vmatpush.bf16.msra.mxu0 %v5643
  %8482 = vmatpush.bf16.msra.mxu0 %v5639
  %8483 = vmatpush.bf16.msra.mxu0 %v5635
  %8484 = vmatpush.bf16.msra.mxu0 %v5631
  %8485 = vmatpush.bf16.msra.mxu0 %v5627
  %8486 = vmatmul.bf16.gmra.mxu0 %v84
  %v8487 = vpop.f32.mrf.mxu0
  %v8488 = vadd.f32 %v8475, %v8487
  %v8489 = vpop.f32.mrf.mxu0
  %8490 = vdwg.mxu0
  %8491 = vmatpush.bf16.msra.mxu0 %v5687
  %8492 = vmatpush.bf16.msra.mxu0 %v5683
  %8493 = vmatpush.bf16.msra.mxu0 %v5679
  %8494 = vmatpush.bf16.msra.mxu0 %v5675
  %8495 = vmatpush.bf16.msra.mxu0 %v5671
  %8496 = vmatpush.bf16.msra.mxu0 %v5667
  %8497 = vmatpush.bf16.msra.mxu0 %v5663
  %8498 = vmatpush.bf16.msra.mxu0 %v5659
  %8499 = vmatmul.bf16.gmra.mxu0 %v85
  %v8500 = vpop.f32.mrf.mxu0
  %v8501 = vadd.f32 %v8488, %v8500
  %v8502 = vpop.f32.mrf.mxu0
  %8503 = vdwg.mxu0
  %8504 = vmatpush.bf16.msra.mxu0 %v5719
  %8505 = vmatpush.bf16.msra.mxu0 %v5715
  %8506 = vmatpush.bf16.msra.mxu0 %v5711
  %8507 = vmatpush.bf16.msra.mxu0 %v5707
  %8508 = vmatpush.bf16.msra.mxu0 %v5703
  %8509 = vmatpush.bf16.msra.mxu0 %v5699
  %8510 = vmatpush.bf16.msra.mxu0 %v5695
  %8511 = vmatpush.bf16.msra.mxu0 %v5691
  %8512 = vmatmul.bf16.gmra.mxu0 %v86
  %v8513 = vpop.f32.mrf.mxu0
  %v8514 = vadd.f32 %v8501, %v8513
  %v8515 = vpop.f32.mrf.mxu0
  %8516 = vdwg.mxu0
  %8517 = vmatpush.bf16.msra.mxu0 %v5751
  %8518 = vmatpush.bf16.msra.mxu0 %v5747
  %8519 = vmatpush.bf16.msra.mxu0 %v5743
  %8520 = vmatpush.bf16.msra.mxu0 %v5739
  %8521 = vmatpush.bf16.msra.mxu0 %v5735
  %8522 = vmatpush.bf16.msra.mxu0 %v5731
  %8523 = vmatpush.bf16.msra.mxu0 %v5727
  %8524 = vmatpush.bf16.msra.mxu0 %v5723
  %8525 = vmatmul.bf16.gmra.mxu0 %v87
  %v8526 = vpop.f32.mrf.mxu0
  %v8527 = vadd.f32 %v8514, %v8526
  %v8528 = vpop.f32.mrf.mxu0
  %8529 = vdwg.mxu0
  %8530 = vmatpush.bf16.msra.mxu0 %v5783
  %8531 = vmatpush.bf16.msra.mxu0 %v5779
  %8532 = vmatpush.bf16.msra.mxu0 %v5775
  %8533 = vmatpush.bf16.msra.mxu0 %v5771
  %8534 = vmatpush.bf16.msra.mxu0 %v5767
  %8535 = vmatpush.bf16.msra.mxu0 %v5763
  %8536 = vmatpush.bf16.msra.mxu0 %v5759
  %8537 = vmatpush.bf16.msra.mxu0 %v5755
  %8538 = vmatmul.bf16.gmra.mxu0 %v88
  %v8539 = vpop.f32.mrf.mxu0
  %v8540 = vadd.f32 %v8527, %v8539
  %v8541 = vpop.f32.mrf.mxu0
  %8542 = vdwg.mxu0
  %8543 = vmatpush.bf16.msra.mxu0 %v5815
  %8544 = vmatpush.bf16.msra.mxu0 %v5811
  %8545 = vmatpush.bf16.msra.mxu0 %v5807
  %8546 = vmatpush.bf16.msra.mxu0 %v5803
  %8547 = vmatpush.bf16.msra.mxu0 %v5799
  %8548 = vmatpush.bf16.msra.mxu0 %v5795
  %8549 = vmatpush.bf16.msra.mxu0 %v5791
  %8550 = vmatpush.bf16.msra.mxu0 %v5787
  %8551 = vmatmul.bf16.gmra.mxu0 %v89
  %v8552 = vpop.f32.mrf.mxu0
  %v8553 = vadd.f32 %v8540, %v8552
  %v8554 = vpop.f32.mrf.mxu0
  %8555 = vdwg.mxu0
  %8556 = vmatpush.bf16.msra.mxu0 %v5847
  %8557 = vmatpush.bf16.msra.mxu0 %v5843
  %8558 = vmatpush.bf16.msra.mxu0 %v5839
  %8559 = vmatpush.bf16.msra.mxu0 %v5835
  %8560 = vmatpush.bf16.msra.mxu0 %v5831
  %8561 = vmatpush.bf16.msra.mxu0 %v5827
  %8562 = vmatpush.bf16.msra.mxu0 %v5823
  %8563 = vmatpush.bf16.msra.mxu0 %v5819
  %8564 = vmatmul.bf16.gmra.mxu0 %v90
  %v8565 = vpop.f32.mrf.mxu0
  %v8566 = vadd.f32 %v8553, %v8565
  %v8567 = vpop.f32.mrf.mxu0
  %8568 = vdwg.mxu0
  %8569 = vmatpush.bf16.msra.mxu0 %v5879
  %8570 = vmatpush.bf16.msra.mxu0 %v5875
  %8571 = vmatpush.bf16.msra.mxu0 %v5871
  %8572 = vmatpush.bf16.msra.mxu0 %v5867
  %8573 = vmatpush.bf16.msra.mxu0 %v5863
  %8574 = vmatpush.bf16.msra.mxu0 %v5859
  %8575 = vmatpush.bf16.msra.mxu0 %v5855
  %8576 = vmatpush.bf16.msra.mxu0 %v5851
  %8577 = vmatmul.bf16.gmra.mxu0 %v91
  %v8578 = vpop.f32.mrf.mxu0
  %v8579 = vadd.f32 %v8566, %v8578
  %v8580 = vpop.f32.mrf.mxu0
  %8581 = vdwg.mxu0
  %8582 = vmatpush.bf16.msra.mxu0 %v5911
  %8583 = vmatpush.bf16.msra.mxu0 %v5907
  %8584 = vmatpush.bf16.msra.mxu0 %v5903
  %8585 = vmatpush.bf16.msra.mxu0 %v5899
  %8586 = vmatpush.bf16.msra.mxu0 %v5895
  %8587 = vmatpush.bf16.msra.mxu0 %v5891
  %8588 = vmatpush.bf16.msra.mxu0 %v5887
  %8589 = vmatpush.bf16.msra.mxu0 %v5883
  %8590 = vmatmul.bf16.gmra.mxu0 %v92
  %v8591 = vpop.f32.mrf.mxu0
  %v8592 = vadd.f32 %v8579, %v8591
  %v8593 = vpop.f32.mrf.mxu0
  %8594 = vdwg.mxu0
  %8595 = vmatpush.bf16.msra.mxu0 %v5943
  %8596 = vmatpush.bf16.msra.mxu0 %v5939
  %8597 = vmatpush.bf16.msra.mxu0 %v5935
  %8598 = vmatpush.bf16.msra.mxu0 %v5931
  %8599 = vmatpush.bf16.msra.mxu0 %v5927
  %8600 = vmatpush.bf16.msra.mxu0 %v5923
  %8601 = vmatpush.bf16.msra.mxu0 %v5919
  %8602 = vmatpush.bf16.msra.mxu0 %v5915
  %8603 = vmatmul.bf16.gmra.mxu0 %v93
  %v8604 = vpop.f32.mrf.mxu0
  %v8605 = vadd.f32 %v8592, %v8604
  %v8606 = vpop.f32.mrf.mxu0
  %8607 = vdwg.mxu0
  %8608 = vmatpush.bf16.msra.mxu0 %v5975
  %8609 = vmatpush.bf16.msra.mxu0 %v5971
  %8610 = vmatpush.bf16.msra.mxu0 %v5967
  %8611 = vmatpush.bf16.msra.mxu0 %v5963
  %8612 = vmatpush.bf16.msra.mxu0 %v5959
  %8613 = vmatpush.bf16.msra.mxu0 %v5955
  %8614 = vmatpush.bf16.msra.mxu0 %v5951
  %8615 = vmatpush.bf16.msra.mxu0 %v5947
  %8616 = vmatmul.bf16.gmra.mxu0 %v94
  %v8617 = vpop.f32.mrf.mxu0
  %v8618 = vadd.f32 %v8605, %v8617
  %v8619 = vpop.f32.mrf.mxu0
  %8620 = vdwg.mxu0
  %8621 = vmatpush.bf16.msra.mxu0 %v6007
  %8622 = vmatpush.bf16.msra.mxu0 %v6003
  %8623 = vmatpush.bf16.msra.mxu0 %v5999
  %8624 = vmatpush.bf16.msra.mxu0 %v5995
  %8625 = vmatpush.bf16.msra.mxu0 %v5991
  %8626 = vmatpush.bf16.msra.mxu0 %v5987
  %8627 = vmatpush.bf16.msra.mxu0 %v5983
  %8628 = vmatpush.bf16.msra.mxu0 %v5979
  %8629 = vmatmul.bf16.gmra.mxu0 %v95
  %v8630 = vpop.f32.mrf.mxu0
  %v8631 = vadd.f32 %v8618, %v8630
  %v8632 = vpop.f32.mrf.mxu0
  %8633 = vdwg.mxu0
  %8634 = vmatpush.bf16.msra.mxu0 %v6039
  %8635 = vmatpush.bf16.msra.mxu0 %v6035
  %8636 = vmatpush.bf16.msra.mxu0 %v6031
  %8637 = vmatpush.bf16.msra.mxu0 %v6027
  %8638 = vmatpush.bf16.msra.mxu0 %v6023
  %8639 = vmatpush.bf16.msra.mxu0 %v6019
  %8640 = vmatpush.bf16.msra.mxu0 %v6015
  %8641 = vmatpush.bf16.msra.mxu0 %v6011
  %8642 = vmatmul.bf16.gmra.mxu0 %v96
  %v8643 = vpop.f32.mrf.mxu0
  %v8644 = vadd.f32 %v8631, %v8643
  %v8645 = vpop.f32.mrf.mxu0
  %8646 = vdwg.mxu0
  %8647 = vmatpush.bf16.msra.mxu0 %v6071
  %8648 = vmatpush.bf16.msra.mxu0 %v6067
  %8649 = vmatpush.bf16.msra.mxu0 %v6063
  %8650 = vmatpush.bf16.msra.mxu0 %v6059
  %8651 = vmatpush.bf16.msra.mxu0 %v6055
  %8652 = vmatpush.bf16.msra.mxu0 %v6051
  %8653 = vmatpush.bf16.msra.mxu0 %v6047
  %8654 = vmatpush.bf16.msra.mxu0 %v6043
  %8655 = vmatmul.bf16.gmra.mxu0 %v97
  %v8656 = vpop.f32.mrf.mxu0
  %v8657 = vadd.f32 %v8644, %v8656
  %v8658 = vpop.f32.mrf.mxu0
  %8659 = vdwg.mxu0
  %8660 = vmatpush.bf16.msra.mxu0 %v6103
  %8661 = vmatpush.bf16.msra.mxu0 %v6099
  %8662 = vmatpush.bf16.msra.mxu0 %v6095
  %8663 = vmatpush.bf16.msra.mxu0 %v6091
  %8664 = vmatpush.bf16.msra.mxu0 %v6087
  %8665 = vmatpush.bf16.msra.mxu0 %v6083
  %8666 = vmatpush.bf16.msra.mxu0 %v6079
  %8667 = vmatpush.bf16.msra.mxu0 %v6075
  %8668 = vmatmul.bf16.gmra.mxu0 %v98
  %v8669 = vpop.f32.mrf.mxu0
  %v8670 = vadd.f32 %v8657, %v8669
  %v8671 = vpop.f32.mrf.mxu0
  %8672 = vdwg.mxu0
  %8673 = vmatpush.bf16.msra.mxu0 %v6135
  %8674 = vmatpush.bf16.msra.mxu0 %v6131
  %8675 = vmatpush.bf16.msra.mxu0 %v6127
  %8676 = vmatpush.bf16.msra.mxu0 %v6123
  %8677 = vmatpush.bf16.msra.mxu0 %v6119
  %8678 = vmatpush.bf16.msra.mxu0 %v6115
  %8679 = vmatpush.bf16.msra.mxu0 %v6111
  %8680 = vmatpush.bf16.msra.mxu0 %v6107
  %8681 = vmatmul.bf16.gmra.mxu0 %v99
  %v8682 = vpop.f32.mrf.mxu0
  %v8683 = vadd.f32 %v8670, %v8682
  %v8684 = vpop.f32.mrf.mxu0
  %8685 = vdwg.mxu0
  %8686 = vmatpush.bf16.msra.mxu0 %v6167
  %8687 = vmatpush.bf16.msra.mxu0 %v6163
  %8688 = vmatpush.bf16.msra.mxu0 %v6159
  %8689 = vmatpush.bf16.msra.mxu0 %v6155
  %8690 = vmatpush.bf16.msra.mxu0 %v6151
  %8691 = vmatpush.bf16.msra.mxu0 %v6147
  %8692 = vmatpush.bf16.msra.mxu0 %v6143
  %8693 = vmatpush.bf16.msra.mxu0 %v6139
  %8694 = vmatmul.bf16.gmra.mxu0 %v100
  %v8695 = vpop.f32.mrf.mxu0
  %v8696 = vadd.f32 %v8683, %v8695
  %v8697 = vpop.f32.mrf.mxu0
  %8698 = vdwg.mxu0
  %8699 = vmatpush.bf16.msra.mxu0 %v6199
  %8700 = vmatpush.bf16.msra.mxu0 %v6195
  %8701 = vmatpush.bf16.msra.mxu0 %v6191
  %8702 = vmatpush.bf16.msra.mxu0 %v6187
  %8703 = vmatpush.bf16.msra.mxu0 %v6183
  %8704 = vmatpush.bf16.msra.mxu0 %v6179
  %8705 = vmatpush.bf16.msra.mxu0 %v6175
  %8706 = vmatpush.bf16.msra.mxu0 %v6171
  %8707 = vmatmul.bf16.gmra.mxu0 %v101
  %v8708 = vpop.f32.mrf.mxu0
  %v8709 = vadd.f32 %v8696, %v8708
  %v8710 = vpop.f32.mrf.mxu0
  %8711 = vdwg.mxu0
  %8712 = vmatpush.bf16.msra.mxu0 %v6231
  %8713 = vmatpush.bf16.msra.mxu0 %v6227
  %8714 = vmatpush.bf16.msra.mxu0 %v6223
  %8715 = vmatpush.bf16.msra.mxu0 %v6219
  %8716 = vmatpush.bf16.msra.mxu0 %v6215
  %8717 = vmatpush.bf16.msra.mxu0 %v6211
  %8718 = vmatpush.bf16.msra.mxu0 %v6207
  %8719 = vmatpush.bf16.msra.mxu0 %v6203
  %8720 = vmatmul.bf16.gmra.mxu0 %v102
  %v8721 = vpop.f32.mrf.mxu0
  %v8722 = vadd.f32 %v8709, %v8721
  %v8723 = vpop.f32.mrf.mxu0
  %8724 = vdwg.mxu0
  %8725 = vmatpush.bf16.msra.mxu0 %v6263
  %8726 = vmatpush.bf16.msra.mxu0 %v6259
  %8727 = vmatpush.bf16.msra.mxu0 %v6255
  %8728 = vmatpush.bf16.msra.mxu0 %v6251
  %8729 = vmatpush.bf16.msra.mxu0 %v6247
  %8730 = vmatpush.bf16.msra.mxu0 %v6243
  %8731 = vmatpush.bf16.msra.mxu0 %v6239
  %8732 = vmatpush.bf16.msra.mxu0 %v6235
  %8733 = vmatmul.bf16.gmra.mxu0 %v103
  %v8734 = vpop.f32.mrf.mxu0
  %v8735 = vadd.f32 %v8722, %v8734
  %v8736 = vpop.f32.mrf.mxu0
  %8737 = vdwg.mxu0
  %8738 = vmatpush.bf16.msra.mxu0 %v6295
  %8739 = vmatpush.bf16.msra.mxu0 %v6291
  %8740 = vmatpush.bf16.msra.mxu0 %v6287
  %8741 = vmatpush.bf16.msra.mxu0 %v6283
  %8742 = vmatpush.bf16.msra.mxu0 %v6279
  %8743 = vmatpush.bf16.msra.mxu0 %v6275
  %8744 = vmatpush.bf16.msra.mxu0 %v6271
  %8745 = vmatpush.bf16.msra.mxu0 %v6267
  %8746 = vmatmul.bf16.gmra.mxu0 %v104
  %v8747 = vpop.f32.mrf.mxu0
  %v8748 = vadd.f32 %v8735, %v8747
  %v8749 = vpop.f32.mrf.mxu0
  %8750 = vdwg.mxu0
  %8751 = vmatpush.bf16.msra.mxu0 %v6327
  %8752 = vmatpush.bf16.msra.mxu0 %v6323
  %8753 = vmatpush.bf16.msra.mxu0 %v6319
  %8754 = vmatpush.bf16.msra.mxu0 %v6315
  %8755 = vmatpush.bf16.msra.mxu0 %v6311
  %8756 = vmatpush.bf16.msra.mxu0 %v6307
  %8757 = vmatpush.bf16.msra.mxu0 %v6303
  %8758 = vmatpush.bf16.msra.mxu0 %v6299
  %8759 = vmatmul.bf16.gmra.mxu0 %v105
  %v8760 = vpop.f32.mrf.mxu0
  %v8761 = vadd.f32 %v8748, %v8760
  %v8762 = vpop.f32.mrf.mxu0
  %8763 = vdwg.mxu0
  %8764 = vmatpush.bf16.msra.mxu0 %v6359
  %8765 = vmatpush.bf16.msra.mxu0 %v6355
  %8766 = vmatpush.bf16.msra.mxu0 %v6351
  %8767 = vmatpush.bf16.msra.mxu0 %v6347
  %8768 = vmatpush.bf16.msra.mxu0 %v6343
  %8769 = vmatpush.bf16.msra.mxu0 %v6339
  %8770 = vmatpush.bf16.msra.mxu0 %v6335
  %8771 = vmatpush.bf16.msra.mxu0 %v6331
  %8772 = vmatmul.bf16.gmra.mxu0 %v106
  %v8773 = vpop.f32.mrf.mxu0
  %v8774 = vadd.f32 %v8761, %v8773
  %v8775 = vpop.f32.mrf.mxu0
  %8776 = vdwg.mxu0
  %8777 = vmatpush.bf16.msra.mxu0 %v6391
  %8778 = vmatpush.bf16.msra.mxu0 %v6387
  %8779 = vmatpush.bf16.msra.mxu0 %v6383
  %8780 = vmatpush.bf16.msra.mxu0 %v6379
  %8781 = vmatpush.bf16.msra.mxu0 %v6375
  %8782 = vmatpush.bf16.msra.mxu0 %v6371
  %8783 = vmatpush.bf16.msra.mxu0 %v6367
  %8784 = vmatpush.bf16.msra.mxu0 %v6363
  %8785 = vmatmul.bf16.gmra.mxu0 %v107
  %v8786 = vpop.f32.mrf.mxu0
  %v8787 = vadd.f32 %v8774, %v8786
  %v8788 = vpop.f32.mrf.mxu0
  %8789 = vdwg.mxu0
  %8790 = vmatpush.bf16.msra.mxu0 %v6423
  %8791 = vmatpush.bf16.msra.mxu0 %v6419
  %8792 = vmatpush.bf16.msra.mxu0 %v6415
  %8793 = vmatpush.bf16.msra.mxu0 %v6411
  %8794 = vmatpush.bf16.msra.mxu0 %v6407
  %8795 = vmatpush.bf16.msra.mxu0 %v6403
  %8796 = vmatpush.bf16.msra.mxu0 %v6399
  %8797 = vmatpush.bf16.msra.mxu0 %v6395
  %8798 = vmatmul.bf16.gmra.mxu0 %v108
  %v8799 = vpop.f32.mrf.mxu0
  %v8800 = vadd.f32 %v8787, %v8799
  %v8801 = vpop.f32.mrf.mxu0
  %8802 = vdwg.mxu0
  %8803 = vmatpush.bf16.msra.mxu0 %v6455
  %8804 = vmatpush.bf16.msra.mxu0 %v6451
  %8805 = vmatpush.bf16.msra.mxu0 %v6447
  %8806 = vmatpush.bf16.msra.mxu0 %v6443
  %8807 = vmatpush.bf16.msra.mxu0 %v6439
  %8808 = vmatpush.bf16.msra.mxu0 %v6435
  %8809 = vmatpush.bf16.msra.mxu0 %v6431
  %8810 = vmatpush.bf16.msra.mxu0 %v6427
  %8811 = vmatmul.bf16.gmra.mxu0 %v109
  %v8812 = vpop.f32.mrf.mxu0
  %v8813 = vadd.f32 %v8800, %v8812
  %v8814 = vpop.f32.mrf.mxu0
  %8815 = vdwg.mxu0
  %8816 = vmatpush.bf16.msra.mxu0 %v6487
  %8817 = vmatpush.bf16.msra.mxu0 %v6483
  %8818 = vmatpush.bf16.msra.mxu0 %v6479
  %8819 = vmatpush.bf16.msra.mxu0 %v6475
  %8820 = vmatpush.bf16.msra.mxu0 %v6471
  %8821 = vmatpush.bf16.msra.mxu0 %v6467
  %8822 = vmatpush.bf16.msra.mxu0 %v6463
  %8823 = vmatpush.bf16.msra.mxu0 %v6459
  %8824 = vmatmul.bf16.gmra.mxu0 %v110
  %v8825 = vpop.f32.mrf.mxu0
  %v8826 = vadd.f32 %v8813, %v8825
  %v8827 = vpop.f32.mrf.mxu0
  %8828 = vdwg.mxu0
  %8829 = vmatpush.bf16.msra.mxu0 %v6519
  %8830 = vmatpush.bf16.msra.mxu0 %v6515
  %8831 = vmatpush.bf16.msra.mxu0 %v6511
  %8832 = vmatpush.bf16.msra.mxu0 %v6507
  %8833 = vmatpush.bf16.msra.mxu0 %v6503
  %8834 = vmatpush.bf16.msra.mxu0 %v6499
  %8835 = vmatpush.bf16.msra.mxu0 %v6495
  %8836 = vmatpush.bf16.msra.mxu0 %v6491
  %8837 = vmatmul.bf16.gmra.mxu0 %v111
  %v8838 = vpop.f32.mrf.mxu0
  %v8839 = vadd.f32 %v8826, %v8838
  %v8840 = vpop.f32.mrf.mxu0
  %8841 = vdwg.mxu0
  %8842 = vmatpush.bf16.msra.mxu0 %v5272
  %8843 = vmatpush.bf16.msra.mxu0 %v5268
  %8844 = vmatpush.bf16.msra.mxu0 %v5264
  %8845 = vmatpush.bf16.msra.mxu0 %v5260
  %8846 = vmatpush.bf16.msra.mxu0 %v5256
  %8847 = vmatpush.bf16.msra.mxu0 %v5252
  %8848 = vmatpush.bf16.msra.mxu0 %v5248
  %8849 = vmatpush.bf16.msra.mxu0 %v5244
  %8850 = vmatmul.bf16.gmra.mxu0 %v72
  %v8851 = vpop.f32.mrf.mxu0
  %v8852 = vadd.f32 %v1396, %v8851
  %v8853 = vpop.f32.mrf.mxu0
  %8854 = vdwg.mxu0
  %8855 = vmatpush.bf16.msra.mxu0 %v5304
  %8856 = vmatpush.bf16.msra.mxu0 %v5300
  %8857 = vmatpush.bf16.msra.mxu0 %v5296
  %8858 = vmatpush.bf16.msra.mxu0 %v5292
  %8859 = vmatpush.bf16.msra.mxu0 %v5288
  %8860 = vmatpush.bf16.msra.mxu0 %v5284
  %8861 = vmatpush.bf16.msra.mxu0 %v5280
  %8862 = vmatpush.bf16.msra.mxu0 %v5276
  %8863 = vmatmul.bf16.gmra.mxu0 %v73
  %v8864 = vpop.f32.mrf.mxu0
  %v8865 = vadd.f32 %v8852, %v8864
  %v8866 = vpop.f32.mrf.mxu0
  %8867 = vdwg.mxu0
  %8868 = vmatpush.bf16.msra.mxu0 %v5336
  %8869 = vmatpush.bf16.msra.mxu0 %v5332
  %8870 = vmatpush.bf16.msra.mxu0 %v5328
  %8871 = vmatpush.bf16.msra.mxu0 %v5324
  %8872 = vmatpush.bf16.msra.mxu0 %v5320
  %8873 = vmatpush.bf16.msra.mxu0 %v5316
  %8874 = vmatpush.bf16.msra.mxu0 %v5312
  %8875 = vmatpush.bf16.msra.mxu0 %v5308
  %8876 = vmatmul.bf16.gmra.mxu0 %v74
  %v8877 = vpop.f32.mrf.mxu0
  %v8878 = vadd.f32 %v8865, %v8877
  %v8879 = vpop.f32.mrf.mxu0
  %8880 = vdwg.mxu0
  %8881 = vmatpush.bf16.msra.mxu0 %v5368
  %8882 = vmatpush.bf16.msra.mxu0 %v5364
  %8883 = vmatpush.bf16.msra.mxu0 %v5360
  %8884 = vmatpush.bf16.msra.mxu0 %v5356
  %8885 = vmatpush.bf16.msra.mxu0 %v5352
  %8886 = vmatpush.bf16.msra.mxu0 %v5348
  %8887 = vmatpush.bf16.msra.mxu0 %v5344
  %8888 = vmatpush.bf16.msra.mxu0 %v5340
  %8889 = vmatmul.bf16.gmra.mxu0 %v75
  %v8890 = vpop.f32.mrf.mxu0
  %v8891 = vadd.f32 %v8878, %v8890
  %v8892 = vpop.f32.mrf.mxu0
  %8893 = vdwg.mxu0
  %8894 = vmatpush.bf16.msra.mxu0 %v5400
  %8895 = vmatpush.bf16.msra.mxu0 %v5396
  %8896 = vmatpush.bf16.msra.mxu0 %v5392
  %8897 = vmatpush.bf16.msra.mxu0 %v5388
  %8898 = vmatpush.bf16.msra.mxu0 %v5384
  %8899 = vmatpush.bf16.msra.mxu0 %v5380
  %8900 = vmatpush.bf16.msra.mxu0 %v5376
  %8901 = vmatpush.bf16.msra.mxu0 %v5372
  %8902 = vmatmul.bf16.gmra.mxu0 %v76
  %v8903 = vpop.f32.mrf.mxu0
  %v8904 = vadd.f32 %v8891, %v8903
  %v8905 = vpop.f32.mrf.mxu0
  %8906 = vdwg.mxu0
  %8907 = vmatpush.bf16.msra.mxu0 %v5432
  %8908 = vmatpush.bf16.msra.mxu0 %v5428
  %8909 = vmatpush.bf16.msra.mxu0 %v5424
  %8910 = vmatpush.bf16.msra.mxu0 %v5420
  %8911 = vmatpush.bf16.msra.mxu0 %v5416
  %8912 = vmatpush.bf16.msra.mxu0 %v5412
  %8913 = vmatpush.bf16.msra.mxu0 %v5408
  %8914 = vmatpush.bf16.msra.mxu0 %v5404
  %8915 = vmatmul.bf16.gmra.mxu0 %v77
  %v8916 = vpop.f32.mrf.mxu0
  %v8917 = vadd.f32 %v8904, %v8916
  %v8918 = vpop.f32.mrf.mxu0
  %8919 = vdwg.mxu0
  %8920 = vmatpush.bf16.msra.mxu0 %v5464
  %8921 = vmatpush.bf16.msra.mxu0 %v5460
  %8922 = vmatpush.bf16.msra.mxu0 %v5456
  %8923 = vmatpush.bf16.msra.mxu0 %v5452
  %8924 = vmatpush.bf16.msra.mxu0 %v5448
  %8925 = vmatpush.bf16.msra.mxu0 %v5444
  %8926 = vmatpush.bf16.msra.mxu0 %v5440
  %8927 = vmatpush.bf16.msra.mxu0 %v5436
  %8928 = vmatmul.bf16.gmra.mxu0 %v78
  %v8929 = vpop.f32.mrf.mxu0
  %v8930 = vadd.f32 %v8917, %v8929
  %v8931 = vpop.f32.mrf.mxu0
  %8932 = vdwg.mxu0
  %8933 = vmatpush.bf16.msra.mxu0 %v5496
  %8934 = vmatpush.bf16.msra.mxu0 %v5492
  %8935 = vmatpush.bf16.msra.mxu0 %v5488
  %8936 = vmatpush.bf16.msra.mxu0 %v5484
  %8937 = vmatpush.bf16.msra.mxu0 %v5480
  %8938 = vmatpush.bf16.msra.mxu0 %v5476
  %8939 = vmatpush.bf16.msra.mxu0 %v5472
  %8940 = vmatpush.bf16.msra.mxu0 %v5468
  %8941 = vmatmul.bf16.gmra.mxu0 %v79
  %v8942 = vpop.f32.mrf.mxu0
  %v8943 = vadd.f32 %v8930, %v8942
  %v8944 = vpop.f32.mrf.mxu0
  %8945 = vdwg.mxu0
  %8946 = vmatpush.bf16.msra.mxu0 %v5528
  %8947 = vmatpush.bf16.msra.mxu0 %v5524
  %8948 = vmatpush.bf16.msra.mxu0 %v5520
  %8949 = vmatpush.bf16.msra.mxu0 %v5516
  %8950 = vmatpush.bf16.msra.mxu0 %v5512
  %8951 = vmatpush.bf16.msra.mxu0 %v5508
  %8952 = vmatpush.bf16.msra.mxu0 %v5504
  %8953 = vmatpush.bf16.msra.mxu0 %v5500
  %8954 = vmatmul.bf16.gmra.mxu0 %v80
  %v8955 = vpop.f32.mrf.mxu0
  %v8956 = vadd.f32 %v8943, %v8955
  %v8957 = vpop.f32.mrf.mxu0
  %8958 = vdwg.mxu0
  %8959 = vmatpush.bf16.msra.mxu0 %v5560
  %8960 = vmatpush.bf16.msra.mxu0 %v5556
  %8961 = vmatpush.bf16.msra.mxu0 %v5552
  %8962 = vmatpush.bf16.msra.mxu0 %v5548
  %8963 = vmatpush.bf16.msra.mxu0 %v5544
  %8964 = vmatpush.bf16.msra.mxu0 %v5540
  %8965 = vmatpush.bf16.msra.mxu0 %v5536
  %8966 = vmatpush.bf16.msra.mxu0 %v5532
  %8967 = vmatmul.bf16.gmra.mxu0 %v81
  %v8968 = vpop.f32.mrf.mxu0
  %v8969 = vadd.f32 %v8956, %v8968
  %v8970 = vpop.f32.mrf.mxu0
  %8971 = vdwg.mxu0
  %8972 = vmatpush.bf16.msra.mxu0 %v5592
  %8973 = vmatpush.bf16.msra.mxu0 %v5588
  %8974 = vmatpush.bf16.msra.mxu0 %v5584
  %8975 = vmatpush.bf16.msra.mxu0 %v5580
  %8976 = vmatpush.bf16.msra.mxu0 %v5576
  %8977 = vmatpush.bf16.msra.mxu0 %v5572
  %8978 = vmatpush.bf16.msra.mxu0 %v5568
  %8979 = vmatpush.bf16.msra.mxu0 %v5564
  %8980 = vmatmul.bf16.gmra.mxu0 %v82
  %v8981 = vpop.f32.mrf.mxu0
  %v8982 = vadd.f32 %v8969, %v8981
  %v8983 = vpop.f32.mrf.mxu0
  %8984 = vdwg.mxu0
  %8985 = vmatpush.bf16.msra.mxu0 %v5624
  %8986 = vmatpush.bf16.msra.mxu0 %v5620
  %8987 = vmatpush.bf16.msra.mxu0 %v5616
  %8988 = vmatpush.bf16.msra.mxu0 %v5612
  %8989 = vmatpush.bf16.msra.mxu0 %v5608
  %8990 = vmatpush.bf16.msra.mxu0 %v5604
  %8991 = vmatpush.bf16.msra.mxu0 %v5600
  %8992 = vmatpush.bf16.msra.mxu0 %v5596
  %8993 = vmatmul.bf16.gmra.mxu0 %v83
  %v8994 = vpop.f32.mrf.mxu0
  %v8995 = vadd.f32 %v8982, %v8994
  %v8996 = vpop.f32.mrf.mxu0
  %8997 = vdwg.mxu0
  %8998 = vmatpush.bf16.msra.mxu0 %v5656
  %8999 = vmatpush.bf16.msra.mxu0 %v5652
  %9000 = vmatpush.bf16.msra.mxu0 %v5648
  %9001 = vmatpush.bf16.msra.mxu0 %v5644
  %9002 = vmatpush.bf16.msra.mxu0 %v5640
  %9003 = vmatpush.bf16.msra.mxu0 %v5636
  %9004 = vmatpush.bf16.msra.mxu0 %v5632
  %9005 = vmatpush.bf16.msra.mxu0 %v5628
  %9006 = vmatmul.bf16.gmra.mxu0 %v84
  %v9007 = vpop.f32.mrf.mxu0
  %v9008 = vadd.f32 %v8995, %v9007
  %v9009 = vpop.f32.mrf.mxu0
  %9010 = vdwg.mxu0
  %9011 = vmatpush.bf16.msra.mxu0 %v5688
  %9012 = vmatpush.bf16.msra.mxu0 %v5684
  %9013 = vmatpush.bf16.msra.mxu0 %v5680
  %9014 = vmatpush.bf16.msra.mxu0 %v5676
  %9015 = vmatpush.bf16.msra.mxu0 %v5672
  %9016 = vmatpush.bf16.msra.mxu0 %v5668
  %9017 = vmatpush.bf16.msra.mxu0 %v5664
  %9018 = vmatpush.bf16.msra.mxu0 %v5660
  %9019 = vmatmul.bf16.gmra.mxu0 %v85
  %v9020 = vpop.f32.mrf.mxu0
  %v9021 = vadd.f32 %v9008, %v9020
  %v9022 = vpop.f32.mrf.mxu0
  %9023 = vdwg.mxu0
  %9024 = vmatpush.bf16.msra.mxu0 %v5720
  %9025 = vmatpush.bf16.msra.mxu0 %v5716
  %9026 = vmatpush.bf16.msra.mxu0 %v5712
  %9027 = vmatpush.bf16.msra.mxu0 %v5708
  %9028 = vmatpush.bf16.msra.mxu0 %v5704
  %9029 = vmatpush.bf16.msra.mxu0 %v5700
  %9030 = vmatpush.bf16.msra.mxu0 %v5696
  %9031 = vmatpush.bf16.msra.mxu0 %v5692
  %9032 = vmatmul.bf16.gmra.mxu0 %v86
  %v9033 = vpop.f32.mrf.mxu0
  %v9034 = vadd.f32 %v9021, %v9033
  %v9035 = vpop.f32.mrf.mxu0
  %9036 = vdwg.mxu0
  %9037 = vmatpush.bf16.msra.mxu0 %v5752
  %9038 = vmatpush.bf16.msra.mxu0 %v5748
  %9039 = vmatpush.bf16.msra.mxu0 %v5744
  %9040 = vmatpush.bf16.msra.mxu0 %v5740
  %9041 = vmatpush.bf16.msra.mxu0 %v5736
  %9042 = vmatpush.bf16.msra.mxu0 %v5732
  %9043 = vmatpush.bf16.msra.mxu0 %v5728
  %9044 = vmatpush.bf16.msra.mxu0 %v5724
  %9045 = vmatmul.bf16.gmra.mxu0 %v87
  %v9046 = vpop.f32.mrf.mxu0
  %v9047 = vadd.f32 %v9034, %v9046
  %v9048 = vpop.f32.mrf.mxu0
  %9049 = vdwg.mxu0
  %9050 = vmatpush.bf16.msra.mxu0 %v5784
  %9051 = vmatpush.bf16.msra.mxu0 %v5780
  %9052 = vmatpush.bf16.msra.mxu0 %v5776
  %9053 = vmatpush.bf16.msra.mxu0 %v5772
  %9054 = vmatpush.bf16.msra.mxu0 %v5768
  %9055 = vmatpush.bf16.msra.mxu0 %v5764
  %9056 = vmatpush.bf16.msra.mxu0 %v5760
  %9057 = vmatpush.bf16.msra.mxu0 %v5756
  %9058 = vmatmul.bf16.gmra.mxu0 %v88
  %v9059 = vpop.f32.mrf.mxu0
  %v9060 = vadd.f32 %v9047, %v9059
  %v9061 = vpop.f32.mrf.mxu0
  %9062 = vdwg.mxu0
  %9063 = vmatpush.bf16.msra.mxu0 %v5816
  %9064 = vmatpush.bf16.msra.mxu0 %v5812
  %9065 = vmatpush.bf16.msra.mxu0 %v5808
  %9066 = vmatpush.bf16.msra.mxu0 %v5804
  %9067 = vmatpush.bf16.msra.mxu0 %v5800
  %9068 = vmatpush.bf16.msra.mxu0 %v5796
  %9069 = vmatpush.bf16.msra.mxu0 %v5792
  %9070 = vmatpush.bf16.msra.mxu0 %v5788
  %9071 = vmatmul.bf16.gmra.mxu0 %v89
  %v9072 = vpop.f32.mrf.mxu0
  %v9073 = vadd.f32 %v9060, %v9072
  %v9074 = vpop.f32.mrf.mxu0
  %9075 = vdwg.mxu0
  %9076 = vmatpush.bf16.msra.mxu0 %v5848
  %9077 = vmatpush.bf16.msra.mxu0 %v5844
  %9078 = vmatpush.bf16.msra.mxu0 %v5840
  %9079 = vmatpush.bf16.msra.mxu0 %v5836
  %9080 = vmatpush.bf16.msra.mxu0 %v5832
  %9081 = vmatpush.bf16.msra.mxu0 %v5828
  %9082 = vmatpush.bf16.msra.mxu0 %v5824
  %9083 = vmatpush.bf16.msra.mxu0 %v5820
  %9084 = vmatmul.bf16.gmra.mxu0 %v90
  %v9085 = vpop.f32.mrf.mxu0
  %v9086 = vadd.f32 %v9073, %v9085
  %v9087 = vpop.f32.mrf.mxu0
  %9088 = vdwg.mxu0
  %9089 = vmatpush.bf16.msra.mxu0 %v5880
  %9090 = vmatpush.bf16.msra.mxu0 %v5876
  %9091 = vmatpush.bf16.msra.mxu0 %v5872
  %9092 = vmatpush.bf16.msra.mxu0 %v5868
  %9093 = vmatpush.bf16.msra.mxu0 %v5864
  %9094 = vmatpush.bf16.msra.mxu0 %v5860
  %9095 = vmatpush.bf16.msra.mxu0 %v5856
  %9096 = vmatpush.bf16.msra.mxu0 %v5852
  %9097 = vmatmul.bf16.gmra.mxu0 %v91
  %v9098 = vpop.f32.mrf.mxu0
  %v9099 = vadd.f32 %v9086, %v9098
  %v9100 = vpop.f32.mrf.mxu0
  %9101 = vdwg.mxu0
  %9102 = vmatpush.bf16.msra.mxu0 %v5912
  %9103 = vmatpush.bf16.msra.mxu0 %v5908
  %9104 = vmatpush.bf16.msra.mxu0 %v5904
  %9105 = vmatpush.bf16.msra.mxu0 %v5900
  %9106 = vmatpush.bf16.msra.mxu0 %v5896
  %9107 = vmatpush.bf16.msra.mxu0 %v5892
  %9108 = vmatpush.bf16.msra.mxu0 %v5888
  %9109 = vmatpush.bf16.msra.mxu0 %v5884
  %9110 = vmatmul.bf16.gmra.mxu0 %v92
  %v9111 = vpop.f32.mrf.mxu0
  %v9112 = vadd.f32 %v9099, %v9111
  %v9113 = vpop.f32.mrf.mxu0
  %9114 = vdwg.mxu0
  %9115 = vmatpush.bf16.msra.mxu0 %v5944
  %9116 = vmatpush.bf16.msra.mxu0 %v5940
  %9117 = vmatpush.bf16.msra.mxu0 %v5936
  %9118 = vmatpush.bf16.msra.mxu0 %v5932
  %9119 = vmatpush.bf16.msra.mxu0 %v5928
  %9120 = vmatpush.bf16.msra.mxu0 %v5924
  %9121 = vmatpush.bf16.msra.mxu0 %v5920
  %9122 = vmatpush.bf16.msra.mxu0 %v5916
  %9123 = vmatmul.bf16.gmra.mxu0 %v93
  %v9124 = vpop.f32.mrf.mxu0
  %v9125 = vadd.f32 %v9112, %v9124
  %v9126 = vpop.f32.mrf.mxu0
  %9127 = vdwg.mxu0
  %9128 = vmatpush.bf16.msra.mxu0 %v5976
  %9129 = vmatpush.bf16.msra.mxu0 %v5972
  %9130 = vmatpush.bf16.msra.mxu0 %v5968
  %9131 = vmatpush.bf16.msra.mxu0 %v5964
  %9132 = vmatpush.bf16.msra.mxu0 %v5960
  %9133 = vmatpush.bf16.msra.mxu0 %v5956
  %9134 = vmatpush.bf16.msra.mxu0 %v5952
  %9135 = vmatpush.bf16.msra.mxu0 %v5948
  %9136 = vmatmul.bf16.gmra.mxu0 %v94
  %v9137 = vpop.f32.mrf.mxu0
  %v9138 = vadd.f32 %v9125, %v9137
  %v9139 = vpop.f32.mrf.mxu0
  %9140 = vdwg.mxu0
  %9141 = vmatpush.bf16.msra.mxu0 %v6008
  %9142 = vmatpush.bf16.msra.mxu0 %v6004
  %9143 = vmatpush.bf16.msra.mxu0 %v6000
  %9144 = vmatpush.bf16.msra.mxu0 %v5996
  %9145 = vmatpush.bf16.msra.mxu0 %v5992
  %9146 = vmatpush.bf16.msra.mxu0 %v5988
  %9147 = vmatpush.bf16.msra.mxu0 %v5984
  %9148 = vmatpush.bf16.msra.mxu0 %v5980
  %9149 = vmatmul.bf16.gmra.mxu0 %v95
  %v9150 = vpop.f32.mrf.mxu0
  %v9151 = vadd.f32 %v9138, %v9150
  %v9152 = vpop.f32.mrf.mxu0
  %9153 = vdwg.mxu0
  %9154 = vmatpush.bf16.msra.mxu0 %v6040
  %9155 = vmatpush.bf16.msra.mxu0 %v6036
  %9156 = vmatpush.bf16.msra.mxu0 %v6032
  %9157 = vmatpush.bf16.msra.mxu0 %v6028
  %9158 = vmatpush.bf16.msra.mxu0 %v6024
  %9159 = vmatpush.bf16.msra.mxu0 %v6020
  %9160 = vmatpush.bf16.msra.mxu0 %v6016
  %9161 = vmatpush.bf16.msra.mxu0 %v6012
  %9162 = vmatmul.bf16.gmra.mxu0 %v96
  %v9163 = vpop.f32.mrf.mxu0
  %v9164 = vadd.f32 %v9151, %v9163
  %v9165 = vpop.f32.mrf.mxu0
  %9166 = vdwg.mxu0
  %9167 = vmatpush.bf16.msra.mxu0 %v6072
  %9168 = vmatpush.bf16.msra.mxu0 %v6068
  %9169 = vmatpush.bf16.msra.mxu0 %v6064
  %9170 = vmatpush.bf16.msra.mxu0 %v6060
  %9171 = vmatpush.bf16.msra.mxu0 %v6056
  %9172 = vmatpush.bf16.msra.mxu0 %v6052
  %9173 = vmatpush.bf16.msra.mxu0 %v6048
  %9174 = vmatpush.bf16.msra.mxu0 %v6044
  %9175 = vmatmul.bf16.gmra.mxu0 %v97
  %v9176 = vpop.f32.mrf.mxu0
  %v9177 = vadd.f32 %v9164, %v9176
  %v9178 = vpop.f32.mrf.mxu0
  %9179 = vdwg.mxu0
  %9180 = vmatpush.bf16.msra.mxu0 %v6104
  %9181 = vmatpush.bf16.msra.mxu0 %v6100
  %9182 = vmatpush.bf16.msra.mxu0 %v6096
  %9183 = vmatpush.bf16.msra.mxu0 %v6092
  %9184 = vmatpush.bf16.msra.mxu0 %v6088
  %9185 = vmatpush.bf16.msra.mxu0 %v6084
  %9186 = vmatpush.bf16.msra.mxu0 %v6080
  %9187 = vmatpush.bf16.msra.mxu0 %v6076
  %9188 = vmatmul.bf16.gmra.mxu0 %v98
  %v9189 = vpop.f32.mrf.mxu0
  %v9190 = vadd.f32 %v9177, %v9189
  %v9191 = vpop.f32.mrf.mxu0
  %9192 = vdwg.mxu0
  %9193 = vmatpush.bf16.msra.mxu0 %v6136
  %9194 = vmatpush.bf16.msra.mxu0 %v6132
  %9195 = vmatpush.bf16.msra.mxu0 %v6128
  %9196 = vmatpush.bf16.msra.mxu0 %v6124
  %9197 = vmatpush.bf16.msra.mxu0 %v6120
  %9198 = vmatpush.bf16.msra.mxu0 %v6116
  %9199 = vmatpush.bf16.msra.mxu0 %v6112
  %9200 = vmatpush.bf16.msra.mxu0 %v6108
  %9201 = vmatmul.bf16.gmra.mxu0 %v99
  %v9202 = vpop.f32.mrf.mxu0
  %v9203 = vadd.f32 %v9190, %v9202
  %v9204 = vpop.f32.mrf.mxu0
  %9205 = vdwg.mxu0
  %9206 = vmatpush.bf16.msra.mxu0 %v6168
  %9207 = vmatpush.bf16.msra.mxu0 %v6164
  %9208 = vmatpush.bf16.msra.mxu0 %v6160
  %9209 = vmatpush.bf16.msra.mxu0 %v6156
  %9210 = vmatpush.bf16.msra.mxu0 %v6152
  %9211 = vmatpush.bf16.msra.mxu0 %v6148
  %9212 = vmatpush.bf16.msra.mxu0 %v6144
  %9213 = vmatpush.bf16.msra.mxu0 %v6140
  %9214 = vmatmul.bf16.gmra.mxu0 %v100
  %v9215 = vpop.f32.mrf.mxu0
  %v9216 = vadd.f32 %v9203, %v9215
  %v9217 = vpop.f32.mrf.mxu0
  %9218 = vdwg.mxu0
  %9219 = vmatpush.bf16.msra.mxu0 %v6200
  %9220 = vmatpush.bf16.msra.mxu0 %v6196
  %9221 = vmatpush.bf16.msra.mxu0 %v6192
  %9222 = vmatpush.bf16.msra.mxu0 %v6188
  %9223 = vmatpush.bf16.msra.mxu0 %v6184
  %9224 = vmatpush.bf16.msra.mxu0 %v6180
  %9225 = vmatpush.bf16.msra.mxu0 %v6176
  %9226 = vmatpush.bf16.msra.mxu0 %v6172
  %9227 = vmatmul.bf16.gmra.mxu0 %v101
  %v9228 = vpop.f32.mrf.mxu0
  %v9229 = vadd.f32 %v9216, %v9228
  %v9230 = vpop.f32.mrf.mxu0
  %9231 = vdwg.mxu0
  %9232 = vmatpush.bf16.msra.mxu0 %v6232
  %9233 = vmatpush.bf16.msra.mxu0 %v6228
  %9234 = vmatpush.bf16.msra.mxu0 %v6224
  %9235 = vmatpush.bf16.msra.mxu0 %v6220
  %9236 = vmatpush.bf16.msra.mxu0 %v6216
  %9237 = vmatpush.bf16.msra.mxu0 %v6212
  %9238 = vmatpush.bf16.msra.mxu0 %v6208
  %9239 = vmatpush.bf16.msra.mxu0 %v6204
  %9240 = vmatmul.bf16.gmra.mxu0 %v102
  %v9241 = vpop.f32.mrf.mxu0
  %v9242 = vadd.f32 %v9229, %v9241
  %v9243 = vpop.f32.mrf.mxu0
  %9244 = vdwg.mxu0
  %9245 = vmatpush.bf16.msra.mxu0 %v6264
  %9246 = vmatpush.bf16.msra.mxu0 %v6260
  %9247 = vmatpush.bf16.msra.mxu0 %v6256
  %9248 = vmatpush.bf16.msra.mxu0 %v6252
  %9249 = vmatpush.bf16.msra.mxu0 %v6248
  %9250 = vmatpush.bf16.msra.mxu0 %v6244
  %9251 = vmatpush.bf16.msra.mxu0 %v6240
  %9252 = vmatpush.bf16.msra.mxu0 %v6236
  %9253 = vmatmul.bf16.gmra.mxu0 %v103
  %v9254 = vpop.f32.mrf.mxu0
  %v9255 = vadd.f32 %v9242, %v9254
  %v9256 = vpop.f32.mrf.mxu0
  %9257 = vdwg.mxu0
  %9258 = vmatpush.bf16.msra.mxu0 %v6296
  %9259 = vmatpush.bf16.msra.mxu0 %v6292
  %9260 = vmatpush.bf16.msra.mxu0 %v6288
  %9261 = vmatpush.bf16.msra.mxu0 %v6284
  %9262 = vmatpush.bf16.msra.mxu0 %v6280
  %9263 = vmatpush.bf16.msra.mxu0 %v6276
  %9264 = vmatpush.bf16.msra.mxu0 %v6272
  %9265 = vmatpush.bf16.msra.mxu0 %v6268
  %9266 = vmatmul.bf16.gmra.mxu0 %v104
  %v9267 = vpop.f32.mrf.mxu0
  %v9268 = vadd.f32 %v9255, %v9267
  %v9269 = vpop.f32.mrf.mxu0
  %9270 = vdwg.mxu0
  %9271 = vmatpush.bf16.msra.mxu0 %v6328
  %9272 = vmatpush.bf16.msra.mxu0 %v6324
  %9273 = vmatpush.bf16.msra.mxu0 %v6320
  %9274 = vmatpush.bf16.msra.mxu0 %v6316
  %9275 = vmatpush.bf16.msra.mxu0 %v6312
  %9276 = vmatpush.bf16.msra.mxu0 %v6308
  %9277 = vmatpush.bf16.msra.mxu0 %v6304
  %9278 = vmatpush.bf16.msra.mxu0 %v6300
  %9279 = vmatmul.bf16.gmra.mxu0 %v105
  %v9280 = vpop.f32.mrf.mxu0
  %v9281 = vadd.f32 %v9268, %v9280
  %v9282 = vpop.f32.mrf.mxu0
  %9283 = vdwg.mxu0
  %9284 = vmatpush.bf16.msra.mxu0 %v6360
  %9285 = vmatpush.bf16.msra.mxu0 %v6356
  %9286 = vmatpush.bf16.msra.mxu0 %v6352
  %9287 = vmatpush.bf16.msra.mxu0 %v6348
  %9288 = vmatpush.bf16.msra.mxu0 %v6344
  %9289 = vmatpush.bf16.msra.mxu0 %v6340
  %9290 = vmatpush.bf16.msra.mxu0 %v6336
  %9291 = vmatpush.bf16.msra.mxu0 %v6332
  %9292 = vmatmul.bf16.gmra.mxu0 %v106
  %v9293 = vpop.f32.mrf.mxu0
  %v9294 = vadd.f32 %v9281, %v9293
  %v9295 = vpop.f32.mrf.mxu0
  %9296 = vdwg.mxu0
  %9297 = vmatpush.bf16.msra.mxu0 %v6392
  %9298 = vmatpush.bf16.msra.mxu0 %v6388
  %9299 = vmatpush.bf16.msra.mxu0 %v6384
  %9300 = vmatpush.bf16.msra.mxu0 %v6380
  %9301 = vmatpush.bf16.msra.mxu0 %v6376
  %9302 = vmatpush.bf16.msra.mxu0 %v6372
  %9303 = vmatpush.bf16.msra.mxu0 %v6368
  %9304 = vmatpush.bf16.msra.mxu0 %v6364
  %9305 = vmatmul.bf16.gmra.mxu0 %v107
  %v9306 = vpop.f32.mrf.mxu0
  %v9307 = vadd.f32 %v9294, %v9306
  %v9308 = vpop.f32.mrf.mxu0
  %9309 = vdwg.mxu0
  %9310 = vmatpush.bf16.msra.mxu0 %v6424
  %9311 = vmatpush.bf16.msra.mxu0 %v6420
  %9312 = vmatpush.bf16.msra.mxu0 %v6416
  %9313 = vmatpush.bf16.msra.mxu0 %v6412
  %9314 = vmatpush.bf16.msra.mxu0 %v6408
  %9315 = vmatpush.bf16.msra.mxu0 %v6404
  %9316 = vmatpush.bf16.msra.mxu0 %v6400
  %9317 = vmatpush.bf16.msra.mxu0 %v6396
  %9318 = vmatmul.bf16.gmra.mxu0 %v108
  %v9319 = vpop.f32.mrf.mxu0
  %v9320 = vadd.f32 %v9307, %v9319
  %v9321 = vpop.f32.mrf.mxu0
  %9322 = vdwg.mxu0
  %9323 = vmatpush.bf16.msra.mxu0 %v6456
  %9324 = vmatpush.bf16.msra.mxu0 %v6452
  %9325 = vmatpush.bf16.msra.mxu0 %v6448
  %9326 = vmatpush.bf16.msra.mxu0 %v6444
  %9327 = vmatpush.bf16.msra.mxu0 %v6440
  %9328 = vmatpush.bf16.msra.mxu0 %v6436
  %9329 = vmatpush.bf16.msra.mxu0 %v6432
  %9330 = vmatpush.bf16.msra.mxu0 %v6428
  %9331 = vmatmul.bf16.gmra.mxu0 %v109
  %v9332 = vpop.f32.mrf.mxu0
  %v9333 = vadd.f32 %v9320, %v9332
  %v9334 = vpop.f32.mrf.mxu0
  %9335 = vdwg.mxu0
  %9336 = vmatpush.bf16.msra.mxu0 %v6488
  %9337 = vmatpush.bf16.msra.mxu0 %v6484
  %9338 = vmatpush.bf16.msra.mxu0 %v6480
  %9339 = vmatpush.bf16.msra.mxu0 %v6476
  %9340 = vmatpush.bf16.msra.mxu0 %v6472
  %9341 = vmatpush.bf16.msra.mxu0 %v6468
  %9342 = vmatpush.bf16.msra.mxu0 %v6464
  %9343 = vmatpush.bf16.msra.mxu0 %v6460
  %9344 = vmatmul.bf16.gmra.mxu0 %v110
  %v9345 = vpop.f32.mrf.mxu0
  %v9346 = vadd.f32 %v9333, %v9345
  %v9347 = vpop.f32.mrf.mxu0
  %9348 = vdwg.mxu0
  %9349 = vmatpush.bf16.msra.mxu0 %v6520
  %9350 = vmatpush.bf16.msra.mxu0 %v6516
  %9351 = vmatpush.bf16.msra.mxu0 %v6512
  %9352 = vmatpush.bf16.msra.mxu0 %v6508
  %9353 = vmatpush.bf16.msra.mxu0 %v6504
  %9354 = vmatpush.bf16.msra.mxu0 %v6500
  %9355 = vmatpush.bf16.msra.mxu0 %v6496
  %9356 = vmatpush.bf16.msra.mxu0 %v6492
  %9357 = vmatmul.bf16.gmra.mxu0 %v111
  %v9358 = vpop.f32.mrf.mxu0
  %v9359 = vadd.f32 %v9346, %v9358
  %v9360 = vpop.f32.mrf.mxu0
  %9361 = vdwg.mxu0
  %9362 = vmatpush.bf16.msra.mxu0 %v5273
  %9363 = vmatpush.bf16.msra.mxu0 %v5269
  %9364 = vmatpush.bf16.msra.mxu0 %v5265
  %9365 = vmatpush.bf16.msra.mxu0 %v5261
  %9366 = vmatpush.bf16.msra.mxu0 %v5257
  %9367 = vmatpush.bf16.msra.mxu0 %v5253
  %9368 = vmatpush.bf16.msra.mxu0 %v5249
  %9369 = vmatpush.bf16.msra.mxu0 %v5245
  %9370 = vmatmul.bf16.gmra.mxu0 %v72
  %v9371 = vpop.f32.mrf.mxu0
  %v9372 = vadd.f32 %v1397, %v9371
  %v9373 = vpop.f32.mrf.mxu0
  %9374 = vdwg.mxu0
  %9375 = vmatpush.bf16.msra.mxu0 %v5305
  %9376 = vmatpush.bf16.msra.mxu0 %v5301
  %9377 = vmatpush.bf16.msra.mxu0 %v5297
  %9378 = vmatpush.bf16.msra.mxu0 %v5293
  %9379 = vmatpush.bf16.msra.mxu0 %v5289
  %9380 = vmatpush.bf16.msra.mxu0 %v5285
  %9381 = vmatpush.bf16.msra.mxu0 %v5281
  %9382 = vmatpush.bf16.msra.mxu0 %v5277
  %9383 = vmatmul.bf16.gmra.mxu0 %v73
  %v9384 = vpop.f32.mrf.mxu0
  %v9385 = vadd.f32 %v9372, %v9384
  %v9386 = vpop.f32.mrf.mxu0
  %9387 = vdwg.mxu0
  %9388 = vmatpush.bf16.msra.mxu0 %v5337
  %9389 = vmatpush.bf16.msra.mxu0 %v5333
  %9390 = vmatpush.bf16.msra.mxu0 %v5329
  %9391 = vmatpush.bf16.msra.mxu0 %v5325
  %9392 = vmatpush.bf16.msra.mxu0 %v5321
  %9393 = vmatpush.bf16.msra.mxu0 %v5317
  %9394 = vmatpush.bf16.msra.mxu0 %v5313
  %9395 = vmatpush.bf16.msra.mxu0 %v5309
  %9396 = vmatmul.bf16.gmra.mxu0 %v74
  %v9397 = vpop.f32.mrf.mxu0
  %v9398 = vadd.f32 %v9385, %v9397
  %v9399 = vpop.f32.mrf.mxu0
  %9400 = vdwg.mxu0
  %9401 = vmatpush.bf16.msra.mxu0 %v5369
  %9402 = vmatpush.bf16.msra.mxu0 %v5365
  %9403 = vmatpush.bf16.msra.mxu0 %v5361
  %9404 = vmatpush.bf16.msra.mxu0 %v5357
  %9405 = vmatpush.bf16.msra.mxu0 %v5353
  %9406 = vmatpush.bf16.msra.mxu0 %v5349
  %9407 = vmatpush.bf16.msra.mxu0 %v5345
  %9408 = vmatpush.bf16.msra.mxu0 %v5341
  %9409 = vmatmul.bf16.gmra.mxu0 %v75
  %v9410 = vpop.f32.mrf.mxu0
  %v9411 = vadd.f32 %v9398, %v9410
  %v9412 = vpop.f32.mrf.mxu0
  %9413 = vdwg.mxu0
  %9414 = vmatpush.bf16.msra.mxu0 %v5401
  %9415 = vmatpush.bf16.msra.mxu0 %v5397
  %9416 = vmatpush.bf16.msra.mxu0 %v5393
  %9417 = vmatpush.bf16.msra.mxu0 %v5389
  %9418 = vmatpush.bf16.msra.mxu0 %v5385
  %9419 = vmatpush.bf16.msra.mxu0 %v5381
  %9420 = vmatpush.bf16.msra.mxu0 %v5377
  %9421 = vmatpush.bf16.msra.mxu0 %v5373
  %9422 = vmatmul.bf16.gmra.mxu0 %v76
  %v9423 = vpop.f32.mrf.mxu0
  %v9424 = vadd.f32 %v9411, %v9423
  %v9425 = vpop.f32.mrf.mxu0
  %9426 = vdwg.mxu0
  %9427 = vmatpush.bf16.msra.mxu0 %v5433
  %9428 = vmatpush.bf16.msra.mxu0 %v5429
  %9429 = vmatpush.bf16.msra.mxu0 %v5425
  %9430 = vmatpush.bf16.msra.mxu0 %v5421
  %9431 = vmatpush.bf16.msra.mxu0 %v5417
  %9432 = vmatpush.bf16.msra.mxu0 %v5413
  %9433 = vmatpush.bf16.msra.mxu0 %v5409
  %9434 = vmatpush.bf16.msra.mxu0 %v5405
  %9435 = vmatmul.bf16.gmra.mxu0 %v77
  %v9436 = vpop.f32.mrf.mxu0
  %v9437 = vadd.f32 %v9424, %v9436
  %v9438 = vpop.f32.mrf.mxu0
  %9439 = vdwg.mxu0
  %9440 = vmatpush.bf16.msra.mxu0 %v5465
  %9441 = vmatpush.bf16.msra.mxu0 %v5461
  %9442 = vmatpush.bf16.msra.mxu0 %v5457
  %9443 = vmatpush.bf16.msra.mxu0 %v5453
  %9444 = vmatpush.bf16.msra.mxu0 %v5449
  %9445 = vmatpush.bf16.msra.mxu0 %v5445
  %9446 = vmatpush.bf16.msra.mxu0 %v5441
  %9447 = vmatpush.bf16.msra.mxu0 %v5437
  %9448 = vmatmul.bf16.gmra.mxu0 %v78
  %v9449 = vpop.f32.mrf.mxu0
  %v9450 = vadd.f32 %v9437, %v9449
  %v9451 = vpop.f32.mrf.mxu0
  %9452 = vdwg.mxu0
  %9453 = vmatpush.bf16.msra.mxu0 %v5497
  %9454 = vmatpush.bf16.msra.mxu0 %v5493
  %9455 = vmatpush.bf16.msra.mxu0 %v5489
  %9456 = vmatpush.bf16.msra.mxu0 %v5485
  %9457 = vmatpush.bf16.msra.mxu0 %v5481
  %9458 = vmatpush.bf16.msra.mxu0 %v5477
  %9459 = vmatpush.bf16.msra.mxu0 %v5473
  %9460 = vmatpush.bf16.msra.mxu0 %v5469
  %9461 = vmatmul.bf16.gmra.mxu0 %v79
  %v9462 = vpop.f32.mrf.mxu0
  %v9463 = vadd.f32 %v9450, %v9462
  %v9464 = vpop.f32.mrf.mxu0
  %9465 = vdwg.mxu0
  %9466 = vmatpush.bf16.msra.mxu0 %v5529
  %9467 = vmatpush.bf16.msra.mxu0 %v5525
  %9468 = vmatpush.bf16.msra.mxu0 %v5521
  %9469 = vmatpush.bf16.msra.mxu0 %v5517
  %9470 = vmatpush.bf16.msra.mxu0 %v5513
  %9471 = vmatpush.bf16.msra.mxu0 %v5509
  %9472 = vmatpush.bf16.msra.mxu0 %v5505
  %9473 = vmatpush.bf16.msra.mxu0 %v5501
  %9474 = vmatmul.bf16.gmra.mxu0 %v80
  %v9475 = vpop.f32.mrf.mxu0
  %v9476 = vadd.f32 %v9463, %v9475
  %v9477 = vpop.f32.mrf.mxu0
  %9478 = vdwg.mxu0
  %9479 = vmatpush.bf16.msra.mxu0 %v5561
  %9480 = vmatpush.bf16.msra.mxu0 %v5557
  %9481 = vmatpush.bf16.msra.mxu0 %v5553
  %9482 = vmatpush.bf16.msra.mxu0 %v5549
  %9483 = vmatpush.bf16.msra.mxu0 %v5545
  %9484 = vmatpush.bf16.msra.mxu0 %v5541
  %9485 = vmatpush.bf16.msra.mxu0 %v5537
  %9486 = vmatpush.bf16.msra.mxu0 %v5533
  %9487 = vmatmul.bf16.gmra.mxu0 %v81
  %v9488 = vpop.f32.mrf.mxu0
  %v9489 = vadd.f32 %v9476, %v9488
  %v9490 = vpop.f32.mrf.mxu0
  %9491 = vdwg.mxu0
  %9492 = vmatpush.bf16.msra.mxu0 %v5593
  %9493 = vmatpush.bf16.msra.mxu0 %v5589
  %9494 = vmatpush.bf16.msra.mxu0 %v5585
  %9495 = vmatpush.bf16.msra.mxu0 %v5581
  %9496 = vmatpush.bf16.msra.mxu0 %v5577
  %9497 = vmatpush.bf16.msra.mxu0 %v5573
  %9498 = vmatpush.bf16.msra.mxu0 %v5569
  %9499 = vmatpush.bf16.msra.mxu0 %v5565
  %9500 = vmatmul.bf16.gmra.mxu0 %v82
  %v9501 = vpop.f32.mrf.mxu0
  %v9502 = vadd.f32 %v9489, %v9501
  %v9503 = vpop.f32.mrf.mxu0
  %9504 = vdwg.mxu0
  %9505 = vmatpush.bf16.msra.mxu0 %v5625
  %9506 = vmatpush.bf16.msra.mxu0 %v5621
  %9507 = vmatpush.bf16.msra.mxu0 %v5617
  %9508 = vmatpush.bf16.msra.mxu0 %v5613
  %9509 = vmatpush.bf16.msra.mxu0 %v5609
  %9510 = vmatpush.bf16.msra.mxu0 %v5605
  %9511 = vmatpush.bf16.msra.mxu0 %v5601
  %9512 = vmatpush.bf16.msra.mxu0 %v5597
  %9513 = vmatmul.bf16.gmra.mxu0 %v83
  %v9514 = vpop.f32.mrf.mxu0
  %v9515 = vadd.f32 %v9502, %v9514
  %v9516 = vpop.f32.mrf.mxu0
  %9517 = vdwg.mxu0
  %9518 = vmatpush.bf16.msra.mxu0 %v5657
  %9519 = vmatpush.bf16.msra.mxu0 %v5653
  %9520 = vmatpush.bf16.msra.mxu0 %v5649
  %9521 = vmatpush.bf16.msra.mxu0 %v5645
  %9522 = vmatpush.bf16.msra.mxu0 %v5641
  %9523 = vmatpush.bf16.msra.mxu0 %v5637
  %9524 = vmatpush.bf16.msra.mxu0 %v5633
  %9525 = vmatpush.bf16.msra.mxu0 %v5629
  %9526 = vmatmul.bf16.gmra.mxu0 %v84
  %v9527 = vpop.f32.mrf.mxu0
  %v9528 = vadd.f32 %v9515, %v9527
  %v9529 = vpop.f32.mrf.mxu0
  %9530 = vdwg.mxu0
  %9531 = vmatpush.bf16.msra.mxu0 %v5689
  %9532 = vmatpush.bf16.msra.mxu0 %v5685
  %9533 = vmatpush.bf16.msra.mxu0 %v5681
  %9534 = vmatpush.bf16.msra.mxu0 %v5677
  %9535 = vmatpush.bf16.msra.mxu0 %v5673
  %9536 = vmatpush.bf16.msra.mxu0 %v5669
  %9537 = vmatpush.bf16.msra.mxu0 %v5665
  %9538 = vmatpush.bf16.msra.mxu0 %v5661
  %9539 = vmatmul.bf16.gmra.mxu0 %v85
  %v9540 = vpop.f32.mrf.mxu0
  %v9541 = vadd.f32 %v9528, %v9540
  %v9542 = vpop.f32.mrf.mxu0
  %9543 = vdwg.mxu0
  %9544 = vmatpush.bf16.msra.mxu0 %v5721
  %9545 = vmatpush.bf16.msra.mxu0 %v5717
  %9546 = vmatpush.bf16.msra.mxu0 %v5713
  %9547 = vmatpush.bf16.msra.mxu0 %v5709
  %9548 = vmatpush.bf16.msra.mxu0 %v5705
  %9549 = vmatpush.bf16.msra.mxu0 %v5701
  %9550 = vmatpush.bf16.msra.mxu0 %v5697
  %9551 = vmatpush.bf16.msra.mxu0 %v5693
  %9552 = vmatmul.bf16.gmra.mxu0 %v86
  %v9553 = vpop.f32.mrf.mxu0
  %v9554 = vadd.f32 %v9541, %v9553
  %v9555 = vpop.f32.mrf.mxu0
  %9556 = vdwg.mxu0
  %9557 = vmatpush.bf16.msra.mxu0 %v5753
  %9558 = vmatpush.bf16.msra.mxu0 %v5749
  %9559 = vmatpush.bf16.msra.mxu0 %v5745
  %9560 = vmatpush.bf16.msra.mxu0 %v5741
  %9561 = vmatpush.bf16.msra.mxu0 %v5737
  %9562 = vmatpush.bf16.msra.mxu0 %v5733
  %9563 = vmatpush.bf16.msra.mxu0 %v5729
  %9564 = vmatpush.bf16.msra.mxu0 %v5725
  %9565 = vmatmul.bf16.gmra.mxu0 %v87
  %v9566 = vpop.f32.mrf.mxu0
  %v9567 = vadd.f32 %v9554, %v9566
  %v9568 = vpop.f32.mrf.mxu0
  %9569 = vdwg.mxu0
  %9570 = vmatpush.bf16.msra.mxu0 %v5785
  %9571 = vmatpush.bf16.msra.mxu0 %v5781
  %9572 = vmatpush.bf16.msra.mxu0 %v5777
  %9573 = vmatpush.bf16.msra.mxu0 %v5773
  %9574 = vmatpush.bf16.msra.mxu0 %v5769
  %9575 = vmatpush.bf16.msra.mxu0 %v5765
  %9576 = vmatpush.bf16.msra.mxu0 %v5761
  %9577 = vmatpush.bf16.msra.mxu0 %v5757
  %9578 = vmatmul.bf16.gmra.mxu0 %v88
  %v9579 = vpop.f32.mrf.mxu0
  %v9580 = vadd.f32 %v9567, %v9579
  %v9581 = vpop.f32.mrf.mxu0
  %9582 = vdwg.mxu0
  %9583 = vmatpush.bf16.msra.mxu0 %v5817
  %9584 = vmatpush.bf16.msra.mxu0 %v5813
  %9585 = vmatpush.bf16.msra.mxu0 %v5809
  %9586 = vmatpush.bf16.msra.mxu0 %v5805
  %9587 = vmatpush.bf16.msra.mxu0 %v5801
  %9588 = vmatpush.bf16.msra.mxu0 %v5797
  %9589 = vmatpush.bf16.msra.mxu0 %v5793
  %9590 = vmatpush.bf16.msra.mxu0 %v5789
  %9591 = vmatmul.bf16.gmra.mxu0 %v89
  %v9592 = vpop.f32.mrf.mxu0
  %v9593 = vadd.f32 %v9580, %v9592
  %v9594 = vpop.f32.mrf.mxu0
  %9595 = vdwg.mxu0
  %9596 = vmatpush.bf16.msra.mxu0 %v5849
  %9597 = vmatpush.bf16.msra.mxu0 %v5845
  %9598 = vmatpush.bf16.msra.mxu0 %v5841
  %9599 = vmatpush.bf16.msra.mxu0 %v5837
  %9600 = vmatpush.bf16.msra.mxu0 %v5833
  %9601 = vmatpush.bf16.msra.mxu0 %v5829
  %9602 = vmatpush.bf16.msra.mxu0 %v5825
  %9603 = vmatpush.bf16.msra.mxu0 %v5821
  %9604 = vmatmul.bf16.gmra.mxu0 %v90
  %v9605 = vpop.f32.mrf.mxu0
  %v9606 = vadd.f32 %v9593, %v9605
  %v9607 = vpop.f32.mrf.mxu0
  %9608 = vdwg.mxu0
  %9609 = vmatpush.bf16.msra.mxu0 %v5881
  %9610 = vmatpush.bf16.msra.mxu0 %v5877
  %9611 = vmatpush.bf16.msra.mxu0 %v5873
  %9612 = vmatpush.bf16.msra.mxu0 %v5869
  %9613 = vmatpush.bf16.msra.mxu0 %v5865
  %9614 = vmatpush.bf16.msra.mxu0 %v5861
  %9615 = vmatpush.bf16.msra.mxu0 %v5857
  %9616 = vmatpush.bf16.msra.mxu0 %v5853
  %9617 = vmatmul.bf16.gmra.mxu0 %v91
  %v9618 = vpop.f32.mrf.mxu0
  %v9619 = vadd.f32 %v9606, %v9618
  %v9620 = vpop.f32.mrf.mxu0
  %9621 = vdwg.mxu0
  %9622 = vmatpush.bf16.msra.mxu0 %v5913
  %9623 = vmatpush.bf16.msra.mxu0 %v5909
  %9624 = vmatpush.bf16.msra.mxu0 %v5905
  %9625 = vmatpush.bf16.msra.mxu0 %v5901
  %9626 = vmatpush.bf16.msra.mxu0 %v5897
  %9627 = vmatpush.bf16.msra.mxu0 %v5893
  %9628 = vmatpush.bf16.msra.mxu0 %v5889
  %9629 = vmatpush.bf16.msra.mxu0 %v5885
  %9630 = vmatmul.bf16.gmra.mxu0 %v92
  %v9631 = vpop.f32.mrf.mxu0
  %v9632 = vadd.f32 %v9619, %v9631
  %v9633 = vpop.f32.mrf.mxu0
  %9634 = vdwg.mxu0
  %9635 = vmatpush.bf16.msra.mxu0 %v5945
  %9636 = vmatpush.bf16.msra.mxu0 %v5941
  %9637 = vmatpush.bf16.msra.mxu0 %v5937
  %9638 = vmatpush.bf16.msra.mxu0 %v5933
  %9639 = vmatpush.bf16.msra.mxu0 %v5929
  %9640 = vmatpush.bf16.msra.mxu0 %v5925
  %9641 = vmatpush.bf16.msra.mxu0 %v5921
  %9642 = vmatpush.bf16.msra.mxu0 %v5917
  %9643 = vmatmul.bf16.gmra.mxu0 %v93
  %v9644 = vpop.f32.mrf.mxu0
  %v9645 = vadd.f32 %v9632, %v9644
  %v9646 = vpop.f32.mrf.mxu0
  %9647 = vdwg.mxu0
  %9648 = vmatpush.bf16.msra.mxu0 %v5977
  %9649 = vmatpush.bf16.msra.mxu0 %v5973
  %9650 = vmatpush.bf16.msra.mxu0 %v5969
  %9651 = vmatpush.bf16.msra.mxu0 %v5965
  %9652 = vmatpush.bf16.msra.mxu0 %v5961
  %9653 = vmatpush.bf16.msra.mxu0 %v5957
  %9654 = vmatpush.bf16.msra.mxu0 %v5953
  %9655 = vmatpush.bf16.msra.mxu0 %v5949
  %9656 = vmatmul.bf16.gmra.mxu0 %v94
  %v9657 = vpop.f32.mrf.mxu0
  %v9658 = vadd.f32 %v9645, %v9657
  %v9659 = vpop.f32.mrf.mxu0
  %9660 = vdwg.mxu0
  %9661 = vmatpush.bf16.msra.mxu0 %v6009
  %9662 = vmatpush.bf16.msra.mxu0 %v6005
  %9663 = vmatpush.bf16.msra.mxu0 %v6001
  %9664 = vmatpush.bf16.msra.mxu0 %v5997
  %9665 = vmatpush.bf16.msra.mxu0 %v5993
  %9666 = vmatpush.bf16.msra.mxu0 %v5989
  %9667 = vmatpush.bf16.msra.mxu0 %v5985
  %9668 = vmatpush.bf16.msra.mxu0 %v5981
  %9669 = vmatmul.bf16.gmra.mxu0 %v95
  %v9670 = vpop.f32.mrf.mxu0
  %v9671 = vadd.f32 %v9658, %v9670
  %v9672 = vpop.f32.mrf.mxu0
  %9673 = vdwg.mxu0
  %9674 = vmatpush.bf16.msra.mxu0 %v6041
  %9675 = vmatpush.bf16.msra.mxu0 %v6037
  %9676 = vmatpush.bf16.msra.mxu0 %v6033
  %9677 = vmatpush.bf16.msra.mxu0 %v6029
  %9678 = vmatpush.bf16.msra.mxu0 %v6025
  %9679 = vmatpush.bf16.msra.mxu0 %v6021
  %9680 = vmatpush.bf16.msra.mxu0 %v6017
  %9681 = vmatpush.bf16.msra.mxu0 %v6013
  %9682 = vmatmul.bf16.gmra.mxu0 %v96
  %v9683 = vpop.f32.mrf.mxu0
  %v9684 = vadd.f32 %v9671, %v9683
  %v9685 = vpop.f32.mrf.mxu0
  %9686 = vdwg.mxu0
  %9687 = vmatpush.bf16.msra.mxu0 %v6073
  %9688 = vmatpush.bf16.msra.mxu0 %v6069
  %9689 = vmatpush.bf16.msra.mxu0 %v6065
  %9690 = vmatpush.bf16.msra.mxu0 %v6061
  %9691 = vmatpush.bf16.msra.mxu0 %v6057
  %9692 = vmatpush.bf16.msra.mxu0 %v6053
  %9693 = vmatpush.bf16.msra.mxu0 %v6049
  %9694 = vmatpush.bf16.msra.mxu0 %v6045
  %9695 = vmatmul.bf16.gmra.mxu0 %v97
  %v9696 = vpop.f32.mrf.mxu0
  %v9697 = vadd.f32 %v9684, %v9696
  %v9698 = vpop.f32.mrf.mxu0
  %9699 = vdwg.mxu0
  %9700 = vmatpush.bf16.msra.mxu0 %v6105
  %9701 = vmatpush.bf16.msra.mxu0 %v6101
  %9702 = vmatpush.bf16.msra.mxu0 %v6097
  %9703 = vmatpush.bf16.msra.mxu0 %v6093
  %9704 = vmatpush.bf16.msra.mxu0 %v6089
  %9705 = vmatpush.bf16.msra.mxu0 %v6085
  %9706 = vmatpush.bf16.msra.mxu0 %v6081
  %9707 = vmatpush.bf16.msra.mxu0 %v6077
  %9708 = vmatmul.bf16.gmra.mxu0 %v98
  %v9709 = vpop.f32.mrf.mxu0
  %v9710 = vadd.f32 %v9697, %v9709
  %v9711 = vpop.f32.mrf.mxu0
  %9712 = vdwg.mxu0
  %9713 = vmatpush.bf16.msra.mxu0 %v6137
  %9714 = vmatpush.bf16.msra.mxu0 %v6133
  %9715 = vmatpush.bf16.msra.mxu0 %v6129
  %9716 = vmatpush.bf16.msra.mxu0 %v6125
  %9717 = vmatpush.bf16.msra.mxu0 %v6121
  %9718 = vmatpush.bf16.msra.mxu0 %v6117
  %9719 = vmatpush.bf16.msra.mxu0 %v6113
  %9720 = vmatpush.bf16.msra.mxu0 %v6109
  %9721 = vmatmul.bf16.gmra.mxu0 %v99
  %v9722 = vpop.f32.mrf.mxu0
  %v9723 = vadd.f32 %v9710, %v9722
  %v9724 = vpop.f32.mrf.mxu0
  %9725 = vdwg.mxu0
  %9726 = vmatpush.bf16.msra.mxu0 %v6169
  %9727 = vmatpush.bf16.msra.mxu0 %v6165
  %9728 = vmatpush.bf16.msra.mxu0 %v6161
  %9729 = vmatpush.bf16.msra.mxu0 %v6157
  %9730 = vmatpush.bf16.msra.mxu0 %v6153
  %9731 = vmatpush.bf16.msra.mxu0 %v6149
  %9732 = vmatpush.bf16.msra.mxu0 %v6145
  %9733 = vmatpush.bf16.msra.mxu0 %v6141
  %9734 = vmatmul.bf16.gmra.mxu0 %v100
  %v9735 = vpop.f32.mrf.mxu0
  %v9736 = vadd.f32 %v9723, %v9735
  %v9737 = vpop.f32.mrf.mxu0
  %9738 = vdwg.mxu0
  %9739 = vmatpush.bf16.msra.mxu0 %v6201
  %9740 = vmatpush.bf16.msra.mxu0 %v6197
  %9741 = vmatpush.bf16.msra.mxu0 %v6193
  %9742 = vmatpush.bf16.msra.mxu0 %v6189
  %9743 = vmatpush.bf16.msra.mxu0 %v6185
  %9744 = vmatpush.bf16.msra.mxu0 %v6181
  %9745 = vmatpush.bf16.msra.mxu0 %v6177
  %9746 = vmatpush.bf16.msra.mxu0 %v6173
  %9747 = vmatmul.bf16.gmra.mxu0 %v101
  %v9748 = vpop.f32.mrf.mxu0
  %v9749 = vadd.f32 %v9736, %v9748
  %v9750 = vpop.f32.mrf.mxu0
  %9751 = vdwg.mxu0
  %9752 = vmatpush.bf16.msra.mxu0 %v6233
  %9753 = vmatpush.bf16.msra.mxu0 %v6229
  %9754 = vmatpush.bf16.msra.mxu0 %v6225
  %9755 = vmatpush.bf16.msra.mxu0 %v6221
  %9756 = vmatpush.bf16.msra.mxu0 %v6217
  %9757 = vmatpush.bf16.msra.mxu0 %v6213
  %9758 = vmatpush.bf16.msra.mxu0 %v6209
  %9759 = vmatpush.bf16.msra.mxu0 %v6205
  %9760 = vmatmul.bf16.gmra.mxu0 %v102
  %v9761 = vpop.f32.mrf.mxu0
  %v9762 = vadd.f32 %v9749, %v9761
  %v9763 = vpop.f32.mrf.mxu0
  %9764 = vdwg.mxu0
  %9765 = vmatpush.bf16.msra.mxu0 %v6265
  %9766 = vmatpush.bf16.msra.mxu0 %v6261
  %9767 = vmatpush.bf16.msra.mxu0 %v6257
  %9768 = vmatpush.bf16.msra.mxu0 %v6253
  %9769 = vmatpush.bf16.msra.mxu0 %v6249
  %9770 = vmatpush.bf16.msra.mxu0 %v6245
  %9771 = vmatpush.bf16.msra.mxu0 %v6241
  %9772 = vmatpush.bf16.msra.mxu0 %v6237
  %9773 = vmatmul.bf16.gmra.mxu0 %v103
  %v9774 = vpop.f32.mrf.mxu0
  %v9775 = vadd.f32 %v9762, %v9774
  %v9776 = vpop.f32.mrf.mxu0
  %9777 = vdwg.mxu0
  %9778 = vmatpush.bf16.msra.mxu0 %v6297
  %9779 = vmatpush.bf16.msra.mxu0 %v6293
  %9780 = vmatpush.bf16.msra.mxu0 %v6289
  %9781 = vmatpush.bf16.msra.mxu0 %v6285
  %9782 = vmatpush.bf16.msra.mxu0 %v6281
  %9783 = vmatpush.bf16.msra.mxu0 %v6277
  %9784 = vmatpush.bf16.msra.mxu0 %v6273
  %9785 = vmatpush.bf16.msra.mxu0 %v6269
  %9786 = vmatmul.bf16.gmra.mxu0 %v104
  %v9787 = vpop.f32.mrf.mxu0
  %v9788 = vadd.f32 %v9775, %v9787
  %v9789 = vpop.f32.mrf.mxu0
  %9790 = vdwg.mxu0
  %9791 = vmatpush.bf16.msra.mxu0 %v6329
  %9792 = vmatpush.bf16.msra.mxu0 %v6325
  %9793 = vmatpush.bf16.msra.mxu0 %v6321
  %9794 = vmatpush.bf16.msra.mxu0 %v6317
  %9795 = vmatpush.bf16.msra.mxu0 %v6313
  %9796 = vmatpush.bf16.msra.mxu0 %v6309
  %9797 = vmatpush.bf16.msra.mxu0 %v6305
  %9798 = vmatpush.bf16.msra.mxu0 %v6301
  %9799 = vmatmul.bf16.gmra.mxu0 %v105
  %v9800 = vpop.f32.mrf.mxu0
  %v9801 = vadd.f32 %v9788, %v9800
  %v9802 = vpop.f32.mrf.mxu0
  %9803 = vdwg.mxu0
  %9804 = vmatpush.bf16.msra.mxu0 %v6361
  %9805 = vmatpush.bf16.msra.mxu0 %v6357
  %9806 = vmatpush.bf16.msra.mxu0 %v6353
  %9807 = vmatpush.bf16.msra.mxu0 %v6349
  %9808 = vmatpush.bf16.msra.mxu0 %v6345
  %9809 = vmatpush.bf16.msra.mxu0 %v6341
  %9810 = vmatpush.bf16.msra.mxu0 %v6337
  %9811 = vmatpush.bf16.msra.mxu0 %v6333
  %9812 = vmatmul.bf16.gmra.mxu0 %v106
  %v9813 = vpop.f32.mrf.mxu0
  %v9814 = vadd.f32 %v9801, %v9813
  %v9815 = vpop.f32.mrf.mxu0
  %9816 = vdwg.mxu0
  %9817 = vmatpush.bf16.msra.mxu0 %v6393
  %9818 = vmatpush.bf16.msra.mxu0 %v6389
  %9819 = vmatpush.bf16.msra.mxu0 %v6385
  %9820 = vmatpush.bf16.msra.mxu0 %v6381
  %9821 = vmatpush.bf16.msra.mxu0 %v6377
  %9822 = vmatpush.bf16.msra.mxu0 %v6373
  %9823 = vmatpush.bf16.msra.mxu0 %v6369
  %9824 = vmatpush.bf16.msra.mxu0 %v6365
  %9825 = vmatmul.bf16.gmra.mxu0 %v107
  %v9826 = vpop.f32.mrf.mxu0
  %v9827 = vadd.f32 %v9814, %v9826
  %v9828 = vpop.f32.mrf.mxu0
  %9829 = vdwg.mxu0
  %9830 = vmatpush.bf16.msra.mxu0 %v6425
  %9831 = vmatpush.bf16.msra.mxu0 %v6421
  %9832 = vmatpush.bf16.msra.mxu0 %v6417
  %9833 = vmatpush.bf16.msra.mxu0 %v6413
  %9834 = vmatpush.bf16.msra.mxu0 %v6409
  %9835 = vmatpush.bf16.msra.mxu0 %v6405
  %9836 = vmatpush.bf16.msra.mxu0 %v6401
  %9837 = vmatpush.bf16.msra.mxu0 %v6397
  %9838 = vmatmul.bf16.gmra.mxu0 %v108
  %v9839 = vpop.f32.mrf.mxu0
  %v9840 = vadd.f32 %v9827, %v9839
  %v9841 = vpop.f32.mrf.mxu0
  %9842 = vdwg.mxu0
  %9843 = vmatpush.bf16.msra.mxu0 %v6457
  %9844 = vmatpush.bf16.msra.mxu0 %v6453
  %9845 = vmatpush.bf16.msra.mxu0 %v6449
  %9846 = vmatpush.bf16.msra.mxu0 %v6445
  %9847 = vmatpush.bf16.msra.mxu0 %v6441
  %9848 = vmatpush.bf16.msra.mxu0 %v6437
  %9849 = vmatpush.bf16.msra.mxu0 %v6433
  %9850 = vmatpush.bf16.msra.mxu0 %v6429
  %9851 = vmatmul.bf16.gmra.mxu0 %v109
  %v9852 = vpop.f32.mrf.mxu0
  %v9853 = vadd.f32 %v9840, %v9852
  %v9854 = vpop.f32.mrf.mxu0
  %9855 = vdwg.mxu0
  %9856 = vmatpush.bf16.msra.mxu0 %v6489
  %9857 = vmatpush.bf16.msra.mxu0 %v6485
  %9858 = vmatpush.bf16.msra.mxu0 %v6481
  %9859 = vmatpush.bf16.msra.mxu0 %v6477
  %9860 = vmatpush.bf16.msra.mxu0 %v6473
  %9861 = vmatpush.bf16.msra.mxu0 %v6469
  %9862 = vmatpush.bf16.msra.mxu0 %v6465
  %9863 = vmatpush.bf16.msra.mxu0 %v6461
  %9864 = vmatmul.bf16.gmra.mxu0 %v110
  %v9865 = vpop.f32.mrf.mxu0
  %v9866 = vadd.f32 %v9853, %v9865
  %v9867 = vpop.f32.mrf.mxu0
  %9868 = vdwg.mxu0
  %9869 = vmatpush.bf16.msra.mxu0 %v6521
  %9870 = vmatpush.bf16.msra.mxu0 %v6517
  %9871 = vmatpush.bf16.msra.mxu0 %v6513
  %9872 = vmatpush.bf16.msra.mxu0 %v6509
  %9873 = vmatpush.bf16.msra.mxu0 %v6505
  %9874 = vmatpush.bf16.msra.mxu0 %v6501
  %9875 = vmatpush.bf16.msra.mxu0 %v6497
  %9876 = vmatpush.bf16.msra.mxu0 %v6493
  %9877 = vmatmul.bf16.gmra.mxu0 %v111
  %v9878 = vpop.f32.mrf.mxu0
  %v9879 = vadd.f32 %v9866, %v9878
  %v9880 = vpop.f32.mrf.mxu0
  %9881 = vdwg.mxu0
  %v9882 = vmax.f32 %v8319, 0.0
  %v9883 = vmax.f32 %v8839, 0.0
  %v9884 = vmax.f32 %v9359, 0.0
  %v9885 = vmax.f32 %v9879, 0.0
  %v9886 = vpack.c.bf16 %v9882, %v9882
  %v9887 = vpack.c.bf16 %v9883, %v9883
  %v9888 = vpack.c.bf16 %v9884, %v9884
  %v9889 = vpack.c.bf16 %v9885, %v9885
  %v9890 = vld [vmem:[%s3] sm:$0xff]
  %v9891 = vld [vmem:[%s3 + $0x8] sm:$0xff]
  %v9892 = vld [vmem:[%s3 + $0x10] sm:$0xff]
  %v9893 = vld [vmem:[%s3 + $0x18] sm:$0xff]
  %v9894 = vld [vmem:[%s3 + $0x20] sm:$0xff]
  %v9895 = vld [vmem:[%s3 + $0x28] sm:$0xff]
  %v9896 = vld [vmem:[%s3 + $0x30] sm:$0xff]
  %v9897 = vld [vmem:[%s3 + $0x38] sm:$0xff]
  %v9898 = vld [vmem:[%s3 + $0x40] sm:$0xff]
  %v9899 = vld [vmem:[%s3 + $0x48] sm:$0xff]
  %v9900 = vld [vmem:[%s3 + $0x50] sm:$0xff]
  %v9901 = vld [vmem:[%s3 + $0x58] sm:$0xff]
  %v9902 = vld [vmem:[%s3 + $0x60] sm:$0xff]
  %v9903 = vld [vmem:[%s3 + $0x68] sm:$0xff]
  %v9904 = vld [vmem:[%s3 + $0x70] sm:$0xff]
  %v9905 = vld [vmem:[%s3 + $0x78] sm:$0xff]
  %v9906 = vld [vmem:[%s3 + $0x80] sm:$0xff]
  %v9907 = vld [vmem:[%s3 + $0x88] sm:$0xff]
  %v9908 = vld [vmem:[%s3 + $0x90] sm:$0xff]
  %v9909 = vld [vmem:[%s3 + $0x98] sm:$0xff]
  %v9910 = vld [vmem:[%s3 + $0xa0] sm:$0xff]
  %v9911 = vld [vmem:[%s3 + $0xa8] sm:$0xff]
  %v9912 = vld [vmem:[%s3 + $0xb0] sm:$0xff]
  %v9913 = vld [vmem:[%s3 + $0xb8] sm:$0xff]
  %v9914 = vld [vmem:[%s3 + $0xc0] sm:$0xff]
  %v9915 = vld [vmem:[%s3 + $0xc8] sm:$0xff]
  %v9916 = vld [vmem:[%s3 + $0xd0] sm:$0xff]
  %v9917 = vld [vmem:[%s3 + $0xd8] sm:$0xff]
  %v9918 = vld [vmem:[%s3 + $0xe0] sm:$0xff]
  %v9919 = vld [vmem:[%s3 + $0xe8] sm:$0xff]
  %v9920 = vld [vmem:[%s3 + $0xf0] sm:$0xff]
  %v9921 = vld [vmem:[%s3 + $0xf8] sm:$0xff]
  %v9922 = vld [vmem:[%s3 + $0x100] sm:$0xff]
  %v9923 = vld [vmem:[%s3 + $0x108] sm:$0xff]
  %v9924 = vld [vmem:[%s3 + $0x110] sm:$0xff]
  %v9925 = vld [vmem:[%s3 + $0x118] sm:$0xff]
  %v9926 = vld [vmem:[%s3 + $0x120] sm:$0xff]
  %v9927 = vld [vmem:[%s3 + $0x128] sm:$0xff]
  %v9928 = vld [vmem:[%s3 + $0x130] sm:$0xff]
  %v9929 = vld [vmem:[%s3 + $0x138] sm:$0xff]
  %v9930 = vld [vmem:[%s3 + $0x140] sm:$0xff]
  %v9931 = vld [vmem:[%s3 + $0x148] sm:$0xff]
  %v9932 = vld [vmem:[%s3 + $0x150] sm:$0xff]
  %v9933 = vld [vmem:[%s3 + $0x158] sm:$0xff]
  %v9934 = vld [vmem:[%s3 + $0x160] sm:$0xff]
  %v9935 = vld [vmem:[%s3 + $0x168] sm:$0xff]
  %v9936 = vld [vmem:[%s3 + $0x170] sm:$0xff]
  %v9937 = vld [vmem:[%s3 + $0x178] sm:$0xff]
  %v9938 = vld [vmem:[%s3 + $0x180] sm:$0xff]
  %v9939 = vld [vmem:[%s3 + $0x188] sm:$0xff]
  %v9940 = vld [vmem:[%s3 + $0x190] sm:$0xff]
  %v9941 = vld [vmem:[%s3 + $0x198] sm:$0xff]
  %v9942 = vld [vmem:[%s3 + $0x1a0] sm:$0xff]
  %v9943 = vld [vmem:[%s3 + $0x1a8] sm:$0xff]
  %v9944 = vld [vmem:[%s3 + $0x1b0] sm:$0xff]
  %v9945 = vld [vmem:[%s3 + $0x1b8] sm:$0xff]
  %v9946 = vld [vmem:[%s3 + $0x1c0] sm:$0xff]
  %v9947 = vld [vmem:[%s3 + $0x1c8] sm:$0xff]
  %v9948 = vld [vmem:[%s3 + $0x1d0] sm:$0xff]
  %v9949 = vld [vmem:[%s3 + $0x1d8] sm:$0xff]
  %v9950 = vld [vmem:[%s3 + $0x1e0] sm:$0xff]
  %v9951 = vld [vmem:[%s3 + $0x1e8] sm:$0xff]
  %v9952 = vld [vmem:[%s3 + $0x1f0] sm:$0xff]
  %v9953 = vld [vmem:[%s3 + $0x1f8] sm:$0xff]
  %v9954 = vld [vmem:[%s4] sm:$0x3]
  %v9956 = vperm.slane %v9954, 0
  %v9957 = vperm.slane %v9954, 1
  %v10024 = vunpack.c.l.b16 %v9890
  %v10025 = vunpack.c.h.b16 %v9890
  %v10026 = vunpack.c.l.b16 %v9891
  %v10027 = vunpack.c.h.b16 %v9891
  %v10028 = vunpack.c.l.b16 %v9892
  %v10029 = vunpack.c.h.b16 %v9892
  %v10030 = vunpack.c.l.b16 %v9893
  %v10031 = vunpack.c.h.b16 %v9893
  %v10032 = vunpack.c.l.b16 %v9894
  %v10033 = vunpack.c.h.b16 %v9894
  %v10034 = vunpack.c.l.b16 %v9895
  %v10035 = vunpack.c.h.b16 %v9895
  %v10036 = vunpack.c.l.b16 %v9896
  %v10037 = vunpack.c.h.b16 %v9896
  %v10038 = vunpack.c.l.b16 %v9897
  %v10039 = vunpack.c.h.b16 %v9897
  %v10040 = vunpack.c.l.b16 %v9898
  %v10041 = vunpack.c.h.b16 %v9898
  %v10042 = vunpack.c.l.b16 %v9899
  %v10043 = vunpack.c.h.b16 %v9899
  %v10044 = vunpack.c.l.b16 %v9900
  %v10045 = vunpack.c.h.b16 %v9900
  %v10046 = vunpack.c.l.b16 %v9901
  %v10047 = vunpack.c.h.b16 %v9901
  %v10048 = vunpack.c.l.b16 %v9902
  %v10049 = vunpack.c.h.b16 %v9902
  %v10050 = vunpack.c.l.b16 %v9903
  %v10051 = vunpack.c.h.b16 %v9903
  %v10052 = vunpack.c.l.b16 %v9904
  %v10053 = vunpack.c.h.b16 %v9904
  %v10054 = vunpack.c.l.b16 %v9905
  %v10055 = vunpack.c.h.b16 %v9905
  %v10056 = vunpack.c.l.b16 %v9906
  %v10057 = vunpack.c.h.b16 %v9906
  %v10058 = vunpack.c.l.b16 %v9907
  %v10059 = vunpack.c.h.b16 %v9907
  %v10060 = vunpack.c.l.b16 %v9908
  %v10061 = vunpack.c.h.b16 %v9908
  %v10062 = vunpack.c.l.b16 %v9909
  %v10063 = vunpack.c.h.b16 %v9909
  %v10064 = vunpack.c.l.b16 %v9910
  %v10065 = vunpack.c.h.b16 %v9910
  %v10066 = vunpack.c.l.b16 %v9911
  %v10067 = vunpack.c.h.b16 %v9911
  %v10068 = vunpack.c.l.b16 %v9912
  %v10069 = vunpack.c.h.b16 %v9912
  %v10070 = vunpack.c.l.b16 %v9913
  %v10071 = vunpack.c.h.b16 %v9913
  %v10072 = vunpack.c.l.b16 %v9914
  %v10073 = vunpack.c.h.b16 %v9914
  %v10074 = vunpack.c.l.b16 %v9915
  %v10075 = vunpack.c.h.b16 %v9915
  %v10076 = vunpack.c.l.b16 %v9916
  %v10077 = vunpack.c.h.b16 %v9916
  %v10078 = vunpack.c.l.b16 %v9917
  %v10079 = vunpack.c.h.b16 %v9917
  %v10080 = vunpack.c.l.b16 %v9918
  %v10081 = vunpack.c.h.b16 %v9918
  %v10082 = vunpack.c.l.b16 %v9919
  %v10083 = vunpack.c.h.b16 %v9919
  %v10084 = vunpack.c.l.b16 %v9920
  %v10085 = vunpack.c.h.b16 %v9920
  %v10086 = vunpack.c.l.b16 %v9921
  %v10087 = vunpack.c.h.b16 %v9921
  %v10088 = vunpack.c.l.b16 %v9922
  %v10089 = vunpack.c.h.b16 %v9922
  %v10090 = vunpack.c.l.b16 %v9923
  %v10091 = vunpack.c.h.b16 %v9923
  %v10092 = vunpack.c.l.b16 %v9924
  %v10093 = vunpack.c.h.b16 %v9924
  %v10094 = vunpack.c.l.b16 %v9925
  %v10095 = vunpack.c.h.b16 %v9925
  %v10096 = vunpack.c.l.b16 %v9926
  %v10097 = vunpack.c.h.b16 %v9926
  %v10098 = vunpack.c.l.b16 %v9927
  %v10099 = vunpack.c.h.b16 %v9927
  %v10100 = vunpack.c.l.b16 %v9928
  %v10101 = vunpack.c.h.b16 %v9928
  %v10102 = vunpack.c.l.b16 %v9929
  %v10103 = vunpack.c.h.b16 %v9929
  %v10104 = vunpack.c.l.b16 %v9930
  %v10105 = vunpack.c.h.b16 %v9930
  %v10106 = vunpack.c.l.b16 %v9931
  %v10107 = vunpack.c.h.b16 %v9931
  %v10108 = vunpack.c.l.b16 %v9932
  %v10109 = vunpack.c.h.b16 %v9932
  %v10110 = vunpack.c.l.b16 %v9933
  %v10111 = vunpack.c.h.b16 %v9933
  %v10112 = vunpack.c.l.b16 %v9934
  %v10113 = vunpack.c.h.b16 %v9934
  %v10114 = vunpack.c.l.b16 %v9935
  %v10115 = vunpack.c.h.b16 %v9935
  %v10116 = vunpack.c.l.b16 %v9936
  %v10117 = vunpack.c.h.b16 %v9936
  %v10118 = vunpack.c.l.b16 %v9937
  %v10119 = vunpack.c.h.b16 %v9937
  %v10120 = vunpack.c.l.b16 %v9938
  %v10121 = vunpack.c.h.b16 %v9938
  %v10122 = vunpack.c.l.b16 %v9939
  %v10123 = vunpack.c.h.b16 %v9939
  %v10124 = vunpack.c.l.b16 %v9940
  %v10125 = vunpack.c.h.b16 %v9940
  %v10126 = vunpack.c.l.b16 %v9941
  %v10127 = vunpack.c.h.b16 %v9941
  %v10128 = vunpack.c.l.b16 %v9942
  %v10129 = vunpack.c.h.b16 %v9942
  %v10130 = vunpack.c.l.b16 %v9943
  %v10131 = vunpack.c.h.b16 %v9943
  %v10132 = vunpack.c.l.b16 %v9944
  %v10133 = vunpack.c.h.b16 %v9944
  %v10134 = vunpack.c.l.b16 %v9945
  %v10135 = vunpack.c.h.b16 %v9945
  %v10136 = vunpack.c.l.b16 %v9946
  %v10137 = vunpack.c.h.b16 %v9946
  %v10138 = vunpack.c.l.b16 %v9947
  %v10139 = vunpack.c.h.b16 %v9947
  %v10140 = vunpack.c.l.b16 %v9948
  %v10141 = vunpack.c.h.b16 %v9948
  %v10142 = vunpack.c.l.b16 %v9949
  %v10143 = vunpack.c.h.b16 %v9949
  %v10144 = vunpack.c.l.b16 %v9950
  %v10145 = vunpack.c.h.b16 %v9950
  %v10146 = vunpack.c.l.b16 %v9951
  %v10147 = vunpack.c.h.b16 %v9951
  %v10148 = vunpack.c.l.b16 %v9952
  %v10149 = vunpack.c.h.b16 %v9952
  %v10150 = vunpack.c.l.b16 %v9953
  %v10151 = vunpack.c.h.b16 %v9953
  %v10152 = vpack.c.b16 %v10026, %v10024
  %v10153 = vpack.c.b16 %v10027, %v10025
  %v10154 = vpack.c.b16 %v10030, %v10028
  %v10155 = vpack.c.b16 %v10031, %v10029
  %v10156 = vpack.c.b16 %v10034, %v10032
  %v10157 = vpack.c.b16 %v10035, %v10033
  %v10158 = vpack.c.b16 %v10038, %v10036
  %v10159 = vpack.c.b16 %v10039, %v10037
  %v10160 = vpack.c.b16 %v10042, %v10040
  %v10161 = vpack.c.b16 %v10043, %v10041
  %v10162 = vpack.c.b16 %v10046, %v10044
  %v10163 = vpack.c.b16 %v10047, %v10045
  %v10164 = vpack.c.b16 %v10050, %v10048
  %v10165 = vpack.c.b16 %v10051, %v10049
  %v10166 = vpack.c.b16 %v10054, %v10052
  %v10167 = vpack.c.b16 %v10055, %v10053
  %v10168 = vpack.c.b16 %v10058, %v10056
  %v10169 = vpack.c.b16 %v10059, %v10057
  %v10170 = vpack.c.b16 %v10062, %v10060
  %v10171 = vpack.c.b16 %v10063, %v10061
  %v10172 = vpack.c.b16 %v10066, %v10064
  %v10173 = vpack.c.b16 %v10067, %v10065
  %v10174 = vpack.c.b16 %v10070, %v10068
  %v10175 = vpack.c.b16 %v10071, %v10069
  %v10176 = vpack.c.b16 %v10074, %v10072
  %v10177 = vpack.c.b16 %v10075, %v10073
  %v10178 = vpack.c.b16 %v10078, %v10076
  %v10179 = vpack.c.b16 %v10079, %v10077
  %v10180 = vpack.c.b16 %v10082, %v10080
  %v10181 = vpack.c.b16 %v10083, %v10081
  %v10182 = vpack.c.b16 %v10086, %v10084
  %v10183 = vpack.c.b16 %v10087, %v10085
  %v10184 = vpack.c.b16 %v10090, %v10088
  %v10185 = vpack.c.b16 %v10091, %v10089
  %v10186 = vpack.c.b16 %v10094, %v10092
  %v10187 = vpack.c.b16 %v10095, %v10093
  %v10188 = vpack.c.b16 %v10098, %v10096
  %v10189 = vpack.c.b16 %v10099, %v10097
  %v10190 = vpack.c.b16 %v10102, %v10100
  %v10191 = vpack.c.b16 %v10103, %v10101
  %v10192 = vpack.c.b16 %v10106, %v10104
  %v10193 = vpack.c.b16 %v10107, %v10105
  %v10194 = vpack.c.b16 %v10110, %v10108
  %v10195 = vpack.c.b16 %v10111, %v10109
  %v10196 = vpack.c.b16 %v10114, %v10112
  %v10197 = vpack.c.b16 %v10115, %v10113
  %v10198 = vpack.c.b16 %v10118, %v10116
  %v10199 = vpack.c.b16 %v10119, %v10117
  %v10200 = vpack.c.b16 %v10122, %v10120
  %v10201 = vpack.c.b16 %v10123, %v10121
  %v10202 = vpack.c.b16 %v10126, %v10124
  %v10203 = vpack.c.b16 %v10127, %v10125
  %v10204 = vpack.c.b16 %v10130, %v10128
  %v10205 = vpack.c.b16 %v10131, %v10129
  %v10206 = vpack.c.b16 %v10134, %v10132
  %v10207 = vpack.c.b16 %v10135, %v10133
  %v10208 = vpack.c.b16 %v10138, %v10136
  %v10209 = vpack.c.b16 %v10139, %v10137
  %v10210 = vpack.c.b16 %v10142, %v10140
  %v10211 = vpack.c.b16 %v10143, %v10141
  %v10212 = vpack.c.b16 %v10146, %v10144
  %v10213 = vpack.c.b16 %v10147, %v10145
  %v10214 = vpack.c.b16 %v10150, %v10148
  %v10215 = vpack.c.b16 %v10151, %v10149
  %10280 = vmatpush.bf16.msra.mxu0 %v10166
  %10281 = vmatpush.bf16.msra.mxu0 %v10164
  %10282 = vmatpush.bf16.msra.mxu0 %v10162
  %10283 = vmatpush.bf16.msra.mxu0 %v10160
  %10284 = vmatpush.bf16.msra.mxu0 %v10158
  %10285 = vmatpush.bf16.msra.mxu0 %v10156
  %10286 = vmatpush.bf16.msra.mxu0 %v10154
  %10287 = vmatpush.bf16.msra.mxu0 %v10152
  %10288 = vmatmul.bf16.gmra.mxu0 %v9886
  %v10289 = vpop.f32.mrf.mxu0
  %v10290 = vadd.f32 %v9956, %v10289
  %v10291 = vpop.f32.mrf.mxu0
  %10292 = vdwg.mxu0
  %10293 = vmatpush.bf16.msra.mxu0 %v10182
  %10294 = vmatpush.bf16.msra.mxu0 %v10180
  %10295 = vmatpush.bf16.msra.mxu0 %v10178
  %10296 = vmatpush.bf16.msra.mxu0 %v10176
  %10297 = vmatpush.bf16.msra.mxu0 %v10174
  %10298 = vmatpush.bf16.msra.mxu0 %v10172
  %10299 = vmatpush.bf16.msra.mxu0 %v10170
  %10300 = vmatpush.bf16.msra.mxu0 %v10168
  %10301 = vmatmul.bf16.gmra.mxu0 %v9887
  %v10302 = vpop.f32.mrf.mxu0
  %v10303 = vadd.f32 %v10290, %v10302
  %v10304 = vpop.f32.mrf.mxu0
  %10305 = vdwg.mxu0
  %10306 = vmatpush.bf16.msra.mxu0 %v10198
  %10307 = vmatpush.bf16.msra.mxu0 %v10196
  %10308 = vmatpush.bf16.msra.mxu0 %v10194
  %10309 = vmatpush.bf16.msra.mxu0 %v10192
  %10310 = vmatpush.bf16.msra.mxu0 %v10190
  %10311 = vmatpush.bf16.msra.mxu0 %v10188
  %10312 = vmatpush.bf16.msra.mxu0 %v10186
  %10313 = vmatpush.bf16.msra.mxu0 %v10184
  %10314 = vmatmul.bf16.gmra.mxu0 %v9888
  %v10315 = vpop.f32.mrf.mxu0
  %v10316 = vadd.f32 %v10303, %v10315
  %v10317 = vpop.f32.mrf.mxu0
  %10318 = vdwg.mxu0
  %10319 = vmatpush.bf16.msra.mxu0 %v10214
  %10320 = vmatpush.bf16.msra.mxu0 %v10212
  %10321 = vmatpush.bf16.msra.mxu0 %v10210
  %10322 = vmatpush.bf16.msra.mxu0 %v10208
  %10323 = vmatpush.bf16.msra.mxu0 %v10206
  %10324 = vmatpush.bf16.msra.mxu0 %v10204
  %10325 = vmatpush.bf16.msra.mxu0 %v10202
  %10326 = vmatpush.bf16.msra.mxu0 %v10200
  %10327 = vmatmul.bf16.gmra.mxu0 %v9889
  %v10328 = vpop.f32.mrf.mxu0
  %v10329 = vadd.f32 %v10316, %v10328
  %v10330 = vpop.f32.mrf.mxu0
  %10331 = vdwg.mxu0
  %10332 = vmatpush.bf16.msra.mxu0 %v10167
  %10333 = vmatpush.bf16.msra.mxu0 %v10165
  %10334 = vmatpush.bf16.msra.mxu0 %v10163
  %10335 = vmatpush.bf16.msra.mxu0 %v10161
  %10336 = vmatpush.bf16.msra.mxu0 %v10159
  %10337 = vmatpush.bf16.msra.mxu0 %v10157
  %10338 = vmatpush.bf16.msra.mxu0 %v10155
  %10339 = vmatpush.bf16.msra.mxu0 %v10153
  %10340 = vmatmul.bf16.gmra.mxu0 %v9886
  %v10341 = vpop.f32.mrf.mxu0
  %v10342 = vadd.f32 %v9957, %v10341
  %v10343 = vpop.f32.mrf.mxu0
  %10344 = vdwg.mxu0
  %10345 = vmatpush.bf16.msra.mxu0 %v10183
  %10346 = vmatpush.bf16.msra.mxu0 %v10181
  %10347 = vmatpush.bf16.msra.mxu0 %v10179
  %10348 = vmatpush.bf16.msra.mxu0 %v10177
  %10349 = vmatpush.bf16.msra.mxu0 %v10175
  %10350 = vmatpush.bf16.msra.mxu0 %v10173
  %10351 = vmatpush.bf16.msra.mxu0 %v10171
  %10352 = vmatpush.bf16.msra.mxu0 %v10169
  %10353 = vmatmul.bf16.gmra.mxu0 %v9887
  %v10354 = vpop.f32.mrf.mxu0
  %v10355 = vadd.f32 %v10342, %v10354
  %v10356 = vpop.f32.mrf.mxu0
  %10357 = vdwg.mxu0
  %10358 = vmatpush.bf16.msra.mxu0 %v10199
  %10359 = vmatpush.bf16.msra.mxu0 %v10197
  %10360 = vmatpush.bf16.msra.mxu0 %v10195
  %10361 = vmatpush.bf16.msra.mxu0 %v10193
  %10362 = vmatpush.bf16.msra.mxu0 %v10191
  %10363 = vmatpush.bf16.msra.mxu0 %v10189
  %10364 = vmatpush.bf16.msra.mxu0 %v10187
  %10365 = vmatpush.bf16.msra.mxu0 %v10185
  %10366 = vmatmul.bf16.gmra.mxu0 %v9888
  %v10367 = vpop.f32.mrf.mxu0
  %v10368 = vadd.f32 %v10355, %v10367
  %v10369 = vpop.f32.mrf.mxu0
  %10370 = vdwg.mxu0
  %10371 = vmatpush.bf16.msra.mxu0 %v10215
  %10372 = vmatpush.bf16.msra.mxu0 %v10213
  %10373 = vmatpush.bf16.msra.mxu0 %v10211
  %10374 = vmatpush.bf16.msra.mxu0 %v10209
  %10375 = vmatpush.bf16.msra.mxu0 %v10207
  %10376 = vmatpush.bf16.msra.mxu0 %v10205
  %10377 = vmatpush.bf16.msra.mxu0 %v10203
  %10378 = vmatpush.bf16.msra.mxu0 %v10201
  %10379 = vmatmul.bf16.gmra.mxu0 %v9889
  %v10380 = vpop.f32.mrf.mxu0
  %v10381 = vadd.f32 %v10368, %v10380
  %v10382 = vpop.f32.mrf.mxu0
  %10383 = vdwg.mxu0
  %v10384 = vmax.f32 %v10329, 0.0
  %v10385 = vmax.f32 %v10381, 0.0
  %v10386 = vpack.c.bf16 %v10384, %v10384
  %v10387 = vpack.c.bf16 %v10385, %v10385
  %v10388 = vld [vmem:[%s5] sm:$0xf]
  %v10389 = vld [vmem:[%s5 + $0x4] sm:$0xf]
  %v10390 = vld [vmem:[%s5 + $0x8] sm:$0xf]
  %v10391 = vld [vmem:[%s5 + $0xc] sm:$0xf]
  %v10392 = vld [vmem:[%s5 + $0x10] sm:$0xf]
  %v10393 = vld [vmem:[%s5 + $0x14] sm:$0xf]
  %v10394 = vld [vmem:[%s5 + $0x18] sm:$0xf]
  %v10395 = vld [vmem:[%s5 + $0x1c] sm:$0xf]
  %v10396 = vld [vmem:[%s5 + $0x20] sm:$0xf]
  %v10397 = vld [vmem:[%s5 + $0x24] sm:$0xf]
  %v10398 = vld [vmem:[%s5 + $0x28] sm:$0xf]
  %v10399 = vld [vmem:[%s5 + $0x2c] sm:$0xf]
  %v10400 = vld [vmem:[%s5 + $0x30] sm:$0xf]
  %v10401 = vld [vmem:[%s5 + $0x34] sm:$0xf]
  %v10402 = vld [vmem:[%s5 + $0x38] sm:$0xf]
  %v10403 = vld [vmem:[%s5 + $0x3c] sm:$0xf]
  %v10404 = vld [vmem:[%s5 + $0x40] sm:$0xf]
  %v10405 = vld [vmem:[%s5 + $0x44] sm:$0xf]
  %v10406 = vld [vmem:[%s5 + $0x48] sm:$0xf]
  %v10407 = vld [vmem:[%s5 + $0x4c] sm:$0xf]
  %v10408 = vld [vmem:[%s5 + $0x50] sm:$0xf]
  %v10409 = vld [vmem:[%s5 + $0x54] sm:$0xf]
  %v10410 = vld [vmem:[%s5 + $0x58] sm:$0xf]
  %v10411 = vld [vmem:[%s5 + $0x5c] sm:$0xf]
  %v10412 = vld [vmem:[%s5 + $0x60] sm:$0xf]
  %v10413 = vld [vmem:[%s5 + $0x64] sm:$0xf]
  %v10414 = vld [vmem:[%s5 + $0x68] sm:$0xf]
  %v10415 = vld [vmem:[%s5 + $0x6c] sm:$0xf]
  %v10416 = vld [vmem:[%s5 + $0x70] sm:$0xf]
  %v10417 = vld [vmem:[%s5 + $0x74] sm:$0xf]
  %v10418 = vld [vmem:[%s5 + $0x78] sm:$0xf]
  %v10419 = vld [vmem:[%s5 + $0x7c] sm:$0xf]
  %v10420 = vld [vmem:[%s6] sm:$0x1]
  %v10422 = vperm.slane %v10420, 0
  %v10456 = vunpack.c.l.b16 %v10388
  %v10457 = vunpack.c.l.b16 %v10389
  %v10458 = vunpack.c.l.b16 %v10390
  %v10459 = vunpack.c.l.b16 %v10391
  %v10460 = vunpack.c.l.b16 %v10392
  %v10461 = vunpack.c.l.b16 %v10393
  %v10462 = vunpack.c.l.b16 %v10394
  %v10463 = vunpack.c.l.b16 %v10395
  %v10464 = vunpack.c.l.b16 %v10396
  %v10465 = vunpack.c.l.b16 %v10397
  %v10466 = vunpack.c.l.b16 %v10398
  %v10467 = vunpack.c.l.b16 %v10399
  %v10468 = vunpack.c.l.b16 %v10400
  %v10469 = vunpack.c.l.b16 %v10401
  %v10470 = vunpack.c.l.b16 %v10402
  %v10471 = vunpack.c.l.b16 %v10403
  %v10472 = vunpack.c.l.b16 %v10404
  %v10473 = vunpack.c.l.b16 %v10405
  %v10474 = vunpack.c.l.b16 %v10406
  %v10475 = vunpack.c.l.b16 %v10407
  %v10476 = vunpack.c.l.b16 %v10408
  %v10477 = vunpack.c.l.b16 %v10409
  %v10478 = vunpack.c.l.b16 %v10410
  %v10479 = vunpack.c.l.b16 %v10411
  %v10480 = vunpack.c.l.b16 %v10412
  %v10481 = vunpack.c.l.b16 %v10413
  %v10482 = vunpack.c.l.b16 %v10414
  %v10483 = vunpack.c.l.b16 %v10415
  %v10484 = vunpack.c.l.b16 %v10416
  %v10485 = vunpack.c.l.b16 %v10417
  %v10486 = vunpack.c.l.b16 %v10418
  %v10487 = vunpack.c.l.b16 %v10419
  %v10488 = vpack.c.b16 %v10457, %v10456
  %v10489 = vpack.c.b16 %v10459, %v10458
  %v10490 = vpack.c.b16 %v10461, %v10460
  %v10491 = vpack.c.b16 %v10463, %v10462
  %v10492 = vpack.c.b16 %v10465, %v10464
  %v10493 = vpack.c.b16 %v10467, %v10466
  %v10494 = vpack.c.b16 %v10469, %v10468
  %v10495 = vpack.c.b16 %v10471, %v10470
  %v10496 = vpack.c.b16 %v10473, %v10472
  %v10497 = vpack.c.b16 %v10475, %v10474
  %v10498 = vpack.c.b16 %v10477, %v10476
  %v10499 = vpack.c.b16 %v10479, %v10478
  %v10500 = vpack.c.b16 %v10481, %v10480
  %v10501 = vpack.c.b16 %v10483, %v10482
  %v10502 = vpack.c.b16 %v10485, %v10484
  %v10503 = vpack.c.b16 %v10487, %v10486
  %10520 = vmatpush.bf16.msra.mxu0 %v10495
  %10521 = vmatpush.bf16.msra.mxu0 %v10494
  %10522 = vmatpush.bf16.msra.mxu0 %v10493
  %10523 = vmatpush.bf16.msra.mxu0 %v10492
  %10524 = vmatpush.bf16.msra.mxu0 %v10491
  %10525 = vmatpush.bf16.msra.mxu0 %v10490
  %10526 = vmatpush.bf16.msra.mxu0 %v10489
  %10527 = vmatpush.bf16.msra.mxu0 %v10488
  %10528 = vmatmul.bf16.gmra.mxu0 %v10386
  %v10529 = vpop.f32.mrf.mxu0
  %v10530 = vadd.f32 %v10422, %v10529
  %v10531 = vpop.f32.mrf.mxu0
  %10532 = vdwg.mxu0
  %10533 = vmatpush.bf16.msra.mxu0 %v10503
  %10534 = vmatpush.bf16.msra.mxu0 %v10502
  %10535 = vmatpush.bf16.msra.mxu0 %v10501
  %10536 = vmatpush.bf16.msra.mxu0 %v10500
  %10537 = vmatpush.bf16.msra.mxu0 %v10499
  %10538 = vmatpush.bf16.msra.mxu0 %v10498
  %10539 = vmatpush.bf16.msra.mxu0 %v10497
  %10540 = vmatpush.bf16.msra.mxu0 %v10496
  %10541 = vmatmul.bf16.gmra.mxu0 %v10387
  %v10542 = vpop.f32.mrf.mxu0
  %v10543 = vadd.f32 %v10530, %v10542
  %v10544 = vpop.f32.mrf.mxu0
  %10545 = vdwg.mxu0
  %v10546 = vmax.f32 %v10543, 0.0
  %v10547 = vpack.c.bf16 %v10546, %v10546
  %v10548 = vld [vmem:[%s7] sm:$0xf]
  %v10549 = vld [vmem:[%s7 + $0x4] sm:$0xf]
  %v10550 = vld [vmem:[%s7 + $0x8] sm:$0xf]
  %v10551 = vld [vmem:[%s7 + $0xc] sm:$0xf]
  %v10552 = vld [vmem:[%s7 + $0x10] sm:$0xf]
  %v10553 = vld [vmem:[%s7 + $0x14] sm:$0xf]
  %v10554 = vld [vmem:[%s7 + $0x18] sm:$0xf]
  %v10555 = vld [vmem:[%s7 + $0x1c] sm:$0xf]
  %v10556 = vld [vmem:[%s7 + $0x20] sm:$0xf]
  %v10557 = vld [vmem:[%s7 + $0x24] sm:$0xf]
  %v10558 = vld [vmem:[%s7 + $0x28] sm:$0xf]
  %v10559 = vld [vmem:[%s7 + $0x2c] sm:$0xf]
  %v10560 = vld [vmem:[%s7 + $0x30] sm:$0xf]
  %v10561 = vld [vmem:[%s7 + $0x34] sm:$0xf]
  %v10562 = vld [vmem:[%s7 + $0x38] sm:$0xf]
  %v10563 = vld [vmem:[%s7 + $0x3c] sm:$0xf]
  %v10564 = vld [vmem:[%s8] sm:$0x1]
  %v10566 = vperm.slane %v10564, 0
  %v10584 = vunpack.c.l.b16 %v10548
  %v10585 = vunpack.c.l.b16 %v10549
  %v10586 = vunpack.c.l.b16 %v10550
  %v10587 = vunpack.c.l.b16 %v10551
  %v10588 = vunpack.c.l.b16 %v10552
  %v10589 = vunpack.c.l.b16 %v10553
  %v10590 = vunpack.c.l.b16 %v10554
  %v10591 = vunpack.c.l.b16 %v10555
  %v10592 = vunpack.c.l.b16 %v10556
  %v10593 = vunpack.c.l.b16 %v10557
  %v10594 = vunpack.c.l.b16 %v10558
  %v10595 = vunpack.c.l.b16 %v10559
  %v10596 = vunpack.c.l.b16 %v10560
  %v10597 = vunpack.c.l.b16 %v10561
  %v10598 = vunpack.c.l.b16 %v10562
  %v10599 = vunpack.c.l.b16 %v10563
  %v10600 = vpack.c.b16 %v10585, %v10584
  %v10601 = vpack.c.b16 %v10587, %v10586
  %v10602 = vpack.c.b16 %v10589, %v10588
  %v10603 = vpack.c.b16 %v10591, %v10590
  %v10604 = vpack.c.b16 %v10593, %v10592
  %v10605 = vpack.c.b16 %v10595, %v10594
  %v10606 = vpack.c.b16 %v10597, %v10596
  %v10607 = vpack.c.b16 %v10599, %v10598
  %10616 = vmatpush.bf16.msra.mxu0 %v10607
  %10617 = vmatpush.bf16.msra.mxu0 %v10606
  %10618 = vmatpush.bf16.msra.mxu0 %v10605
  %10619 = vmatpush.bf16.msra.mxu0 %v10604
  %10620 = vmatpush.bf16.msra.mxu0 %v10603
  %10621 = vmatpush.bf16.msra.mxu0 %v10602
  %10622 = vmatpush.bf16.msra.mxu0 %v10601
  %10623 = vmatpush.bf16.msra.mxu0 %v10600
  %10624 = vmatmul.bf16.gmra.mxu0 %v10547
  %v10625 = vpop.f32.mrf.mxu0
  %v10626 = vadd.f32 %v10566, %v10625
  %v10627 = vpop.f32.mrf.mxu0
  %10628 = vdwg.mxu0
  %10629 = vst [vmem:[%s9] sm:$0xff] %v10626
  // Predicated region
  $region38: #{_forward_impl.1} parent=0 // pred_check
    _
  $region39: #{_forward_impl.1} parent=0 // pred_check_branch
    %10631 = sbr.rel (0) target = $region41
  $region40: #{_forward_impl.1} parent=0 // pred_region
    _
  $region41: #{_forward_impl.1} parent=0 // pred_fallthru
    _
  // Predicated region
  $region42: #{_forward_impl.1} parent=0 // pred_check
    _
  $region43: #{_forward_impl.1} parent=0 // pred_check_branch
    %10633 = sbr.rel (0) target = $region45
  $region44: #{_forward_impl.1} parent=0 // pred_region
    _
  $region45: #{_forward_impl.1} parent=0 // pred_fallthru
    _

</llo_original>
